<compile_context>
chip_gen: v7x
topology: tpu7x:2x2x1
jax: 0.10.0
libtpu: 0.0.40
codegen_flags: <defaults>
</compile_context>

<pallas_src>
import functools
import math

import jax
import jax.numpy as jnp
from jax.experimental import pallas as pl
from jax.experimental.pallas import tpu as pltpu


# ---------------------------------------------------------------------------
# Fused kernel: conv1 -> conv2+BN+ReLU (per image) -> MAX -> conv3+BN+ReLU
#               -> conv4 (+bias), one H-row tile per grid step.
# ---------------------------------------------------------------------------
def _ifcnn_kernel(x_ref, w1_ref, w2_ref, s2_ref, b2_ref, w3_ref, s3_ref, b3_ref,
                  w4_ref, b4_ref, o_ref, c1s_ref, ms_ref, *, n_tiles):
  n_img = x_ref.shape[0]
  tile_h, W = o_ref.shape[2], o_ref.shape[3]
  R1 = tile_h + 4                      # conv1 rows computed (incl. +-2 halo)
  R2 = tile_h + 2                      # conv2 / fused rows (incl. +-1 halo)

  t = pl.program_id(0) % n_tiles       # H-tile index within the image
  first = t == 0
  last = t == n_tiles - 1

  fmax = None
  for img in range(n_img):             # static unroll over fused source images
    xi = x_ref[img]                    # (tile_h+10, W+6, 3) bf16

    # ---- conv1 (7x7, 3->64): in-kernel im2col -> single K=147 MXU matmul.
    x21 = jnp.concatenate([xi[:, kw:kw + W, :] for kw in range(7)], axis=-1)
    slab1 = jnp.concatenate([x21[kh:kh + R1] for kh in range(7)], axis=-1)
    c1 = jnp.dot(slab1.reshape(R1 * W, 147), w1_ref[...],
                 preferred_element_type=jnp.float32)
    c1 = c1.astype(jnp.bfloat16).reshape(R1, W, 64)

    # conv1 tile -> scratch with replicate column halo; the +-1 halo rows that
    # fall outside the image replicate the true edge output row (PyTorch's
    # replicate pad is applied to conv1's OUTPUT, not to extra input rows).
    c1s_ref[:, 1:W + 1, :] = c1
    c1s_ref[:, 0:1, :] = c1[:, 0:1, :]
    c1s_ref[:, W + 1:W + 2, :] = c1[:, W - 1:W, :]

    @pl.when(first)
    def _():
      c1s_ref[1, :, :] = c1s_ref[2, :, :]            # conv1 row -1 := row 0

    @pl.when(last)
    def _():
      c1s_ref[R1 - 2, :, :] = c1s_ref[R1 - 3, :, :]  # conv1 row H := row H-1

    # ---- conv2 (3x3, 64->64) + BN + ReLU: kw folded into K (=192), kh folded
    #      into the MXU output dim (=192) -> one matmul + 2 row-shifted adds.
    slab2 = jnp.concatenate([c1s_ref[:, kw:kw + W, :] for kw in range(3)],
                            axis=-1)                              # (R1, W, 192)
    p2 = jnp.dot(slab2.reshape(R1 * W, 192), w2_ref[...],
                 preferred_element_type=jnp.float32).reshape(R1, W, 192)
    f = (p2[0:R2, :, 0:64] + p2[1:R2 + 1, :, 64:128]
         + p2[2:R2 + 2, :, 128:192])
    f = jnp.maximum(f * s2_ref[...] + b2_ref[...], 0.0).astype(jnp.bfloat16)
    fmax = f if fmax is None else jnp.maximum(fmax, f)            # MAX fusion

  # ---- MAX-fused feature -> scratch with replicate col halo + row-halo fix.
  ms_ref[:, 1:W + 1, :] = fmax
  ms_ref[:, 0:1, :] = fmax[:, 0:1, :]
  ms_ref[:, W + 1:W + 2, :] = fmax[:, W - 1:W, :]

  @pl.when(first)
  def _():
    ms_ref[0, :, :] = ms_ref[1, :, :]

  @pl.when(last)
  def _():
    ms_ref[R2 - 1, :, :] = ms_ref[R2 - 2, :, :]

  # ---- conv3 (3x3, 64->64) + BN + ReLU: same N=192 fold as conv2.
  slab3 = jnp.concatenate([ms_ref[:, kw:kw + W, :] for kw in range(3)], axis=-1)
  p3 = jnp.dot(slab3.reshape(R2 * W, 192), w3_ref[...],
               preferred_element_type=jnp.float32).reshape(R2, W, 192)
  y = (p3[0:tile_h, :, 0:64] + p3[1:tile_h + 1, :, 64:128]
       + p3[2:tile_h + 2, :, 128:192])
  y = jnp.maximum(y * s3_ref[...] + b3_ref[...], 0.0)     # (tile_h, W, 64) f32

  # ---- conv4 (1x1, 64->3, +bias) on the VPU/XLU: 3 broadcast-muls +
  #      64-lane reductions -> channel-major output, no MXU stream / transpose.
  yb = y.astype(jnp.bfloat16).astype(jnp.float32)
  w4 = w4_ref[...].astype(jnp.float32)                    # (3, 64)
  b4 = b4_ref[...]                                        # (1, 3)
  for c in range(3):
    zc = jnp.sum(yb * w4[c].reshape(1, 1, 64), axis=-1) + b4[0, c]
    o_ref[0, c, :, :] = zc.astype(o_ref.dtype)


# ---------------------------------------------------------------------------
# pallas_call wrapper
# ---------------------------------------------------------------------------
def _ifcnn_pallas(x_all, w1, w2, s2, b2, w3, s3, b3, w4, b4, *,
                  tile_h, n_tiles, n_img):
  GI, R_in, Wp, _ = x_all.shape
  G = GI // n_img
  W = Wp - 6
  R1, R2 = tile_h + 4, tile_h + 2
  kernel = functools.partial(_ifcnn_kernel, n_tiles=n_tiles)

  flops = 2 * G * W * (n_img * (R1 * 147 * 64 + R1 * 192 * 192)
                       + R2 * 192 * 192 + tile_h * 64 * 3)
  bytes_accessed = ((x_all.size + w1.size + w2.size + w3.size + w4.size) * 2
                    + (s2.size + b2.size + s3.size + b3.size + b4.size) * 4
                    + G * 3 * tile_h * W * 4)

  def const(*shape):
    return pl.BlockSpec(shape, lambda g, _s=len(shape): (0,) * _s)

  return pl.pallas_call(
      kernel,
      out_shape=jax.ShapeDtypeStruct((G, 3, tile_h, W), jnp.float32),
      grid_spec=pltpu.PrefetchScalarGridSpec(
          num_scalar_prefetch=0,
          grid=(G,),
          in_specs=[
              pl.BlockSpec((n_img, R_in, Wp, 3), lambda g: (g, 0, 0, 0)),
              const(147, 64),                     # conv1 weight (kh,kw,ci)->co
              const(192, 192),                    # conv2 weight (kw,ci)->(kh,co)
              const(1, 64), const(1, 64),         # conv2 BN scale / bias
              const(192, 192),                    # conv3 weight (kw,ci)->(kh,co)
              const(1, 64), const(1, 64),         # conv3 BN scale / bias
              const(3, 64), const(1, 3),          # conv4 weight / bias
          ],
          out_specs=pl.BlockSpec((1, 3, tile_h, W), lambda g: (g, 0, 0, 0)),
          scratch_shapes=[
              pltpu.VMEM((R1, W + 2, 64), jnp.bfloat16),   # conv1 rows + col halo
              pltpu.VMEM((R2, W + 2, 64), jnp.bfloat16),   # fused rows + col halo
          ],
      ),
      compiler_params=pltpu.CompilerParams(
          dimension_semantics=("parallel",),
          vmem_limit_bytes=32 * 1024 * 1024),
      cost_estimate=pl.CostEstimate(flops=int(flops), transcendentals=0,
                                    bytes_accessed=int(bytes_accessed)),
  )(x_all, w1, w2, s2, b2, w3, s3, b3, w4, b4)


# ---------------------------------------------------------------------------
# VMEM-aware tile picker
# ---------------------------------------------------------------------------
def _estimate_tile_vmem(tile_h, W, n_img):
  """Conservative per-grid-step VMEM footprint in bytes."""
  r8 = lambda v: -(-v // 8) * 8
  r128 = lambda v: -(-v // 128) * 128
  R_in, R1, R2 = tile_h + 10, tile_h + 4, tile_h + 2
  lane = 128
  persistent = 0
  persistent += 2 * n_img * R_in * r8(W + 6) * lane * 2   # dbl-buffered input (3->128 lanes)
  persistent += 2 * 3 * r8(tile_h) * r128(W) * 4          # dbl-buffered output block
  persistent += (R1 + R2) * r8(W + 2) * lane * 2          # halo scratch refs
  persistent += R2 * r8(W) * lane * 2                     # running MAX feature
  persistent += 512 * 1024                                # weights + slack
  stage1 = ((R_in + 2 * R1) * r8(W) * lane * 2            # x21 + K=147 slab
            + r8(R1 * W) * lane * 4 + R1 * r8(W) * lane * 2)   # conv1 acc + bf16
  stage2 = (R1 * r8(W) * 2 * lane * (2 + 4)               # conv2 slab + f32 P buffer
            + R2 * r8(W) * lane * 4)                      # conv2 output
  stage3 = (R2 * r8(W) * 2 * lane * (2 + 4)               # conv3 slab + f32 P buffer
            + tile_h * r8(W) * lane * 4 * 2)              # conv3 out + conv4 temps
  return persistent + max(stage1, stage2, stage3)


def _pick_tile_h(H, W, n_img, budget=13 * 1024 * 1024):
  """Largest divisor of H whose working set fits a conservative scoped-VMEM
  budget (safe on v5e's 16 MiB default; vmem_limit_bytes is raised to 32 MiB)."""
  for cand in range(H, 1, -1):
    if H % cand == 0 and _estimate_tile_vmem(cand, W, n_img) <= budget:
      return cand
  # TODO(synk): ragged last tile / W tiling for prime-height or very wide images.
  for cand in range(2, H + 1):
    if H % cand == 0:
      return cand
  return H


# ---------------------------------------------------------------------------
# Forward pass (PyTorch NCHW in / NCHW out)
# ---------------------------------------------------------------------------
def ifcnn_forward(params, *tensors_nchw, tile_h=None):
  n_img = len(tensors_nchw)
  N, C, H, W = tensors_nchw[0].shape
  assert C == 3, C
  tH = tile_h if tile_h is not None else _pick_tile_h(H, W, n_img)
  assert H % tH == 0 and tH >= 2, (H, tH)
  nH = H // tH
  G = N * nH
  R_in = tH + 10
  Wp = W + 6
  bf16 = jnp.bfloat16

  # Weight prep (folded for the in-kernel formulations).
  w1 = params['w1'].reshape(147, 64).astype(bf16)                 # rows: kh*21+kw*3+ci
  w2 = params['w2'].transpose(1, 2, 0, 3).reshape(192, 192).astype(bf16)  # (kw,ci)->(kh,co)
  w3 = params['w3'].transpose(1, 2, 0, 3).reshape(192, 192).astype(bf16)
  w4 = params['w4'].reshape(64, 3).T.astype(bf16)                 # (3, 64)
  s2 = params['s2'].reshape(1, 64).astype(jnp.float32)
  b2 = params['b2'].reshape(1, 64).astype(jnp.float32)
  s3 = params['s3'].reshape(1, 64).astype(jnp.float32)
  b3 = params['b3'].reshape(1, 64).astype(jnp.float32)
  b4 = params['b4'].reshape(1, 3).astype(jnp.float32)

  # Raw 3-channel input (no kw pre-fold): edge-pad 5 rows (3 for conv1 + 2 for
  # the per-tile conv2 halo) and 3 cols, then gather overlapping row windows.
  # Halo duplication is cheap on 3 bf16 channels.
  tiles = []
  for x in tensors_nchw:
    xh = jnp.transpose(x, (0, 2, 3, 1)).astype(bf16)                      # NHWC
    xp = jnp.pad(xh, ((0, 0), (5, 5), (3, 3), (0, 0)), mode='edge')
    xt = jnp.stack([xp[:, t * tH:t * tH + R_in] for t in range(nH)], axis=1)
    tiles.append(xt.reshape(G, R_in, Wp, 3))
  x_all = jnp.stack(tiles, axis=1).reshape(G * n_img, R_in, Wp, 3)

  out = _ifcnn_pallas(x_all, w1, w2, s2, b2, w3, s3, b3, w4, b4,
                      tile_h=tH, n_tiles=nH, n_img=n_img)   # (G, 3, tH, W) f32
  out = out.reshape(N, nH, 3, tH, W)
  return jnp.transpose(out, (0, 2, 1, 3, 4)).reshape(N, 3, H, W)


# ---------------------------------------------------------------------------
# Pure-JAX reference. compute_dtype=bfloat16 mirrors the kernel's bf16-compute
# / f32-accumulate; compute_dtype=float32 is the full-f32 PyTorch semantics.
# ---------------------------------------------------------------------------
def _ref_conv(x, w, scale, bias, relu, cd):
  y = jax.lax.conv_general_dilated(
      x.astype(cd), w.astype(cd),
      window_strides=(1, 1), padding='VALID',
      dimension_numbers=('NHWC', 'HWIO', 'NHWC'),
      preferred_element_type=jnp.float32,
      precision=jax.lax.Precision.HIGHEST)
  y = y * scale.reshape(1, 1, 1, -1) + bias.reshape(1, 1, 1, -1)
  if relu:
    y = jnp.maximum(y, 0.0)
  return y


def ifcnn_reference(params, *tensors_nchw, compute_dtype=jnp.float32):
  cd = compute_dtype

  def q(a):  # re-quantize activations at the same points the kernel does
    return a.astype(cd).astype(jnp.float32)

  ones64 = jnp.ones((64,), jnp.float32)
  zeros64 = jnp.zeros((64,), jnp.float32)
  feats = []
  for x in tensors_nchw:
    xh = q(jnp.transpose(x, (0, 2, 3, 1)))
    xp = jnp.pad(xh, ((0, 0), (3, 3), (3, 3), (0, 0)), mode='edge')
    c1 = q(_ref_conv(xp, params['w1'], ones64, zeros64, False, cd))
    c1p = jnp.pad(c1, ((0, 0), (1, 1), (1, 1), (0, 0)), mode='edge')
    f = q(_ref_conv(c1p, params['w2'], params['s2'], params['b2'], True, cd))
    feats.append(f)
  out = feats[0]
  for f in feats[1:]:
    out = jnp.maximum(out, f)
  outp = jnp.pad(out, ((0, 0), (1, 1), (1, 1), (0, 0)), mode='edge')
  y = _ref_conv(outp, params['w3'], params['s3'], params['b3'], True, cd)
  z = _ref_conv(y, params['w4'], jnp.ones((3,), jnp.float32), params['b4'],
                False, cd)
  return jnp.transpose(z, (0, 3, 1, 2))


# ---------------------------------------------------------------------------
# Deterministic parameter init (matches the module's shapes / init scheme)
# ---------------------------------------------------------------------------
def init_params(key):
  eps = 1e-5
  ks = jax.random.split(key, 5)
  # conv1 = resnet.conv1: Conv2d(3, 64, k=7, bias=False) (stride/pad overridden)
  w1 = jax.random.normal(ks[0], (7, 7, 3, 64), jnp.float32) * math.sqrt(2.0 / (7 * 7 * 64))
  # conv2 / conv3 ConvBlocks: Conv2d(64, 64, k=3, bias=False)
  w2 = jax.random.normal(ks[1], (3, 3, 64, 64), jnp.float32) * math.sqrt(2.0 / (3 * 3 * 64))
  w3 = jax.random.normal(ks[2], (3, 3, 64, 64), jnp.float32) * math.sqrt(2.0 / (3 * 3 * 64))
  # conv4: Conv2d(64, 3, k=1, bias=True)
  w4 = jax.random.normal(ks[3], (1, 1, 64, 3), jnp.float32) * math.sqrt(2.0 / (1 * 1 * 3))
  b4 = jax.random.uniform(ks[4], (3,), jnp.float32,
                          -1.0 / math.sqrt(64.0), 1.0 / math.sqrt(64.0))
  # Eval-mode BatchNorm2d folded: scale = gamma/sqrt(var+eps), bias = beta - mean*scale.
  bn_scale = jnp.full((64,), 1.0 / math.sqrt(1.0 + eps), jnp.float32)
  bn_bias = jnp.zeros((64,), jnp.float32)
  return dict(
      w1=w1,
      w2=w2, s2=bn_scale, b2=bn_bias,
      w3=w3, s3=bn_scale, b3=bn_bias,
      w4=w4, b4=b4,
  )


# ---------------------------------------------------------------------------
if __name__ == "__main__":
  key = jax.random.PRNGKey(0)
  kp, kx1, kx2 = jax.random.split(key, 3)
  params = init_params(kp)

  # Two source images to fuse (IFCNN takes *tensors), NCHW like the PyTorch module.
  x1 = jax.random.normal(kx1, (2, 3, 16, 16), jnp.float32)
  x2 = jax.random.normal(kx2, (2, 3, 16, 16), jnp.float32)

  # tile_h=8 exercises the multi-row-tile path (2 tiles per 16-row image).
  fwd_tiled = jax.jit(lambda p, a, b: ifcnn_forward(p, a, b, tile_h=8))
  out = jax.block_until_ready(fwd_tiled(params, x1, x2))
  assert out.shape == (2, 3, 16, 16), out.shape

  # Whole-image (single tile) path via the automatic tile picker.
  fwd_auto = jax.jit(lambda p, a, b: ifcnn_forward(p, a, b))
  out_auto = jax.block_until_ready(fwd_auto(params, x1, x2))

  # (1) Tight check vs a reference mirroring the kernel's bf16-compute /
  #     f32-accumulate rounding points.
  ref_bf16 = jax.block_until_ready(
      ifcnn_reference(params, x1, x2, compute_dtype=jnp.bfloat16))
  err_tiled = float(jnp.max(jnp.abs(out - ref_bf16)))
  err_auto = float(jnp.max(jnp.abs(out_auto - ref_bf16)))
  assert jnp.allclose(out, ref_bf16, atol=1e-2, rtol=1e-2), err_tiled
  assert jnp.allclose(out_auto, ref_bf16, atol=1e-2, rtol=1e-2), err_auto

  # (2) Sanity check vs the full-f32 (PyTorch-semantics) reference with a
  #     bf16-appropriate tolerance; structural bugs give O(1) errors.
  ref_f32 = jax.block_until_ready(
      ifcnn_reference(params, x1, x2, compute_dtype=jnp.float32))
  err_f32 = float(jnp.max(jnp.abs(out - ref_f32)))
  assert err_f32 < 0.25, err_f32

  print("KERNEL_OK")
</pallas_src>

<mosaic_0001>
module attributes {stable_mosaic.version = 11 : i64} {
  func.func @_ifcnn_kernel(%arg0: i32, %arg1: memref<2x18x22x3xbf16, #tpu.memory_space<vmem>>, %arg2: memref<147x64xbf16, #tpu.memory_space<vmem>>, %arg3: memref<192x192xbf16, #tpu.memory_space<vmem>>, %arg4: memref<1x64xf32, #tpu.memory_space<vmem>>, %arg5: memref<1x64xf32, #tpu.memory_space<vmem>>, %arg6: memref<192x192xbf16, #tpu.memory_space<vmem>>, %arg7: memref<1x64xf32, #tpu.memory_space<vmem>>, %arg8: memref<1x64xf32, #tpu.memory_space<vmem>>, %arg9: memref<3x64xbf16, #tpu.memory_space<vmem>>, %arg10: memref<1x3xf32, #tpu.memory_space<vmem>>, %arg11: memref<1x3x8x16xf32, #tpu.memory_space<vmem>>, %arg12: memref<12x18x64xbf16, #tpu.memory_space<vmem>>, %arg13: memref<10x18x64xbf16, #tpu.memory_space<vmem>>) attributes {dimension_semantics = [#tpu.dimension_semantics<parallel>], iteration_bounds = array<i64: 4>, scalar_prefetch = 0 : i64, scratch_operands = 2 : i64, tpu.core_type = #tpu.core_type<tc>, window_params = [{transform_indices = @transform_0, window_bounds = array<i64: 2, 18, 22, 3>}, {pipeline_mode = #tpu.pipeline_mode<synchronous>, transform_indices = @transform_1, window_bounds = array<i64: 147, 64>}, {pipeline_mode = #tpu.pipeline_mode<synchronous>, transform_indices = @transform_2, window_bounds = array<i64: 192, 192>}, {pipeline_mode = #tpu.pipeline_mode<synchronous>, transform_indices = @transform_3, window_bounds = array<i64: 1, 64>}, {pipeline_mode = #tpu.pipeline_mode<synchronous>, transform_indices = @transform_4, window_bounds = array<i64: 1, 64>}, {pipeline_mode = #tpu.pipeline_mode<synchronous>, transform_indices = @transform_5, window_bounds = array<i64: 192, 192>}, {pipeline_mode = #tpu.pipeline_mode<synchronous>, transform_indices = @transform_6, window_bounds = array<i64: 1, 64>}, {pipeline_mode = #tpu.pipeline_mode<synchronous>, transform_indices = @transform_7, window_bounds = array<i64: 1, 64>}, {pipeline_mode = #tpu.pipeline_mode<synchronous>, transform_indices = @transform_8, window_bounds = array<i64: 3, 64>}, {pipeline_mode = #tpu.pipeline_mode<synchronous>, transform_indices = @transform_9, window_bounds = array<i64: 1, 3>}, {transform_indices = @transform_10, window_bounds = array<i64: 1, 3, 8, 16>}]} {
    %c2_i32 = arith.constant 2 : i32
    %c0_i32 = arith.constant 0 : i32
    %0 = arith.cmpi eq, %c2_i32, %c0_i32 : i32
    %c1_i32 = arith.constant 1 : i32
    %1 = arith.select %0, %c1_i32, %c2_i32 : i32
    %2 = arith.remsi %arg0, %1 : i32
    %c0_i32_0 = arith.constant 0 : i32
    %3 = arith.cmpi ne, %2, %c0_i32_0 : i32
    %c0_i32_1 = arith.constant 0 : i32
    %4 = arith.cmpi slt, %2, %c0_i32_1 : i32
    %c0_i32_2 = arith.constant 0 : i32
    %5 = arith.cmpi slt, %1, %c0_i32_2 : i32
    %6 = arith.xori %4, %5 : i1
    %7 = arith.andi %6, %3 : i1
    %8 = arith.addi %2, %1 : i32
    %9 = arith.select %7, %8, %2 : i32
    %c0_i32_3 = arith.constant 0 : i32
    %10 = arith.cmpi eq, %9, %c0_i32_3 : i32
    %c1_i32_4 = arith.constant 1 : i32
    %11 = arith.cmpi eq, %9, %c1_i32_4 : i32
    %c0 = arith.constant 0 : index
    %c0_5 = arith.constant 0 : index
    %c0_6 = arith.constant 0 : index
    %c0_7 = arith.constant 0 : index
    %12 = vector.load %arg1[%c0, %c0_5, %c0_6, %c0_7] : memref<2x18x22x3xbf16, #tpu.memory_space<vmem>>, vector<1x18x22x3xbf16>
    %13 = vector.shape_cast %12 : vector<1x18x22x3xbf16> to vector<18x22x3xbf16>
    %14 = vector.extract_strided_slice %13 {offsets = [0, 0, 0], sizes = [18, 16, 3], strides = [1, 1, 1]} : vector<18x22x3xbf16> to vector<18x16x3xbf16>
    %15 = vector.extract_strided_slice %13 {offsets = [0, 1, 0], sizes = [18, 16, 3], strides = [1, 1, 1]} : vector<18x22x3xbf16> to vector<18x16x3xbf16>
    %16 = vector.extract_strided_slice %13 {offsets = [0, 2, 0], sizes = [18, 16, 3], strides = [1, 1, 1]} : vector<18x22x3xbf16> to vector<18x16x3xbf16>
    %17 = vector.extract_strided_slice %13 {offsets = [0, 3, 0], sizes = [18, 16, 3], strides = [1, 1, 1]} : vector<18x22x3xbf16> to vector<18x16x3xbf16>
    %18 = vector.extract_strided_slice %13 {offsets = [0, 4, 0], sizes = [18, 16, 3], strides = [1, 1, 1]} : vector<18x22x3xbf16> to vector<18x16x3xbf16>
    %19 = vector.extract_strided_slice %13 {offsets = [0, 5, 0], sizes = [18, 16, 3], strides = [1, 1, 1]} : vector<18x22x3xbf16> to vector<18x16x3xbf16>
    %20 = vector.extract_strided_slice %13 {offsets = [0, 6, 0], sizes = [18, 16, 3], strides = [1, 1, 1]} : vector<18x22x3xbf16> to vector<18x16x3xbf16>
    %21 = tpu.concatenate %14, %15, %16, %17, %18, %19, %20 in 2 : vector<18x16x3xbf16>, vector<18x16x3xbf16>, vector<18x16x3xbf16>, vector<18x16x3xbf16>, vector<18x16x3xbf16>, vector<18x16x3xbf16>, vector<18x16x3xbf16> -> vector<18x16x21xbf16>
    %22 = vector.extract_strided_slice %21 {offsets = [0, 0, 0], sizes = [12, 16, 21], strides = [1, 1, 1]} : vector<18x16x21xbf16> to vector<12x16x21xbf16>
    %23 = vector.extract_strided_slice %21 {offsets = [1, 0, 0], sizes = [12, 16, 21], strides = [1, 1, 1]} : vector<18x16x21xbf16> to vector<12x16x21xbf16>
    %24 = vector.extract_strided_slice %21 {offsets = [2, 0, 0], sizes = [12, 16, 21], strides = [1, 1, 1]} : vector<18x16x21xbf16> to vector<12x16x21xbf16>
    %25 = vector.extract_strided_slice %21 {offsets = [3, 0, 0], sizes = [12, 16, 21], strides = [1, 1, 1]} : vector<18x16x21xbf16> to vector<12x16x21xbf16>
    %26 = vector.extract_strided_slice %21 {offsets = [4, 0, 0], sizes = [12, 16, 21], strides = [1, 1, 1]} : vector<18x16x21xbf16> to vector<12x16x21xbf16>
    %27 = vector.extract_strided_slice %21 {offsets = [5, 0, 0], sizes = [12, 16, 21], strides = [1, 1, 1]} : vector<18x16x21xbf16> to vector<12x16x21xbf16>
    %28 = vector.extract_strided_slice %21 {offsets = [6, 0, 0], sizes = [12, 16, 21], strides = [1, 1, 1]} : vector<18x16x21xbf16> to vector<12x16x21xbf16>
    %29 = tpu.concatenate %22, %23, %24, %25, %26, %27, %28 in 2 : vector<12x16x21xbf16>, vector<12x16x21xbf16>, vector<12x16x21xbf16>, vector<12x16x21xbf16>, vector<12x16x21xbf16>, vector<12x16x21xbf16>, vector<12x16x21xbf16> -> vector<12x16x147xbf16>
    %30 = vector.shape_cast %29 : vector<12x16x147xbf16> to vector<192x147xbf16>
    %c0_8 = arith.constant 0 : index
    %c0_9 = arith.constant 0 : index
    %31 = vector.load %arg2[%c0_8, %c0_9] : memref<147x64xbf16, #tpu.memory_space<vmem>>, vector<147x64xbf16>
    %cst = arith.constant dense<0.000000e+00> : vector<192x64xf32>
    %32 = tpu.matmul %30, %31, %cst {dimension_numbers = #tpu.dot_dimension_numbers<[1], [0], [0], [1], [0, 0, 1, 1], [], []>} : vector<192x147xbf16>, vector<147x64xbf16>, vector<192x64xf32> -> vector<192x64xf32>
    %33 = arith.truncf %32 : vector<192x64xf32> to vector<192x64xbf16>
    %34 = vector.shape_cast %33 : vector<192x64xbf16> to vector<12x16x64xbf16>
    %c0_10 = arith.constant 0 : index
    %c1 = arith.constant 1 : index
    %c0_11 = arith.constant 0 : index
    %35 = vector.load %arg12[%c0_10, %c1, %c0_11] : memref<12x18x64xbf16, #tpu.memory_space<vmem>>, vector<12x16x64xbf16>
    tpu.vector_store %arg12[%c0_10, %c1, %c0_11], %34 {strides = array<i32>} : memref<12x18x64xbf16, #tpu.memory_space<vmem>>, vector<12x16x64xbf16>,
    %36 = vector.extract_strided_slice %34 {offsets = [0, 0, 0], sizes = [12, 1, 64], strides = [1, 1, 1]} : vector<12x16x64xbf16> to vector<12x1x64xbf16>
    %c0_12 = arith.constant 0 : index
    %c0_13 = arith.constant 0 : index
    %c0_14 = arith.constant 0 : index
    %37 = vector.load %arg12[%c0_12, %c0_13, %c0_14] : memref<12x18x64xbf16, #tpu.memory_space<vmem>>, vector<12x1x64xbf16>
    tpu.vector_store %arg12[%c0_12, %c0_13, %c0_14], %36 {strides = array<i32>} : memref<12x18x64xbf16, #tpu.memory_space<vmem>>, vector<12x1x64xbf16>,
    %38 = vector.extract_strided_slice %34 {offsets = [0, 15, 0], sizes = [12, 1, 64], strides = [1, 1, 1]} : vector<12x16x64xbf16> to vector<12x1x64xbf16>
    %c0_15 = arith.constant 0 : index
    %c17 = arith.constant 17 : index
    %c0_16 = arith.constant 0 : index
    %39 = vector.load %arg12[%c0_15, %c17, %c0_16] : memref<12x18x64xbf16, #tpu.memory_space<vmem>>, vector<12x1x64xbf16>
    tpu.vector_store %arg12[%c0_15, %c17, %c0_16], %38 {strides = array<i32>} : memref<12x18x64xbf16, #tpu.memory_space<vmem>>, vector<12x1x64xbf16>,
    %40 = arith.extui %10 : i1 to i32
    %c0_i32_17 = arith.constant 0 : i32
    %41 = arith.cmpi ne, %40, %c0_i32_17 : i32
    scf.if %41 {
      %c2_117 = arith.constant 2 : index
      %c0_118 = arith.constant 0 : index
      %c0_119 = arith.constant 0 : index
      %201 = vector.load %arg12[%c2_117, %c0_118, %c0_119] : memref<12x18x64xbf16, #tpu.memory_space<vmem>>, vector<1x18x64xbf16>
      %202 = vector.shape_cast %201 : vector<1x18x64xbf16> to vector<18x64xbf16>
      %c1_120 = arith.constant 1 : index
      %c0_121 = arith.constant 0 : index
      %c0_122 = arith.constant 0 : index
      %203 = vector.load %arg12[%c1_120, %c0_121, %c0_122] : memref<12x18x64xbf16, #tpu.memory_space<vmem>>, vector<1x18x64xbf16>
      %204 = vector.shape_cast %203 : vector<1x18x64xbf16> to vector<18x64xbf16>
      %205 = vector.shape_cast %202 : vector<18x64xbf16> to vector<1x18x64xbf16>
      tpu.vector_store %arg12[%c1_120, %c0_121, %c0_122], %205 {strides = array<i32>} : memref<12x18x64xbf16, #tpu.memory_space<vmem>>, vector<1x18x64xbf16>,
    } else {
    }
    %42 = arith.extui %11 : i1 to i32
    %c0_i32_18 = arith.constant 0 : i32
    %43 = arith.cmpi ne, %42, %c0_i32_18 : i32
    scf.if %43 {
      %c9 = arith.constant 9 : index
      %c0_117 = arith.constant 0 : index
      %c0_118 = arith.constant 0 : index
      %201 = vector.load %arg12[%c9, %c0_117, %c0_118] : memref<12x18x64xbf16, #tpu.memory_space<vmem>>, vector<1x18x64xbf16>
      %202 = vector.shape_cast %201 : vector<1x18x64xbf16> to vector<18x64xbf16>
      %c10 = arith.constant 10 : index
      %c0_119 = arith.constant 0 : index
      %c0_120 = arith.constant 0 : index
      %203 = vector.load %arg12[%c10, %c0_119, %c0_120] : memref<12x18x64xbf16, #tpu.memory_space<vmem>>, vector<1x18x64xbf16>
      %204 = vector.shape_cast %203 : vector<1x18x64xbf16> to vector<18x64xbf16>
      %205 = vector.shape_cast %202 : vector<18x64xbf16> to vector<1x18x64xbf16>
      tpu.vector_store %arg12[%c10, %c0_119, %c0_120], %205 {strides = array<i32>} : memref<12x18x64xbf16, #tpu.memory_space<vmem>>, vector<1x18x64xbf16>,
    } else {
    }
    %c0_19 = arith.constant 0 : index
    %c0_20 = arith.constant 0 : index
    %c0_21 = arith.constant 0 : index
    %44 = vector.load %arg12[%c0_19, %c0_20, %c0_21] : memref<12x18x64xbf16, #tpu.memory_space<vmem>>, vector<12x16x64xbf16>
    %c0_22 = arith.constant 0 : index
    %c1_23 = arith.constant 1 : index
    %c0_24 = arith.constant 0 : index
    %45 = vector.load %arg12[%c0_22, %c1_23, %c0_24] : memref<12x18x64xbf16, #tpu.memory_space<vmem>>, vector<12x16x64xbf16>
    %c0_25 = arith.constant 0 : index
    %c2 = arith.constant 2 : index
    %c0_26 = arith.constant 0 : index
    %46 = vector.load %arg12[%c0_25, %c2, %c0_26] : memref<12x18x64xbf16, #tpu.memory_space<vmem>>, vector<12x16x64xbf16>
    %47 = tpu.concatenate %44, %45, %46 in 2 : vector<12x16x64xbf16>, vector<12x16x64xbf16>, vector<12x16x64xbf16> -> vector<12x16x192xbf16>
    %48 = vector.shape_cast %47 : vector<12x16x192xbf16> to vector<192x192xbf16>
    %c0_27 = arith.constant 0 : index
    %c0_28 = arith.constant 0 : index
    %49 = vector.load %arg3[%c0_27, %c0_28] : memref<192x192xbf16, #tpu.memory_space<vmem>>, vector<192x192xbf16>
    %cst_29 = arith.constant dense<0.000000e+00> : vector<192x192xf32>
    %50 = tpu.matmul %48, %49, %cst_29 {dimension_numbers = #tpu.dot_dimension_numbers<[1], [0], [0], [1], [0, 0, 1, 1], [], []>} : vector<192x192xbf16>, vector<192x192xbf16>, vector<192x192xf32> -> vector<192x192xf32>
    %51 = vector.shape_cast %50 : vector<192x192xf32> to vector<12x16x192xf32>
    %52 = vector.extract_strided_slice %51 {offsets = [0, 0, 0], sizes = [10, 16, 64], strides = [1, 1, 1]} : vector<12x16x192xf32> to vector<10x16x64xf32>
    %53 = vector.extract_strided_slice %51 {offsets = [1, 0, 64], sizes = [10, 16, 64], strides = [1, 1, 1]} : vector<12x16x192xf32> to vector<10x16x64xf32>
    %54 = arith.addf %52, %53 : vector<10x16x64xf32>
    %55 = vector.extract_strided_slice %51 {offsets = [2, 0, 128], sizes = [10, 16, 64], strides = [1, 1, 1]} : vector<12x16x192xf32> to vector<10x16x64xf32>
    %56 = arith.addf %54, %55 : vector<10x16x64xf32>
    %c0_30 = arith.constant 0 : index
    %c0_31 = arith.constant 0 : index
    %57 = vector.load %arg4[%c0_30, %c0_31] : memref<1x64xf32, #tpu.memory_space<vmem>>, vector<1x64xf32>
    %58 = vector.shape_cast %57 : vector<1x64xf32> to vector<1x1x64xf32>
    %59 = vector.broadcast %58 : vector<1x1x64xf32> to vector<10x16x64xf32>
    %60 = arith.mulf %56, %59 : vector<10x16x64xf32>
    %c0_32 = arith.constant 0 : index
    %c0_33 = arith.constant 0 : index
    %61 = vector.load %arg5[%c0_32, %c0_33] : memref<1x64xf32, #tpu.memory_space<vmem>>, vector<1x64xf32>
    %62 = vector.shape_cast %61 : vector<1x64xf32> to vector<1x1x64xf32>
    %63 = vector.broadcast %62 : vector<1x1x64xf32> to vector<10x16x64xf32>
    %64 = arith.addf %60, %63 : vector<10x16x64xf32>
    %cst_34 = arith.constant 0.000000e+00 : f32
    %65 = vector.broadcast %cst_34 : f32 to vector<10x16x64xf32>
    %66 = arith.maximumf %64, %65 : vector<10x16x64xf32>
    %67 = arith.truncf %66 : vector<10x16x64xf32> to vector<10x16x64xbf16>
    %c1_35 = arith.constant 1 : index
    %c0_36 = arith.constant 0 : index
    %c0_37 = arith.constant 0 : index
    %c0_38 = arith.constant 0 : index
    %68 = vector.load %arg1[%c1_35, %c0_36, %c0_37, %c0_38] : memref<2x18x22x3xbf16, #tpu.memory_space<vmem>>, vector<1x18x22x3xbf16>
    %69 = vector.shape_cast %68 : vector<1x18x22x3xbf16> to vector<18x22x3xbf16>
    %70 = vector.extract_strided_slice %69 {offsets = [0, 0, 0], sizes = [18, 16, 3], strides = [1, 1, 1]} : vector<18x22x3xbf16> to vector<18x16x3xbf16>
    %71 = vector.extract_strided_slice %69 {offsets = [0, 1, 0], sizes = [18, 16, 3], strides = [1, 1, 1]} : vector<18x22x3xbf16> to vector<18x16x3xbf16>
    %72 = vector.extract_strided_slice %69 {offsets = [0, 2, 0], sizes = [18, 16, 3], strides = [1, 1, 1]} : vector<18x22x3xbf16> to vector<18x16x3xbf16>
    %73 = vector.extract_strided_slice %69 {offsets = [0, 3, 0], sizes = [18, 16, 3], strides = [1, 1, 1]} : vector<18x22x3xbf16> to vector<18x16x3xbf16>
    %74 = vector.extract_strided_slice %69 {offsets = [0, 4, 0], sizes = [18, 16, 3], strides = [1, 1, 1]} : vector<18x22x3xbf16> to vector<18x16x3xbf16>
    %75 = vector.extract_strided_slice %69 {offsets = [0, 5, 0], sizes = [18, 16, 3], strides = [1, 1, 1]} : vector<18x22x3xbf16> to vector<18x16x3xbf16>
    %76 = vector.extract_strided_slice %69 {offsets = [0, 6, 0], sizes = [18, 16, 3], strides = [1, 1, 1]} : vector<18x22x3xbf16> to vector<18x16x3xbf16>
    %77 = tpu.concatenate %70, %71, %72, %73, %74, %75, %76 in 2 : vector<18x16x3xbf16>, vector<18x16x3xbf16>, vector<18x16x3xbf16>, vector<18x16x3xbf16>, vector<18x16x3xbf16>, vector<18x16x3xbf16>, vector<18x16x3xbf16> -> vector<18x16x21xbf16>
    %78 = vector.extract_strided_slice %77 {offsets = [0, 0, 0], sizes = [12, 16, 21], strides = [1, 1, 1]} : vector<18x16x21xbf16> to vector<12x16x21xbf16>
    %79 = vector.extract_strided_slice %77 {offsets = [1, 0, 0], sizes = [12, 16, 21], strides = [1, 1, 1]} : vector<18x16x21xbf16> to vector<12x16x21xbf16>
    %80 = vector.extract_strided_slice %77 {offsets = [2, 0, 0], sizes = [12, 16, 21], strides = [1, 1, 1]} : vector<18x16x21xbf16> to vector<12x16x21xbf16>
    %81 = vector.extract_strided_slice %77 {offsets = [3, 0, 0], sizes = [12, 16, 21], strides = [1, 1, 1]} : vector<18x16x21xbf16> to vector<12x16x21xbf16>
    %82 = vector.extract_strided_slice %77 {offsets = [4, 0, 0], sizes = [12, 16, 21], strides = [1, 1, 1]} : vector<18x16x21xbf16> to vector<12x16x21xbf16>
    %83 = vector.extract_strided_slice %77 {offsets = [5, 0, 0], sizes = [12, 16, 21], strides = [1, 1, 1]} : vector<18x16x21xbf16> to vector<12x16x21xbf16>
    %84 = vector.extract_strided_slice %77 {offsets = [6, 0, 0], sizes = [12, 16, 21], strides = [1, 1, 1]} : vector<18x16x21xbf16> to vector<12x16x21xbf16>
    %85 = tpu.concatenate %78, %79, %80, %81, %82, %83, %84 in 2 : vector<12x16x21xbf16>, vector<12x16x21xbf16>, vector<12x16x21xbf16>, vector<12x16x21xbf16>, vector<12x16x21xbf16>, vector<12x16x21xbf16>, vector<12x16x21xbf16> -> vector<12x16x147xbf16>
    %86 = vector.shape_cast %85 : vector<12x16x147xbf16> to vector<192x147xbf16>
    %c0_39 = arith.constant 0 : index
    %c0_40 = arith.constant 0 : index
    %87 = vector.load %arg2[%c0_39, %c0_40] : memref<147x64xbf16, #tpu.memory_space<vmem>>, vector<147x64xbf16>
    %cst_41 = arith.constant dense<0.000000e+00> : vector<192x64xf32>
    %88 = tpu.matmul %86, %87, %cst_41 {dimension_numbers = #tpu.dot_dimension_numbers<[1], [0], [0], [1], [0, 0, 1, 1], [], []>} : vector<192x147xbf16>, vector<147x64xbf16>, vector<192x64xf32> -> vector<192x64xf32>
    %89 = arith.truncf %88 : vector<192x64xf32> to vector<192x64xbf16>
    %90 = vector.shape_cast %89 : vector<192x64xbf16> to vector<12x16x64xbf16>
    %c0_42 = arith.constant 0 : index
    %c1_43 = arith.constant 1 : index
    %c0_44 = arith.constant 0 : index
    %91 = vector.load %arg12[%c0_42, %c1_43, %c0_44] : memref<12x18x64xbf16, #tpu.memory_space<vmem>>, vector<12x16x64xbf16>
    tpu.vector_store %arg12[%c0_42, %c1_43, %c0_44], %90 {strides = array<i32>} : memref<12x18x64xbf16, #tpu.memory_space<vmem>>, vector<12x16x64xbf16>,
    %92 = vector.extract_strided_slice %90 {offsets = [0, 0, 0], sizes = [12, 1, 64], strides = [1, 1, 1]} : vector<12x16x64xbf16> to vector<12x1x64xbf16>
    %c0_45 = arith.constant 0 : index
    %c0_46 = arith.constant 0 : index
    %c0_47 = arith.constant 0 : index
    %93 = vector.load %arg12[%c0_45, %c0_46, %c0_47] : memref<12x18x64xbf16, #tpu.memory_space<vmem>>, vector<12x1x64xbf16>
    tpu.vector_store %arg12[%c0_45, %c0_46, %c0_47], %92 {strides = array<i32>} : memref<12x18x64xbf16, #tpu.memory_space<vmem>>, vector<12x1x64xbf16>,
    %94 = vector.extract_strided_slice %90 {offsets = [0, 15, 0], sizes = [12, 1, 64], strides = [1, 1, 1]} : vector<12x16x64xbf16> to vector<12x1x64xbf16>
    %c0_48 = arith.constant 0 : index
    %c17_49 = arith.constant 17 : index
    %c0_50 = arith.constant 0 : index
    %95 = vector.load %arg12[%c0_48, %c17_49, %c0_50] : memref<12x18x64xbf16, #tpu.memory_space<vmem>>, vector<12x1x64xbf16>
    tpu.vector_store %arg12[%c0_48, %c17_49, %c0_50], %94 {strides = array<i32>} : memref<12x18x64xbf16, #tpu.memory_space<vmem>>, vector<12x1x64xbf16>,
    %96 = arith.extui %10 : i1 to i32
    %c0_i32_51 = arith.constant 0 : i32
    %97 = arith.cmpi ne, %96, %c0_i32_51 : i32
    scf.if %97 {
      %c2_117 = arith.constant 2 : index
      %c0_118 = arith.constant 0 : index
      %c0_119 = arith.constant 0 : index
      %201 = vector.load %arg12[%c2_117, %c0_118, %c0_119] : memref<12x18x64xbf16, #tpu.memory_space<vmem>>, vector<1x18x64xbf16>
      %202 = vector.shape_cast %201 : vector<1x18x64xbf16> to vector<18x64xbf16>
      %c1_120 = arith.constant 1 : index
      %c0_121 = arith.constant 0 : index
      %c0_122 = arith.constant 0 : index
      %203 = vector.load %arg12[%c1_120, %c0_121, %c0_122] : memref<12x18x64xbf16, #tpu.memory_space<vmem>>, vector<1x18x64xbf16>
      %204 = vector.shape_cast %203 : vector<1x18x64xbf16> to vector<18x64xbf16>
      %205 = vector.shape_cast %202 : vector<18x64xbf16> to vector<1x18x64xbf16>
      tpu.vector_store %arg12[%c1_120, %c0_121, %c0_122], %205 {strides = array<i32>} : memref<12x18x64xbf16, #tpu.memory_space<vmem>>, vector<1x18x64xbf16>,
    } else {
    }
    %98 = arith.extui %11 : i1 to i32
    %c0_i32_52 = arith.constant 0 : i32
    %99 = arith.cmpi ne, %98, %c0_i32_52 : i32
    scf.if %99 {
      %c9 = arith.constant 9 : index
      %c0_117 = arith.constant 0 : index
      %c0_118 = arith.constant 0 : index
      %201 = vector.load %arg12[%c9, %c0_117, %c0_118] : memref<12x18x64xbf16, #tpu.memory_space<vmem>>, vector<1x18x64xbf16>
      %202 = vector.shape_cast %201 : vector<1x18x64xbf16> to vector<18x64xbf16>
      %c10 = arith.constant 10 : index
      %c0_119 = arith.constant 0 : index
      %c0_120 = arith.constant 0 : index
      %203 = vector.load %arg12[%c10, %c0_119, %c0_120] : memref<12x18x64xbf16, #tpu.memory_space<vmem>>, vector<1x18x64xbf16>
      %204 = vector.shape_cast %203 : vector<1x18x64xbf16> to vector<18x64xbf16>
      %205 = vector.shape_cast %202 : vector<18x64xbf16> to vector<1x18x64xbf16>
      tpu.vector_store %arg12[%c10, %c0_119, %c0_120], %205 {strides = array<i32>} : memref<12x18x64xbf16, #tpu.memory_space<vmem>>, vector<1x18x64xbf16>,
    } else {
    }
    %c0_53 = arith.constant 0 : index
    %c0_54 = arith.constant 0 : index
    %c0_55 = arith.constant 0 : index
    %100 = vector.load %arg12[%c0_53, %c0_54, %c0_55] : memref<12x18x64xbf16, #tpu.memory_space<vmem>>, vector<12x16x64xbf16>
    %c0_56 = arith.constant 0 : index
    %c1_57 = arith.constant 1 : index
    %c0_58 = arith.constant 0 : index
    %101 = vector.load %arg12[%c0_56, %c1_57, %c0_58] : memref<12x18x64xbf16, #tpu.memory_space<vmem>>, vector<12x16x64xbf16>
    %c0_59 = arith.constant 0 : index
    %c2_60 = arith.constant 2 : index
    %c0_61 = arith.constant 0 : index
    %102 = vector.load %arg12[%c0_59, %c2_60, %c0_61] : memref<12x18x64xbf16, #tpu.memory_space<vmem>>, vector<12x16x64xbf16>
    %103 = tpu.concatenate %100, %101, %102 in 2 : vector<12x16x64xbf16>, vector<12x16x64xbf16>, vector<12x16x64xbf16> -> vector<12x16x192xbf16>
    %104 = vector.shape_cast %103 : vector<12x16x192xbf16> to vector<192x192xbf16>
    %c0_62 = arith.constant 0 : index
    %c0_63 = arith.constant 0 : index
    %105 = vector.load %arg3[%c0_62, %c0_63] : memref<192x192xbf16, #tpu.memory_space<vmem>>, vector<192x192xbf16>
    %cst_64 = arith.constant dense<0.000000e+00> : vector<192x192xf32>
    %106 = tpu.matmul %104, %105, %cst_64 {dimension_numbers = #tpu.dot_dimension_numbers<[1], [0], [0], [1], [0, 0, 1, 1], [], []>} : vector<192x192xbf16>, vector<192x192xbf16>, vector<192x192xf32> -> vector<192x192xf32>
    %107 = vector.shape_cast %106 : vector<192x192xf32> to vector<12x16x192xf32>
    %108 = vector.extract_strided_slice %107 {offsets = [0, 0, 0], sizes = [10, 16, 64], strides = [1, 1, 1]} : vector<12x16x192xf32> to vector<10x16x64xf32>
    %109 = vector.extract_strided_slice %107 {offsets = [1, 0, 64], sizes = [10, 16, 64], strides = [1, 1, 1]} : vector<12x16x192xf32> to vector<10x16x64xf32>
    %110 = arith.addf %108, %109 : vector<10x16x64xf32>
    %111 = vector.extract_strided_slice %107 {offsets = [2, 0, 128], sizes = [10, 16, 64], strides = [1, 1, 1]} : vector<12x16x192xf32> to vector<10x16x64xf32>
    %112 = arith.addf %110, %111 : vector<10x16x64xf32>
    %c0_65 = arith.constant 0 : index
    %c0_66 = arith.constant 0 : index
    %113 = vector.load %arg4[%c0_65, %c0_66] : memref<1x64xf32, #tpu.memory_space<vmem>>, vector<1x64xf32>
    %114 = vector.shape_cast %113 : vector<1x64xf32> to vector<1x1x64xf32>
    %115 = vector.broadcast %114 : vector<1x1x64xf32> to vector<10x16x64xf32>
    %116 = arith.mulf %112, %115 : vector<10x16x64xf32>
    %c0_67 = arith.constant 0 : index
    %c0_68 = arith.constant 0 : index
    %117 = vector.load %arg5[%c0_67, %c0_68] : memref<1x64xf32, #tpu.memory_space<vmem>>, vector<1x64xf32>
    %118 = vector.shape_cast %117 : vector<1x64xf32> to vector<1x1x64xf32>
    %119 = vector.broadcast %118 : vector<1x1x64xf32> to vector<10x16x64xf32>
    %120 = arith.addf %116, %119 : vector<10x16x64xf32>
    %cst_69 = arith.constant 0.000000e+00 : f32
    %121 = vector.broadcast %cst_69 : f32 to vector<10x16x64xf32>
    %122 = arith.maximumf %120, %121 : vector<10x16x64xf32>
    %123 = arith.truncf %122 : vector<10x16x64xf32> to vector<10x16x64xbf16>
    %124 = arith.maximumf %67, %123 : vector<10x16x64xbf16>
    %c0_70 = arith.constant 0 : index
    %c1_71 = arith.constant 1 : index
    %c0_72 = arith.constant 0 : index
    %125 = vector.load %arg13[%c0_70, %c1_71, %c0_72] : memref<10x18x64xbf16, #tpu.memory_space<vmem>>, vector<10x16x64xbf16>
    tpu.vector_store %arg13[%c0_70, %c1_71, %c0_72], %124 {strides = array<i32>} : memref<10x18x64xbf16, #tpu.memory_space<vmem>>, vector<10x16x64xbf16>,
    %126 = vector.extract_strided_slice %124 {offsets = [0, 0, 0], sizes = [10, 1, 64], strides = [1, 1, 1]} : vector<10x16x64xbf16> to vector<10x1x64xbf16>
    %c0_73 = arith.constant 0 : index
    %c0_74 = arith.constant 0 : index
    %c0_75 = arith.constant 0 : index
    %127 = vector.load %arg13[%c0_73, %c0_74, %c0_75] : memref<10x18x64xbf16, #tpu.memory_space<vmem>>, vector<10x1x64xbf16>
    tpu.vector_store %arg13[%c0_73, %c0_74, %c0_75], %126 {strides = array<i32>} : memref<10x18x64xbf16, #tpu.memory_space<vmem>>, vector<10x1x64xbf16>,
    %128 = vector.extract_strided_slice %124 {offsets = [0, 15, 0], sizes = [10, 1, 64], strides = [1, 1, 1]} : vector<10x16x64xbf16> to vector<10x1x64xbf16>
    %c0_76 = arith.constant 0 : index
    %c17_77 = arith.constant 17 : index
    %c0_78 = arith.constant 0 : index
    %129 = vector.load %arg13[%c0_76, %c17_77, %c0_78] : memref<10x18x64xbf16, #tpu.memory_space<vmem>>, vector<10x1x64xbf16>
    tpu.vector_store %arg13[%c0_76, %c17_77, %c0_78], %128 {strides = array<i32>} : memref<10x18x64xbf16, #tpu.memory_space<vmem>>, vector<10x1x64xbf16>,
    %130 = arith.extui %10 : i1 to i32
    %c0_i32_79 = arith.constant 0 : i32
    %131 = arith.cmpi ne, %130, %c0_i32_79 : i32
    scf.if %131 {
      %c1_117 = arith.constant 1 : index
      %c0_118 = arith.constant 0 : index
      %c0_119 = arith.constant 0 : index
      %201 = vector.load %arg13[%c1_117, %c0_118, %c0_119] : memref<10x18x64xbf16, #tpu.memory_space<vmem>>, vector<1x18x64xbf16>
      %202 = vector.shape_cast %201 : vector<1x18x64xbf16> to vector<18x64xbf16>
      %c0_120 = arith.constant 0 : index
      %c0_121 = arith.constant 0 : index
      %c0_122 = arith.constant 0 : index
      %203 = vector.load %arg13[%c0_120, %c0_121, %c0_122] : memref<10x18x64xbf16, #tpu.memory_space<vmem>>, vector<1x18x64xbf16>
      %204 = vector.shape_cast %203 : vector<1x18x64xbf16> to vector<18x64xbf16>
      %205 = vector.shape_cast %202 : vector<18x64xbf16> to vector<1x18x64xbf16>
      tpu.vector_store %arg13[%c0_120, %c0_121, %c0_122], %205 {strides = array<i32>} : memref<10x18x64xbf16, #tpu.memory_space<vmem>>, vector<1x18x64xbf16>,
    } else {
    }
    %132 = arith.extui %11 : i1 to i32
    %c0_i32_80 = arith.constant 0 : i32
    %133 = arith.cmpi ne, %132, %c0_i32_80 : i32
    scf.if %133 {
      %c8 = arith.constant 8 : index
      %c0_117 = arith.constant 0 : index
      %c0_118 = arith.constant 0 : index
      %201 = vector.load %arg13[%c8, %c0_117, %c0_118] : memref<10x18x64xbf16, #tpu.memory_space<vmem>>, vector<1x18x64xbf16>
      %202 = vector.shape_cast %201 : vector<1x18x64xbf16> to vector<18x64xbf16>
      %c9 = arith.constant 9 : index
      %c0_119 = arith.constant 0 : index
      %c0_120 = arith.constant 0 : index
      %203 = vector.load %arg13[%c9, %c0_119, %c0_120] : memref<10x18x64xbf16, #tpu.memory_space<vmem>>, vector<1x18x64xbf16>
      %204 = vector.shape_cast %203 : vector<1x18x64xbf16> to vector<18x64xbf16>
      %205 = vector.shape_cast %202 : vector<18x64xbf16> to vector<1x18x64xbf16>
      tpu.vector_store %arg13[%c9, %c0_119, %c0_120], %205 {strides = array<i32>} : memref<10x18x64xbf16, #tpu.memory_space<vmem>>, vector<1x18x64xbf16>,
    } else {
    }
    %c0_81 = arith.constant 0 : index
    %c0_82 = arith.constant 0 : index
    %c0_83 = arith.constant 0 : index
    %134 = vector.load %arg13[%c0_81, %c0_82, %c0_83] : memref<10x18x64xbf16, #tpu.memory_space<vmem>>, vector<10x16x64xbf16>
    %c0_84 = arith.constant 0 : index
    %c1_85 = arith.constant 1 : index
    %c0_86 = arith.constant 0 : index
    %135 = vector.load %arg13[%c0_84, %c1_85, %c0_86] : memref<10x18x64xbf16, #tpu.memory_space<vmem>>, vector<10x16x64xbf16>
    %c0_87 = arith.constant 0 : index
    %c2_88 = arith.constant 2 : index
    %c0_89 = arith.constant 0 : index
    %136 = vector.load %arg13[%c0_87, %c2_88, %c0_89] : memref<10x18x64xbf16, #tpu.memory_space<vmem>>, vector<10x16x64xbf16>
    %137 = tpu.concatenate %134, %135, %136 in 2 : vector<10x16x64xbf16>, vector<10x16x64xbf16>, vector<10x16x64xbf16> -> vector<10x16x192xbf16>
    %138 = vector.shape_cast %137 : vector<10x16x192xbf16> to vector<160x192xbf16>
    %c0_90 = arith.constant 0 : index
    %c0_91 = arith.constant 0 : index
    %139 = vector.load %arg6[%c0_90, %c0_91] : memref<192x192xbf16, #tpu.memory_space<vmem>>, vector<192x192xbf16>
    %cst_92 = arith.constant dense<0.000000e+00> : vector<160x192xf32>
    %140 = tpu.matmul %138, %139, %cst_92 {dimension_numbers = #tpu.dot_dimension_numbers<[1], [0], [0], [1], [0, 0, 1, 1], [], []>} : vector<160x192xbf16>, vector<192x192xbf16>, vector<160x192xf32> -> vector<160x192xf32>
    %141 = vector.shape_cast %140 : vector<160x192xf32> to vector<10x16x192xf32>
    %142 = vector.extract_strided_slice %141 {offsets = [0, 0, 0], sizes = [8, 16, 64], strides = [1, 1, 1]} : vector<10x16x192xf32> to vector<8x16x64xf32>
    %143 = vector.extract_strided_slice %141 {offsets = [1, 0, 64], sizes = [8, 16, 64], strides = [1, 1, 1]} : vector<10x16x192xf32> to vector<8x16x64xf32>
    %144 = arith.addf %142, %143 : vector<8x16x64xf32>
    %145 = vector.extract_strided_slice %141 {offsets = [2, 0, 128], sizes = [8, 16, 64], strides = [1, 1, 1]} : vector<10x16x192xf32> to vector<8x16x64xf32>
    %146 = arith.addf %144, %145 : vector<8x16x64xf32>
    %c0_93 = arith.constant 0 : index
    %c0_94 = arith.constant 0 : index
    %147 = vector.load %arg7[%c0_93, %c0_94] : memref<1x64xf32, #tpu.memory_space<vmem>>, vector<1x64xf32>
    %148 = vector.shape_cast %147 : vector<1x64xf32> to vector<1x1x64xf32>
    %149 = vector.broadcast %148 : vector<1x1x64xf32> to vector<8x16x64xf32>
    %150 = arith.mulf %146, %149 : vector<8x16x64xf32>
    %c0_95 = arith.constant 0 : index
    %c0_96 = arith.constant 0 : index
    %151 = vector.load %arg8[%c0_95, %c0_96] : memref<1x64xf32, #tpu.memory_space<vmem>>, vector<1x64xf32>
    %152 = vector.shape_cast %151 : vector<1x64xf32> to vector<1x1x64xf32>
    %153 = vector.broadcast %152 : vector<1x1x64xf32> to vector<8x16x64xf32>
    %154 = arith.addf %150, %153 : vector<8x16x64xf32>
    %cst_97 = arith.constant 0.000000e+00 : f32
    %155 = vector.broadcast %cst_97 : f32 to vector<8x16x64xf32>
    %156 = arith.maximumf %154, %155 : vector<8x16x64xf32>
    %157 = arith.truncf %156 : vector<8x16x64xf32> to vector<8x16x64xbf16>
    %158 = arith.extf %157 : vector<8x16x64xbf16> to vector<8x16x64xf32>
    %c0_98 = arith.constant 0 : index
    %c0_99 = arith.constant 0 : index
    %159 = vector.load %arg9[%c0_98, %c0_99] : memref<3x64xbf16, #tpu.memory_space<vmem>>, vector<3x64xbf16>
    %160 = arith.extf %159 : vector<3x64xbf16> to vector<3x64xf32>
    %c0_100 = arith.constant 0 : index
    %c0_101 = arith.constant 0 : index
    %161 = vector.load %arg10[%c0_100, %c0_101] : memref<1x3xf32, #tpu.memory_space<vmem>>, vector<1x3xf32>
    %162 = vector.extract_strided_slice %160 {offsets = [0, 0], sizes = [1, 64], strides = [1, 1]} : vector<3x64xf32> to vector<1x64xf32>
    %163 = vector.shape_cast %162 : vector<1x64xf32> to vector<64xf32>
    %164 = vector.shape_cast %163 : vector<64xf32> to vector<1x1x64xf32>
    %165 = vector.broadcast %164 : vector<1x1x64xf32> to vector<8x16x64xf32>
    %166 = arith.mulf %158, %165 : vector<8x16x64xf32>
    %cst_102 = arith.constant dense<0.000000e+00> : vector<8x16xf32>
    %167 = vector.multi_reduction <add>, %166, %cst_102 [2] : vector<8x16x64xf32> to vector<8x16xf32>
    %168 = vector.extract_strided_slice %161 {offsets = [0, 0], sizes = [1, 1], strides = [1, 1]} : vector<1x3xf32> to vector<1x1xf32>
    %169 = vector.extract %168[0, 0] : f32 from vector<1x1xf32>
    %170 = vector.broadcast %169 : f32 to vector<8x16xf32>
    %171 = arith.addf %167, %170 : vector<8x16xf32>
    %c0_103 = arith.constant 0 : index
    %c0_104 = arith.constant 0 : index
    %c0_105 = arith.constant 0 : index
    %c0_106 = arith.constant 0 : index
    %172 = vector.load %arg11[%c0_103, %c0_104, %c0_105, %c0_106] : memref<1x3x8x16xf32, #tpu.memory_space<vmem>>, vector<1x1x8x16xf32>
    %173 = vector.shape_cast %172 : vector<1x1x8x16xf32> to vector<8x16xf32>
    %174 = vector.shape_cast %171 : vector<8x16xf32> to vector<1x1x8x16xf32>
    tpu.vector_store %arg11[%c0_103, %c0_104, %c0_105, %c0_106], %174 {strides = array<i32>} : memref<1x3x8x16xf32, #tpu.memory_space<vmem>>, vector<1x1x8x16xf32>,
    %175 = vector.extract_strided_slice %160 {offsets = [1, 0], sizes = [1, 64], strides = [1, 1]} : vector<3x64xf32> to vector<1x64xf32>
    %176 = vector.shape_cast %175 : vector<1x64xf32> to vector<64xf32>
    %177 = vector.shape_cast %176 : vector<64xf32> to vector<1x1x64xf32>
    %178 = vector.broadcast %177 : vector<1x1x64xf32> to vector<8x16x64xf32>
    %179 = arith.mulf %158, %178 : vector<8x16x64xf32>
    %cst_107 = arith.constant dense<0.000000e+00> : vector<8x16xf32>
    %180 = vector.multi_reduction <add>, %179, %cst_107 [2] : vector<8x16x64xf32> to vector<8x16xf32>
    %181 = vector.extract_strided_slice %161 {offsets = [0, 1], sizes = [1, 1], strides = [1, 1]} : vector<1x3xf32> to vector<1x1xf32>
    %182 = vector.extract %181[0, 0] : f32 from vector<1x1xf32>
    %183 = vector.broadcast %182 : f32 to vector<8x16xf32>
    %184 = arith.addf %180, %183 : vector<8x16xf32>
    %c0_108 = arith.constant 0 : index
    %c1_109 = arith.constant 1 : index
    %c0_110 = arith.constant 0 : index
    %c0_111 = arith.constant 0 : index
    %185 = vector.load %arg11[%c0_108, %c1_109, %c0_110, %c0_111] : memref<1x3x8x16xf32, #tpu.memory_space<vmem>>, vector<1x1x8x16xf32>
    %186 = vector.shape_cast %185 : vector<1x1x8x16xf32> to vector<8x16xf32>
    %187 = vector.shape_cast %184 : vector<8x16xf32> to vector<1x1x8x16xf32>
    tpu.vector_store %arg11[%c0_108, %c1_109, %c0_110, %c0_111], %187 {strides = array<i32>} : memref<1x3x8x16xf32, #tpu.memory_space<vmem>>, vector<1x1x8x16xf32>,
    %188 = vector.extract_strided_slice %160 {offsets = [2, 0], sizes = [1, 64], strides = [1, 1]} : vector<3x64xf32> to vector<1x64xf32>
    %189 = vector.shape_cast %188 : vector<1x64xf32> to vector<64xf32>
    %190 = vector.shape_cast %189 : vector<64xf32> to vector<1x1x64xf32>
    %191 = vector.broadcast %190 : vector<1x1x64xf32> to vector<8x16x64xf32>
    %192 = arith.mulf %158, %191 : vector<8x16x64xf32>
    %cst_112 = arith.constant dense<0.000000e+00> : vector<8x16xf32>
    %193 = vector.multi_reduction <add>, %192, %cst_112 [2] : vector<8x16x64xf32> to vector<8x16xf32>
    %194 = vector.extract_strided_slice %161 {offsets = [0, 2], sizes = [1, 1], strides = [1, 1]} : vector<1x3xf32> to vector<1x1xf32>
    %195 = vector.extract %194[0, 0] : f32 from vector<1x1xf32>
    %196 = vector.broadcast %195 : f32 to vector<8x16xf32>
    %197 = arith.addf %193, %196 : vector<8x16xf32>
    %c0_113 = arith.constant 0 : index
    %c2_114 = arith.constant 2 : index
    %c0_115 = arith.constant 0 : index
    %c0_116 = arith.constant 0 : index
    %198 = vector.load %arg11[%c0_113, %c2_114, %c0_115, %c0_116] : memref<1x3x8x16xf32, #tpu.memory_space<vmem>>, vector<1x1x8x16xf32>
    %199 = vector.shape_cast %198 : vector<1x1x8x16xf32> to vector<8x16xf32>
    %200 = vector.shape_cast %197 : vector<8x16xf32> to vector<1x1x8x16xf32>
    tpu.vector_store %arg11[%c0_113, %c2_114, %c0_115, %c0_116], %200 {strides = array<i32>} : memref<1x3x8x16xf32, #tpu.memory_space<vmem>>, vector<1x1x8x16xf32>,
    return
  }
  func.func @transform_0(%arg0: i32) -> (i32, i32, i32, i32) {
    %c0_i32 = arith.constant 0 : i32
    %c0_i32_0 = arith.constant 0 : i32
    %c0_i32_1 = arith.constant 0 : i32
    %c0_i32_2 = arith.constant 0 : i32
    return %arg0, %c0_i32, %c0_i32_0, %c0_i32_1 : i32, i32, i32, i32
  }
  func.func @transform_1(%arg0: i32) -> (i32, i32) {
    %c0_i32 = arith.constant 0 : i32
    %c0_i32_0 = arith.constant 0 : i32
    %c0_i32_1 = arith.constant 0 : i32
    return %c0_i32, %c0_i32_0 : i32, i32
  }
  func.func @transform_2(%arg0: i32) -> (i32, i32) {
    %c0_i32 = arith.constant 0 : i32
    %c0_i32_0 = arith.constant 0 : i32
    %c0_i32_1 = arith.constant 0 : i32
    return %c0_i32, %c0_i32_0 : i32, i32
  }
  func.func @transform_3(%arg0: i32) -> (i32, i32) {
    %c0_i32 = arith.constant 0 : i32
    %c0_i32_0 = arith.constant 0 : i32
    %c0_i32_1 = arith.constant 0 : i32
    return %c0_i32, %c0_i32_0 : i32, i32
  }
  func.func @transform_4(%arg0: i32) -> (i32, i32) {
    %c0_i32 = arith.constant 0 : i32
    %c0_i32_0 = arith.constant 0 : i32
    %c0_i32_1 = arith.constant 0 : i32
    return %c0_i32, %c0_i32_0 : i32, i32
  }
  func.func @transform_5(%arg0: i32) -> (i32, i32) {
    %c0_i32 = arith.constant 0 : i32
    %c0_i32_0 = arith.constant 0 : i32
    %c0_i32_1 = arith.constant 0 : i32
    return %c0_i32, %c0_i32_0 : i32, i32
  }
  func.func @transform_6(%arg0: i32) -> (i32, i32) {
    %c0_i32 = arith.constant 0 : i32
    %c0_i32_0 = arith.constant 0 : i32
    %c0_i32_1 = arith.constant 0 : i32
    return %c0_i32, %c0_i32_0 : i32, i32
  }
  func.func @transform_7(%arg0: i32) -> (i32, i32) {
    %c0_i32 = arith.constant 0 : i32
    %c0_i32_0 = arith.constant 0 : i32
    %c0_i32_1 = arith.constant 0 : i32
    return %c0_i32, %c0_i32_0 : i32, i32
  }
  func.func @transform_8(%arg0: i32) -> (i32, i32) {
    %c0_i32 = arith.constant 0 : i32
    %c0_i32_0 = arith.constant 0 : i32
    %c0_i32_1 = arith.constant 0 : i32
    return %c0_i32, %c0_i32_0 : i32, i32
  }
  func.func @transform_9(%arg0: i32) -> (i32, i32) {
    %c0_i32 = arith.constant 0 : i32
    %c0_i32_0 = arith.constant 0 : i32
    %c0_i32_1 = arith.constant 0 : i32
    return %c0_i32, %c0_i32_0 : i32, i32
  }
  func.func @transform_10(%arg0: i32) -> (i32, i32, i32, i32) {
    %c0_i32 = arith.constant 0 : i32
    %c0_i32_0 = arith.constant 0 : i32
    %c0_i32_1 = arith.constant 0 : i32
    %c0_i32_2 = arith.constant 0 : i32
    return %arg0, %c0_i32, %c0_i32_0, %c0_i32_1 : i32, i32, i32, i32
  }
}

</mosaic_0001>

<llo_original>
// kernel: _lambda_.1
$region0: #{_lambda_.1}
  #allocation0 [shape = 'u32[]', space=smem, size = 0x4, offset = 0x4, fixed_abs, tag = 'smem constant byte address 0x4 - core index']
  #allocation1 [shape = 'u32[144,128]{1,0:T(1,128)}', space=vmem, size = 0x12000, scoped, tag = 'internal scratch']
  #allocation2 [shape = 'bf16[12,18,64]{2,1,0:T(8,128)(2,1)}', space=vmem, size = 0x12000, scoped, tag = 'scratch operand']
  #allocation3 [shape = 'bf16[10,18,64]{2,1,0:T(8,128)(2,1)}', space=vmem, size = 0xf000, scoped, tag = 'scratch operand']
  %s0 = inlined_call_operand.vmem [shape: bf16[8,18,22,3], index: 0, kind: input, shape index: {}]
  %s1 = inlined_call_operand.vmem [shape: bf16[147,64], index: 1, kind: input, shape index: {}]
  %s2 = inlined_call_operand.vmem [shape: bf16[192,192], index: 2, kind: input, shape index: {}]
  %s3 = inlined_call_operand.vmem [shape: f32[1,64], index: 3, kind: input, shape index: {}]
  %s4 = inlined_call_operand.vmem [shape: f32[1,64], index: 4, kind: input, shape index: {}]
  %s5 = inlined_call_operand.vmem [shape: bf16[192,192], index: 5, kind: input, shape index: {}]
  %s6 = inlined_call_operand.vmem [shape: f32[1,64], index: 6, kind: input, shape index: {}]
  %s7 = inlined_call_operand.vmem [shape: f32[1,64], index: 7, kind: input, shape index: {}]
  %s8 = inlined_call_operand.vmem [shape: bf16[3,64], index: 8, kind: input, shape index: {}]
  %s9 = inlined_call_operand.vmem [shape: f32[1,3], index: 9, kind: input, shape index: {}]
  %s10 = inlined_call_operand.vmem [shape: f32[4,3,8,16], index: 10, kind: output, shape index: {}]
  %s11 = sld [smem:[#allocation0]]
  $region97: #{_lambda_.1} parent=0
    _
  %s13 = ssub.s32 1, %s11
  %s14 = scalar_select 0, %s13, %s11
  loop: start=0, step=1, limit=6
  $region2: #{_lambda_.1} parent=0 // loop_pre_header
    _
  $region3: #{_lambda_.1} parent=0 // loop_header
    %s16 = sphi 0, %s20
    %p17 = scmp.ge.s32.totalorder %s16, 6
    %s26 = sphi 0, %s28
    %s29 = sphi 0, %s26
    %s30 = sphi 0, %s29
    %s46 = sphi 0, %s30
    %s50 = sphi 0, %s50
    %s52 = sphi 0, %s50
    %s53 = sphi 0, %s52
    %s67 = sphi 0, %s53
    %s71 = sphi 0, %s71
    %s73 = sphi 0, %s71
    %s74 = sphi 0, %s73
    %s88 = sphi 0, %s74
    %s92 = sphi 0, %s92
    %s94 = sphi 0, %s92
    %s95 = sphi 0, %s94
    %s109 = sphi 0, %s95
    %s113 = sphi 0, %s113
    %s115 = sphi 0, %s113
    %s116 = sphi 0, %s115
    %s130 = sphi 0, %s116
    %s134 = sphi 0, %s134
    %s136 = sphi 0, %s134
    %s137 = sphi 0, %s136
    %s151 = sphi 0, %s137
    %s155 = sphi 0, %s155
    %s157 = sphi 0, %s155
    %s158 = sphi 0, %s157
    %s172 = sphi 0, %s158
    %s176 = sphi 0, %s176
    %s178 = sphi 0, %s176
    %s179 = sphi 0, %s178
    %s193 = sphi 0, %s179
    %s197 = sphi 0, %s197
    %s199 = sphi 0, %s197
    %s200 = sphi 0, %s199
    %s214 = sphi 0, %s200
    %s218 = sphi 0, %s218
    %s220 = sphi 0, %s218
    %s221 = sphi 0, %s220
    %s235 = sphi 0, %s221
    %s241 = sphi 0, %s243
    %s244 = sphi 0, %s241
    %s245 = sphi 0, %s244
    %s261 = sphi 0, %s245
  $region4: #{_lambda_.1} parent=0 // loop_header_branch
    %19 = sbr.rel (%p17) target = $region8
  $region5: #{_lambda_.1} parent=0 // loop_body
    %s21 = ssub.s32 %s16, 1
    %s22 = ssub.s32 %s16, 2
    %s23 = sadd.s32 %s16, 1
    %s24 = ssub.s32 %s16, %s23
    %p25 = scmp.eq.s32.totalorder %s24, 0
    %s27 = sadd.s32 %s26, 1
    %s28 = scalar_select %p25, %s26, %s27
    %p31 = pneg %p25
    %p32 = scmp.eq.s32.totalorder %s16, 3
    %p33 = por %p31, %p32
    %p34 = scmp.ne.s32.totalorder %s26, %s29
    %p35 = scmp.eq.s32.totalorder %s16, 0
    %p36 = por %p34, %p35
    %p37 = scmp.ne.s32.totalorder %s26, %s29
    %p38 = scmp.eq.s32.totalorder %s21, 3
    %p39 = por %p37, %p38
    %p40 = scmp.ne.s32.totalorder %s29, %s30
    %p41 = scmp.eq.s32.totalorder %s21, 0
    %p42 = por %p40, %p41
    %p43 = scmp.ne.s32.totalorder %s29, %s30
    %p44 = scmp.eq.s32.totalorder %s22, 3
    %p45 = por %p43, %p44
    %p47 = scmp.ne.s32.totalorder %s30, %s46
    %p48 = scmp.eq.s32.totalorder %s22, 0
    %p49 = por %p47, %p48
    %s51 = sadd.s32 %s50, 1
    %p54 = scmp.eq.s32.totalorder %s16, 3
    %p55 = scmp.ne.s32.totalorder %s50, %s52
    %p56 = scmp.eq.s32.totalorder %s16, 0
    %p57 = por %p55, %p56
    %p58 = scmp.ne.s32.totalorder %s50, %s52
    %p59 = scmp.eq.s32.totalorder %s21, 3
    %p60 = por %p58, %p59
    %p61 = scmp.ne.s32.totalorder %s52, %s53
    %p62 = scmp.eq.s32.totalorder %s21, 0
    %p63 = por %p61, %p62
    %p64 = scmp.ne.s32.totalorder %s52, %s53
    %p65 = scmp.eq.s32.totalorder %s22, 3
    %p66 = por %p64, %p65
    %p68 = scmp.ne.s32.totalorder %s53, %s67
    %p69 = scmp.eq.s32.totalorder %s22, 0
    %p70 = por %p68, %p69
    %s72 = sadd.s32 %s71, 1
    %p75 = scmp.eq.s32.totalorder %s16, 3
    %p76 = scmp.ne.s32.totalorder %s71, %s73
    %p77 = scmp.eq.s32.totalorder %s16, 0
    %p78 = por %p76, %p77
    %p79 = scmp.ne.s32.totalorder %s71, %s73
    %p80 = scmp.eq.s32.totalorder %s21, 3
    %p81 = por %p79, %p80
    %p82 = scmp.ne.s32.totalorder %s73, %s74
    %p83 = scmp.eq.s32.totalorder %s21, 0
    %p84 = por %p82, %p83
    %p85 = scmp.ne.s32.totalorder %s73, %s74
    %p86 = scmp.eq.s32.totalorder %s22, 3
    %p87 = por %p85, %p86
    %p89 = scmp.ne.s32.totalorder %s74, %s88
    %p90 = scmp.eq.s32.totalorder %s22, 0
    %p91 = por %p89, %p90
    %s93 = sadd.s32 %s92, 1
    %p96 = scmp.eq.s32.totalorder %s16, 3
    %p97 = scmp.ne.s32.totalorder %s92, %s94
    %p98 = scmp.eq.s32.totalorder %s16, 0
    %p99 = por %p97, %p98
    %p100 = scmp.ne.s32.totalorder %s92, %s94
    %p101 = scmp.eq.s32.totalorder %s21, 3
    %p102 = por %p100, %p101
    %p103 = scmp.ne.s32.totalorder %s94, %s95
    %p104 = scmp.eq.s32.totalorder %s21, 0
    %p105 = por %p103, %p104
    %p106 = scmp.ne.s32.totalorder %s94, %s95
    %p107 = scmp.eq.s32.totalorder %s22, 3
    %p108 = por %p106, %p107
    %p110 = scmp.ne.s32.totalorder %s95, %s109
    %p111 = scmp.eq.s32.totalorder %s22, 0
    %p112 = por %p110, %p111
    %s114 = sadd.s32 %s113, 1
    %p117 = scmp.eq.s32.totalorder %s16, 3
    %p118 = scmp.ne.s32.totalorder %s113, %s115
    %p119 = scmp.eq.s32.totalorder %s16, 0
    %p120 = por %p118, %p119
    %p121 = scmp.ne.s32.totalorder %s113, %s115
    %p122 = scmp.eq.s32.totalorder %s21, 3
    %p123 = por %p121, %p122
    %p124 = scmp.ne.s32.totalorder %s115, %s116
    %p125 = scmp.eq.s32.totalorder %s21, 0
    %p126 = por %p124, %p125
    %p127 = scmp.ne.s32.totalorder %s115, %s116
    %p128 = scmp.eq.s32.totalorder %s22, 3
    %p129 = por %p127, %p128
    %p131 = scmp.ne.s32.totalorder %s116, %s130
    %p132 = scmp.eq.s32.totalorder %s22, 0
    %p133 = por %p131, %p132
    %s135 = sadd.s32 %s134, 1
    %p138 = scmp.eq.s32.totalorder %s16, 3
    %p139 = scmp.ne.s32.totalorder %s134, %s136
    %p140 = scmp.eq.s32.totalorder %s16, 0
    %p141 = por %p139, %p140
    %p142 = scmp.ne.s32.totalorder %s134, %s136
    %p143 = scmp.eq.s32.totalorder %s21, 3
    %p144 = por %p142, %p143
    %p145 = scmp.ne.s32.totalorder %s136, %s137
    %p146 = scmp.eq.s32.totalorder %s21, 0
    %p147 = por %p145, %p146
    %p148 = scmp.ne.s32.totalorder %s136, %s137
    %p149 = scmp.eq.s32.totalorder %s22, 3
    %p150 = por %p148, %p149
    %p152 = scmp.ne.s32.totalorder %s137, %s151
    %p153 = scmp.eq.s32.totalorder %s22, 0
    %p154 = por %p152, %p153
    %s156 = sadd.s32 %s155, 1
    %p159 = scmp.eq.s32.totalorder %s16, 3
    %p160 = scmp.ne.s32.totalorder %s155, %s157
    %p161 = scmp.eq.s32.totalorder %s16, 0
    %p162 = por %p160, %p161
    %p163 = scmp.ne.s32.totalorder %s155, %s157
    %p164 = scmp.eq.s32.totalorder %s21, 3
    %p165 = por %p163, %p164
    %p166 = scmp.ne.s32.totalorder %s157, %s158
    %p167 = scmp.eq.s32.totalorder %s21, 0
    %p168 = por %p166, %p167
    %p169 = scmp.ne.s32.totalorder %s157, %s158
    %p170 = scmp.eq.s32.totalorder %s22, 3
    %p171 = por %p169, %p170
    %p173 = scmp.ne.s32.totalorder %s158, %s172
    %p174 = scmp.eq.s32.totalorder %s22, 0
    %p175 = por %p173, %p174
    %s177 = sadd.s32 %s176, 1
    %p180 = scmp.eq.s32.totalorder %s16, 3
    %p181 = scmp.ne.s32.totalorder %s176, %s178
    %p182 = scmp.eq.s32.totalorder %s16, 0
    %p183 = por %p181, %p182
    %p184 = scmp.ne.s32.totalorder %s176, %s178
    %p185 = scmp.eq.s32.totalorder %s21, 3
    %p186 = por %p184, %p185
    %p187 = scmp.ne.s32.totalorder %s178, %s179
    %p188 = scmp.eq.s32.totalorder %s21, 0
    %p189 = por %p187, %p188
    %p190 = scmp.ne.s32.totalorder %s178, %s179
    %p191 = scmp.eq.s32.totalorder %s22, 3
    %p192 = por %p190, %p191
    %p194 = scmp.ne.s32.totalorder %s179, %s193
    %p195 = scmp.eq.s32.totalorder %s22, 0
    %p196 = por %p194, %p195
    %s198 = sadd.s32 %s197, 1
    %p201 = scmp.eq.s32.totalorder %s16, 3
    %p202 = scmp.ne.s32.totalorder %s197, %s199
    %p203 = scmp.eq.s32.totalorder %s16, 0
    %p204 = por %p202, %p203
    %p205 = scmp.ne.s32.totalorder %s197, %s199
    %p206 = scmp.eq.s32.totalorder %s21, 3
    %p207 = por %p205, %p206
    %p208 = scmp.ne.s32.totalorder %s199, %s200
    %p209 = scmp.eq.s32.totalorder %s21, 0
    %p210 = por %p208, %p209
    %p211 = scmp.ne.s32.totalorder %s199, %s200
    %p212 = scmp.eq.s32.totalorder %s22, 3
    %p213 = por %p211, %p212
    %p215 = scmp.ne.s32.totalorder %s200, %s214
    %p216 = scmp.eq.s32.totalorder %s22, 0
    %p217 = por %p215, %p216
    %s219 = sadd.s32 %s218, 1
    %p222 = scmp.eq.s32.totalorder %s16, 3
    %p223 = scmp.ne.s32.totalorder %s218, %s220
    %p224 = scmp.eq.s32.totalorder %s16, 0
    %p225 = por %p223, %p224
    %p226 = scmp.ne.s32.totalorder %s218, %s220
    %p227 = scmp.eq.s32.totalorder %s21, 3
    %p228 = por %p226, %p227
    %p229 = scmp.ne.s32.totalorder %s220, %s221
    %p230 = scmp.eq.s32.totalorder %s21, 0
    %p231 = por %p229, %p230
    %p232 = scmp.ne.s32.totalorder %s220, %s221
    %p233 = scmp.eq.s32.totalorder %s22, 3
    %p234 = por %p232, %p233
    %p236 = scmp.ne.s32.totalorder %s221, %s235
    %p237 = scmp.eq.s32.totalorder %s22, 0
    %p238 = por %p236, %p237
    %s239 = ssub.s32 %s16, %s23
    %p240 = scmp.eq.s32.totalorder %s239, 0
    %s242 = sadd.s32 %s241, 1
    %s243 = scalar_select %p240, %s241, %s242
    %p246 = pneg %p240
    %p247 = scmp.eq.s32.totalorder %s16, 3
    %p248 = por %p246, %p247
    %p249 = scmp.ne.s32.totalorder %s241, %s244
    %p250 = scmp.eq.s32.totalorder %s16, 0
    %p251 = por %p249, %p250
    %p252 = scmp.ne.s32.totalorder %s241, %s244
    %p253 = scmp.eq.s32.totalorder %s21, 3
    %p254 = por %p252, %p253
    %p255 = scmp.ne.s32.totalorder %s244, %s245
    %p256 = scmp.eq.s32.totalorder %s21, 0
    %p257 = por %p255, %p256
    %p258 = scmp.ne.s32.totalorder %s244, %s245
    %p259 = scmp.eq.s32.totalorder %s22, 3
    %p260 = por %p258, %p259
    %p262 = scmp.ne.s32.totalorder %s245, %s261
    %p263 = scmp.eq.s32.totalorder %s22, 0
    %p264 = por %p262, %p263
    %p265 = scmp.le.s32.totalorder 1, %s16
    %p266 = scmp.lt.s32.totalorder %s16, 5
    %p267 = pnand %p265, %p266
    %p268 = pneg %p267
    // Predicated region
    $region9: #{_lambda_.1} parent=5 // pred_check
      _
    $region10: #{_lambda_.1} parent=5 // pred_check_branch
      %270 = sbr.rel (%p267) target = $region12
    $region11: #{_lambda_.1} parent=5 // pred_region
      %s271 = ssub.s32 %s16, 1
      // Predicated region
      $region13: #{_lambda_.1} parent=11 // pred_check
        %p272 = pneg %p63
      $region14: #{_lambda_.1} parent=11 // pred_check_branch
        %274 = sbr.rel (%p272) target = $region16
      $region15: #{_lambda_.1} parent=11 // pred_region
        _
      $region16: #{_lambda_.1} parent=11 // pred_fallthru
        _
      // Predicated region
      $region17: #{_lambda_.1} parent=11 // pred_check
        %p275 = pneg %p84
      $region18: #{_lambda_.1} parent=11 // pred_check_branch
        %277 = sbr.rel (%p275) target = $region20
      $region19: #{_lambda_.1} parent=11 // pred_region
        _
      $region20: #{_lambda_.1} parent=11 // pred_fallthru
        _
      // Predicated region
      $region21: #{_lambda_.1} parent=11 // pred_check
        %p278 = pneg %p105
      $region22: #{_lambda_.1} parent=11 // pred_check_branch
        %280 = sbr.rel (%p278) target = $region24
      $region23: #{_lambda_.1} parent=11 // pred_region
        _
      $region24: #{_lambda_.1} parent=11 // pred_fallthru
        _
      // Predicated region
      $region25: #{_lambda_.1} parent=11 // pred_check
        %p281 = pneg %p126
      $region26: #{_lambda_.1} parent=11 // pred_check_branch
        %283 = sbr.rel (%p281) target = $region28
      $region27: #{_lambda_.1} parent=11 // pred_region
        _
      $region28: #{_lambda_.1} parent=11 // pred_fallthru
        _
      // Predicated region
      $region29: #{_lambda_.1} parent=11 // pred_check
        %p284 = pneg %p147
      $region30: #{_lambda_.1} parent=11 // pred_check_branch
        %286 = sbr.rel (%p284) target = $region32
      $region31: #{_lambda_.1} parent=11 // pred_region
        _
      $region32: #{_lambda_.1} parent=11 // pred_fallthru
        _
      // Predicated region
      $region33: #{_lambda_.1} parent=11 // pred_check
        %p287 = pneg %p168
      $region34: #{_lambda_.1} parent=11 // pred_check_branch
        %289 = sbr.rel (%p287) target = $region36
      $region35: #{_lambda_.1} parent=11 // pred_region
        _
      $region36: #{_lambda_.1} parent=11 // pred_fallthru
        _
      // Predicated region
      $region37: #{_lambda_.1} parent=11 // pred_check
        %p290 = pneg %p189
      $region38: #{_lambda_.1} parent=11 // pred_check_branch
        %292 = sbr.rel (%p290) target = $region40
      $region39: #{_lambda_.1} parent=11 // pred_region
        _
      $region40: #{_lambda_.1} parent=11 // pred_fallthru
        _
      // Predicated region
      $region41: #{_lambda_.1} parent=11 // pred_check
        %p293 = pneg %p210
      $region42: #{_lambda_.1} parent=11 // pred_check_branch
        %295 = sbr.rel (%p293) target = $region44
      $region43: #{_lambda_.1} parent=11 // pred_region
        _
      $region44: #{_lambda_.1} parent=11 // pred_fallthru
        _
      // Predicated region
      $region45: #{_lambda_.1} parent=11 // pred_check
        %p296 = pneg %p231
      $region46: #{_lambda_.1} parent=11 // pred_check_branch
        %298 = sbr.rel (%p296) target = $region48
      $region47: #{_lambda_.1} parent=11 // pred_region
        _
      $region48: #{_lambda_.1} parent=11 // pred_fallthru
        _
    $region12: #{_lambda_.1} parent=5 // pred_fallthru
      _
    %p299 = scmp.lt.s32.totalorder %s16, 4
    // Predicated region
    $region49: #{_lambda_.1} parent=5 // pred_check
      %p300 = pneg %p299
    $region50: #{_lambda_.1} parent=5 // pred_check_branch
      %302 = sbr.rel (%p300) target = $region52
    $region51: #{_lambda_.1} parent=5 // pred_region
      // Predicated region
      $region53: #{_lambda_.1} parent=51 // pred_check
        %p303 = pneg %p36
      $region54: #{_lambda_.1} parent=51 // pred_check_branch
        %305 = sbr.rel (%p303) target = $region56
      $region55: #{_lambda_.1} parent=51 // pred_region
        %s306 = smul.u32 2, %s16
        %p307 = scmp.lt.s32.totalorder %s306, 7
        %s308 = scalar_select %p307, %s306, 7
        %s309 = smul.addr %s308, 54
        %s310 = smul.addr %s309, 4
        %s311 = scalar_lea.vmem %s0, %s310
        %s312 = smul.u32 2, %s16
      $region56: #{_lambda_.1} parent=51 // pred_fallthru
        _
    $region52: #{_lambda_.1} parent=5 // pred_fallthru
      _
    %p313 = scmp.le.s32.totalorder 1, %s16
    %p314 = scmp.lt.s32.totalorder %s16, 5
    %p315 = pnand %p313, %p314
    %p316 = pneg %p315
    // Predicated region
    $region57: #{_lambda_.1} parent=5 // pred_check
      _
    $region58: #{_lambda_.1} parent=5 // pred_check_branch
      %318 = sbr.rel (%p315) target = $region60
    $region59: #{_lambda_.1} parent=5 // pred_region
      %s319 = ssub.s32 %s16, 1
      %s320 = smul.u32 2, %s21
      %p321 = scmp.lt.s32.totalorder %s320, 7
      %s322 = scalar_select %p321, %s320, 7
      %s323 = smul.addr %s322, 54
      %s324 = smul.addr %s323, 4
      %s325 = scalar_lea.vmem %s0, %s324
      %p326 = pneg %p42
      %p327 = pneg %p39
      %p328 = pneg %p63
      %p329 = pneg %p60
      %p330 = pneg %p84
      %p331 = pneg %p81
      %p332 = pneg %p105
      %p333 = pneg %p102
      %p334 = pneg %p126
      %p335 = pneg %p123
      %p336 = pneg %p147
      %p337 = pneg %p144
      %p338 = pneg %p168
      %p339 = pneg %p165
      %p340 = pneg %p189
      %p341 = pneg %p186
      %p342 = pneg %p210
      %p343 = pneg %p207
      %p344 = pneg %p231
      %p345 = pneg %p228
      %p346 = pneg %p257
      %p347 = pneg %p254
      %p348 = scmp.lt.s32.totalorder %s21, 3
      %s349 = scalar_select %p348, %s21, 3
      %s350 = smul.addr %s349, 3
      %s351 = smul.addr %s350, 8
      %s352 = scalar_lea.vmem %s10, %s351
      %s353 = smul.u32 2, %s21
      %p354 = scmp.lt.s32.totalorder %s353, 7
      %s355 = scalar_select %p354, %s353, 7
      %s356 = smul.addr %s355, 54
      %s357 = smul.addr %s356, 4
      %s358 = scalar_lea.vmem %s0, %s357
      %s359 = smul.u32 2, %s21
      %p360 = scmp.lt.s32.totalorder %s21, 3
      %s361 = scalar_select %p360, %s21, 3
      %s362 = smul.addr %s361, 3
      %s363 = smul.addr %s362, 8
      %s364 = scalar_lea.vmem %s10, %s363
      %p366 = scmp.lt.s32.totalorder %s21, 0
      %s367 = ssub.s32 0, %s21
      %s368 = scalar_select %p366, %s367, %s21
      %s369 = sand.u32 %s368, 1
      %s370 = ssub.s32 0, %s369
      %s371 = scalar_select %p366, %s370, %s369
      %p372 = scmp.ne.s32.totalorder %s371, 0
      %p373 = scmp.lt.s32.totalorder %s371, 0
      %p374 = pnand %p373, %p372
      %p375 = pneg %p374
      %s376 = sadd.s32 %s371, 2
      %s377 = scalar_select %p375, %s376, %s371
      %p378 = scmp.eq.s32.totalorder %s377, 0
      %p379 = scmp.eq.s32.totalorder %s377, 1
      %v380 = vld [vmem:[%s358] sm:$0xf]
      %v381 = vld [vmem:[%s358 + $0x4] sm:$0xf]
      %v382 = vld [vmem:[%s358 + $0x8] sm:$0x7]
      %v383 = vld [vmem:[%s358 + $0xc] sm:$0xf]
      %v384 = vld [vmem:[%s358 + $0x10] sm:$0xf]
      %v385 = vld [vmem:[%s358 + $0x14] sm:$0x7]
      %v386 = vld [vmem:[%s358 + $0x18] sm:$0xf]
      %v387 = vld [vmem:[%s358 + $0x1c] sm:$0xf]
      %v388 = vld [vmem:[%s358 + $0x20] sm:$0x7]
      %v389 = vld [vmem:[%s358 + $0x24] sm:$0xf]
      %v390 = vld [vmem:[%s358 + $0x28] sm:$0xf]
      %v391 = vld [vmem:[%s358 + $0x2c] sm:$0x7]
      %v392 = vld [vmem:[%s358 + $0x30] sm:$0xf]
      %v393 = vld [vmem:[%s358 + $0x34] sm:$0xf]
      %v394 = vld [vmem:[%s358 + $0x38] sm:$0x7]
      %v395 = vld [vmem:[%s358 + $0x3c] sm:$0xf]
      %v396 = vld [vmem:[%s358 + $0x40] sm:$0xf]
      %v397 = vld [vmem:[%s358 + $0x44] sm:$0x7]
      %v398 = vld [vmem:[%s358 + $0x48] sm:$0xf]
      %v399 = vld [vmem:[%s358 + $0x4c] sm:$0xf]
      %v400 = vld [vmem:[%s358 + $0x50] sm:$0x7]
      %v401 = vld [vmem:[%s358 + $0x54] sm:$0xf]
      %v402 = vld [vmem:[%s358 + $0x58] sm:$0xf]
      %v403 = vld [vmem:[%s358 + $0x5c] sm:$0x7]
      %v404 = vld [vmem:[%s358 + $0x60] sm:$0xf]
      %v405 = vld [vmem:[%s358 + $0x64] sm:$0xf]
      %v406 = vld [vmem:[%s358 + $0x68] sm:$0x7]
      %v407 = vld [vmem:[%s358 + $0x6c] sm:$0xf]
      %v408 = vld [vmem:[%s358 + $0x70] sm:$0xf]
      %v409 = vld [vmem:[%s358 + $0x74] sm:$0x7]
      %v410 = vld [vmem:[%s358 + $0x78] sm:$0xf]
      %v411 = vld [vmem:[%s358 + $0x7c] sm:$0xf]
      %v412 = vld [vmem:[%s358 + $0x80] sm:$0x7]
      %v413 = vld [vmem:[%s358 + $0x84] sm:$0xf]
      %v414 = vld [vmem:[%s358 + $0x88] sm:$0xf]
      %v415 = vld [vmem:[%s358 + $0x8c] sm:$0x7]
      %v416 = vld [vmem:[%s358 + $0x90] sm:$0xf]
      %v417 = vld [vmem:[%s358 + $0x94] sm:$0xf]
      %v418 = vld [vmem:[%s358 + $0x98] sm:$0x7]
      %v419 = vld [vmem:[%s358 + $0x9c] sm:$0xf]
      %v420 = vld [vmem:[%s358 + $0xa0] sm:$0xf]
      %v421 = vld [vmem:[%s358 + $0xa4] sm:$0x7]
      %v422 = vld [vmem:[%s358 + $0xa8] sm:$0xf]
      %v423 = vld [vmem:[%s358 + $0xac] sm:$0xf]
      %v424 = vld [vmem:[%s358 + $0xb0] sm:$0x7]
      %v425 = vld [vmem:[%s358 + $0xb4] sm:$0xf]
      %v426 = vld [vmem:[%s358 + $0xb8] sm:$0xf]
      %v427 = vld [vmem:[%s358 + $0xbc] sm:$0x7]
      %v428 = vld [vmem:[%s358 + $0xc0] sm:$0xf]
      %v429 = vld [vmem:[%s358 + $0xc4] sm:$0xf]
      %v430 = vld [vmem:[%s358 + $0xc8] sm:$0x7]
      %v431 = vld [vmem:[%s358 + $0xcc] sm:$0xf]
      %v432 = vld [vmem:[%s358 + $0xd0] sm:$0xf]
      %v433 = vld [vmem:[%s358 + $0xd4] sm:$0x7]
      %v470 = vunpack.c.l.b16 %v380
      %v471 = vunpack.c.l.b16 %v381
      %v472 = vunpack.c.l.b16 %v383
      %v473 = vunpack.c.l.b16 %v384
      %v474 = vunpack.c.l.b16 %v386
      %v475 = vunpack.c.l.b16 %v387
      %v476 = vunpack.c.l.b16 %v389
      %v477 = vunpack.c.l.b16 %v390
      %v478 = vunpack.c.l.b16 %v392
      %v479 = vunpack.c.l.b16 %v393
      %v480 = vunpack.c.l.b16 %v395
      %v481 = vunpack.c.l.b16 %v396
      %v482 = vunpack.c.l.b16 %v398
      %v483 = vunpack.c.l.b16 %v399
      %v484 = vunpack.c.l.b16 %v401
      %v485 = vunpack.c.l.b16 %v402
      %v486 = vunpack.c.l.b16 %v404
      %v487 = vunpack.c.l.b16 %v405
      %v488 = vunpack.c.l.b16 %v407
      %v489 = vunpack.c.l.b16 %v408
      %v490 = vunpack.c.l.b16 %v410
      %v491 = vunpack.c.l.b16 %v411
      %v492 = vunpack.c.l.b16 %v413
      %v493 = vunpack.c.l.b16 %v414
      %v494 = vunpack.c.l.b16 %v416
      %v495 = vunpack.c.l.b16 %v417
      %v496 = vunpack.c.l.b16 %v419
      %v497 = vunpack.c.l.b16 %v420
      %v498 = vunpack.c.l.b16 %v422
      %v499 = vunpack.c.l.b16 %v423
      %v500 = vunpack.c.l.b16 %v425
      %v501 = vunpack.c.l.b16 %v426
      %v502 = vunpack.c.l.b16 %v428
      %v503 = vunpack.c.l.b16 %v429
      %v504 = vunpack.c.l.b16 %v431
      %v505 = vunpack.c.l.b16 %v432
      %v506 = vpack.c.b16 %v471, %v470
      %v507 = vpack.c.b16 %v473, %v472
      %v508 = vpack.c.b16 %v475, %v474
      %v509 = vpack.c.b16 %v477, %v476
      %v510 = vpack.c.b16 %v479, %v478
      %v511 = vpack.c.b16 %v481, %v480
      %v512 = vpack.c.b16 %v483, %v482
      %v513 = vpack.c.b16 %v485, %v484
      %v514 = vpack.c.b16 %v487, %v486
      %v515 = vpack.c.b16 %v489, %v488
      %v516 = vpack.c.b16 %v491, %v490
      %v517 = vpack.c.b16 %v493, %v492
      %v518 = vpack.c.b16 %v495, %v494
      %v519 = vpack.c.b16 %v497, %v496
      %v520 = vpack.c.b16 %v499, %v498
      %v521 = vpack.c.b16 %v501, %v500
      %v522 = vpack.c.b16 %v503, %v502
      %v523 = vpack.c.b16 %v505, %v504
      %v542 = vunpack.c.l.b16 %v382
      %v543 = vunpack.c.l.b16 %v385
      %v544 = vunpack.c.l.b16 %v388
      %v545 = vunpack.c.l.b16 %v391
      %v546 = vunpack.c.l.b16 %v394
      %v547 = vunpack.c.l.b16 %v397
      %v548 = vunpack.c.l.b16 %v400
      %v549 = vunpack.c.l.b16 %v403
      %v550 = vunpack.c.l.b16 %v406
      %v551 = vunpack.c.l.b16 %v409
      %v552 = vunpack.c.l.b16 %v412
      %v553 = vunpack.c.l.b16 %v415
      %v554 = vunpack.c.l.b16 %v418
      %v555 = vunpack.c.l.b16 %v421
      %v556 = vunpack.c.l.b16 %v424
      %v557 = vunpack.c.l.b16 %v427
      %v558 = vunpack.c.l.b16 %v430
      %v559 = vunpack.c.l.b16 %v433
      %v560 = vpack.c.b16 %v542, %v542
      %v561 = vpack.c.b16 %v543, %v543
      %v562 = vpack.c.b16 %v544, %v544
      %v563 = vpack.c.b16 %v545, %v545
      %v564 = vpack.c.b16 %v546, %v546
      %v565 = vpack.c.b16 %v547, %v547
      %v566 = vpack.c.b16 %v548, %v548
      %v567 = vpack.c.b16 %v549, %v549
      %v568 = vpack.c.b16 %v550, %v550
      %v569 = vpack.c.b16 %v551, %v551
      %v570 = vpack.c.b16 %v552, %v552
      %v571 = vpack.c.b16 %v553, %v553
      %v572 = vpack.c.b16 %v554, %v554
      %v573 = vpack.c.b16 %v555, %v555
      %v574 = vpack.c.b16 %v556, %v556
      %v575 = vpack.c.b16 %v557, %v557
      %v576 = vpack.c.b16 %v558, %v558
      %v577 = vpack.c.b16 %v559, %v559
      %vm578 = vsmask.f32 7424
      %v580 = vshrl.u32 %v506, 16
      %v582 = vshll.u32 %v506, 16
      %v584 = vrot.slane %v582, 1
      %v585 = vor.u32 %v580, %v584
      %v587 = vshll.u32 %v560, 16
      %v589 = vrot.slane %v587, 1
      %v590 = vsel %vm578, %v585, %v589
      %v592 = vshrl.u32 %v507, 16
      %v594 = vshll.u32 %v507, 16
      %v596 = vrot.slane %v594, 1
      %v597 = vor.u32 %v592, %v596
      %v599 = vshll.u32 %v561, 16
      %v601 = vrot.slane %v599, 1
      %v602 = vsel %vm578, %v597, %v601
      %v604 = vshrl.u32 %v508, 16
      %v606 = vshll.u32 %v508, 16
      %v608 = vrot.slane %v606, 1
      %v609 = vor.u32 %v604, %v608
      %v611 = vshll.u32 %v562, 16
      %v613 = vrot.slane %v611, 1
      %v614 = vsel %vm578, %v609, %v613
      %v616 = vshrl.u32 %v509, 16
      %v618 = vshll.u32 %v509, 16
      %v620 = vrot.slane %v618, 1
      %v621 = vor.u32 %v616, %v620
      %v623 = vshll.u32 %v563, 16
      %v625 = vrot.slane %v623, 1
      %v626 = vsel %vm578, %v621, %v625
      %v628 = vshrl.u32 %v510, 16
      %v630 = vshll.u32 %v510, 16
      %v632 = vrot.slane %v630, 1
      %v633 = vor.u32 %v628, %v632
      %v635 = vshll.u32 %v564, 16
      %v637 = vrot.slane %v635, 1
      %v638 = vsel %vm578, %v633, %v637
      %v640 = vshrl.u32 %v511, 16
      %v642 = vshll.u32 %v511, 16
      %v644 = vrot.slane %v642, 1
      %v645 = vor.u32 %v640, %v644
      %v647 = vshll.u32 %v565, 16
      %v649 = vrot.slane %v647, 1
      %v650 = vsel %vm578, %v645, %v649
      %v652 = vshrl.u32 %v512, 16
      %v654 = vshll.u32 %v512, 16
      %v656 = vrot.slane %v654, 1
      %v657 = vor.u32 %v652, %v656
      %v659 = vshll.u32 %v566, 16
      %v661 = vrot.slane %v659, 1
      %v662 = vsel %vm578, %v657, %v661
      %v664 = vshrl.u32 %v513, 16
      %v666 = vshll.u32 %v513, 16
      %v668 = vrot.slane %v666, 1
      %v669 = vor.u32 %v664, %v668
      %v671 = vshll.u32 %v567, 16
      %v673 = vrot.slane %v671, 1
      %v674 = vsel %vm578, %v669, %v673
      %v676 = vshrl.u32 %v514, 16
      %v678 = vshll.u32 %v514, 16
      %v680 = vrot.slane %v678, 1
      %v681 = vor.u32 %v676, %v680
      %v683 = vshll.u32 %v568, 16
      %v685 = vrot.slane %v683, 1
      %v686 = vsel %vm578, %v681, %v685
      %v688 = vshrl.u32 %v515, 16
      %v690 = vshll.u32 %v515, 16
      %v692 = vrot.slane %v690, 1
      %v693 = vor.u32 %v688, %v692
      %v695 = vshll.u32 %v569, 16
      %v697 = vrot.slane %v695, 1
      %v698 = vsel %vm578, %v693, %v697
      %v700 = vshrl.u32 %v516, 16
      %v702 = vshll.u32 %v516, 16
      %v704 = vrot.slane %v702, 1
      %v705 = vor.u32 %v700, %v704
      %v707 = vshll.u32 %v570, 16
      %v709 = vrot.slane %v707, 1
      %v710 = vsel %vm578, %v705, %v709
      %v712 = vshrl.u32 %v517, 16
      %v714 = vshll.u32 %v517, 16
      %v716 = vrot.slane %v714, 1
      %v717 = vor.u32 %v712, %v716
      %v719 = vshll.u32 %v571, 16
      %v721 = vrot.slane %v719, 1
      %v722 = vsel %vm578, %v717, %v721
      %v724 = vshrl.u32 %v518, 16
      %v726 = vshll.u32 %v518, 16
      %v728 = vrot.slane %v726, 1
      %v729 = vor.u32 %v724, %v728
      %v731 = vshll.u32 %v572, 16
      %v733 = vrot.slane %v731, 1
      %v734 = vsel %vm578, %v729, %v733
      %v736 = vshrl.u32 %v519, 16
      %v738 = vshll.u32 %v519, 16
      %v740 = vrot.slane %v738, 1
      %v741 = vor.u32 %v736, %v740
      %v743 = vshll.u32 %v573, 16
      %v745 = vrot.slane %v743, 1
      %v746 = vsel %vm578, %v741, %v745
      %v748 = vshrl.u32 %v520, 16
      %v750 = vshll.u32 %v520, 16
      %v752 = vrot.slane %v750, 1
      %v753 = vor.u32 %v748, %v752
      %v755 = vshll.u32 %v574, 16
      %v757 = vrot.slane %v755, 1
      %v758 = vsel %vm578, %v753, %v757
      %v760 = vshrl.u32 %v521, 16
      %v762 = vshll.u32 %v521, 16
      %v764 = vrot.slane %v762, 1
      %v765 = vor.u32 %v760, %v764
      %v767 = vshll.u32 %v575, 16
      %v769 = vrot.slane %v767, 1
      %v770 = vsel %vm578, %v765, %v769
      %v772 = vshrl.u32 %v522, 16
      %v774 = vshll.u32 %v522, 16
      %v776 = vrot.slane %v774, 1
      %v777 = vor.u32 %v772, %v776
      %v779 = vshll.u32 %v576, 16
      %v781 = vrot.slane %v779, 1
      %v782 = vsel %vm578, %v777, %v781
      %v784 = vshrl.u32 %v523, 16
      %v786 = vshll.u32 %v523, 16
      %v788 = vrot.slane %v786, 1
      %v789 = vor.u32 %v784, %v788
      %v791 = vshll.u32 %v577, 16
      %v793 = vrot.slane %v791, 1
      %v794 = vsel %vm578, %v789, %v793
      %795 = vrot.lane.b32.xlu0 %v590, 3
      %v796 = vpop.permute.xlu0 %795
      %797 = vrot.lane.b32.xlu0 %v602, 3
      %v798 = vpop.permute.xlu0 %797
      %799 = vrot.lane.b32.xlu0 %v614, 3
      %v800 = vpop.permute.xlu0 %799
      %801 = vrot.lane.b32.xlu0 %v626, 3
      %v802 = vpop.permute.xlu0 %801
      %803 = vrot.lane.b32.xlu0 %v638, 3
      %v804 = vpop.permute.xlu0 %803
      %805 = vrot.lane.b32.xlu0 %v650, 3
      %v806 = vpop.permute.xlu0 %805
      %807 = vrot.lane.b32.xlu0 %v662, 3
      %v808 = vpop.permute.xlu0 %807
      %809 = vrot.lane.b32.xlu0 %v674, 3
      %v810 = vpop.permute.xlu0 %809
      %811 = vrot.lane.b32.xlu0 %v686, 3
      %v812 = vpop.permute.xlu0 %811
      %813 = vrot.lane.b32.xlu0 %v698, 3
      %v814 = vpop.permute.xlu0 %813
      %815 = vrot.lane.b32.xlu0 %v710, 3
      %v816 = vpop.permute.xlu0 %815
      %817 = vrot.lane.b32.xlu0 %v722, 3
      %v818 = vpop.permute.xlu0 %817
      %819 = vrot.lane.b32.xlu0 %v734, 3
      %v820 = vpop.permute.xlu0 %819
      %821 = vrot.lane.b32.xlu0 %v746, 3
      %v822 = vpop.permute.xlu0 %821
      %823 = vrot.lane.b32.xlu0 %v758, 3
      %v824 = vpop.permute.xlu0 %823
      %825 = vrot.lane.b32.xlu0 %v770, 3
      %v826 = vpop.permute.xlu0 %825
      %827 = vrot.lane.b32.xlu0 %v782, 3
      %v828 = vpop.permute.xlu0 %827
      %829 = vrot.lane.b32.xlu0 %v794, 3
      %v830 = vpop.permute.xlu0 %829
      %vm831 = vcmask 1046528
      %v832 = vrot.slane %v506, 1
      %v833 = vrot.slane %v560, 1
      %v834 = vsel %vm831, %v832, %v833
      %v835 = vrot.slane %v507, 1
      %v836 = vrot.slane %v561, 1
      %v837 = vsel %vm831, %v835, %v836
      %v838 = vrot.slane %v508, 1
      %v839 = vrot.slane %v562, 1
      %v840 = vsel %vm831, %v838, %v839
      %v841 = vrot.slane %v509, 1
      %v842 = vrot.slane %v563, 1
      %v843 = vsel %vm831, %v841, %v842
      %v844 = vrot.slane %v510, 1
      %v845 = vrot.slane %v564, 1
      %v846 = vsel %vm831, %v844, %v845
      %v847 = vrot.slane %v511, 1
      %v848 = vrot.slane %v565, 1
      %v849 = vsel %vm831, %v847, %v848
      %v850 = vrot.slane %v512, 1
      %v851 = vrot.slane %v566, 1
      %v852 = vsel %vm831, %v850, %v851
      %v853 = vrot.slane %v513, 1
      %v854 = vrot.slane %v567, 1
      %v855 = vsel %vm831, %v853, %v854
      %v856 = vrot.slane %v514, 1
      %v857 = vrot.slane %v568, 1
      %v858 = vsel %vm831, %v856, %v857
      %v859 = vrot.slane %v515, 1
      %v860 = vrot.slane %v569, 1
      %v861 = vsel %vm831, %v859, %v860
      %v862 = vrot.slane %v516, 1
      %v863 = vrot.slane %v570, 1
      %v864 = vsel %vm831, %v862, %v863
      %v865 = vrot.slane %v517, 1
      %v866 = vrot.slane %v571, 1
      %v867 = vsel %vm831, %v865, %v866
      %v868 = vrot.slane %v518, 1
      %v869 = vrot.slane %v572, 1
      %v870 = vsel %vm831, %v868, %v869
      %v871 = vrot.slane %v519, 1
      %v872 = vrot.slane %v573, 1
      %v873 = vsel %vm831, %v871, %v872
      %v874 = vrot.slane %v520, 1
      %v875 = vrot.slane %v574, 1
      %v876 = vsel %vm831, %v874, %v875
      %v877 = vrot.slane %v521, 1
      %v878 = vrot.slane %v575, 1
      %v879 = vsel %vm831, %v877, %v878
      %v880 = vrot.slane %v522, 1
      %v881 = vrot.slane %v576, 1
      %v882 = vsel %vm831, %v880, %v881
      %v883 = vrot.slane %v523, 1
      %v884 = vrot.slane %v577, 1
      %v885 = vsel %vm831, %v883, %v884
      %886 = vrot.lane.b32.xlu0 %v834, 6
      %v887 = vpop.permute.xlu0 %886
      %888 = vrot.lane.b32.xlu0 %v837, 6
      %v889 = vpop.permute.xlu0 %888
      %890 = vrot.lane.b32.xlu0 %v840, 6
      %v891 = vpop.permute.xlu0 %890
      %892 = vrot.lane.b32.xlu0 %v843, 6
      %v893 = vpop.permute.xlu0 %892
      %894 = vrot.lane.b32.xlu0 %v846, 6
      %v895 = vpop.permute.xlu0 %894
      %896 = vrot.lane.b32.xlu0 %v849, 6
      %v897 = vpop.permute.xlu0 %896
      %898 = vrot.lane.b32.xlu0 %v852, 6
      %v899 = vpop.permute.xlu0 %898
      %900 = vrot.lane.b32.xlu0 %v855, 6
      %v901 = vpop.permute.xlu0 %900
      %902 = vrot.lane.b32.xlu0 %v858, 6
      %v903 = vpop.permute.xlu0 %902
      %904 = vrot.lane.b32.xlu0 %v861, 6
      %v905 = vpop.permute.xlu0 %904
      %906 = vrot.lane.b32.xlu0 %v864, 6
      %v907 = vpop.permute.xlu0 %906
      %908 = vrot.lane.b32.xlu0 %v867, 6
      %v909 = vpop.permute.xlu0 %908
      %910 = vrot.lane.b32.xlu0 %v870, 6
      %v911 = vpop.permute.xlu0 %910
      %912 = vrot.lane.b32.xlu0 %v873, 6
      %v913 = vpop.permute.xlu0 %912
      %914 = vrot.lane.b32.xlu0 %v876, 6
      %v915 = vpop.permute.xlu0 %914
      %916 = vrot.lane.b32.xlu0 %v879, 6
      %v917 = vpop.permute.xlu0 %916
      %918 = vrot.lane.b32.xlu0 %v882, 6
      %v919 = vpop.permute.xlu0 %918
      %920 = vrot.lane.b32.xlu0 %v885, 6
      %v921 = vpop.permute.xlu0 %920
      %vm922 = vsmask.f32 6400
      %v923 = vrot.slane %v580, 1
      %v924 = vrot.slane %v582, 2
      %v925 = vor.u32 %v923, %v924
      %v926 = vshrl.u32 %v560, 16
      %v928 = vrot.slane %v926, 1
      %v929 = vrot.slane %v587, 2
      %v930 = vor.u32 %v928, %v929
      %v931 = vsel %vm922, %v925, %v930
      %v932 = vrot.slane %v592, 1
      %v933 = vrot.slane %v594, 2
      %v934 = vor.u32 %v932, %v933
      %v935 = vshrl.u32 %v561, 16
      %v937 = vrot.slane %v935, 1
      %v938 = vrot.slane %v599, 2
      %v939 = vor.u32 %v937, %v938
      %v940 = vsel %vm922, %v934, %v939
      %v941 = vrot.slane %v604, 1
      %v942 = vrot.slane %v606, 2
      %v943 = vor.u32 %v941, %v942
      %v944 = vshrl.u32 %v562, 16
      %v946 = vrot.slane %v944, 1
      %v947 = vrot.slane %v611, 2
      %v948 = vor.u32 %v946, %v947
      %v949 = vsel %vm922, %v943, %v948
      %v950 = vrot.slane %v616, 1
      %v951 = vrot.slane %v618, 2
      %v952 = vor.u32 %v950, %v951
      %v953 = vshrl.u32 %v563, 16
      %v955 = vrot.slane %v953, 1
      %v956 = vrot.slane %v623, 2
      %v957 = vor.u32 %v955, %v956
      %v958 = vsel %vm922, %v952, %v957
      %v959 = vrot.slane %v628, 1
      %v960 = vrot.slane %v630, 2
      %v961 = vor.u32 %v959, %v960
      %v962 = vshrl.u32 %v564, 16
      %v964 = vrot.slane %v962, 1
      %v965 = vrot.slane %v635, 2
      %v966 = vor.u32 %v964, %v965
      %v967 = vsel %vm922, %v961, %v966
      %v968 = vrot.slane %v640, 1
      %v969 = vrot.slane %v642, 2
      %v970 = vor.u32 %v968, %v969
      %v971 = vshrl.u32 %v565, 16
      %v973 = vrot.slane %v971, 1
      %v974 = vrot.slane %v647, 2
      %v975 = vor.u32 %v973, %v974
      %v976 = vsel %vm922, %v970, %v975
      %v977 = vrot.slane %v652, 1
      %v978 = vrot.slane %v654, 2
      %v979 = vor.u32 %v977, %v978
      %v980 = vshrl.u32 %v566, 16
      %v982 = vrot.slane %v980, 1
      %v983 = vrot.slane %v659, 2
      %v984 = vor.u32 %v982, %v983
      %v985 = vsel %vm922, %v979, %v984
      %v986 = vrot.slane %v664, 1
      %v987 = vrot.slane %v666, 2
      %v988 = vor.u32 %v986, %v987
      %v989 = vshrl.u32 %v567, 16
      %v991 = vrot.slane %v989, 1
      %v992 = vrot.slane %v671, 2
      %v993 = vor.u32 %v991, %v992
      %v994 = vsel %vm922, %v988, %v993
      %v995 = vrot.slane %v676, 1
      %v996 = vrot.slane %v678, 2
      %v997 = vor.u32 %v995, %v996
      %v998 = vshrl.u32 %v568, 16
      %v1000 = vrot.slane %v998, 1
      %v1001 = vrot.slane %v683, 2
      %v1002 = vor.u32 %v1000, %v1001
      %v1003 = vsel %vm922, %v997, %v1002
      %v1004 = vrot.slane %v688, 1
      %v1005 = vrot.slane %v690, 2
      %v1006 = vor.u32 %v1004, %v1005
      %v1007 = vshrl.u32 %v569, 16
      %v1009 = vrot.slane %v1007, 1
      %v1010 = vrot.slane %v695, 2
      %v1011 = vor.u32 %v1009, %v1010
      %v1012 = vsel %vm922, %v1006, %v1011
      %v1013 = vrot.slane %v700, 1
      %v1014 = vrot.slane %v702, 2
      %v1015 = vor.u32 %v1013, %v1014
      %v1016 = vshrl.u32 %v570, 16
      %v1018 = vrot.slane %v1016, 1
      %v1019 = vrot.slane %v707, 2
      %v1020 = vor.u32 %v1018, %v1019
      %v1021 = vsel %vm922, %v1015, %v1020
      %v1022 = vrot.slane %v712, 1
      %v1023 = vrot.slane %v714, 2
      %v1024 = vor.u32 %v1022, %v1023
      %v1025 = vshrl.u32 %v571, 16
      %v1027 = vrot.slane %v1025, 1
      %v1028 = vrot.slane %v719, 2
      %v1029 = vor.u32 %v1027, %v1028
      %v1030 = vsel %vm922, %v1024, %v1029
      %v1031 = vrot.slane %v724, 1
      %v1032 = vrot.slane %v726, 2
      %v1033 = vor.u32 %v1031, %v1032
      %v1034 = vshrl.u32 %v572, 16
      %v1036 = vrot.slane %v1034, 1
      %v1037 = vrot.slane %v731, 2
      %v1038 = vor.u32 %v1036, %v1037
      %v1039 = vsel %vm922, %v1033, %v1038
      %v1040 = vrot.slane %v736, 1
      %v1041 = vrot.slane %v738, 2
      %v1042 = vor.u32 %v1040, %v1041
      %v1043 = vshrl.u32 %v573, 16
      %v1045 = vrot.slane %v1043, 1
      %v1046 = vrot.slane %v743, 2
      %v1047 = vor.u32 %v1045, %v1046
      %v1048 = vsel %vm922, %v1042, %v1047
      %v1049 = vrot.slane %v748, 1
      %v1050 = vrot.slane %v750, 2
      %v1051 = vor.u32 %v1049, %v1050
      %v1052 = vshrl.u32 %v574, 16
      %v1054 = vrot.slane %v1052, 1
      %v1055 = vrot.slane %v755, 2
      %v1056 = vor.u32 %v1054, %v1055
      %v1057 = vsel %vm922, %v1051, %v1056
      %v1058 = vrot.slane %v760, 1
      %v1059 = vrot.slane %v762, 2
      %v1060 = vor.u32 %v1058, %v1059
      %v1061 = vshrl.u32 %v575, 16
      %v1063 = vrot.slane %v1061, 1
      %v1064 = vrot.slane %v767, 2
      %v1065 = vor.u32 %v1063, %v1064
      %v1066 = vsel %vm922, %v1060, %v1065
      %v1067 = vrot.slane %v772, 1
      %v1068 = vrot.slane %v774, 2
      %v1069 = vor.u32 %v1067, %v1068
      %v1070 = vshrl.u32 %v576, 16
      %v1072 = vrot.slane %v1070, 1
      %v1073 = vrot.slane %v779, 2
      %v1074 = vor.u32 %v1072, %v1073
      %v1075 = vsel %vm922, %v1069, %v1074
      %v1076 = vrot.slane %v784, 1
      %v1077 = vrot.slane %v786, 2
      %v1078 = vor.u32 %v1076, %v1077
      %v1079 = vshrl.u32 %v577, 16
      %v1081 = vrot.slane %v1079, 1
      %v1082 = vrot.slane %v791, 2
      %v1083 = vor.u32 %v1081, %v1082
      %v1084 = vsel %vm922, %v1078, %v1083
      %1085 = vrot.lane.b32.xlu0 %v931, 9
      %v1086 = vpop.permute.xlu0 %1085
      %1087 = vrot.lane.b32.xlu0 %v940, 9
      %v1088 = vpop.permute.xlu0 %1087
      %1089 = vrot.lane.b32.xlu0 %v949, 9
      %v1090 = vpop.permute.xlu0 %1089
      %1091 = vrot.lane.b32.xlu0 %v958, 9
      %v1092 = vpop.permute.xlu0 %1091
      %1093 = vrot.lane.b32.xlu0 %v967, 9
      %v1094 = vpop.permute.xlu0 %1093
      %1095 = vrot.lane.b32.xlu0 %v976, 9
      %v1096 = vpop.permute.xlu0 %1095
      %1097 = vrot.lane.b32.xlu0 %v985, 9
      %v1098 = vpop.permute.xlu0 %1097
      %1099 = vrot.lane.b32.xlu0 %v994, 9
      %v1100 = vpop.permute.xlu0 %1099
      %1101 = vrot.lane.b32.xlu0 %v1003, 9
      %v1102 = vpop.permute.xlu0 %1101
      %1103 = vrot.lane.b32.xlu0 %v1012, 9
      %v1104 = vpop.permute.xlu0 %1103
      %1105 = vrot.lane.b32.xlu0 %v1021, 9
      %v1106 = vpop.permute.xlu0 %1105
      %1107 = vrot.lane.b32.xlu0 %v1030, 9
      %v1108 = vpop.permute.xlu0 %1107
      %1109 = vrot.lane.b32.xlu0 %v1039, 9
      %v1110 = vpop.permute.xlu0 %1109
      %1111 = vrot.lane.b32.xlu0 %v1048, 9
      %v1112 = vpop.permute.xlu0 %1111
      %1113 = vrot.lane.b32.xlu0 %v1057, 9
      %v1114 = vpop.permute.xlu0 %1113
      %1115 = vrot.lane.b32.xlu0 %v1066, 9
      %v1116 = vpop.permute.xlu0 %1115
      %1117 = vrot.lane.b32.xlu0 %v1075, 9
      %v1118 = vpop.permute.xlu0 %1117
      %1119 = vrot.lane.b32.xlu0 %v1084, 9
      %v1120 = vpop.permute.xlu0 %1119
      %vm1121 = vcmask 1045504
      %v1122 = vrot.slane %v506, 2
      %v1123 = vrot.slane %v560, 2
      %v1124 = vsel %vm1121, %v1122, %v1123
      %v1125 = vrot.slane %v507, 2
      %v1126 = vrot.slane %v561, 2
      %v1127 = vsel %vm1121, %v1125, %v1126
      %v1128 = vrot.slane %v508, 2
      %v1129 = vrot.slane %v562, 2
      %v1130 = vsel %vm1121, %v1128, %v1129
      %v1131 = vrot.slane %v509, 2
      %v1132 = vrot.slane %v563, 2
      %v1133 = vsel %vm1121, %v1131, %v1132
      %v1134 = vrot.slane %v510, 2
      %v1135 = vrot.slane %v564, 2
      %v1136 = vsel %vm1121, %v1134, %v1135
      %v1137 = vrot.slane %v511, 2
      %v1138 = vrot.slane %v565, 2
      %v1139 = vsel %vm1121, %v1137, %v1138
      %v1140 = vrot.slane %v512, 2
      %v1141 = vrot.slane %v566, 2
      %v1142 = vsel %vm1121, %v1140, %v1141
      %v1143 = vrot.slane %v513, 2
      %v1144 = vrot.slane %v567, 2
      %v1145 = vsel %vm1121, %v1143, %v1144
      %v1146 = vrot.slane %v514, 2
      %v1147 = vrot.slane %v568, 2
      %v1148 = vsel %vm1121, %v1146, %v1147
      %v1149 = vrot.slane %v515, 2
      %v1150 = vrot.slane %v569, 2
      %v1151 = vsel %vm1121, %v1149, %v1150
      %v1152 = vrot.slane %v516, 2
      %v1153 = vrot.slane %v570, 2
      %v1154 = vsel %vm1121, %v1152, %v1153
      %v1155 = vrot.slane %v517, 2
      %v1156 = vrot.slane %v571, 2
      %v1157 = vsel %vm1121, %v1155, %v1156
      %v1158 = vrot.slane %v518, 2
      %v1159 = vrot.slane %v572, 2
      %v1160 = vsel %vm1121, %v1158, %v1159
      %v1161 = vrot.slane %v519, 2
      %v1162 = vrot.slane %v573, 2
      %v1163 = vsel %vm1121, %v1161, %v1162
      %v1164 = vrot.slane %v520, 2
      %v1165 = vrot.slane %v574, 2
      %v1166 = vsel %vm1121, %v1164, %v1165
      %v1167 = vrot.slane %v521, 2
      %v1168 = vrot.slane %v575, 2
      %v1169 = vsel %vm1121, %v1167, %v1168
      %v1170 = vrot.slane %v522, 2
      %v1171 = vrot.slane %v576, 2
      %v1172 = vsel %vm1121, %v1170, %v1171
      %v1173 = vrot.slane %v523, 2
      %v1174 = vrot.slane %v577, 2
      %v1175 = vsel %vm1121, %v1173, %v1174
      %1176 = vrot.lane.b32.xlu0 %v1124, 12
      %v1177 = vpop.permute.xlu0 %1176
      %1178 = vrot.lane.b32.xlu0 %v1127, 12
      %v1179 = vpop.permute.xlu0 %1178
      %1180 = vrot.lane.b32.xlu0 %v1130, 12
      %v1181 = vpop.permute.xlu0 %1180
      %1182 = vrot.lane.b32.xlu0 %v1133, 12
      %v1183 = vpop.permute.xlu0 %1182
      %1184 = vrot.lane.b32.xlu0 %v1136, 12
      %v1185 = vpop.permute.xlu0 %1184
      %1186 = vrot.lane.b32.xlu0 %v1139, 12
      %v1187 = vpop.permute.xlu0 %1186
      %1188 = vrot.lane.b32.xlu0 %v1142, 12
      %v1189 = vpop.permute.xlu0 %1188
      %1190 = vrot.lane.b32.xlu0 %v1145, 12
      %v1191 = vpop.permute.xlu0 %1190
      %1192 = vrot.lane.b32.xlu0 %v1148, 12
      %v1193 = vpop.permute.xlu0 %1192
      %1194 = vrot.lane.b32.xlu0 %v1151, 12
      %v1195 = vpop.permute.xlu0 %1194
      %1196 = vrot.lane.b32.xlu0 %v1154, 12
      %v1197 = vpop.permute.xlu0 %1196
      %1198 = vrot.lane.b32.xlu0 %v1157, 12
      %v1199 = vpop.permute.xlu0 %1198
      %1200 = vrot.lane.b32.xlu0 %v1160, 12
      %v1201 = vpop.permute.xlu0 %1200
      %1202 = vrot.lane.b32.xlu0 %v1163, 12
      %v1203 = vpop.permute.xlu0 %1202
      %1204 = vrot.lane.b32.xlu0 %v1166, 12
      %v1205 = vpop.permute.xlu0 %1204
      %1206 = vrot.lane.b32.xlu0 %v1169, 12
      %v1207 = vpop.permute.xlu0 %1206
      %1208 = vrot.lane.b32.xlu0 %v1172, 12
      %v1209 = vpop.permute.xlu0 %1208
      %1210 = vrot.lane.b32.xlu0 %v1175, 12
      %v1211 = vpop.permute.xlu0 %1210
      %vm1212 = vsmask.f32 5376
      %v1213 = vrot.slane %v580, 2
      %v1214 = vrot.slane %v582, 3
      %v1215 = vor.u32 %v1213, %v1214
      %v1216 = vrot.slane %v926, 2
      %v1217 = vrot.slane %v587, 3
      %v1218 = vor.u32 %v1216, %v1217
      %v1219 = vsel %vm1212, %v1215, %v1218
      %v1220 = vrot.slane %v592, 2
      %v1221 = vrot.slane %v594, 3
      %v1222 = vor.u32 %v1220, %v1221
      %v1223 = vrot.slane %v935, 2
      %v1224 = vrot.slane %v599, 3
      %v1225 = vor.u32 %v1223, %v1224
      %v1226 = vsel %vm1212, %v1222, %v1225
      %v1227 = vrot.slane %v604, 2
      %v1228 = vrot.slane %v606, 3
      %v1229 = vor.u32 %v1227, %v1228
      %v1230 = vrot.slane %v944, 2
      %v1231 = vrot.slane %v611, 3
      %v1232 = vor.u32 %v1230, %v1231
      %v1233 = vsel %vm1212, %v1229, %v1232
      %v1234 = vrot.slane %v616, 2
      %v1235 = vrot.slane %v618, 3
      %v1236 = vor.u32 %v1234, %v1235
      %v1237 = vrot.slane %v953, 2
      %v1238 = vrot.slane %v623, 3
      %v1239 = vor.u32 %v1237, %v1238
      %v1240 = vsel %vm1212, %v1236, %v1239
      %v1241 = vrot.slane %v628, 2
      %v1242 = vrot.slane %v630, 3
      %v1243 = vor.u32 %v1241, %v1242
      %v1244 = vrot.slane %v962, 2
      %v1245 = vrot.slane %v635, 3
      %v1246 = vor.u32 %v1244, %v1245
      %v1247 = vsel %vm1212, %v1243, %v1246
      %v1248 = vrot.slane %v640, 2
      %v1249 = vrot.slane %v642, 3
      %v1250 = vor.u32 %v1248, %v1249
      %v1251 = vrot.slane %v971, 2
      %v1252 = vrot.slane %v647, 3
      %v1253 = vor.u32 %v1251, %v1252
      %v1254 = vsel %vm1212, %v1250, %v1253
      %v1255 = vrot.slane %v652, 2
      %v1256 = vrot.slane %v654, 3
      %v1257 = vor.u32 %v1255, %v1256
      %v1258 = vrot.slane %v980, 2
      %v1259 = vrot.slane %v659, 3
      %v1260 = vor.u32 %v1258, %v1259
      %v1261 = vsel %vm1212, %v1257, %v1260
      %v1262 = vrot.slane %v664, 2
      %v1263 = vrot.slane %v666, 3
      %v1264 = vor.u32 %v1262, %v1263
      %v1265 = vrot.slane %v989, 2
      %v1266 = vrot.slane %v671, 3
      %v1267 = vor.u32 %v1265, %v1266
      %v1268 = vsel %vm1212, %v1264, %v1267
      %v1269 = vrot.slane %v676, 2
      %v1270 = vrot.slane %v678, 3
      %v1271 = vor.u32 %v1269, %v1270
      %v1272 = vrot.slane %v998, 2
      %v1273 = vrot.slane %v683, 3
      %v1274 = vor.u32 %v1272, %v1273
      %v1275 = vsel %vm1212, %v1271, %v1274
      %v1276 = vrot.slane %v688, 2
      %v1277 = vrot.slane %v690, 3
      %v1278 = vor.u32 %v1276, %v1277
      %v1279 = vrot.slane %v1007, 2
      %v1280 = vrot.slane %v695, 3
      %v1281 = vor.u32 %v1279, %v1280
      %v1282 = vsel %vm1212, %v1278, %v1281
      %v1283 = vrot.slane %v700, 2
      %v1284 = vrot.slane %v702, 3
      %v1285 = vor.u32 %v1283, %v1284
      %v1286 = vrot.slane %v1016, 2
      %v1287 = vrot.slane %v707, 3
      %v1288 = vor.u32 %v1286, %v1287
      %v1289 = vsel %vm1212, %v1285, %v1288
      %v1290 = vrot.slane %v712, 2
      %v1291 = vrot.slane %v714, 3
      %v1292 = vor.u32 %v1290, %v1291
      %v1293 = vrot.slane %v1025, 2
      %v1294 = vrot.slane %v719, 3
      %v1295 = vor.u32 %v1293, %v1294
      %v1296 = vsel %vm1212, %v1292, %v1295
      %v1297 = vrot.slane %v724, 2
      %v1298 = vrot.slane %v726, 3
      %v1299 = vor.u32 %v1297, %v1298
      %v1300 = vrot.slane %v1034, 2
      %v1301 = vrot.slane %v731, 3
      %v1302 = vor.u32 %v1300, %v1301
      %v1303 = vsel %vm1212, %v1299, %v1302
      %v1304 = vrot.slane %v736, 2
      %v1305 = vrot.slane %v738, 3
      %v1306 = vor.u32 %v1304, %v1305
      %v1307 = vrot.slane %v1043, 2
      %v1308 = vrot.slane %v743, 3
      %v1309 = vor.u32 %v1307, %v1308
      %v1310 = vsel %vm1212, %v1306, %v1309
      %v1311 = vrot.slane %v748, 2
      %v1312 = vrot.slane %v750, 3
      %v1313 = vor.u32 %v1311, %v1312
      %v1314 = vrot.slane %v1052, 2
      %v1315 = vrot.slane %v755, 3
      %v1316 = vor.u32 %v1314, %v1315
      %v1317 = vsel %vm1212, %v1313, %v1316
      %v1318 = vrot.slane %v760, 2
      %v1319 = vrot.slane %v762, 3
      %v1320 = vor.u32 %v1318, %v1319
      %v1321 = vrot.slane %v1061, 2
      %v1322 = vrot.slane %v767, 3
      %v1323 = vor.u32 %v1321, %v1322
      %v1324 = vsel %vm1212, %v1320, %v1323
      %v1325 = vrot.slane %v772, 2
      %v1326 = vrot.slane %v774, 3
      %v1327 = vor.u32 %v1325, %v1326
      %v1328 = vrot.slane %v1070, 2
      %v1329 = vrot.slane %v779, 3
      %v1330 = vor.u32 %v1328, %v1329
      %v1331 = vsel %vm1212, %v1327, %v1330
      %v1332 = vrot.slane %v784, 2
      %v1333 = vrot.slane %v786, 3
      %v1334 = vor.u32 %v1332, %v1333
      %v1335 = vrot.slane %v1079, 2
      %v1336 = vrot.slane %v791, 3
      %v1337 = vor.u32 %v1335, %v1336
      %v1338 = vsel %vm1212, %v1334, %v1337
      %1339 = vrot.lane.b32.xlu0 %v1219, 15
      %v1340 = vpop.permute.xlu0 %1339
      %1341 = vrot.lane.b32.xlu0 %v1226, 15
      %v1342 = vpop.permute.xlu0 %1341
      %1343 = vrot.lane.b32.xlu0 %v1233, 15
      %v1344 = vpop.permute.xlu0 %1343
      %1345 = vrot.lane.b32.xlu0 %v1240, 15
      %v1346 = vpop.permute.xlu0 %1345
      %1347 = vrot.lane.b32.xlu0 %v1247, 15
      %v1348 = vpop.permute.xlu0 %1347
      %1349 = vrot.lane.b32.xlu0 %v1254, 15
      %v1350 = vpop.permute.xlu0 %1349
      %1351 = vrot.lane.b32.xlu0 %v1261, 15
      %v1352 = vpop.permute.xlu0 %1351
      %1353 = vrot.lane.b32.xlu0 %v1268, 15
      %v1354 = vpop.permute.xlu0 %1353
      %1355 = vrot.lane.b32.xlu0 %v1275, 15
      %v1356 = vpop.permute.xlu0 %1355
      %1357 = vrot.lane.b32.xlu0 %v1282, 15
      %v1358 = vpop.permute.xlu0 %1357
      %1359 = vrot.lane.b32.xlu0 %v1289, 15
      %v1360 = vpop.permute.xlu0 %1359
      %1361 = vrot.lane.b32.xlu0 %v1296, 15
      %v1362 = vpop.permute.xlu0 %1361
      %1363 = vrot.lane.b32.xlu0 %v1303, 15
      %v1364 = vpop.permute.xlu0 %1363
      %1365 = vrot.lane.b32.xlu0 %v1310, 15
      %v1366 = vpop.permute.xlu0 %1365
      %1367 = vrot.lane.b32.xlu0 %v1317, 15
      %v1368 = vpop.permute.xlu0 %1367
      %1369 = vrot.lane.b32.xlu0 %v1324, 15
      %v1370 = vpop.permute.xlu0 %1369
      %1371 = vrot.lane.b32.xlu0 %v1331, 15
      %v1372 = vpop.permute.xlu0 %1371
      %1373 = vrot.lane.b32.xlu0 %v1338, 15
      %v1374 = vpop.permute.xlu0 %1373
      %vm1375 = vcmask 1044480
      %v1376 = vrot.slane %v506, 3
      %v1377 = vrot.slane %v560, 3
      %v1378 = vsel %vm1375, %v1376, %v1377
      %v1379 = vrot.slane %v507, 3
      %v1380 = vrot.slane %v561, 3
      %v1381 = vsel %vm1375, %v1379, %v1380
      %v1382 = vrot.slane %v508, 3
      %v1383 = vrot.slane %v562, 3
      %v1384 = vsel %vm1375, %v1382, %v1383
      %v1385 = vrot.slane %v509, 3
      %v1386 = vrot.slane %v563, 3
      %v1387 = vsel %vm1375, %v1385, %v1386
      %v1388 = vrot.slane %v510, 3
      %v1389 = vrot.slane %v564, 3
      %v1390 = vsel %vm1375, %v1388, %v1389
      %v1391 = vrot.slane %v511, 3
      %v1392 = vrot.slane %v565, 3
      %v1393 = vsel %vm1375, %v1391, %v1392
      %v1394 = vrot.slane %v512, 3
      %v1395 = vrot.slane %v566, 3
      %v1396 = vsel %vm1375, %v1394, %v1395
      %v1397 = vrot.slane %v513, 3
      %v1398 = vrot.slane %v567, 3
      %v1399 = vsel %vm1375, %v1397, %v1398
      %v1400 = vrot.slane %v514, 3
      %v1401 = vrot.slane %v568, 3
      %v1402 = vsel %vm1375, %v1400, %v1401
      %v1403 = vrot.slane %v515, 3
      %v1404 = vrot.slane %v569, 3
      %v1405 = vsel %vm1375, %v1403, %v1404
      %v1406 = vrot.slane %v516, 3
      %v1407 = vrot.slane %v570, 3
      %v1408 = vsel %vm1375, %v1406, %v1407
      %v1409 = vrot.slane %v517, 3
      %v1410 = vrot.slane %v571, 3
      %v1411 = vsel %vm1375, %v1409, %v1410
      %v1412 = vrot.slane %v518, 3
      %v1413 = vrot.slane %v572, 3
      %v1414 = vsel %vm1375, %v1412, %v1413
      %v1415 = vrot.slane %v519, 3
      %v1416 = vrot.slane %v573, 3
      %v1417 = vsel %vm1375, %v1415, %v1416
      %v1418 = vrot.slane %v520, 3
      %v1419 = vrot.slane %v574, 3
      %v1420 = vsel %vm1375, %v1418, %v1419
      %v1421 = vrot.slane %v521, 3
      %v1422 = vrot.slane %v575, 3
      %v1423 = vsel %vm1375, %v1421, %v1422
      %v1424 = vrot.slane %v522, 3
      %v1425 = vrot.slane %v576, 3
      %v1426 = vsel %vm1375, %v1424, %v1425
      %v1427 = vrot.slane %v523, 3
      %v1428 = vrot.slane %v577, 3
      %v1429 = vsel %vm1375, %v1427, %v1428
      %1430 = vrot.lane.b32.xlu0 %v1378, 18
      %v1431 = vpop.permute.xlu0 %1430
      %1432 = vrot.lane.b32.xlu0 %v1381, 18
      %v1433 = vpop.permute.xlu0 %1432
      %1434 = vrot.lane.b32.xlu0 %v1384, 18
      %v1435 = vpop.permute.xlu0 %1434
      %1436 = vrot.lane.b32.xlu0 %v1387, 18
      %v1437 = vpop.permute.xlu0 %1436
      %1438 = vrot.lane.b32.xlu0 %v1390, 18
      %v1439 = vpop.permute.xlu0 %1438
      %1440 = vrot.lane.b32.xlu0 %v1393, 18
      %v1441 = vpop.permute.xlu0 %1440
      %1442 = vrot.lane.b32.xlu0 %v1396, 18
      %v1443 = vpop.permute.xlu0 %1442
      %1444 = vrot.lane.b32.xlu0 %v1399, 18
      %v1445 = vpop.permute.xlu0 %1444
      %1446 = vrot.lane.b32.xlu0 %v1402, 18
      %v1447 = vpop.permute.xlu0 %1446
      %1448 = vrot.lane.b32.xlu0 %v1405, 18
      %v1449 = vpop.permute.xlu0 %1448
      %1450 = vrot.lane.b32.xlu0 %v1408, 18
      %v1451 = vpop.permute.xlu0 %1450
      %1452 = vrot.lane.b32.xlu0 %v1411, 18
      %v1453 = vpop.permute.xlu0 %1452
      %1454 = vrot.lane.b32.xlu0 %v1414, 18
      %v1455 = vpop.permute.xlu0 %1454
      %1456 = vrot.lane.b32.xlu0 %v1417, 18
      %v1457 = vpop.permute.xlu0 %1456
      %1458 = vrot.lane.b32.xlu0 %v1420, 18
      %v1459 = vpop.permute.xlu0 %1458
      %1460 = vrot.lane.b32.xlu0 %v1423, 18
      %v1461 = vpop.permute.xlu0 %1460
      %1462 = vrot.lane.b32.xlu0 %v1426, 18
      %v1463 = vpop.permute.xlu0 %1462
      %1464 = vrot.lane.b32.xlu0 %v1429, 18
      %v1465 = vpop.permute.xlu0 %1464
      %vm1466 = vcmask 23552
      %v1468 = vsel %vm1466, %v506, %v796
      %v1470 = vsel %vm1466, %v507, %v798
      %v1472 = vsel %vm1466, %v508, %v800
      %v1474 = vsel %vm1466, %v509, %v802
      %v1476 = vsel %vm1466, %v510, %v804
      %v1478 = vsel %vm1466, %v511, %v806
      %v1480 = vsel %vm1466, %v512, %v808
      %v1482 = vsel %vm1466, %v513, %v810
      %v1484 = vsel %vm1466, %v514, %v812
      %v1486 = vsel %vm1466, %v515, %v814
      %v1488 = vsel %vm1466, %v516, %v816
      %v1490 = vsel %vm1466, %v517, %v818
      %v1492 = vsel %vm1466, %v518, %v820
      %v1494 = vsel %vm1466, %v519, %v822
      %v1496 = vsel %vm1466, %v520, %v824
      %v1498 = vsel %vm1466, %v521, %v826
      %v1500 = vsel %vm1466, %v522, %v828
      %v1502 = vsel %vm1466, %v523, %v830
      %vm1503 = vcmask 48128
      %v1505 = vsel %vm1503, %v1468, %v887
      %v1507 = vsel %vm1503, %v1470, %v889
      %v1509 = vsel %vm1503, %v1472, %v891
      %v1511 = vsel %vm1503, %v1474, %v893
      %v1513 = vsel %vm1503, %v1476, %v895
      %v1515 = vsel %vm1503, %v1478, %v897
      %v1517 = vsel %vm1503, %v1480, %v899
      %v1519 = vsel %vm1503, %v1482, %v901
      %v1521 = vsel %vm1503, %v1484, %v903
      %v1523 = vsel %vm1503, %v1486, %v905
      %v1525 = vsel %vm1503, %v1488, %v907
      %v1527 = vsel %vm1503, %v1490, %v909
      %v1529 = vsel %vm1503, %v1492, %v911
      %v1531 = vsel %vm1503, %v1494, %v913
      %v1533 = vsel %vm1503, %v1496, %v915
      %v1535 = vsel %vm1503, %v1498, %v917
      %v1537 = vsel %vm1503, %v1500, %v919
      %v1539 = vsel %vm1503, %v1502, %v921
      %vm1540 = vcmask 72704
      %v1542 = vsel %vm1540, %v1505, %v1086
      %v1544 = vsel %vm1540, %v1507, %v1088
      %v1546 = vsel %vm1540, %v1509, %v1090
      %v1548 = vsel %vm1540, %v1511, %v1092
      %v1550 = vsel %vm1540, %v1513, %v1094
      %v1552 = vsel %vm1540, %v1515, %v1096
      %v1554 = vsel %vm1540, %v1517, %v1098
      %v1556 = vsel %vm1540, %v1519, %v1100
      %v1558 = vsel %vm1540, %v1521, %v1102
      %v1560 = vsel %vm1540, %v1523, %v1104
      %v1562 = vsel %vm1540, %v1525, %v1106
      %v1564 = vsel %vm1540, %v1527, %v1108
      %v1566 = vsel %vm1540, %v1529, %v1110
      %v1568 = vsel %vm1540, %v1531, %v1112
      %v1570 = vsel %vm1540, %v1533, %v1114
      %v1572 = vsel %vm1540, %v1535, %v1116
      %v1574 = vsel %vm1540, %v1537, %v1118
      %v1576 = vsel %vm1540, %v1539, %v1120
      %vm1577 = vcmask 97280
      %v1579 = vsel %vm1577, %v1542, %v1177
      %v1581 = vsel %vm1577, %v1544, %v1179
      %v1583 = vsel %vm1577, %v1546, %v1181
      %v1585 = vsel %vm1577, %v1548, %v1183
      %v1587 = vsel %vm1577, %v1550, %v1185
      %v1589 = vsel %vm1577, %v1552, %v1187
      %v1591 = vsel %vm1577, %v1554, %v1189
      %v1593 = vsel %vm1577, %v1556, %v1191
      %v1595 = vsel %vm1577, %v1558, %v1193
      %v1597 = vsel %vm1577, %v1560, %v1195
      %v1599 = vsel %vm1577, %v1562, %v1197
      %v1601 = vsel %vm1577, %v1564, %v1199
      %v1603 = vsel %vm1577, %v1566, %v1201
      %v1605 = vsel %vm1577, %v1568, %v1203
      %v1607 = vsel %vm1577, %v1570, %v1205
      %v1609 = vsel %vm1577, %v1572, %v1207
      %v1611 = vsel %vm1577, %v1574, %v1209
      %v1613 = vsel %vm1577, %v1576, %v1211
      %vm1614 = vcmask 121856
      %v1616 = vsel %vm1614, %v1579, %v1340
      %v1618 = vsel %vm1614, %v1581, %v1342
      %v1620 = vsel %vm1614, %v1583, %v1344
      %v1622 = vsel %vm1614, %v1585, %v1346
      %v1624 = vsel %vm1614, %v1587, %v1348
      %v1626 = vsel %vm1614, %v1589, %v1350
      %v1628 = vsel %vm1614, %v1591, %v1352
      %v1630 = vsel %vm1614, %v1593, %v1354
      %v1632 = vsel %vm1614, %v1595, %v1356
      %v1634 = vsel %vm1614, %v1597, %v1358
      %v1636 = vsel %vm1614, %v1599, %v1360
      %v1638 = vsel %vm1614, %v1601, %v1362
      %v1640 = vsel %vm1614, %v1603, %v1364
      %v1642 = vsel %vm1614, %v1605, %v1366
      %v1644 = vsel %vm1614, %v1607, %v1368
      %v1646 = vsel %vm1614, %v1609, %v1370
      %v1648 = vsel %vm1614, %v1611, %v1372
      %v1650 = vsel %vm1614, %v1613, %v1374
      %vm1651 = vcmask 146432
      %v1653 = vsel %vm1651, %v1616, %v1431
      %v1655 = vsel %vm1651, %v1618, %v1433
      %v1657 = vsel %vm1651, %v1620, %v1435
      %v1659 = vsel %vm1651, %v1622, %v1437
      %v1661 = vsel %vm1651, %v1624, %v1439
      %v1663 = vsel %vm1651, %v1626, %v1441
      %v1665 = vsel %vm1651, %v1628, %v1443
      %v1667 = vsel %vm1651, %v1630, %v1445
      %v1669 = vsel %vm1651, %v1632, %v1447
      %v1671 = vsel %vm1651, %v1634, %v1449
      %v1673 = vsel %vm1651, %v1636, %v1451
      %v1675 = vsel %vm1651, %v1638, %v1453
      %v1677 = vsel %vm1651, %v1640, %v1455
      %v1679 = vsel %vm1651, %v1642, %v1457
      %v1681 = vsel %vm1651, %v1644, %v1459
      %v1683 = vsel %vm1651, %v1646, %v1461
      %v1685 = vsel %vm1651, %v1648, %v1463
      %v1687 = vsel %vm1651, %v1650, %v1465
      %1700 = vrot.lane.b32.xlu0 %v1655, 21
      %v1701 = vpop.permute.xlu0 %1700
      %1702 = vrot.lane.b32.xlu0 %v1657, 21
      %v1703 = vpop.permute.xlu0 %1702
      %1704 = vrot.lane.b32.xlu0 %v1659, 21
      %v1705 = vpop.permute.xlu0 %1704
      %1706 = vrot.lane.b32.xlu0 %v1661, 21
      %v1707 = vpop.permute.xlu0 %1706
      %1708 = vrot.lane.b32.xlu0 %v1663, 21
      %v1709 = vpop.permute.xlu0 %1708
      %1710 = vrot.lane.b32.xlu0 %v1665, 21
      %v1711 = vpop.permute.xlu0 %1710
      %1712 = vrot.lane.b32.xlu0 %v1667, 21
      %v1713 = vpop.permute.xlu0 %1712
      %1714 = vrot.lane.b32.xlu0 %v1669, 21
      %v1715 = vpop.permute.xlu0 %1714
      %1716 = vrot.lane.b32.xlu0 %v1671, 21
      %v1717 = vpop.permute.xlu0 %1716
      %1718 = vrot.lane.b32.xlu0 %v1673, 21
      %v1719 = vpop.permute.xlu0 %1718
      %1720 = vrot.lane.b32.xlu0 %v1675, 21
      %v1721 = vpop.permute.xlu0 %1720
      %1722 = vrot.lane.b32.xlu0 %v1677, 21
      %v1723 = vpop.permute.xlu0 %1722
      %1725 = vrot.lane.b32.xlu0 %v1657, 42
      %v1726 = vpop.permute.xlu0 %1725
      %1727 = vrot.lane.b32.xlu0 %v1659, 42
      %v1728 = vpop.permute.xlu0 %1727
      %1729 = vrot.lane.b32.xlu0 %v1661, 42
      %v1730 = vpop.permute.xlu0 %1729
      %1731 = vrot.lane.b32.xlu0 %v1663, 42
      %v1732 = vpop.permute.xlu0 %1731
      %1733 = vrot.lane.b32.xlu0 %v1665, 42
      %v1734 = vpop.permute.xlu0 %1733
      %1735 = vrot.lane.b32.xlu0 %v1667, 42
      %v1736 = vpop.permute.xlu0 %1735
      %1737 = vrot.lane.b32.xlu0 %v1669, 42
      %v1738 = vpop.permute.xlu0 %1737
      %1739 = vrot.lane.b32.xlu0 %v1671, 42
      %v1740 = vpop.permute.xlu0 %1739
      %1741 = vrot.lane.b32.xlu0 %v1673, 42
      %v1742 = vpop.permute.xlu0 %1741
      %1743 = vrot.lane.b32.xlu0 %v1675, 42
      %v1744 = vpop.permute.xlu0 %1743
      %1745 = vrot.lane.b32.xlu0 %v1677, 42
      %v1746 = vpop.permute.xlu0 %1745
      %1747 = vrot.lane.b32.xlu0 %v1679, 42
      %v1748 = vpop.permute.xlu0 %1747
      %1750 = vrot.lane.b32.xlu0 %v1659, 63
      %v1751 = vpop.permute.xlu0 %1750
      %1752 = vrot.lane.b32.xlu0 %v1661, 63
      %v1753 = vpop.permute.xlu0 %1752
      %1754 = vrot.lane.b32.xlu0 %v1663, 63
      %v1755 = vpop.permute.xlu0 %1754
      %1756 = vrot.lane.b32.xlu0 %v1665, 63
      %v1757 = vpop.permute.xlu0 %1756
      %1758 = vrot.lane.b32.xlu0 %v1667, 63
      %v1759 = vpop.permute.xlu0 %1758
      %1760 = vrot.lane.b32.xlu0 %v1669, 63
      %v1761 = vpop.permute.xlu0 %1760
      %1762 = vrot.lane.b32.xlu0 %v1671, 63
      %v1763 = vpop.permute.xlu0 %1762
      %1764 = vrot.lane.b32.xlu0 %v1673, 63
      %v1765 = vpop.permute.xlu0 %1764
      %1766 = vrot.lane.b32.xlu0 %v1675, 63
      %v1767 = vpop.permute.xlu0 %1766
      %1768 = vrot.lane.b32.xlu0 %v1677, 63
      %v1769 = vpop.permute.xlu0 %1768
      %1770 = vrot.lane.b32.xlu0 %v1679, 63
      %v1771 = vpop.permute.xlu0 %1770
      %1772 = vrot.lane.b32.xlu0 %v1681, 63
      %v1773 = vpop.permute.xlu0 %1772
      %1775 = vrot.lane.b32.xlu0 %v1661, 84
      %v1776 = vpop.permute.xlu0 %1775
      %1777 = vrot.lane.b32.xlu0 %v1663, 84
      %v1778 = vpop.permute.xlu0 %1777
      %1779 = vrot.lane.b32.xlu0 %v1665, 84
      %v1780 = vpop.permute.xlu0 %1779
      %1781 = vrot.lane.b32.xlu0 %v1667, 84
      %v1782 = vpop.permute.xlu0 %1781
      %1783 = vrot.lane.b32.xlu0 %v1669, 84
      %v1784 = vpop.permute.xlu0 %1783
      %1785 = vrot.lane.b32.xlu0 %v1671, 84
      %v1786 = vpop.permute.xlu0 %1785
      %1787 = vrot.lane.b32.xlu0 %v1673, 84
      %v1788 = vpop.permute.xlu0 %1787
      %1789 = vrot.lane.b32.xlu0 %v1675, 84
      %v1790 = vpop.permute.xlu0 %1789
      %1791 = vrot.lane.b32.xlu0 %v1677, 84
      %v1792 = vpop.permute.xlu0 %1791
      %1793 = vrot.lane.b32.xlu0 %v1679, 84
      %v1794 = vpop.permute.xlu0 %1793
      %1795 = vrot.lane.b32.xlu0 %v1681, 84
      %v1796 = vpop.permute.xlu0 %1795
      %1797 = vrot.lane.b32.xlu0 %v1683, 84
      %v1798 = vpop.permute.xlu0 %1797
      %1800 = vrot.lane.b32.xlu0 %v1663, 105
      %v1801 = vpop.permute.xlu0 %1800
      %1802 = vrot.lane.b32.xlu0 %v1665, 105
      %v1803 = vpop.permute.xlu0 %1802
      %1804 = vrot.lane.b32.xlu0 %v1667, 105
      %v1805 = vpop.permute.xlu0 %1804
      %1806 = vrot.lane.b32.xlu0 %v1669, 105
      %v1807 = vpop.permute.xlu0 %1806
      %1808 = vrot.lane.b32.xlu0 %v1671, 105
      %v1809 = vpop.permute.xlu0 %1808
      %1810 = vrot.lane.b32.xlu0 %v1673, 105
      %v1811 = vpop.permute.xlu0 %1810
      %1812 = vrot.lane.b32.xlu0 %v1675, 105
      %v1813 = vpop.permute.xlu0 %1812
      %1814 = vrot.lane.b32.xlu0 %v1677, 105
      %v1815 = vpop.permute.xlu0 %1814
      %1816 = vrot.lane.b32.xlu0 %v1679, 105
      %v1817 = vpop.permute.xlu0 %1816
      %1818 = vrot.lane.b32.xlu0 %v1681, 105
      %v1819 = vpop.permute.xlu0 %1818
      %1820 = vrot.lane.b32.xlu0 %v1683, 105
      %v1821 = vpop.permute.xlu0 %1820
      %1822 = vrot.lane.b32.xlu0 %v1685, 105
      %v1823 = vpop.permute.xlu0 %1822
      %1825 = vrot.lane.b32.xlu0 %v1665, 126
      %v1826 = vpop.permute.xlu0 %1825
      %1827 = vrot.lane.b32.xlu0 %v1667, 126
      %v1828 = vpop.permute.xlu0 %1827
      %1829 = vrot.lane.b32.xlu0 %v1669, 126
      %v1830 = vpop.permute.xlu0 %1829
      %1831 = vrot.lane.b32.xlu0 %v1671, 126
      %v1832 = vpop.permute.xlu0 %1831
      %1833 = vrot.lane.b32.xlu0 %v1673, 126
      %v1834 = vpop.permute.xlu0 %1833
      %1835 = vrot.lane.b32.xlu0 %v1675, 126
      %v1836 = vpop.permute.xlu0 %1835
      %1837 = vrot.lane.b32.xlu0 %v1677, 126
      %v1838 = vpop.permute.xlu0 %1837
      %1839 = vrot.lane.b32.xlu0 %v1679, 126
      %v1840 = vpop.permute.xlu0 %1839
      %1841 = vrot.lane.b32.xlu0 %v1681, 126
      %v1842 = vpop.permute.xlu0 %1841
      %1843 = vrot.lane.b32.xlu0 %v1683, 126
      %v1844 = vpop.permute.xlu0 %1843
      %1845 = vrot.lane.b32.xlu0 %v1685, 126
      %v1846 = vpop.permute.xlu0 %1845
      %1847 = vrot.lane.b32.xlu0 %v1687, 126
      %v1848 = vpop.permute.xlu0 %1847
      %vm1849 = vcmask 171008
      %v1851 = vsel %vm1849, %v1653, %v1701
      %v1853 = vsel %vm1849, %v1655, %v1703
      %v1855 = vsel %vm1849, %v1657, %v1705
      %v1857 = vsel %vm1849, %v1659, %v1707
      %v1859 = vsel %vm1849, %v1661, %v1709
      %v1861 = vsel %vm1849, %v1663, %v1711
      %v1863 = vsel %vm1849, %v1665, %v1713
      %v1865 = vsel %vm1849, %v1667, %v1715
      %v1867 = vsel %vm1849, %v1669, %v1717
      %v1869 = vsel %vm1849, %v1671, %v1719
      %v1871 = vsel %vm1849, %v1673, %v1721
      %v1873 = vsel %vm1849, %v1675, %v1723
      %vm1874 = vcmask 343040
      %v1876 = vsel %vm1874, %v1851, %v1726
      %v1878 = vsel %vm1874, %v1853, %v1728
      %v1880 = vsel %vm1874, %v1855, %v1730
      %v1882 = vsel %vm1874, %v1857, %v1732
      %v1884 = vsel %vm1874, %v1859, %v1734
      %v1886 = vsel %vm1874, %v1861, %v1736
      %v1888 = vsel %vm1874, %v1863, %v1738
      %v1890 = vsel %vm1874, %v1865, %v1740
      %v1892 = vsel %vm1874, %v1867, %v1742
      %v1894 = vsel %vm1874, %v1869, %v1744
      %v1896 = vsel %vm1874, %v1871, %v1746
      %v1898 = vsel %vm1874, %v1873, %v1748
      %vm1899 = vcmask 515072
      %v1901 = vsel %vm1899, %v1876, %v1751
      %v1903 = vsel %vm1899, %v1878, %v1753
      %v1905 = vsel %vm1899, %v1880, %v1755
      %v1907 = vsel %vm1899, %v1882, %v1757
      %v1909 = vsel %vm1899, %v1884, %v1759
      %v1911 = vsel %vm1899, %v1886, %v1761
      %v1913 = vsel %vm1899, %v1888, %v1763
      %v1915 = vsel %vm1899, %v1890, %v1765
      %v1917 = vsel %vm1899, %v1892, %v1767
      %v1919 = vsel %vm1899, %v1894, %v1769
      %v1921 = vsel %vm1899, %v1896, %v1771
      %v1923 = vsel %vm1899, %v1898, %v1773
      %vm1924 = vcmask 687104
      %v1926 = vsel %vm1924, %v1901, %v1776
      %v1928 = vsel %vm1924, %v1903, %v1778
      %v1930 = vsel %vm1924, %v1905, %v1780
      %v1932 = vsel %vm1924, %v1907, %v1782
      %v1934 = vsel %vm1924, %v1909, %v1784
      %v1936 = vsel %vm1924, %v1911, %v1786
      %v1938 = vsel %vm1924, %v1913, %v1788
      %v1940 = vsel %vm1924, %v1915, %v1790
      %v1942 = vsel %vm1924, %v1917, %v1792
      %v1944 = vsel %vm1924, %v1919, %v1794
      %v1946 = vsel %vm1924, %v1921, %v1796
      %v1948 = vsel %vm1924, %v1923, %v1798
      %vm1949 = vcmask 859136
      %v1951 = vsel %vm1949, %v1926, %v1801
      %v1953 = vsel %vm1949, %v1928, %v1803
      %v1955 = vsel %vm1949, %v1930, %v1805
      %v1957 = vsel %vm1949, %v1932, %v1807
      %v1959 = vsel %vm1949, %v1934, %v1809
      %v1961 = vsel %vm1949, %v1936, %v1811
      %v1963 = vsel %vm1949, %v1938, %v1813
      %v1965 = vsel %vm1949, %v1940, %v1815
      %v1967 = vsel %vm1949, %v1942, %v1817
      %v1969 = vsel %vm1949, %v1944, %v1819
      %v1971 = vsel %vm1949, %v1946, %v1821
      %v1973 = vsel %vm1949, %v1948, %v1823
      %vm1974 = vcmask 1031168
      %v1976 = vsel %vm1974, %v1951, %v1826
      %v1979 = vsel %vm1974, %v1953, %v1828
      %v1982 = vsel %vm1974, %v1955, %v1830
      %v1985 = vsel %vm1974, %v1957, %v1832
      %v1988 = vsel %vm1974, %v1959, %v1834
      %v1991 = vsel %vm1974, %v1961, %v1836
      %v1994 = vsel %vm1974, %v1963, %v1838
      %v1997 = vsel %vm1974, %v1965, %v1840
      %v2000 = vsel %vm1974, %v1967, %v1842
      %v2003 = vsel %vm1974, %v1969, %v1844
      %v2006 = vsel %vm1974, %v1971, %v1846
      %v2009 = vsel %vm1974, %v1973, %v1848
      %v2011 = vld [vmem:[%s1] sm:$0xf]
      %v2012 = vld [vmem:[%s1 + $0x4] sm:$0xf]
      %v2013 = vld [vmem:[%s1 + $0x8] sm:$0xf]
      %v2014 = vld [vmem:[%s1 + $0xc] sm:$0xf]
      %v2015 = vld [vmem:[%s1 + $0x10] sm:$0xf]
      %v2016 = vld [vmem:[%s1 + $0x14] sm:$0xf]
      %v2017 = vld [vmem:[%s1 + $0x18] sm:$0xf]
      %v2018 = vld [vmem:[%s1 + $0x1c] sm:$0xf]
      %v2019 = vld [vmem:[%s1 + $0x20] sm:$0xf]
      %v2020 = vld [vmem:[%s1 + $0x24] sm:$0xf]
      %v2021 = vld [vmem:[%s1 + $0x28] sm:$0xf]
      %v2022 = vld [vmem:[%s1 + $0x2c] sm:$0xf]
      %v2023 = vld [vmem:[%s1 + $0x30] sm:$0xf]
      %v2024 = vld [vmem:[%s1 + $0x34] sm:$0xf]
      %v2025 = vld [vmem:[%s1 + $0x38] sm:$0xf]
      %v2026 = vld [vmem:[%s1 + $0x3c] sm:$0xf]
      %v2027 = vld [vmem:[%s1 + $0x40] sm:$0xf]
      %v2028 = vld [vmem:[%s1 + $0x44] sm:$0xf]
      %v2029 = vld [vmem:[%s1 + $0x48] sm:$0x3]
      %v2049 = vunpack.c.l.b16 %v2011
      %v2050 = vunpack.c.l.b16 %v2012
      %v2051 = vunpack.c.l.b16 %v2013
      %v2052 = vunpack.c.l.b16 %v2014
      %v2053 = vunpack.c.l.b16 %v2015
      %v2054 = vunpack.c.l.b16 %v2016
      %v2055 = vunpack.c.l.b16 %v2017
      %v2056 = vunpack.c.l.b16 %v2018
      %v2057 = vunpack.c.l.b16 %v2019
      %v2058 = vunpack.c.l.b16 %v2020
      %v2059 = vunpack.c.l.b16 %v2021
      %v2060 = vunpack.c.l.b16 %v2022
      %v2061 = vunpack.c.l.b16 %v2023
      %v2062 = vunpack.c.l.b16 %v2024
      %v2063 = vunpack.c.l.b16 %v2025
      %v2064 = vunpack.c.l.b16 %v2026
      %v2065 = vunpack.c.l.b16 %v2027
      %v2066 = vunpack.c.l.b16 %v2028
      %v2067 = vunpack.c.l.b16 %v2029
      %v2068 = vpack.c.b16 %v2050, %v2049
      %v2069 = vpack.c.b16 %v2052, %v2051
      %v2070 = vpack.c.b16 %v2054, %v2053
      %v2071 = vpack.c.b16 %v2056, %v2055
      %v2072 = vpack.c.b16 %v2058, %v2057
      %v2073 = vpack.c.b16 %v2060, %v2059
      %v2074 = vpack.c.b16 %v2062, %v2061
      %v2075 = vpack.c.b16 %v2064, %v2063
      %v2076 = vpack.c.b16 %v2066, %v2065
      %v2077 = vpack.c.b16 %v2067, %v2067
      %vm2087 = vcmask 154624
      %v2088 = vsel %vm2087, %v1826, 0
      %v2090 = vsel %vm2087, %v1828, 0
      %v2092 = vsel %vm2087, %v1830, 0
      %v2094 = vsel %vm2087, %v1832, 0
      %v2096 = vsel %vm2087, %v1834, 0
      %v2098 = vsel %vm2087, %v1836, 0
      %v2100 = vsel %vm2087, %v1838, 0
      %v2102 = vsel %vm2087, %v1840, 0
      %v2104 = vsel %vm2087, %v1842, 0
      %v2106 = vsel %vm2087, %v1844, 0
      %v2108 = vsel %vm2087, %v1846, 0
      %v2110 = vsel %vm2087, %v1848, 0
      %vm2112 = vcmask 1040384
      %vm2113 = vcmask 1041408
      %v2114 = vsel %vm2112, 4294967295, 65535
      %v2115 = vsel %vm2113, %v2114, 0
      %v2117 = vand.u32 %v2077, %v2115
      %2119 = vmatprep.subr.bf16.mxu0 0
      %2120 = vmatpush1.bf16.msra.mxu0 %v2068
      %2121 = vmatprep.subr.bf16.mxu0 0
      %2122 = vmatpush1.bf16.msra.mxu0 %v2069
      %2123 = vmatprep.subr.bf16.mxu0 0
      %2124 = vmatpush1.bf16.msra.mxu0 %v2070
      %2125 = vmatprep.subr.bf16.mxu0 0
      %2126 = vmatpush1.bf16.msra.mxu0 %v2071
      %2127 = vmatprep.subr.bf16.mxu0 0
      %2128 = vmatpush1.bf16.msra.mxu0 %v2072
      %2129 = vmatprep.subr.bf16.mxu0 0
      %2130 = vmatpush1.bf16.msra.mxu0 %v2073
      %2131 = vmatprep.subr.bf16.mxu0 0
      %2132 = vmatpush1.bf16.msra.mxu0 %v2074
      %2133 = vmatprep.subr.bf16.mxu0 0
      %2134 = vmatpush1.bf16.msra.mxu0 %v2075
      %2135 = vmatprep.subr.bf16.mxu0 0
      %2136 = vmatpush1.bf16.msra.mxu0 %v2076
      %2137 = vmatprep.subr.bf16.mxu0 0
      %2138 = vmatpush1.bf16.msra.mxu0 %v2117
      %2139 = vmatprep.subr.bf16.mxu0 0
      %2140 = vmatpush1.bf16.msra.mxu0 0
      %2141 = vmatprep.subr.bf16.mxu0 0
      %2142 = vmatpush1.bf16.msra.mxu0 0
      %2143 = vmatprep.subr.bf16.mxu0 0
      %2144 = vmatpush1.bf16.msra.mxu0 0
      %2145 = vmatprep.subr.bf16.mxu0 0
      %2146 = vmatpush1.bf16.msra.mxu0 0
      %2147 = vmatprep.subr.bf16.mxu0 0
      %2148 = vmatpush1.bf16.msra.mxu0 0
      %2149 = vmatprep.subr.bf16.mxu0 0
      %2150 = vmatpush1.bf16.msra.mxu0 0
      %2151 = vmatprep.mubr.bf16.mxu0 %v2088
      %2152 = vmatmul.mubr.bf16.gmra.mrb[0].mxu0 %v1976
      %v2153 = vpop.f32.mrb[0].mxu0
      %v2154 = vadd.f32 0.0, %v2153
      %v2155 = vpop.f32.mrb[0].mxu0
      %v2156 = vpop.f32.mrb[0].mxu0
      %v2157 = vadd.f32 0.0, %v2156
      %v2158 = vpop.f32.mrb[0].mxu0
      %2159 = vmatprep.mubr.bf16.mxu0 %v2090
      %2160 = vmatmul.mubr.bf16.gmra.mrb[0].mxu0 %v1979
      %v2161 = vpop.f32.mrb[0].mxu0
      %v2162 = vadd.f32 0.0, %v2161
      %v2163 = vpop.f32.mrb[0].mxu0
      %v2164 = vpop.f32.mrb[0].mxu0
      %v2165 = vadd.f32 0.0, %v2164
      %v2166 = vpop.f32.mrb[0].mxu0
      %2167 = vmatprep.mubr.bf16.mxu0 %v2092
      %2168 = vmatmul.mubr.bf16.gmra.mrb[0].mxu0 %v1982
      %v2169 = vpop.f32.mrb[0].mxu0
      %v2170 = vadd.f32 0.0, %v2169
      %v2171 = vpop.f32.mrb[0].mxu0
      %v2172 = vpop.f32.mrb[0].mxu0
      %v2173 = vadd.f32 0.0, %v2172
      %v2174 = vpop.f32.mrb[0].mxu0
      %2175 = vmatprep.mubr.bf16.mxu0 %v2094
      %2176 = vmatmul.mubr.bf16.gmra.mrb[0].mxu0 %v1985
      %v2177 = vpop.f32.mrb[0].mxu0
      %v2178 = vadd.f32 0.0, %v2177
      %v2179 = vpop.f32.mrb[0].mxu0
      %v2180 = vpop.f32.mrb[0].mxu0
      %v2181 = vadd.f32 0.0, %v2180
      %v2182 = vpop.f32.mrb[0].mxu0
      %2183 = vmatprep.mubr.bf16.mxu0 %v2096
      %2184 = vmatmul.mubr.bf16.gmra.mrb[0].mxu0 %v1988
      %v2185 = vpop.f32.mrb[0].mxu0
      %v2186 = vadd.f32 0.0, %v2185
      %v2187 = vpop.f32.mrb[0].mxu0
      %v2188 = vpop.f32.mrb[0].mxu0
      %v2189 = vadd.f32 0.0, %v2188
      %v2190 = vpop.f32.mrb[0].mxu0
      %2191 = vmatprep.mubr.bf16.mxu0 %v2098
      %2192 = vmatmul.mubr.bf16.gmra.mrb[0].mxu0 %v1991
      %v2193 = vpop.f32.mrb[0].mxu0
      %v2194 = vadd.f32 0.0, %v2193
      %v2195 = vpop.f32.mrb[0].mxu0
      %v2196 = vpop.f32.mrb[0].mxu0
      %v2197 = vadd.f32 0.0, %v2196
      %v2198 = vpop.f32.mrb[0].mxu0
      %2199 = vmatprep.mubr.bf16.mxu0 %v2100
      %2200 = vmatmul.mubr.bf16.gmra.mrb[0].mxu0 %v1994
      %v2201 = vpop.f32.mrb[0].mxu0
      %v2202 = vadd.f32 0.0, %v2201
      %v2203 = vpop.f32.mrb[0].mxu0
      %v2204 = vpop.f32.mrb[0].mxu0
      %v2205 = vadd.f32 0.0, %v2204
      %v2206 = vpop.f32.mrb[0].mxu0
      %2207 = vmatprep.mubr.bf16.mxu0 %v2102
      %2208 = vmatmul.mubr.bf16.gmra.mrb[0].mxu0 %v1997
      %v2209 = vpop.f32.mrb[0].mxu0
      %v2210 = vadd.f32 0.0, %v2209
      %v2211 = vpop.f32.mrb[0].mxu0
      %v2212 = vpop.f32.mrb[0].mxu0
      %v2213 = vadd.f32 0.0, %v2212
      %v2214 = vpop.f32.mrb[0].mxu0
      %2215 = vmatprep.mubr.bf16.mxu0 %v2104
      %2216 = vmatmul.mubr.bf16.gmra.mrb[0].mxu0 %v2000
      %v2217 = vpop.f32.mrb[0].mxu0
      %v2218 = vadd.f32 0.0, %v2217
      %v2219 = vpop.f32.mrb[0].mxu0
      %v2220 = vpop.f32.mrb[0].mxu0
      %v2221 = vadd.f32 0.0, %v2220
      %v2222 = vpop.f32.mrb[0].mxu0
      %2223 = vmatprep.mubr.bf16.mxu0 %v2106
      %2224 = vmatmul.mubr.bf16.gmra.mrb[0].mxu0 %v2003
      %v2225 = vpop.f32.mrb[0].mxu0
      %v2226 = vadd.f32 0.0, %v2225
      %v2227 = vpop.f32.mrb[0].mxu0
      %v2228 = vpop.f32.mrb[0].mxu0
      %v2229 = vadd.f32 0.0, %v2228
      %v2230 = vpop.f32.mrb[0].mxu0
      %2231 = vmatprep.mubr.bf16.mxu0 %v2108
      %2232 = vmatmul.mubr.bf16.gmra.mrb[0].mxu0 %v2006
      %v2233 = vpop.f32.mrb[0].mxu0
      %v2234 = vadd.f32 0.0, %v2233
      %v2235 = vpop.f32.mrb[0].mxu0
      %v2236 = vpop.f32.mrb[0].mxu0
      %v2237 = vadd.f32 0.0, %v2236
      %v2238 = vpop.f32.mrb[0].mxu0
      %2239 = vmatprep.mubr.bf16.mxu0 %v2110
      %2240 = vmatmul.mubr.bf16.gmra.mrb[0].mxu0 %v2009
      %v2241 = vpop.f32.mrb[0].mxu0
      %v2242 = vadd.f32 0.0, %v2241
      %v2243 = vpop.f32.mrb[0].mxu0
      %v2244 = vpop.f32.mrb[0].mxu0
      %v2245 = vadd.f32 0.0, %v2244
      %v2246 = vpop.f32.mrb[0].mxu0
      %2247 = vdwg.mxu0
      %v2248 = vpack.c.bf16 %v2157, %v2154
      %v2249 = vpack.c.bf16 %v2165, %v2162
      %v2250 = vpack.c.bf16 %v2173, %v2170
      %v2251 = vpack.c.bf16 %v2181, %v2178
      %v2252 = vpack.c.bf16 %v2189, %v2186
      %v2253 = vpack.c.bf16 %v2197, %v2194
      %v2254 = vpack.c.bf16 %v2205, %v2202
      %v2255 = vpack.c.bf16 %v2213, %v2210
      %v2256 = vpack.c.bf16 %v2221, %v2218
      %v2257 = vpack.c.bf16 %v2229, %v2226
      %v2258 = vpack.c.bf16 %v2237, %v2234
      %v2259 = vpack.c.bf16 %v2245, %v2242
      %v2272 = vunpack.c.l.b16 %v2248
      %v2273 = vunpack.c.h.b16 %v2248
      %v2274 = vunpack.c.l.b16 %v2249
      %v2275 = vunpack.c.h.b16 %v2249
      %v2276 = vunpack.c.l.b16 %v2250
      %v2277 = vunpack.c.h.b16 %v2250
      %v2278 = vunpack.c.l.b16 %v2251
      %v2279 = vunpack.c.h.b16 %v2251
      %v2280 = vunpack.c.l.b16 %v2252
      %v2281 = vunpack.c.h.b16 %v2252
      %v2282 = vunpack.c.l.b16 %v2253
      %v2283 = vunpack.c.h.b16 %v2253
      %v2284 = vunpack.c.l.b16 %v2254
      %v2285 = vunpack.c.h.b16 %v2254
      %v2286 = vunpack.c.l.b16 %v2255
      %v2287 = vunpack.c.h.b16 %v2255
      %v2288 = vunpack.c.l.b16 %v2256
      %v2289 = vunpack.c.h.b16 %v2256
      %v2290 = vunpack.c.l.b16 %v2257
      %v2291 = vunpack.c.h.b16 %v2257
      %v2292 = vunpack.c.l.b16 %v2258
      %v2293 = vunpack.c.h.b16 %v2258
      %v2294 = vunpack.c.l.b16 %v2259
      %v2295 = vunpack.c.h.b16 %v2259
      %v2296 = vpack.c.b16 %v2272, %v2272
      %v2297 = vpack.c.b16 %v2273, %v2273
      %v2298 = vpack.c.b16 %v2274, %v2274
      %v2299 = vpack.c.b16 %v2275, %v2275
      %v2300 = vpack.c.b16 %v2276, %v2276
      %v2301 = vpack.c.b16 %v2277, %v2277
      %v2302 = vpack.c.b16 %v2278, %v2278
      %v2303 = vpack.c.b16 %v2279, %v2279
      %v2304 = vpack.c.b16 %v2280, %v2280
      %v2305 = vpack.c.b16 %v2281, %v2281
      %v2306 = vpack.c.b16 %v2282, %v2282
      %v2307 = vpack.c.b16 %v2283, %v2283
      %v2308 = vpack.c.b16 %v2284, %v2284
      %v2309 = vpack.c.b16 %v2285, %v2285
      %v2310 = vpack.c.b16 %v2286, %v2286
      %v2311 = vpack.c.b16 %v2287, %v2287
      %v2312 = vpack.c.b16 %v2288, %v2288
      %v2313 = vpack.c.b16 %v2289, %v2289
      %v2314 = vpack.c.b16 %v2290, %v2290
      %v2315 = vpack.c.b16 %v2291, %v2291
      %v2316 = vpack.c.b16 %v2292, %v2292
      %v2317 = vpack.c.b16 %v2293, %v2293
      %v2318 = vpack.c.b16 %v2294, %v2294
      %v2319 = vpack.c.b16 %v2295, %v2295
      %vm2320 = vsmask.f32 256
      %vm2321 = vsmask.f32 4368
      %vm2322 = vmor %vm2320, %vm2321
      %v2324 = vshrl.u32 %v2296, 16
      %v2326 = vrot.slane %v2324, 7
      %v2327 = vshll.u32 %v2296, 16
      %v2329 = vor.u32 %v2326, %v2327
      %v2330 = vrot.slane %v2326, 4
      %v2332 = vshrl.u32 %v2297, 16
      %v2334 = vrot.slane %v2332, 7
      %v2335 = vshll.u32 %v2297, 16
      %v2337 = vor.u32 %v2334, %v2335
      %v2338 = vsel %vm2322, %v2330, %v2337
      %v2339 = vrot.slane %v2334, 4
      %v2341 = vshrl.u32 %v2298, 16
      %v2343 = vrot.slane %v2341, 7
      %v2344 = vshll.u32 %v2298, 16
      %v2346 = vor.u32 %v2343, %v2344
      %v2347 = vrot.slane %v2343, 4
      %v2349 = vshrl.u32 %v2299, 16
      %v2351 = vrot.slane %v2349, 7
      %v2352 = vshll.u32 %v2299, 16
      %v2354 = vor.u32 %v2351, %v2352
      %v2355 = vsel %vm2322, %v2347, %v2354
      %v2356 = vrot.slane %v2351, 4
      %v2358 = vshrl.u32 %v2300, 16
      %v2360 = vrot.slane %v2358, 7
      %v2361 = vshll.u32 %v2300, 16
      %v2363 = vor.u32 %v2360, %v2361
      %v2364 = vrot.slane %v2360, 4
      %v2366 = vshrl.u32 %v2301, 16
      %v2368 = vrot.slane %v2366, 7
      %v2369 = vshll.u32 %v2301, 16
      %v2371 = vor.u32 %v2368, %v2369
      %v2372 = vsel %vm2322, %v2364, %v2371
      %v2373 = vrot.slane %v2368, 4
      %v2375 = vshrl.u32 %v2302, 16
      %v2377 = vrot.slane %v2375, 7
      %v2378 = vshll.u32 %v2302, 16
      %v2380 = vor.u32 %v2377, %v2378
      %v2381 = vrot.slane %v2377, 4
      %v2383 = vshrl.u32 %v2303, 16
      %v2385 = vrot.slane %v2383, 7
      %v2386 = vshll.u32 %v2303, 16
      %v2388 = vor.u32 %v2385, %v2386
      %v2389 = vsel %vm2322, %v2381, %v2388
      %v2390 = vrot.slane %v2385, 4
      %v2392 = vshrl.u32 %v2304, 16
      %v2394 = vrot.slane %v2392, 7
      %v2395 = vshll.u32 %v2304, 16
      %v2397 = vor.u32 %v2394, %v2395
      %v2398 = vrot.slane %v2394, 4
      %v2400 = vshrl.u32 %v2305, 16
      %v2402 = vrot.slane %v2400, 7
      %v2403 = vshll.u32 %v2305, 16
      %v2405 = vor.u32 %v2402, %v2403
      %v2406 = vsel %vm2322, %v2398, %v2405
      %v2407 = vrot.slane %v2402, 4
      %v2409 = vshrl.u32 %v2306, 16
      %v2411 = vrot.slane %v2409, 7
      %v2412 = vshll.u32 %v2306, 16
      %v2414 = vor.u32 %v2411, %v2412
      %v2415 = vrot.slane %v2411, 4
      %v2417 = vshrl.u32 %v2307, 16
      %v2419 = vrot.slane %v2417, 7
      %v2420 = vshll.u32 %v2307, 16
      %v2422 = vor.u32 %v2419, %v2420
      %v2423 = vsel %vm2322, %v2415, %v2422
      %v2424 = vrot.slane %v2419, 4
      %v2426 = vshrl.u32 %v2308, 16
      %v2428 = vrot.slane %v2426, 7
      %v2429 = vshll.u32 %v2308, 16
      %v2431 = vor.u32 %v2428, %v2429
      %v2432 = vrot.slane %v2428, 4
      %v2434 = vshrl.u32 %v2309, 16
      %v2436 = vrot.slane %v2434, 7
      %v2437 = vshll.u32 %v2309, 16
      %v2439 = vor.u32 %v2436, %v2437
      %v2440 = vsel %vm2322, %v2432, %v2439
      %v2441 = vrot.slane %v2436, 4
      %v2443 = vshrl.u32 %v2310, 16
      %v2445 = vrot.slane %v2443, 7
      %v2446 = vshll.u32 %v2310, 16
      %v2448 = vor.u32 %v2445, %v2446
      %v2449 = vrot.slane %v2445, 4
      %v2451 = vshrl.u32 %v2311, 16
      %v2453 = vrot.slane %v2451, 7
      %v2454 = vshll.u32 %v2311, 16
      %v2456 = vor.u32 %v2453, %v2454
      %v2457 = vsel %vm2322, %v2449, %v2456
      %v2458 = vrot.slane %v2453, 4
      %v2460 = vshrl.u32 %v2312, 16
      %v2462 = vrot.slane %v2460, 7
      %v2463 = vshll.u32 %v2312, 16
      %v2465 = vor.u32 %v2462, %v2463
      %v2466 = vrot.slane %v2462, 4
      %v2468 = vshrl.u32 %v2313, 16
      %v2470 = vrot.slane %v2468, 7
      %v2471 = vshll.u32 %v2313, 16
      %v2473 = vor.u32 %v2470, %v2471
      %v2474 = vsel %vm2322, %v2466, %v2473
      %v2475 = vrot.slane %v2470, 4
      %v2477 = vshrl.u32 %v2314, 16
      %v2479 = vrot.slane %v2477, 7
      %v2480 = vshll.u32 %v2314, 16
      %v2482 = vor.u32 %v2479, %v2480
      %v2483 = vrot.slane %v2479, 4
      %v2485 = vshrl.u32 %v2315, 16
      %v2487 = vrot.slane %v2485, 7
      %v2488 = vshll.u32 %v2315, 16
      %v2490 = vor.u32 %v2487, %v2488
      %v2491 = vsel %vm2322, %v2483, %v2490
      %v2492 = vrot.slane %v2487, 4
      %v2494 = vshrl.u32 %v2316, 16
      %v2496 = vrot.slane %v2494, 7
      %v2497 = vshll.u32 %v2316, 16
      %v2499 = vor.u32 %v2496, %v2497
      %v2500 = vrot.slane %v2496, 4
      %v2502 = vshrl.u32 %v2317, 16
      %v2504 = vrot.slane %v2502, 7
      %v2505 = vshll.u32 %v2317, 16
      %v2507 = vor.u32 %v2504, %v2505
      %v2508 = vsel %vm2322, %v2500, %v2507
      %v2509 = vrot.slane %v2504, 4
      %v2511 = vshrl.u32 %v2318, 16
      %v2513 = vrot.slane %v2511, 7
      %v2514 = vshll.u32 %v2318, 16
      %v2516 = vor.u32 %v2513, %v2514
      %v2517 = vrot.slane %v2513, 4
      %v2519 = vshrl.u32 %v2319, 16
      %v2521 = vrot.slane %v2519, 7
      %v2522 = vshll.u32 %v2319, 16
      %v2524 = vor.u32 %v2521, %v2522
      %v2525 = vsel %vm2322, %v2517, %v2524
      %v2526 = vrot.slane %v2521, 4
      %vm2563 = vcmask 519168
      %vm2564 = vsmask.f32 7938
      %vm2565 = vmand %vm2563, %vm2564
      %v2566 = vld [vmem:[#allocation2] sm:$0xf]
      %v2567 = vsel %vm2565, %v2329, %v2566
      %2568 = vst [vmem:[#allocation2] sm:$0xf] %v2567
      %vm2569 = vcmask 519168
      %2570 = vst.msk [vmem:[#allocation2 + $0x4] sm:$0xf] %vm2569, %v2338
      %vm2571 = vcmask 516096
      %vm2572 = vmand %vm2571, %vm2320
      %v2573 = vld [vmem:[#allocation2 + $0x8] sm:$0x1]
      %v2574 = vsel %vm2572, %v2339, %v2573
      %2575 = vst [vmem:[#allocation2 + $0x8] sm:$0x1] %v2574
      %v2576 = vld [vmem:[#allocation2 + $0xc] sm:$0xf]
      %v2577 = vsel %vm2565, %v2346, %v2576
      %2578 = vst [vmem:[#allocation2 + $0xc] sm:$0xf] %v2577
      %2579 = vst.msk [vmem:[#allocation2 + $0x10] sm:$0xf] %vm2569, %v2355
      %v2580 = vld [vmem:[#allocation2 + $0x14] sm:$0x1]
      %v2581 = vsel %vm2572, %v2356, %v2580
      %2582 = vst [vmem:[#allocation2 + $0x14] sm:$0x1] %v2581
      %v2583 = vld [vmem:[#allocation2 + $0x18] sm:$0xf]
      %v2584 = vsel %vm2565, %v2363, %v2583
      %2585 = vst [vmem:[#allocation2 + $0x18] sm:$0xf] %v2584
      %2586 = vst.msk [vmem:[#allocation2 + $0x1c] sm:$0xf] %vm2569, %v2372
      %v2587 = vld [vmem:[#allocation2 + $0x20] sm:$0x1]
      %v2588 = vsel %vm2572, %v2373, %v2587
      %2589 = vst [vmem:[#allocation2 + $0x20] sm:$0x1] %v2588
      %v2590 = vld [vmem:[#allocation2 + $0x24] sm:$0xf]
      %v2591 = vsel %vm2565, %v2380, %v2590
      %2592 = vst [vmem:[#allocation2 + $0x24] sm:$0xf] %v2591
      %2593 = vst.msk [vmem:[#allocation2 + $0x28] sm:$0xf] %vm2569, %v2389
      %v2594 = vld [vmem:[#allocation2 + $0x2c] sm:$0x1]
      %v2595 = vsel %vm2572, %v2390, %v2594
      %2596 = vst [vmem:[#allocation2 + $0x2c] sm:$0x1] %v2595
      %v2597 = vld [vmem:[#allocation2 + $0x30] sm:$0xf]
      %v2598 = vsel %vm2565, %v2397, %v2597
      %2599 = vst [vmem:[#allocation2 + $0x30] sm:$0xf] %v2598
      %2600 = vst.msk [vmem:[#allocation2 + $0x34] sm:$0xf] %vm2569, %v2406
      %v2601 = vld [vmem:[#allocation2 + $0x38] sm:$0x1]
      %v2602 = vsel %vm2572, %v2407, %v2601
      %2603 = vst [vmem:[#allocation2 + $0x38] sm:$0x1] %v2602
      %v2604 = vld [vmem:[#allocation2 + $0x3c] sm:$0xf]
      %v2605 = vsel %vm2565, %v2414, %v2604
      %2606 = vst [vmem:[#allocation2 + $0x3c] sm:$0xf] %v2605
      %2607 = vst.msk [vmem:[#allocation2 + $0x40] sm:$0xf] %vm2569, %v2423
      %v2608 = vld [vmem:[#allocation2 + $0x44] sm:$0x1]
      %v2609 = vsel %vm2572, %v2424, %v2608
      %2610 = vst [vmem:[#allocation2 + $0x44] sm:$0x1] %v2609
      %v2611 = vld [vmem:[#allocation2 + $0x48] sm:$0xf]
      %v2612 = vsel %vm2565, %v2431, %v2611
      %2613 = vst [vmem:[#allocation2 + $0x48] sm:$0xf] %v2612
      %2614 = vst.msk [vmem:[#allocation2 + $0x4c] sm:$0xf] %vm2569, %v2440
      %v2615 = vld [vmem:[#allocation2 + $0x50] sm:$0x1]
      %v2616 = vsel %vm2572, %v2441, %v2615
      %2617 = vst [vmem:[#allocation2 + $0x50] sm:$0x1] %v2616
      %v2618 = vld [vmem:[#allocation2 + $0x54] sm:$0xf]
      %v2619 = vsel %vm2565, %v2448, %v2618
      %2620 = vst [vmem:[#allocation2 + $0x54] sm:$0xf] %v2619
      %2621 = vst.msk [vmem:[#allocation2 + $0x58] sm:$0xf] %vm2569, %v2457
      %v2622 = vld [vmem:[#allocation2 + $0x5c] sm:$0x1]
      %v2623 = vsel %vm2572, %v2458, %v2622
      %2624 = vst [vmem:[#allocation2 + $0x5c] sm:$0x1] %v2623
      %v2625 = vld [vmem:[#allocation2 + $0x60] sm:$0xf]
      %v2626 = vsel %vm2565, %v2465, %v2625
      %2627 = vst [vmem:[#allocation2 + $0x60] sm:$0xf] %v2626
      %2628 = vst.msk [vmem:[#allocation2 + $0x64] sm:$0xf] %vm2569, %v2474
      %v2629 = vld [vmem:[#allocation2 + $0x68] sm:$0x1]
      %v2630 = vsel %vm2572, %v2475, %v2629
      %2631 = vst [vmem:[#allocation2 + $0x68] sm:$0x1] %v2630
      %v2632 = vld [vmem:[#allocation2 + $0x6c] sm:$0xf]
      %v2633 = vsel %vm2565, %v2482, %v2632
      %2634 = vst [vmem:[#allocation2 + $0x6c] sm:$0xf] %v2633
      %2635 = vst.msk [vmem:[#allocation2 + $0x70] sm:$0xf] %vm2569, %v2491
      %v2636 = vld [vmem:[#allocation2 + $0x74] sm:$0x1]
      %v2637 = vsel %vm2572, %v2492, %v2636
      %2638 = vst [vmem:[#allocation2 + $0x74] sm:$0x1] %v2637
      %v2639 = vld [vmem:[#allocation2 + $0x78] sm:$0xf]
      %v2640 = vsel %vm2565, %v2499, %v2639
      %2641 = vst [vmem:[#allocation2 + $0x78] sm:$0xf] %v2640
      %2642 = vst.msk [vmem:[#allocation2 + $0x7c] sm:$0xf] %vm2569, %v2508
      %v2643 = vld [vmem:[#allocation2 + $0x80] sm:$0x1]
      %v2644 = vsel %vm2572, %v2509, %v2643
      %2645 = vst [vmem:[#allocation2 + $0x80] sm:$0x1] %v2644
      %v2646 = vld [vmem:[#allocation2 + $0x84] sm:$0xf]
      %v2647 = vsel %vm2565, %v2516, %v2646
      %2648 = vst [vmem:[#allocation2 + $0x84] sm:$0xf] %v2647
      %2649 = vst.msk [vmem:[#allocation2 + $0x88] sm:$0xf] %vm2569, %v2525
      %v2650 = vld [vmem:[#allocation2 + $0x8c] sm:$0x1]
      %v2651 = vsel %vm2572, %v2526, %v2650
      %2652 = vst [vmem:[#allocation2 + $0x8c] sm:$0x1] %v2651
      %v2653 = vld [vmem:[#allocation2] sm:$0x1]
      %v2654 = vsel %vm2572, %v2248, %v2653
      %2655 = vst [vmem:[#allocation2] sm:$0x1] %v2654
      %v2656 = vld [vmem:[#allocation2 + $0xc] sm:$0x1]
      %v2657 = vsel %vm2572, %v2249, %v2656
      %2658 = vst [vmem:[#allocation2 + $0xc] sm:$0x1] %v2657
      %v2659 = vld [vmem:[#allocation2 + $0x18] sm:$0x1]
      %v2660 = vsel %vm2572, %v2250, %v2659
      %2661 = vst [vmem:[#allocation2 + $0x18] sm:$0x1] %v2660
      %v2662 = vld [vmem:[#allocation2 + $0x24] sm:$0x1]
      %v2663 = vsel %vm2572, %v2251, %v2662
      %2664 = vst [vmem:[#allocation2 + $0x24] sm:$0x1] %v2663
      %v2665 = vld [vmem:[#allocation2 + $0x30] sm:$0x1]
      %v2666 = vsel %vm2572, %v2252, %v2665
      %2667 = vst [vmem:[#allocation2 + $0x30] sm:$0x1] %v2666
      %v2668 = vld [vmem:[#allocation2 + $0x3c] sm:$0x1]
      %v2669 = vsel %vm2572, %v2253, %v2668
      %2670 = vst [vmem:[#allocation2 + $0x3c] sm:$0x1] %v2669
      %v2671 = vld [vmem:[#allocation2 + $0x48] sm:$0x1]
      %v2672 = vsel %vm2572, %v2254, %v2671
      %2673 = vst [vmem:[#allocation2 + $0x48] sm:$0x1] %v2672
      %v2674 = vld [vmem:[#allocation2 + $0x54] sm:$0x1]
      %v2675 = vsel %vm2572, %v2255, %v2674
      %2676 = vst [vmem:[#allocation2 + $0x54] sm:$0x1] %v2675
      %v2677 = vld [vmem:[#allocation2 + $0x60] sm:$0x1]
      %v2678 = vsel %vm2572, %v2256, %v2677
      %2679 = vst [vmem:[#allocation2 + $0x60] sm:$0x1] %v2678
      %v2680 = vld [vmem:[#allocation2 + $0x6c] sm:$0x1]
      %v2681 = vsel %vm2572, %v2257, %v2680
      %2682 = vst [vmem:[#allocation2 + $0x6c] sm:$0x1] %v2681
      %v2683 = vld [vmem:[#allocation2 + $0x78] sm:$0x1]
      %v2684 = vsel %vm2572, %v2258, %v2683
      %2685 = vst [vmem:[#allocation2 + $0x78] sm:$0x1] %v2684
      %v2686 = vld [vmem:[#allocation2 + $0x84] sm:$0x1]
      %v2687 = vsel %vm2572, %v2259, %v2686
      %2688 = vst [vmem:[#allocation2 + $0x84] sm:$0x1] %v2687
      %v2689 = vrot.slane %v2297, 7
      %v2690 = vrot.slane %v2689, 4
      %v2691 = vrot.slane %v2299, 7
      %v2692 = vrot.slane %v2691, 4
      %v2693 = vrot.slane %v2301, 7
      %v2694 = vrot.slane %v2693, 4
      %v2695 = vrot.slane %v2303, 7
      %v2696 = vrot.slane %v2695, 4
      %v2697 = vrot.slane %v2305, 7
      %v2698 = vrot.slane %v2697, 4
      %v2699 = vrot.slane %v2307, 7
      %v2700 = vrot.slane %v2699, 4
      %v2701 = vrot.slane %v2309, 7
      %v2702 = vrot.slane %v2701, 4
      %v2703 = vrot.slane %v2311, 7
      %v2704 = vrot.slane %v2703, 4
      %v2705 = vrot.slane %v2313, 7
      %v2706 = vrot.slane %v2705, 4
      %v2707 = vrot.slane %v2315, 7
      %v2708 = vrot.slane %v2707, 4
      %v2709 = vrot.slane %v2317, 7
      %v2710 = vrot.slane %v2709, 4
      %v2711 = vrot.slane %v2319, 7
      %v2712 = vrot.slane %v2711, 4
      %vm2725 = vmand %vm2571, %vm2564
      %v2726 = vld [vmem:[#allocation2 + $0x8] sm:$0x1]
      %v2727 = vsel %vm2725, %v2690, %v2726
      %2728 = vst [vmem:[#allocation2 + $0x8] sm:$0x1] %v2727
      %v2729 = vld [vmem:[#allocation2 + $0x14] sm:$0x1]
      %v2730 = vsel %vm2725, %v2692, %v2729
      %2731 = vst [vmem:[#allocation2 + $0x14] sm:$0x1] %v2730
      %v2732 = vld [vmem:[#allocation2 + $0x20] sm:$0x1]
      %v2733 = vsel %vm2725, %v2694, %v2732
      %2734 = vst [vmem:[#allocation2 + $0x20] sm:$0x1] %v2733
      %v2735 = vld [vmem:[#allocation2 + $0x2c] sm:$0x1]
      %v2736 = vsel %vm2725, %v2696, %v2735
      %2737 = vst [vmem:[#allocation2 + $0x2c] sm:$0x1] %v2736
      %v2738 = vld [vmem:[#allocation2 + $0x38] sm:$0x1]
      %v2739 = vsel %vm2725, %v2698, %v2738
      %2740 = vst [vmem:[#allocation2 + $0x38] sm:$0x1] %v2739
      %v2741 = vld [vmem:[#allocation2 + $0x44] sm:$0x1]
      %v2742 = vsel %vm2725, %v2700, %v2741
      %2743 = vst [vmem:[#allocation2 + $0x44] sm:$0x1] %v2742
      %v2744 = vld [vmem:[#allocation2 + $0x50] sm:$0x1]
      %v2745 = vsel %vm2725, %v2702, %v2744
      %2746 = vst [vmem:[#allocation2 + $0x50] sm:$0x1] %v2745
      %v2747 = vld [vmem:[#allocation2 + $0x5c] sm:$0x1]
      %v2748 = vsel %vm2725, %v2704, %v2747
      %2749 = vst [vmem:[#allocation2 + $0x5c] sm:$0x1] %v2748
      %v2750 = vld [vmem:[#allocation2 + $0x68] sm:$0x1]
      %v2751 = vsel %vm2725, %v2706, %v2750
      %2752 = vst [vmem:[#allocation2 + $0x68] sm:$0x1] %v2751
      %v2753 = vld [vmem:[#allocation2 + $0x74] sm:$0x1]
      %v2754 = vsel %vm2725, %v2708, %v2753
      %2755 = vst [vmem:[#allocation2 + $0x74] sm:$0x1] %v2754
      %v2756 = vld [vmem:[#allocation2 + $0x80] sm:$0x1]
      %v2757 = vsel %vm2725, %v2710, %v2756
      %2758 = vst [vmem:[#allocation2 + $0x80] sm:$0x1] %v2757
      %v2759 = vld [vmem:[#allocation2 + $0x8c] sm:$0x1]
      %v2760 = vsel %vm2725, %v2712, %v2759
      %2761 = vst [vmem:[#allocation2 + $0x8c] sm:$0x1] %v2760
      // Predicated region
      $region61: #{_lambda_.1} parent=59 // pred_check
        %p2762 = pneg %p378
      $region62: #{_lambda_.1} parent=59 // pred_check_branch
        %2764 = sbr.rel (%p2762) target = $region64
      $region63: #{_lambda_.1} parent=59 // pred_region
        %s2765 = scalar_lea.vmem [#allocation2], 24
        %v2766 = vld [vmem:[%s2765] sm:$0xf]
        %v2767 = vld [vmem:[%s2765 + $0x4] sm:$0xf]
        %v2768 = vld [vmem:[%s2765 + $0x8] sm:$0x1]
        %s2769 = scalar_lea.vmem [#allocation2], 12
        %2770 = vst.msk [vmem:[%s2769] sm:$0xf] %vm2569, %v2766
        %2771 = vst.msk [vmem:[%s2769 + $0x4] sm:$0xf] %vm2569, %v2767
        %vm2772 = vcmask 516096
        %2773 = vst.msk [vmem:[%s2769 + $0x8] sm:$0x1] %vm2772, %v2768
      $region64: #{_lambda_.1} parent=59 // pred_fallthru
        _
      // Predicated region
      $region65: #{_lambda_.1} parent=59 // pred_check
        %p2774 = pneg %p379
      $region66: #{_lambda_.1} parent=59 // pred_check_branch
        %2776 = sbr.rel (%p2774) target = $region68
      $region67: #{_lambda_.1} parent=59 // pred_region
        %s2777 = scalar_lea.vmem [#allocation2], 108
        %v2778 = vld [vmem:[%s2777] sm:$0xf]
        %v2779 = vld [vmem:[%s2777 + $0x4] sm:$0xf]
        %v2780 = vld [vmem:[%s2777 + $0x8] sm:$0x1]
        %s2781 = scalar_lea.vmem [#allocation2], 120
        %2782 = vst.msk [vmem:[%s2781] sm:$0xf] %vm2569, %v2778
        %2783 = vst.msk [vmem:[%s2781 + $0x4] sm:$0xf] %vm2569, %v2779
        %vm2784 = vcmask 516096
        %2785 = vst.msk [vmem:[%s2781 + $0x8] sm:$0x1] %vm2784, %v2780
      $region68: #{_lambda_.1} parent=59 // pred_fallthru
        _
      %v2786 = vld [vmem:[#allocation2] sm:$0xf]
      %v2787 = vld [vmem:[#allocation2 + $0x4] sm:$0xf]
      %v2788 = vld [vmem:[#allocation2 + $0xc] sm:$0xf]
      %v2789 = vld [vmem:[#allocation2 + $0x10] sm:$0xf]
      %v2790 = vld [vmem:[#allocation2 + $0x18] sm:$0xf]
      %v2791 = vld [vmem:[#allocation2 + $0x1c] sm:$0xf]
      %v2792 = vld [vmem:[#allocation2 + $0x24] sm:$0xf]
      %v2793 = vld [vmem:[#allocation2 + $0x28] sm:$0xf]
      %v2794 = vld [vmem:[#allocation2 + $0x30] sm:$0xf]
      %v2795 = vld [vmem:[#allocation2 + $0x34] sm:$0xf]
      %v2796 = vld [vmem:[#allocation2 + $0x3c] sm:$0xf]
      %v2797 = vld [vmem:[#allocation2 + $0x40] sm:$0xf]
      %v2798 = vld [vmem:[#allocation2 + $0x48] sm:$0xf]
      %v2799 = vld [vmem:[#allocation2 + $0x4c] sm:$0xf]
      %v2800 = vld [vmem:[#allocation2 + $0x54] sm:$0xf]
      %v2801 = vld [vmem:[#allocation2 + $0x58] sm:$0xf]
      %v2802 = vld [vmem:[#allocation2 + $0x60] sm:$0xf]
      %v2803 = vld [vmem:[#allocation2 + $0x64] sm:$0xf]
      %v2804 = vld [vmem:[#allocation2 + $0x6c] sm:$0xf]
      %v2805 = vld [vmem:[#allocation2 + $0x70] sm:$0xf]
      %v2806 = vld [vmem:[#allocation2 + $0x78] sm:$0xf]
      %v2807 = vld [vmem:[#allocation2 + $0x7c] sm:$0xf]
      %v2808 = vld [vmem:[#allocation2 + $0x84] sm:$0xf]
      %v2809 = vld [vmem:[#allocation2 + $0x88] sm:$0xf]
      %v2810 = vld [vmem:[#allocation2 + $0x8] sm:$0x1]
      %v2811 = vld [vmem:[#allocation2 + $0x14] sm:$0x1]
      %v2812 = vld [vmem:[#allocation2 + $0x20] sm:$0x1]
      %v2813 = vld [vmem:[#allocation2 + $0x2c] sm:$0x1]
      %v2814 = vld [vmem:[#allocation2 + $0x38] sm:$0x1]
      %v2815 = vld [vmem:[#allocation2 + $0x44] sm:$0x1]
      %v2816 = vld [vmem:[#allocation2 + $0x50] sm:$0x1]
      %v2817 = vld [vmem:[#allocation2 + $0x5c] sm:$0x1]
      %v2818 = vld [vmem:[#allocation2 + $0x68] sm:$0x1]
      %v2819 = vld [vmem:[#allocation2 + $0x74] sm:$0x1]
      %v2820 = vld [vmem:[#allocation2 + $0x80] sm:$0x1]
      %v2821 = vld [vmem:[#allocation2 + $0x8c] sm:$0x1]
      %v2822 = vld [vmem:[#allocation2] sm:$0xe]
      %v2823 = vld [vmem:[#allocation2 + $0xc] sm:$0xe]
      %v2824 = vld [vmem:[#allocation2 + $0x18] sm:$0xe]
      %v2825 = vld [vmem:[#allocation2 + $0x24] sm:$0xe]
      %v2826 = vld [vmem:[#allocation2 + $0x30] sm:$0xe]
      %v2827 = vld [vmem:[#allocation2 + $0x3c] sm:$0xe]
      %v2828 = vld [vmem:[#allocation2 + $0x48] sm:$0xe]
      %v2829 = vld [vmem:[#allocation2 + $0x54] sm:$0xe]
      %v2830 = vld [vmem:[#allocation2 + $0x60] sm:$0xe]
      %v2831 = vld [vmem:[#allocation2 + $0x6c] sm:$0xe]
      %v2832 = vld [vmem:[#allocation2 + $0x78] sm:$0xe]
      %v2833 = vld [vmem:[#allocation2 + $0x84] sm:$0xe]
      %v2858 = vunpack.c.l.b16 %v2786
      %v2859 = vunpack.c.l.b16 %v2787
      %v2860 = vunpack.c.l.b16 %v2788
      %v2861 = vunpack.c.l.b16 %v2789
      %v2862 = vunpack.c.l.b16 %v2790
      %v2863 = vunpack.c.l.b16 %v2791
      %v2864 = vunpack.c.l.b16 %v2792
      %v2865 = vunpack.c.l.b16 %v2793
      %v2866 = vunpack.c.l.b16 %v2794
      %v2867 = vunpack.c.l.b16 %v2795
      %v2868 = vunpack.c.l.b16 %v2796
      %v2869 = vunpack.c.l.b16 %v2797
      %v2870 = vunpack.c.l.b16 %v2798
      %v2871 = vunpack.c.l.b16 %v2799
      %v2872 = vunpack.c.l.b16 %v2800
      %v2873 = vunpack.c.l.b16 %v2801
      %v2874 = vunpack.c.l.b16 %v2802
      %v2875 = vunpack.c.l.b16 %v2803
      %v2876 = vunpack.c.l.b16 %v2804
      %v2877 = vunpack.c.l.b16 %v2805
      %v2878 = vunpack.c.l.b16 %v2806
      %v2879 = vunpack.c.l.b16 %v2807
      %v2880 = vunpack.c.l.b16 %v2808
      %v2881 = vunpack.c.l.b16 %v2809
      %v2882 = vpack.c.b16 %v2859, %v2858
      %v2883 = vpack.c.b16 %v2861, %v2860
      %v2884 = vpack.c.b16 %v2863, %v2862
      %v2885 = vpack.c.b16 %v2865, %v2864
      %v2886 = vpack.c.b16 %v2867, %v2866
      %v2887 = vpack.c.b16 %v2869, %v2868
      %v2888 = vpack.c.b16 %v2871, %v2870
      %v2889 = vpack.c.b16 %v2873, %v2872
      %v2890 = vpack.c.b16 %v2875, %v2874
      %v2891 = vpack.c.b16 %v2877, %v2876
      %v2892 = vpack.c.b16 %v2879, %v2878
      %v2893 = vpack.c.b16 %v2881, %v2880
      %v2906 = vunpack.c.l.b16 %v2810
      %v2907 = vunpack.c.l.b16 %v2811
      %v2908 = vunpack.c.l.b16 %v2812
      %v2909 = vunpack.c.l.b16 %v2813
      %v2910 = vunpack.c.l.b16 %v2814
      %v2911 = vunpack.c.l.b16 %v2815
      %v2912 = vunpack.c.l.b16 %v2816
      %v2913 = vunpack.c.l.b16 %v2817
      %v2914 = vunpack.c.l.b16 %v2818
      %v2915 = vunpack.c.l.b16 %v2819
      %v2916 = vunpack.c.l.b16 %v2820
      %v2917 = vunpack.c.l.b16 %v2821
      %v2918 = vpack.c.b16 %v2906, %v2906
      %v2919 = vpack.c.b16 %v2907, %v2907
      %v2920 = vpack.c.b16 %v2908, %v2908
      %v2921 = vpack.c.b16 %v2909, %v2909
      %v2922 = vpack.c.b16 %v2910, %v2910
      %v2923 = vpack.c.b16 %v2911, %v2911
      %v2924 = vpack.c.b16 %v2912, %v2912
      %v2925 = vpack.c.b16 %v2913, %v2913
      %v2926 = vpack.c.b16 %v2914, %v2914
      %v2927 = vpack.c.b16 %v2915, %v2915
      %v2928 = vpack.c.b16 %v2916, %v2916
      %v2929 = vpack.c.b16 %v2917, %v2917
      %v2931 = vshrl.u32 %v2882, 16
      %v2933 = vshll.u32 %v2882, 16
      %v2935 = vrot.slane %v2933, 1
      %v2936 = vor.u32 %v2931, %v2935
      %v2938 = vshll.u32 %v2918, 16
      %v2940 = vrot.slane %v2938, 1
      %v2941 = vsel %vm578, %v2936, %v2940
      %v2943 = vshrl.u32 %v2883, 16
      %v2945 = vshll.u32 %v2883, 16
      %v2947 = vrot.slane %v2945, 1
      %v2948 = vor.u32 %v2943, %v2947
      %v2950 = vshll.u32 %v2919, 16
      %v2952 = vrot.slane %v2950, 1
      %v2953 = vsel %vm578, %v2948, %v2952
      %v2955 = vshrl.u32 %v2884, 16
      %v2957 = vshll.u32 %v2884, 16
      %v2959 = vrot.slane %v2957, 1
      %v2960 = vor.u32 %v2955, %v2959
      %v2962 = vshll.u32 %v2920, 16
      %v2964 = vrot.slane %v2962, 1
      %v2965 = vsel %vm578, %v2960, %v2964
      %v2967 = vshrl.u32 %v2885, 16
      %v2969 = vshll.u32 %v2885, 16
      %v2971 = vrot.slane %v2969, 1
      %v2972 = vor.u32 %v2967, %v2971
      %v2974 = vshll.u32 %v2921, 16
      %v2976 = vrot.slane %v2974, 1
      %v2977 = vsel %vm578, %v2972, %v2976
      %v2979 = vshrl.u32 %v2886, 16
      %v2981 = vshll.u32 %v2886, 16
      %v2983 = vrot.slane %v2981, 1
      %v2984 = vor.u32 %v2979, %v2983
      %v2986 = vshll.u32 %v2922, 16
      %v2988 = vrot.slane %v2986, 1
      %v2989 = vsel %vm578, %v2984, %v2988
      %v2991 = vshrl.u32 %v2887, 16
      %v2993 = vshll.u32 %v2887, 16
      %v2995 = vrot.slane %v2993, 1
      %v2996 = vor.u32 %v2991, %v2995
      %v2998 = vshll.u32 %v2923, 16
      %v3000 = vrot.slane %v2998, 1
      %v3001 = vsel %vm578, %v2996, %v3000
      %v3003 = vshrl.u32 %v2888, 16
      %v3005 = vshll.u32 %v2888, 16
      %v3007 = vrot.slane %v3005, 1
      %v3008 = vor.u32 %v3003, %v3007
      %v3010 = vshll.u32 %v2924, 16
      %v3012 = vrot.slane %v3010, 1
      %v3013 = vsel %vm578, %v3008, %v3012
      %v3015 = vshrl.u32 %v2889, 16
      %v3017 = vshll.u32 %v2889, 16
      %v3019 = vrot.slane %v3017, 1
      %v3020 = vor.u32 %v3015, %v3019
      %v3022 = vshll.u32 %v2925, 16
      %v3024 = vrot.slane %v3022, 1
      %v3025 = vsel %vm578, %v3020, %v3024
      %v3027 = vshrl.u32 %v2890, 16
      %v3029 = vshll.u32 %v2890, 16
      %v3031 = vrot.slane %v3029, 1
      %v3032 = vor.u32 %v3027, %v3031
      %v3034 = vshll.u32 %v2926, 16
      %v3036 = vrot.slane %v3034, 1
      %v3037 = vsel %vm578, %v3032, %v3036
      %v3039 = vshrl.u32 %v2891, 16
      %v3041 = vshll.u32 %v2891, 16
      %v3043 = vrot.slane %v3041, 1
      %v3044 = vor.u32 %v3039, %v3043
      %v3046 = vshll.u32 %v2927, 16
      %v3048 = vrot.slane %v3046, 1
      %v3049 = vsel %vm578, %v3044, %v3048
      %v3051 = vshrl.u32 %v2892, 16
      %v3053 = vshll.u32 %v2892, 16
      %v3055 = vrot.slane %v3053, 1
      %v3056 = vor.u32 %v3051, %v3055
      %v3058 = vshll.u32 %v2928, 16
      %v3060 = vrot.slane %v3058, 1
      %v3061 = vsel %vm578, %v3056, %v3060
      %v3063 = vshrl.u32 %v2893, 16
      %v3065 = vshll.u32 %v2893, 16
      %v3067 = vrot.slane %v3065, 1
      %v3068 = vor.u32 %v3063, %v3067
      %v3070 = vshll.u32 %v2929, 16
      %v3072 = vrot.slane %v3070, 1
      %v3073 = vsel %vm578, %v3068, %v3072
      %3074 = vrot.lane.b32.xlu0 %v2941, 64
      %v3075 = vpop.permute.xlu0 %3074
      %3076 = vrot.lane.b32.xlu0 %v2953, 64
      %v3077 = vpop.permute.xlu0 %3076
      %3078 = vrot.lane.b32.xlu0 %v2965, 64
      %v3079 = vpop.permute.xlu0 %3078
      %3080 = vrot.lane.b32.xlu0 %v2977, 64
      %v3081 = vpop.permute.xlu0 %3080
      %3082 = vrot.lane.b32.xlu0 %v2989, 64
      %v3083 = vpop.permute.xlu0 %3082
      %3084 = vrot.lane.b32.xlu0 %v3001, 64
      %v3085 = vpop.permute.xlu0 %3084
      %3086 = vrot.lane.b32.xlu0 %v3013, 64
      %v3087 = vpop.permute.xlu0 %3086
      %3088 = vrot.lane.b32.xlu0 %v3025, 64
      %v3089 = vpop.permute.xlu0 %3088
      %3090 = vrot.lane.b32.xlu0 %v3037, 64
      %v3091 = vpop.permute.xlu0 %3090
      %3092 = vrot.lane.b32.xlu0 %v3049, 64
      %v3093 = vpop.permute.xlu0 %3092
      %3094 = vrot.lane.b32.xlu0 %v3061, 64
      %v3095 = vpop.permute.xlu0 %3094
      %3096 = vrot.lane.b32.xlu0 %v3073, 64
      %v3097 = vpop.permute.xlu0 %3096
      %v3110 = vunpack.c.l.b16 %v2822
      %v3111 = vunpack.c.l.b16 %v2823
      %v3112 = vunpack.c.l.b16 %v2824
      %v3113 = vunpack.c.l.b16 %v2825
      %v3114 = vunpack.c.l.b16 %v2826
      %v3115 = vunpack.c.l.b16 %v2827
      %v3116 = vunpack.c.l.b16 %v2828
      %v3117 = vunpack.c.l.b16 %v2829
      %v3118 = vunpack.c.l.b16 %v2830
      %v3119 = vunpack.c.l.b16 %v2831
      %v3120 = vunpack.c.l.b16 %v2832
      %v3121 = vunpack.c.l.b16 %v2833
      %v3122 = vpack.c.b16 %v2859, %v3110
      %v3123 = vpack.c.b16 %v2861, %v3111
      %v3124 = vpack.c.b16 %v2863, %v3112
      %v3125 = vpack.c.b16 %v2865, %v3113
      %v3126 = vpack.c.b16 %v2867, %v3114
      %v3127 = vpack.c.b16 %v2869, %v3115
      %v3128 = vpack.c.b16 %v2871, %v3116
      %v3129 = vpack.c.b16 %v2873, %v3117
      %v3130 = vpack.c.b16 %v2875, %v3118
      %v3131 = vpack.c.b16 %v2877, %v3119
      %v3132 = vpack.c.b16 %v2879, %v3120
      %v3133 = vpack.c.b16 %v2881, %v3121
      %v3134 = vrot.slane %v3122, 1
      %v3135 = vrot.slane %v2918, 1
      %v3136 = vsel %vm831, %v3134, %v3135
      %v3137 = vrot.slane %v3123, 1
      %v3138 = vrot.slane %v2919, 1
      %v3139 = vsel %vm831, %v3137, %v3138
      %v3140 = vrot.slane %v3124, 1
      %v3141 = vrot.slane %v2920, 1
      %v3142 = vsel %vm831, %v3140, %v3141
      %v3143 = vrot.slane %v3125, 1
      %v3144 = vrot.slane %v2921, 1
      %v3145 = vsel %vm831, %v3143, %v3144
      %v3146 = vrot.slane %v3126, 1
      %v3147 = vrot.slane %v2922, 1
      %v3148 = vsel %vm831, %v3146, %v3147
      %v3149 = vrot.slane %v3127, 1
      %v3150 = vrot.slane %v2923, 1
      %v3151 = vsel %vm831, %v3149, %v3150
      %v3152 = vrot.slane %v3128, 1
      %v3153 = vrot.slane %v2924, 1
      %v3154 = vsel %vm831, %v3152, %v3153
      %v3155 = vrot.slane %v3129, 1
      %v3156 = vrot.slane %v2925, 1
      %v3157 = vsel %vm831, %v3155, %v3156
      %v3158 = vrot.slane %v3130, 1
      %v3159 = vrot.slane %v2926, 1
      %v3160 = vsel %vm831, %v3158, %v3159
      %v3161 = vrot.slane %v3131, 1
      %v3162 = vrot.slane %v2927, 1
      %v3163 = vsel %vm831, %v3161, %v3162
      %v3164 = vrot.slane %v3132, 1
      %v3165 = vrot.slane %v2928, 1
      %v3166 = vsel %vm831, %v3164, %v3165
      %v3167 = vrot.slane %v3133, 1
      %v3168 = vrot.slane %v2929, 1
      %v3169 = vsel %vm831, %v3167, %v3168
      %vm3170 = vcmask 523264
      %v3172 = vsel %vm3170, %v2882, %v3075
      %v3175 = vsel %vm3170, %v2883, %v3077
      %v3178 = vsel %vm3170, %v2884, %v3079
      %v3181 = vsel %vm3170, %v2885, %v3081
      %v3184 = vsel %vm3170, %v2886, %v3083
      %v3187 = vsel %vm3170, %v2887, %v3085
      %v3190 = vsel %vm3170, %v2888, %v3087
      %v3193 = vsel %vm3170, %v2889, %v3089
      %v3196 = vsel %vm3170, %v2890, %v3091
      %v3199 = vsel %vm3170, %v2891, %v3093
      %v3202 = vsel %vm3170, %v2892, %v3095
      %v3205 = vsel %vm3170, %v2893, %v3097
      %v3207 = vld [vmem:[%s2] sm:$0xff]
      %v3208 = vld [vmem:[%s2 + $0x8] sm:$0xff]
      %v3209 = vld [vmem:[%s2 + $0x10] sm:$0xff]
      %v3210 = vld [vmem:[%s2 + $0x18] sm:$0xff]
      %v3211 = vld [vmem:[%s2 + $0x20] sm:$0xff]
      %v3212 = vld [vmem:[%s2 + $0x28] sm:$0xff]
      %v3213 = vld [vmem:[%s2 + $0x30] sm:$0xff]
      %v3214 = vld [vmem:[%s2 + $0x38] sm:$0xff]
      %v3215 = vld [vmem:[%s2 + $0x40] sm:$0xff]
      %v3216 = vld [vmem:[%s2 + $0x48] sm:$0xff]
      %v3217 = vld [vmem:[%s2 + $0x50] sm:$0xff]
      %v3218 = vld [vmem:[%s2 + $0x58] sm:$0xff]
      %v3219 = vld [vmem:[%s2 + $0x60] sm:$0xff]
      %v3220 = vld [vmem:[%s2 + $0x68] sm:$0xff]
      %v3221 = vld [vmem:[%s2 + $0x70] sm:$0xff]
      %v3222 = vld [vmem:[%s2 + $0x78] sm:$0xff]
      %v3223 = vld [vmem:[%s2 + $0x80] sm:$0xff]
      %v3224 = vld [vmem:[%s2 + $0x88] sm:$0xff]
      %v3225 = vld [vmem:[%s2 + $0x90] sm:$0xff]
      %v3226 = vld [vmem:[%s2 + $0x98] sm:$0xff]
      %v3227 = vld [vmem:[%s2 + $0xa0] sm:$0xff]
      %v3228 = vld [vmem:[%s2 + $0xa8] sm:$0xff]
      %v3229 = vld [vmem:[%s2 + $0xb0] sm:$0xff]
      %v3230 = vld [vmem:[%s2 + $0xb8] sm:$0xff]
      %v3255 = vunpack.c.l.b16 %v3207
      %v3256 = vunpack.c.h.b16 %v3207
      %v3257 = vunpack.c.l.b16 %v3208
      %v3258 = vunpack.c.h.b16 %v3208
      %v3259 = vunpack.c.l.b16 %v3209
      %v3260 = vunpack.c.h.b16 %v3209
      %v3261 = vunpack.c.l.b16 %v3210
      %v3262 = vunpack.c.h.b16 %v3210
      %v3263 = vunpack.c.l.b16 %v3211
      %v3264 = vunpack.c.h.b16 %v3211
      %v3265 = vunpack.c.l.b16 %v3212
      %v3266 = vunpack.c.h.b16 %v3212
      %v3267 = vunpack.c.l.b16 %v3213
      %v3268 = vunpack.c.h.b16 %v3213
      %v3269 = vunpack.c.l.b16 %v3214
      %v3270 = vunpack.c.h.b16 %v3214
      %v3271 = vunpack.c.l.b16 %v3215
      %v3272 = vunpack.c.h.b16 %v3215
      %v3273 = vunpack.c.l.b16 %v3216
      %v3274 = vunpack.c.h.b16 %v3216
      %v3275 = vunpack.c.l.b16 %v3217
      %v3276 = vunpack.c.h.b16 %v3217
      %v3277 = vunpack.c.l.b16 %v3218
      %v3278 = vunpack.c.h.b16 %v3218
      %v3279 = vunpack.c.l.b16 %v3219
      %v3280 = vunpack.c.h.b16 %v3219
      %v3281 = vunpack.c.l.b16 %v3220
      %v3282 = vunpack.c.h.b16 %v3220
      %v3283 = vunpack.c.l.b16 %v3221
      %v3284 = vunpack.c.h.b16 %v3221
      %v3285 = vunpack.c.l.b16 %v3222
      %v3286 = vunpack.c.h.b16 %v3222
      %v3287 = vunpack.c.l.b16 %v3223
      %v3288 = vunpack.c.h.b16 %v3223
      %v3289 = vunpack.c.l.b16 %v3224
      %v3290 = vunpack.c.h.b16 %v3224
      %v3291 = vunpack.c.l.b16 %v3225
      %v3292 = vunpack.c.h.b16 %v3225
      %v3293 = vunpack.c.l.b16 %v3226
      %v3294 = vunpack.c.h.b16 %v3226
      %v3295 = vunpack.c.l.b16 %v3227
      %v3296 = vunpack.c.h.b16 %v3227
      %v3297 = vunpack.c.l.b16 %v3228
      %v3298 = vunpack.c.h.b16 %v3228
      %v3299 = vunpack.c.l.b16 %v3229
      %v3300 = vunpack.c.h.b16 %v3229
      %v3301 = vunpack.c.l.b16 %v3230
      %v3302 = vunpack.c.h.b16 %v3230
      %v3303 = vpack.c.b16 %v3257, %v3255
      %v3304 = vpack.c.b16 %v3258, %v3256
      %v3305 = vpack.c.b16 %v3261, %v3259
      %v3306 = vpack.c.b16 %v3262, %v3260
      %v3307 = vpack.c.b16 %v3265, %v3263
      %v3308 = vpack.c.b16 %v3266, %v3264
      %v3309 = vpack.c.b16 %v3269, %v3267
      %v3310 = vpack.c.b16 %v3270, %v3268
      %v3311 = vpack.c.b16 %v3273, %v3271
      %v3312 = vpack.c.b16 %v3274, %v3272
      %v3313 = vpack.c.b16 %v3277, %v3275
      %v3314 = vpack.c.b16 %v3278, %v3276
      %v3315 = vpack.c.b16 %v3281, %v3279
      %v3316 = vpack.c.b16 %v3282, %v3280
      %v3317 = vpack.c.b16 %v3285, %v3283
      %v3318 = vpack.c.b16 %v3286, %v3284
      %v3319 = vpack.c.b16 %v3289, %v3287
      %v3320 = vpack.c.b16 %v3290, %v3288
      %v3321 = vpack.c.b16 %v3293, %v3291
      %v3322 = vpack.c.b16 %v3294, %v3292
      %v3323 = vpack.c.b16 %v3297, %v3295
      %v3324 = vpack.c.b16 %v3298, %v3296
      %v3325 = vpack.c.b16 %v3301, %v3299
      %v3326 = vpack.c.b16 %v3302, %v3300
      %v3352 = vsel %vm3170, %v3136, 0
      %v3355 = vsel %vm3170, %v3139, 0
      %v3358 = vsel %vm3170, %v3142, 0
      %v3361 = vsel %vm3170, %v3145, 0
      %v3364 = vsel %vm3170, %v3148, 0
      %v3367 = vsel %vm3170, %v3151, 0
      %v3370 = vsel %vm3170, %v3154, 0
      %v3373 = vsel %vm3170, %v3157, 0
      %v3376 = vsel %vm3170, %v3160, 0
      %v3379 = vsel %vm3170, %v3163, 0
      %v3382 = vsel %vm3170, %v3166, 0
      %v3385 = vsel %vm3170, %v3169, 0
      %3387 = vmatprep.subr.bf16.mxu0 %v3304
      %3388 = vmatpush1.bf16.msra.mxu0 %v3303
      %3389 = vmatprep.subr.bf16.mxu0 %v3306
      %3390 = vmatpush1.bf16.msra.mxu0 %v3305
      %3391 = vmatprep.subr.bf16.mxu0 %v3308
      %3392 = vmatpush1.bf16.msra.mxu0 %v3307
      %3393 = vmatprep.subr.bf16.mxu0 %v3310
      %3394 = vmatpush1.bf16.msra.mxu0 %v3309
      %3395 = vmatprep.subr.bf16.mxu0 %v3312
      %3396 = vmatpush1.bf16.msra.mxu0 %v3311
      %3397 = vmatprep.subr.bf16.mxu0 %v3314
      %3398 = vmatpush1.bf16.msra.mxu0 %v3313
      %3399 = vmatprep.subr.bf16.mxu0 %v3316
      %3400 = vmatpush1.bf16.msra.mxu0 %v3315
      %3401 = vmatprep.subr.bf16.mxu0 %v3318
      %3402 = vmatpush1.bf16.msra.mxu0 %v3317
      %3403 = vmatprep.subr.bf16.mxu0 %v3320
      %3404 = vmatpush1.bf16.msra.mxu0 %v3319
      %3405 = vmatprep.subr.bf16.mxu0 %v3322
      %3406 = vmatpush1.bf16.msra.mxu0 %v3321
      %3407 = vmatprep.subr.bf16.mxu0 %v3324
      %3408 = vmatpush1.bf16.msra.mxu0 %v3323
      %3409 = vmatprep.subr.bf16.mxu0 %v3326
      %3410 = vmatpush1.bf16.msra.mxu0 %v3325
      %3411 = vmatprep.subr.bf16.mxu0 0
      %3412 = vmatpush1.bf16.msra.mxu0 0
      %3413 = vmatprep.subr.bf16.mxu0 0
      %3414 = vmatpush1.bf16.msra.mxu0 0
      %3415 = vmatprep.subr.bf16.mxu0 0
      %3416 = vmatpush1.bf16.msra.mxu0 0
      %3417 = vmatprep.subr.bf16.mxu0 0
      %3418 = vmatpush1.bf16.msra.mxu0 0
      %3419 = vmatprep.mubr.bf16.mxu0 %v3352
      %3420 = vmatmul.mubr.bf16.gmra.mrb[0].mxu0 %v3172
      %v3421 = vpop.f32.mrb[0].mxu0
      %v3422 = vadd.f32 0.0, %v3421
      %v3423 = vpop.f32.mrb[0].mxu0
      %v3424 = vpop.f32.mrb[0].mxu0
      %v3425 = vadd.f32 0.0, %v3424
      %v3426 = vpop.f32.mrb[0].mxu0
      %3427 = vmatprep.mubr.bf16.mxu0 %v3355
      %3428 = vmatmul.mubr.bf16.gmra.mrb[0].mxu0 %v3175
      %v3429 = vpop.f32.mrb[0].mxu0
      %v3430 = vadd.f32 0.0, %v3429
      %v3431 = vpop.f32.mrb[0].mxu0
      %v3432 = vpop.f32.mrb[0].mxu0
      %v3433 = vadd.f32 0.0, %v3432
      %v3434 = vpop.f32.mrb[0].mxu0
      %3435 = vmatprep.mubr.bf16.mxu0 %v3358
      %3436 = vmatmul.mubr.bf16.gmra.mrb[0].mxu0 %v3178
      %v3437 = vpop.f32.mrb[0].mxu0
      %v3438 = vadd.f32 0.0, %v3437
      %v3439 = vpop.f32.mrb[0].mxu0
      %v3440 = vadd.f32 0.0, %v3439
      %v3441 = vpop.f32.mrb[0].mxu0
      %v3442 = vadd.f32 0.0, %v3441
      %v3443 = vpop.f32.mrb[0].mxu0
      %v3444 = vadd.f32 0.0, %v3443
      %3445 = vmatprep.mubr.bf16.mxu0 %v3361
      %3446 = vmatmul.mubr.bf16.gmra.mrb[0].mxu0 %v3181
      %v3447 = vpop.f32.mrb[0].mxu0
      %v3448 = vadd.f32 0.0, %v3447
      %v3449 = vpop.f32.mrb[0].mxu0
      %v3450 = vadd.f32 0.0, %v3449
      %v3451 = vpop.f32.mrb[0].mxu0
      %v3452 = vadd.f32 0.0, %v3451
      %v3453 = vpop.f32.mrb[0].mxu0
      %v3454 = vadd.f32 0.0, %v3453
      %3455 = vmatprep.mubr.bf16.mxu0 %v3364
      %3456 = vmatmul.mubr.bf16.gmra.mrb[0].mxu0 %v3184
      %v3457 = vpop.f32.mrb[0].mxu0
      %v3458 = vadd.f32 0.0, %v3457
      %v3459 = vpop.f32.mrb[0].mxu0
      %v3460 = vadd.f32 0.0, %v3459
      %v3461 = vpop.f32.mrb[0].mxu0
      %v3462 = vadd.f32 0.0, %v3461
      %v3463 = vpop.f32.mrb[0].mxu0
      %v3464 = vadd.f32 0.0, %v3463
      %3465 = vmatprep.mubr.bf16.mxu0 %v3367
      %3466 = vmatmul.mubr.bf16.gmra.mrb[0].mxu0 %v3187
      %v3467 = vpop.f32.mrb[0].mxu0
      %v3468 = vadd.f32 0.0, %v3467
      %v3469 = vpop.f32.mrb[0].mxu0
      %v3470 = vadd.f32 0.0, %v3469
      %v3471 = vpop.f32.mrb[0].mxu0
      %v3472 = vadd.f32 0.0, %v3471
      %v3473 = vpop.f32.mrb[0].mxu0
      %v3474 = vadd.f32 0.0, %v3473
      %3475 = vmatprep.mubr.bf16.mxu0 %v3370
      %3476 = vmatmul.mubr.bf16.gmra.mrb[0].mxu0 %v3190
      %v3477 = vpop.f32.mrb[0].mxu0
      %v3478 = vadd.f32 0.0, %v3477
      %v3479 = vpop.f32.mrb[0].mxu0
      %v3480 = vadd.f32 0.0, %v3479
      %v3481 = vpop.f32.mrb[0].mxu0
      %v3482 = vadd.f32 0.0, %v3481
      %v3483 = vpop.f32.mrb[0].mxu0
      %v3484 = vadd.f32 0.0, %v3483
      %3485 = vmatprep.mubr.bf16.mxu0 %v3373
      %3486 = vmatmul.mubr.bf16.gmra.mrb[0].mxu0 %v3193
      %v3487 = vpop.f32.mrb[0].mxu0
      %v3488 = vadd.f32 0.0, %v3487
      %v3489 = vpop.f32.mrb[0].mxu0
      %v3490 = vadd.f32 0.0, %v3489
      %v3491 = vpop.f32.mrb[0].mxu0
      %v3492 = vadd.f32 0.0, %v3491
      %v3493 = vpop.f32.mrb[0].mxu0
      %v3494 = vadd.f32 0.0, %v3493
      %3495 = vmatprep.mubr.bf16.mxu0 %v3376
      %3496 = vmatmul.mubr.bf16.gmra.mrb[0].mxu0 %v3196
      %v3497 = vpop.f32.mrb[0].mxu0
      %v3498 = vadd.f32 0.0, %v3497
      %v3499 = vpop.f32.mrb[0].mxu0
      %v3500 = vadd.f32 0.0, %v3499
      %v3501 = vpop.f32.mrb[0].mxu0
      %v3502 = vadd.f32 0.0, %v3501
      %v3503 = vpop.f32.mrb[0].mxu0
      %v3504 = vadd.f32 0.0, %v3503
      %3505 = vmatprep.mubr.bf16.mxu0 %v3379
      %3506 = vmatmul.mubr.bf16.gmra.mrb[0].mxu0 %v3199
      %v3507 = vpop.f32.mrb[0].mxu0
      %v3508 = vadd.f32 0.0, %v3507
      %v3509 = vpop.f32.mrb[0].mxu0
      %v3510 = vadd.f32 0.0, %v3509
      %v3511 = vpop.f32.mrb[0].mxu0
      %v3512 = vadd.f32 0.0, %v3511
      %v3513 = vpop.f32.mrb[0].mxu0
      %v3514 = vadd.f32 0.0, %v3513
      %3515 = vmatprep.mubr.bf16.mxu0 %v3382
      %3516 = vmatmul.mubr.bf16.gmra.mrb[0].mxu0 %v3202
      %v3517 = vpop.f32.mrb[0].mxu0
      %v3518 = vadd.f32 0.0, %v3517
      %v3519 = vpop.f32.mrb[0].mxu0
      %v3520 = vadd.f32 0.0, %v3519
      %v3521 = vpop.f32.mrb[0].mxu0
      %v3522 = vadd.f32 0.0, %v3521
      %v3523 = vpop.f32.mrb[0].mxu0
      %v3524 = vadd.f32 0.0, %v3523
      %3525 = vmatprep.mubr.bf16.mxu0 %v3385
      %3526 = vmatmul.mubr.bf16.gmra.mrb[0].mxu0 %v3205
      %v3527 = vpop.f32.mrb[0].mxu0
      %v3528 = vpop.f32.mrb[0].mxu0
      %v3529 = vadd.f32 0.0, %v3528
      %v3530 = vpop.f32.mrb[0].mxu0
      %v3531 = vpop.f32.mrb[0].mxu0
      %v3532 = vadd.f32 0.0, %v3531
      %3533 = vdwg.mxu0
      %3554 = vrot.lane.b32.xlu0 %v3430, 64
      %v3555 = vpop.permute.xlu0 %3554
      %3556 = vrot.lane.b32.xlu0 %v3433, 64
      %v3557 = vpop.permute.xlu0 %3556
      %3558 = vrot.lane.b32.xlu0 %v3438, 64
      %v3559 = vpop.permute.xlu0 %3558
      %3560 = vrot.lane.b32.xlu0 %v3442, 64
      %v3561 = vpop.permute.xlu0 %3560
      %3562 = vrot.lane.b32.xlu0 %v3448, 64
      %v3563 = vpop.permute.xlu0 %3562
      %3564 = vrot.lane.b32.xlu0 %v3452, 64
      %v3565 = vpop.permute.xlu0 %3564
      %3566 = vrot.lane.b32.xlu0 %v3458, 64
      %v3567 = vpop.permute.xlu0 %3566
      %3568 = vrot.lane.b32.xlu0 %v3462, 64
      %v3569 = vpop.permute.xlu0 %3568
      %3570 = vrot.lane.b32.xlu0 %v3468, 64
      %v3571 = vpop.permute.xlu0 %3570
      %3572 = vrot.lane.b32.xlu0 %v3472, 64
      %v3573 = vpop.permute.xlu0 %3572
      %3574 = vrot.lane.b32.xlu0 %v3478, 64
      %v3575 = vpop.permute.xlu0 %3574
      %3576 = vrot.lane.b32.xlu0 %v3482, 64
      %v3577 = vpop.permute.xlu0 %3576
      %3578 = vrot.lane.b32.xlu0 %v3488, 64
      %v3579 = vpop.permute.xlu0 %3578
      %3580 = vrot.lane.b32.xlu0 %v3492, 64
      %v3581 = vpop.permute.xlu0 %3580
      %3582 = vrot.lane.b32.xlu0 %v3498, 64
      %v3583 = vpop.permute.xlu0 %3582
      %3584 = vrot.lane.b32.xlu0 %v3502, 64
      %v3585 = vpop.permute.xlu0 %3584
      %3586 = vrot.lane.b32.xlu0 %v3508, 64
      %v3587 = vpop.permute.xlu0 %3586
      %3588 = vrot.lane.b32.xlu0 %v3512, 64
      %v3589 = vpop.permute.xlu0 %3588
      %3590 = vrot.lane.b32.xlu0 %v3518, 64
      %v3591 = vpop.permute.xlu0 %3590
      %3592 = vrot.lane.b32.xlu0 %v3522, 64
      %v3593 = vpop.permute.xlu0 %3592
      %v3614 = vadd.f32 %v3422, %v3555
      %v3615 = vadd.f32 %v3425, %v3557
      %v3616 = vadd.f32 %v3430, %v3559
      %v3617 = vadd.f32 %v3433, %v3561
      %v3618 = vadd.f32 %v3438, %v3563
      %v3619 = vadd.f32 %v3442, %v3565
      %v3620 = vadd.f32 %v3448, %v3567
      %v3621 = vadd.f32 %v3452, %v3569
      %v3622 = vadd.f32 %v3458, %v3571
      %v3623 = vadd.f32 %v3462, %v3573
      %v3624 = vadd.f32 %v3468, %v3575
      %v3625 = vadd.f32 %v3472, %v3577
      %v3626 = vadd.f32 %v3478, %v3579
      %v3627 = vadd.f32 %v3482, %v3581
      %v3628 = vadd.f32 %v3488, %v3583
      %v3629 = vadd.f32 %v3492, %v3585
      %v3630 = vadd.f32 %v3498, %v3587
      %v3631 = vadd.f32 %v3502, %v3589
      %v3632 = vadd.f32 %v3508, %v3591
      %v3633 = vadd.f32 %v3512, %v3593
      %v3634 = vadd.f32 %v3614, %v3440
      %v3635 = vadd.f32 %v3615, %v3444
      %v3636 = vadd.f32 %v3616, %v3450
      %v3637 = vadd.f32 %v3617, %v3454
      %v3638 = vadd.f32 %v3618, %v3460
      %v3639 = vadd.f32 %v3619, %v3464
      %v3640 = vadd.f32 %v3620, %v3470
      %v3641 = vadd.f32 %v3621, %v3474
      %v3642 = vadd.f32 %v3622, %v3480
      %v3643 = vadd.f32 %v3623, %v3484
      %v3644 = vadd.f32 %v3624, %v3490
      %v3645 = vadd.f32 %v3625, %v3494
      %v3646 = vadd.f32 %v3626, %v3500
      %v3647 = vadd.f32 %v3627, %v3504
      %v3648 = vadd.f32 %v3628, %v3510
      %v3649 = vadd.f32 %v3629, %v3514
      %v3650 = vadd.f32 %v3630, %v3520
      %v3651 = vadd.f32 %v3631, %v3524
      %v3652 = vadd.f32 %v3632, %v3529
      %v3653 = vadd.f32 %v3633, %v3532
      %v3654 = vld [vmem:[%s3] sm:$0x1]
      %v3656 = vlaneseq
      %v3657 = vshrl.u32 %v3656, 7
      %v3658 = vsub.s32 0, %v3657
      %v3659 = vrot.slane %v3654, %v3658
      %v3661 = vmul.f32 %v3634, %v3659
      %v3662 = vmul.f32 %v3635, %v3659
      %v3663 = vmul.f32 %v3636, %v3659
      %v3664 = vmul.f32 %v3637, %v3659
      %v3665 = vmul.f32 %v3638, %v3659
      %v3666 = vmul.f32 %v3639, %v3659
      %v3667 = vmul.f32 %v3640, %v3659
      %v3668 = vmul.f32 %v3641, %v3659
      %v3669 = vmul.f32 %v3642, %v3659
      %v3670 = vmul.f32 %v3643, %v3659
      %v3671 = vmul.f32 %v3644, %v3659
      %v3672 = vmul.f32 %v3645, %v3659
      %v3673 = vmul.f32 %v3646, %v3659
      %v3674 = vmul.f32 %v3647, %v3659
      %v3675 = vmul.f32 %v3648, %v3659
      %v3676 = vmul.f32 %v3649, %v3659
      %v3677 = vmul.f32 %v3650, %v3659
      %v3678 = vmul.f32 %v3651, %v3659
      %v3679 = vmul.f32 %v3652, %v3659
      %v3680 = vmul.f32 %v3653, %v3659
      %v3681 = vld [vmem:[%s4] sm:$0x1]
      %v3683 = vlaneseq
      %v3684 = vshrl.u32 %v3683, 7
      %v3685 = vsub.s32 0, %v3684
      %v3686 = vrot.slane %v3681, %v3685
      %v3688 = vadd.f32 %v3661, %v3686
      %v3689 = vadd.f32 %v3662, %v3686
      %v3690 = vadd.f32 %v3663, %v3686
      %v3691 = vadd.f32 %v3664, %v3686
      %v3692 = vadd.f32 %v3665, %v3686
      %v3693 = vadd.f32 %v3666, %v3686
      %v3694 = vadd.f32 %v3667, %v3686
      %v3695 = vadd.f32 %v3668, %v3686
      %v3696 = vadd.f32 %v3669, %v3686
      %v3697 = vadd.f32 %v3670, %v3686
      %v3698 = vadd.f32 %v3671, %v3686
      %v3699 = vadd.f32 %v3672, %v3686
      %v3700 = vadd.f32 %v3673, %v3686
      %v3701 = vadd.f32 %v3674, %v3686
      %v3702 = vadd.f32 %v3675, %v3686
      %v3703 = vadd.f32 %v3676, %v3686
      %v3704 = vadd.f32 %v3677, %v3686
      %v3705 = vadd.f32 %v3678, %v3686
      %v3706 = vadd.f32 %v3679, %v3686
      %v3707 = vadd.f32 %v3680, %v3686
      %v3708 = vmax.f32 %v3688, 0.0
      %v3709 = vmax.f32 %v3689, 0.0
      %v3710 = vmax.f32 %v3690, 0.0
      %v3711 = vmax.f32 %v3691, 0.0
      %v3712 = vmax.f32 %v3692, 0.0
      %v3713 = vmax.f32 %v3693, 0.0
      %v3714 = vmax.f32 %v3694, 0.0
      %v3715 = vmax.f32 %v3695, 0.0
      %v3716 = vmax.f32 %v3696, 0.0
      %v3717 = vmax.f32 %v3697, 0.0
      %v3718 = vmax.f32 %v3698, 0.0
      %v3719 = vmax.f32 %v3699, 0.0
      %v3720 = vmax.f32 %v3700, 0.0
      %v3721 = vmax.f32 %v3701, 0.0
      %v3722 = vmax.f32 %v3702, 0.0
      %v3723 = vmax.f32 %v3703, 0.0
      %v3724 = vmax.f32 %v3704, 0.0
      %v3725 = vmax.f32 %v3705, 0.0
      %v3726 = vmax.f32 %v3706, 0.0
      %v3727 = vmax.f32 %v3707, 0.0
      %v3728 = vpack.c.bf16 %v3709, %v3708
      %v3729 = vpack.c.bf16 %v3711, %v3710
      %v3730 = vpack.c.bf16 %v3713, %v3712
      %v3731 = vpack.c.bf16 %v3715, %v3714
      %v3732 = vpack.c.bf16 %v3717, %v3716
      %v3733 = vpack.c.bf16 %v3719, %v3718
      %v3734 = vpack.c.bf16 %v3721, %v3720
      %v3735 = vpack.c.bf16 %v3723, %v3722
      %v3736 = vpack.c.bf16 %v3725, %v3724
      %v3737 = vpack.c.bf16 %v3727, %v3726
      %s3738 = scalar_lea.vmem %s358, 216
      %v3739 = vld [vmem:[%s3738] sm:$0xf]
      %v3740 = vld [vmem:[%s3738 + $0x4] sm:$0xf]
      %v3741 = vld [vmem:[%s3738 + $0x8] sm:$0x7]
      %v3742 = vld [vmem:[%s3738 + $0xc] sm:$0xf]
      %v3743 = vld [vmem:[%s3738 + $0x10] sm:$0xf]
      %v3744 = vld [vmem:[%s3738 + $0x14] sm:$0x7]
      %v3745 = vld [vmem:[%s3738 + $0x18] sm:$0xf]
      %v3746 = vld [vmem:[%s3738 + $0x1c] sm:$0xf]
      %v3747 = vld [vmem:[%s3738 + $0x20] sm:$0x7]
      %v3748 = vld [vmem:[%s3738 + $0x24] sm:$0xf]
      %v3749 = vld [vmem:[%s3738 + $0x28] sm:$0xf]
      %v3750 = vld [vmem:[%s3738 + $0x2c] sm:$0x7]
      %v3751 = vld [vmem:[%s3738 + $0x30] sm:$0xf]
      %v3752 = vld [vmem:[%s3738 + $0x34] sm:$0xf]
      %v3753 = vld [vmem:[%s3738 + $0x38] sm:$0x7]
      %v3754 = vld [vmem:[%s3738 + $0x3c] sm:$0xf]
      %v3755 = vld [vmem:[%s3738 + $0x40] sm:$0xf]
      %v3756 = vld [vmem:[%s3738 + $0x44] sm:$0x7]
      %v3757 = vld [vmem:[%s3738 + $0x48] sm:$0xf]
      %v3758 = vld [vmem:[%s3738 + $0x4c] sm:$0xf]
      %v3759 = vld [vmem:[%s3738 + $0x50] sm:$0x7]
      %v3760 = vld [vmem:[%s3738 + $0x54] sm:$0xf]
      %v3761 = vld [vmem:[%s3738 + $0x58] sm:$0xf]
      %v3762 = vld [vmem:[%s3738 + $0x5c] sm:$0x7]
      %v3763 = vld [vmem:[%s3738 + $0x60] sm:$0xf]
      %v3764 = vld [vmem:[%s3738 + $0x64] sm:$0xf]
      %v3765 = vld [vmem:[%s3738 + $0x68] sm:$0x7]
      %v3766 = vld [vmem:[%s3738 + $0x6c] sm:$0xf]
      %v3767 = vld [vmem:[%s3738 + $0x70] sm:$0xf]
      %v3768 = vld [vmem:[%s3738 + $0x74] sm:$0x7]
      %v3769 = vld [vmem:[%s3738 + $0x78] sm:$0xf]
      %v3770 = vld [vmem:[%s3738 + $0x7c] sm:$0xf]
      %v3771 = vld [vmem:[%s3738 + $0x80] sm:$0x7]
      %v3772 = vld [vmem:[%s3738 + $0x84] sm:$0xf]
      %v3773 = vld [vmem:[%s3738 + $0x88] sm:$0xf]
      %v3774 = vld [vmem:[%s3738 + $0x8c] sm:$0x7]
      %v3775 = vld [vmem:[%s3738 + $0x90] sm:$0xf]
      %v3776 = vld [vmem:[%s3738 + $0x94] sm:$0xf]
      %v3777 = vld [vmem:[%s3738 + $0x98] sm:$0x7]
      %v3778 = vld [vmem:[%s3738 + $0x9c] sm:$0xf]
      %v3779 = vld [vmem:[%s3738 + $0xa0] sm:$0xf]
      %v3780 = vld [vmem:[%s3738 + $0xa4] sm:$0x7]
      %v3781 = vld [vmem:[%s3738 + $0xa8] sm:$0xf]
      %v3782 = vld [vmem:[%s3738 + $0xac] sm:$0xf]
      %v3783 = vld [vmem:[%s3738 + $0xb0] sm:$0x7]
      %v3784 = vld [vmem:[%s3738 + $0xb4] sm:$0xf]
      %v3785 = vld [vmem:[%s3738 + $0xb8] sm:$0xf]
      %v3786 = vld [vmem:[%s3738 + $0xbc] sm:$0x7]
      %v3787 = vld [vmem:[%s3738 + $0xc0] sm:$0xf]
      %v3788 = vld [vmem:[%s3738 + $0xc4] sm:$0xf]
      %v3789 = vld [vmem:[%s3738 + $0xc8] sm:$0x7]
      %v3790 = vld [vmem:[%s3738 + $0xcc] sm:$0xf]
      %v3791 = vld [vmem:[%s3738 + $0xd0] sm:$0xf]
      %v3792 = vld [vmem:[%s3738 + $0xd4] sm:$0x7]
      %v3829 = vunpack.c.l.b16 %v3739
      %v3830 = vunpack.c.l.b16 %v3740
      %v3831 = vunpack.c.l.b16 %v3742
      %v3832 = vunpack.c.l.b16 %v3743
      %v3833 = vunpack.c.l.b16 %v3745
      %v3834 = vunpack.c.l.b16 %v3746
      %v3835 = vunpack.c.l.b16 %v3748
      %v3836 = vunpack.c.l.b16 %v3749
      %v3837 = vunpack.c.l.b16 %v3751
      %v3838 = vunpack.c.l.b16 %v3752
      %v3839 = vunpack.c.l.b16 %v3754
      %v3840 = vunpack.c.l.b16 %v3755
      %v3841 = vunpack.c.l.b16 %v3757
      %v3842 = vunpack.c.l.b16 %v3758
      %v3843 = vunpack.c.l.b16 %v3760
      %v3844 = vunpack.c.l.b16 %v3761
      %v3845 = vunpack.c.l.b16 %v3763
      %v3846 = vunpack.c.l.b16 %v3764
      %v3847 = vunpack.c.l.b16 %v3766
      %v3848 = vunpack.c.l.b16 %v3767
      %v3849 = vunpack.c.l.b16 %v3769
      %v3850 = vunpack.c.l.b16 %v3770
      %v3851 = vunpack.c.l.b16 %v3772
      %v3852 = vunpack.c.l.b16 %v3773
      %v3853 = vunpack.c.l.b16 %v3775
      %v3854 = vunpack.c.l.b16 %v3776
      %v3855 = vunpack.c.l.b16 %v3778
      %v3856 = vunpack.c.l.b16 %v3779
      %v3857 = vunpack.c.l.b16 %v3781
      %v3858 = vunpack.c.l.b16 %v3782
      %v3859 = vunpack.c.l.b16 %v3784
      %v3860 = vunpack.c.l.b16 %v3785
      %v3861 = vunpack.c.l.b16 %v3787
      %v3862 = vunpack.c.l.b16 %v3788
      %v3863 = vunpack.c.l.b16 %v3790
      %v3864 = vunpack.c.l.b16 %v3791
      %v3865 = vpack.c.b16 %v3830, %v3829
      %v3866 = vpack.c.b16 %v3832, %v3831
      %v3867 = vpack.c.b16 %v3834, %v3833
      %v3868 = vpack.c.b16 %v3836, %v3835
      %v3869 = vpack.c.b16 %v3838, %v3837
      %v3870 = vpack.c.b16 %v3840, %v3839
      %v3871 = vpack.c.b16 %v3842, %v3841
      %v3872 = vpack.c.b16 %v3844, %v3843
      %v3873 = vpack.c.b16 %v3846, %v3845
      %v3874 = vpack.c.b16 %v3848, %v3847
      %v3875 = vpack.c.b16 %v3850, %v3849
      %v3876 = vpack.c.b16 %v3852, %v3851
      %v3877 = vpack.c.b16 %v3854, %v3853
      %v3878 = vpack.c.b16 %v3856, %v3855
      %v3879 = vpack.c.b16 %v3858, %v3857
      %v3880 = vpack.c.b16 %v3860, %v3859
      %v3881 = vpack.c.b16 %v3862, %v3861
      %v3882 = vpack.c.b16 %v3864, %v3863
      %v3901 = vunpack.c.l.b16 %v3741
      %v3902 = vunpack.c.l.b16 %v3744
      %v3903 = vunpack.c.l.b16 %v3747
      %v3904 = vunpack.c.l.b16 %v3750
      %v3905 = vunpack.c.l.b16 %v3753
      %v3906 = vunpack.c.l.b16 %v3756
      %v3907 = vunpack.c.l.b16 %v3759
      %v3908 = vunpack.c.l.b16 %v3762
      %v3909 = vunpack.c.l.b16 %v3765
      %v3910 = vunpack.c.l.b16 %v3768
      %v3911 = vunpack.c.l.b16 %v3771
      %v3912 = vunpack.c.l.b16 %v3774
      %v3913 = vunpack.c.l.b16 %v3777
      %v3914 = vunpack.c.l.b16 %v3780
      %v3915 = vunpack.c.l.b16 %v3783
      %v3916 = vunpack.c.l.b16 %v3786
      %v3917 = vunpack.c.l.b16 %v3789
      %v3918 = vunpack.c.l.b16 %v3792
      %v3919 = vpack.c.b16 %v3901, %v3901
      %v3920 = vpack.c.b16 %v3902, %v3902
      %v3921 = vpack.c.b16 %v3903, %v3903
      %v3922 = vpack.c.b16 %v3904, %v3904
      %v3923 = vpack.c.b16 %v3905, %v3905
      %v3924 = vpack.c.b16 %v3906, %v3906
      %v3925 = vpack.c.b16 %v3907, %v3907
      %v3926 = vpack.c.b16 %v3908, %v3908
      %v3927 = vpack.c.b16 %v3909, %v3909
      %v3928 = vpack.c.b16 %v3910, %v3910
      %v3929 = vpack.c.b16 %v3911, %v3911
      %v3930 = vpack.c.b16 %v3912, %v3912
      %v3931 = vpack.c.b16 %v3913, %v3913
      %v3932 = vpack.c.b16 %v3914, %v3914
      %v3933 = vpack.c.b16 %v3915, %v3915
      %v3934 = vpack.c.b16 %v3916, %v3916
      %v3935 = vpack.c.b16 %v3917, %v3917
      %v3936 = vpack.c.b16 %v3918, %v3918
      %v3938 = vshrl.u32 %v3865, 16
      %v3940 = vshll.u32 %v3865, 16
      %v3942 = vrot.slane %v3940, 1
      %v3943 = vor.u32 %v3938, %v3942
      %v3945 = vshll.u32 %v3919, 16
      %v3947 = vrot.slane %v3945, 1
      %v3948 = vsel %vm578, %v3943, %v3947
      %v3950 = vshrl.u32 %v3866, 16
      %v3952 = vshll.u32 %v3866, 16
      %v3954 = vrot.slane %v3952, 1
      %v3955 = vor.u32 %v3950, %v3954
      %v3957 = vshll.u32 %v3920, 16
      %v3959 = vrot.slane %v3957, 1
      %v3960 = vsel %vm578, %v3955, %v3959
      %v3962 = vshrl.u32 %v3867, 16
      %v3964 = vshll.u32 %v3867, 16
      %v3966 = vrot.slane %v3964, 1
      %v3967 = vor.u32 %v3962, %v3966
      %v3969 = vshll.u32 %v3921, 16
      %v3971 = vrot.slane %v3969, 1
      %v3972 = vsel %vm578, %v3967, %v3971
      %v3974 = vshrl.u32 %v3868, 16
      %v3976 = vshll.u32 %v3868, 16
      %v3978 = vrot.slane %v3976, 1
      %v3979 = vor.u32 %v3974, %v3978
      %v3981 = vshll.u32 %v3922, 16
      %v3983 = vrot.slane %v3981, 1
      %v3984 = vsel %vm578, %v3979, %v3983
      %v3986 = vshrl.u32 %v3869, 16
      %v3988 = vshll.u32 %v3869, 16
      %v3990 = vrot.slane %v3988, 1
      %v3991 = vor.u32 %v3986, %v3990
      %v3993 = vshll.u32 %v3923, 16
      %v3995 = vrot.slane %v3993, 1
      %v3996 = vsel %vm578, %v3991, %v3995
      %v3998 = vshrl.u32 %v3870, 16
      %v4000 = vshll.u32 %v3870, 16
      %v4002 = vrot.slane %v4000, 1
      %v4003 = vor.u32 %v3998, %v4002
      %v4005 = vshll.u32 %v3924, 16
      %v4007 = vrot.slane %v4005, 1
      %v4008 = vsel %vm578, %v4003, %v4007
      %v4010 = vshrl.u32 %v3871, 16
      %v4012 = vshll.u32 %v3871, 16
      %v4014 = vrot.slane %v4012, 1
      %v4015 = vor.u32 %v4010, %v4014
      %v4017 = vshll.u32 %v3925, 16
      %v4019 = vrot.slane %v4017, 1
      %v4020 = vsel %vm578, %v4015, %v4019
      %v4022 = vshrl.u32 %v3872, 16
      %v4024 = vshll.u32 %v3872, 16
      %v4026 = vrot.slane %v4024, 1
      %v4027 = vor.u32 %v4022, %v4026
      %v4029 = vshll.u32 %v3926, 16
      %v4031 = vrot.slane %v4029, 1
      %v4032 = vsel %vm578, %v4027, %v4031
      %v4034 = vshrl.u32 %v3873, 16
      %v4036 = vshll.u32 %v3873, 16
      %v4038 = vrot.slane %v4036, 1
      %v4039 = vor.u32 %v4034, %v4038
      %v4041 = vshll.u32 %v3927, 16
      %v4043 = vrot.slane %v4041, 1
      %v4044 = vsel %vm578, %v4039, %v4043
      %v4046 = vshrl.u32 %v3874, 16
      %v4048 = vshll.u32 %v3874, 16
      %v4050 = vrot.slane %v4048, 1
      %v4051 = vor.u32 %v4046, %v4050
      %v4053 = vshll.u32 %v3928, 16
      %v4055 = vrot.slane %v4053, 1
      %v4056 = vsel %vm578, %v4051, %v4055
      %v4058 = vshrl.u32 %v3875, 16
      %v4060 = vshll.u32 %v3875, 16
      %v4062 = vrot.slane %v4060, 1
      %v4063 = vor.u32 %v4058, %v4062
      %v4065 = vshll.u32 %v3929, 16
      %v4067 = vrot.slane %v4065, 1
      %v4068 = vsel %vm578, %v4063, %v4067
      %v4070 = vshrl.u32 %v3876, 16
      %v4072 = vshll.u32 %v3876, 16
      %v4074 = vrot.slane %v4072, 1
      %v4075 = vor.u32 %v4070, %v4074
      %v4077 = vshll.u32 %v3930, 16
      %v4079 = vrot.slane %v4077, 1
      %v4080 = vsel %vm578, %v4075, %v4079
      %v4082 = vshrl.u32 %v3877, 16
      %v4084 = vshll.u32 %v3877, 16
      %v4086 = vrot.slane %v4084, 1
      %v4087 = vor.u32 %v4082, %v4086
      %v4089 = vshll.u32 %v3931, 16
      %v4091 = vrot.slane %v4089, 1
      %v4092 = vsel %vm578, %v4087, %v4091
      %v4094 = vshrl.u32 %v3878, 16
      %v4096 = vshll.u32 %v3878, 16
      %v4098 = vrot.slane %v4096, 1
      %v4099 = vor.u32 %v4094, %v4098
      %v4101 = vshll.u32 %v3932, 16
      %v4103 = vrot.slane %v4101, 1
      %v4104 = vsel %vm578, %v4099, %v4103
      %v4106 = vshrl.u32 %v3879, 16
      %v4108 = vshll.u32 %v3879, 16
      %v4110 = vrot.slane %v4108, 1
      %v4111 = vor.u32 %v4106, %v4110
      %v4113 = vshll.u32 %v3933, 16
      %v4115 = vrot.slane %v4113, 1
      %v4116 = vsel %vm578, %v4111, %v4115
      %v4118 = vshrl.u32 %v3880, 16
      %v4120 = vshll.u32 %v3880, 16
      %v4122 = vrot.slane %v4120, 1
      %v4123 = vor.u32 %v4118, %v4122
      %v4125 = vshll.u32 %v3934, 16
      %v4127 = vrot.slane %v4125, 1
      %v4128 = vsel %vm578, %v4123, %v4127
      %v4130 = vshrl.u32 %v3881, 16
      %v4132 = vshll.u32 %v3881, 16
      %v4134 = vrot.slane %v4132, 1
      %v4135 = vor.u32 %v4130, %v4134
      %v4137 = vshll.u32 %v3935, 16
      %v4139 = vrot.slane %v4137, 1
      %v4140 = vsel %vm578, %v4135, %v4139
      %v4142 = vshrl.u32 %v3882, 16
      %v4144 = vshll.u32 %v3882, 16
      %v4146 = vrot.slane %v4144, 1
      %v4147 = vor.u32 %v4142, %v4146
      %v4149 = vshll.u32 %v3936, 16
      %v4151 = vrot.slane %v4149, 1
      %v4152 = vsel %vm578, %v4147, %v4151
      %4153 = vrot.lane.b32.xlu0 %v3948, 3
      %v4154 = vpop.permute.xlu0 %4153
      %4155 = vrot.lane.b32.xlu0 %v3960, 3
      %v4156 = vpop.permute.xlu0 %4155
      %4157 = vrot.lane.b32.xlu0 %v3972, 3
      %v4158 = vpop.permute.xlu0 %4157
      %4159 = vrot.lane.b32.xlu0 %v3984, 3
      %v4160 = vpop.permute.xlu0 %4159
      %4161 = vrot.lane.b32.xlu0 %v3996, 3
      %v4162 = vpop.permute.xlu0 %4161
      %4163 = vrot.lane.b32.xlu0 %v4008, 3
      %v4164 = vpop.permute.xlu0 %4163
      %4165 = vrot.lane.b32.xlu0 %v4020, 3
      %v4166 = vpop.permute.xlu0 %4165
      %4167 = vrot.lane.b32.xlu0 %v4032, 3
      %v4168 = vpop.permute.xlu0 %4167
      %4169 = vrot.lane.b32.xlu0 %v4044, 3
      %v4170 = vpop.permute.xlu0 %4169
      %4171 = vrot.lane.b32.xlu0 %v4056, 3
      %v4172 = vpop.permute.xlu0 %4171
      %4173 = vrot.lane.b32.xlu0 %v4068, 3
      %v4174 = vpop.permute.xlu0 %4173
      %4175 = vrot.lane.b32.xlu0 %v4080, 3
      %v4176 = vpop.permute.xlu0 %4175
      %4177 = vrot.lane.b32.xlu0 %v4092, 3
      %v4178 = vpop.permute.xlu0 %4177
      %4179 = vrot.lane.b32.xlu0 %v4104, 3
      %v4180 = vpop.permute.xlu0 %4179
      %4181 = vrot.lane.b32.xlu0 %v4116, 3
      %v4182 = vpop.permute.xlu0 %4181
      %4183 = vrot.lane.b32.xlu0 %v4128, 3
      %v4184 = vpop.permute.xlu0 %4183
      %4185 = vrot.lane.b32.xlu0 %v4140, 3
      %v4186 = vpop.permute.xlu0 %4185
      %4187 = vrot.lane.b32.xlu0 %v4152, 3
      %v4188 = vpop.permute.xlu0 %4187
      %v4189 = vrot.slane %v3865, 1
      %v4190 = vrot.slane %v3919, 1
      %v4191 = vsel %vm831, %v4189, %v4190
      %v4192 = vrot.slane %v3866, 1
      %v4193 = vrot.slane %v3920, 1
      %v4194 = vsel %vm831, %v4192, %v4193
      %v4195 = vrot.slane %v3867, 1
      %v4196 = vrot.slane %v3921, 1
      %v4197 = vsel %vm831, %v4195, %v4196
      %v4198 = vrot.slane %v3868, 1
      %v4199 = vrot.slane %v3922, 1
      %v4200 = vsel %vm831, %v4198, %v4199
      %v4201 = vrot.slane %v3869, 1
      %v4202 = vrot.slane %v3923, 1
      %v4203 = vsel %vm831, %v4201, %v4202
      %v4204 = vrot.slane %v3870, 1
      %v4205 = vrot.slane %v3924, 1
      %v4206 = vsel %vm831, %v4204, %v4205
      %v4207 = vrot.slane %v3871, 1
      %v4208 = vrot.slane %v3925, 1
      %v4209 = vsel %vm831, %v4207, %v4208
      %v4210 = vrot.slane %v3872, 1
      %v4211 = vrot.slane %v3926, 1
      %v4212 = vsel %vm831, %v4210, %v4211
      %v4213 = vrot.slane %v3873, 1
      %v4214 = vrot.slane %v3927, 1
      %v4215 = vsel %vm831, %v4213, %v4214
      %v4216 = vrot.slane %v3874, 1
      %v4217 = vrot.slane %v3928, 1
      %v4218 = vsel %vm831, %v4216, %v4217
      %v4219 = vrot.slane %v3875, 1
      %v4220 = vrot.slane %v3929, 1
      %v4221 = vsel %vm831, %v4219, %v4220
      %v4222 = vrot.slane %v3876, 1
      %v4223 = vrot.slane %v3930, 1
      %v4224 = vsel %vm831, %v4222, %v4223
      %v4225 = vrot.slane %v3877, 1
      %v4226 = vrot.slane %v3931, 1
      %v4227 = vsel %vm831, %v4225, %v4226
      %v4228 = vrot.slane %v3878, 1
      %v4229 = vrot.slane %v3932, 1
      %v4230 = vsel %vm831, %v4228, %v4229
      %v4231 = vrot.slane %v3879, 1
      %v4232 = vrot.slane %v3933, 1
      %v4233 = vsel %vm831, %v4231, %v4232
      %v4234 = vrot.slane %v3880, 1
      %v4235 = vrot.slane %v3934, 1
      %v4236 = vsel %vm831, %v4234, %v4235
      %v4237 = vrot.slane %v3881, 1
      %v4238 = vrot.slane %v3935, 1
      %v4239 = vsel %vm831, %v4237, %v4238
      %v4240 = vrot.slane %v3882, 1
      %v4241 = vrot.slane %v3936, 1
      %v4242 = vsel %vm831, %v4240, %v4241
      %4243 = vrot.lane.b32.xlu0 %v4191, 6
      %v4244 = vpop.permute.xlu0 %4243
      %4245 = vrot.lane.b32.xlu0 %v4194, 6
      %v4246 = vpop.permute.xlu0 %4245
      %4247 = vrot.lane.b32.xlu0 %v4197, 6
      %v4248 = vpop.permute.xlu0 %4247
      %4249 = vrot.lane.b32.xlu0 %v4200, 6
      %v4250 = vpop.permute.xlu0 %4249
      %4251 = vrot.lane.b32.xlu0 %v4203, 6
      %v4252 = vpop.permute.xlu0 %4251
      %4253 = vrot.lane.b32.xlu0 %v4206, 6
      %v4254 = vpop.permute.xlu0 %4253
      %4255 = vrot.lane.b32.xlu0 %v4209, 6
      %v4256 = vpop.permute.xlu0 %4255
      %4257 = vrot.lane.b32.xlu0 %v4212, 6
      %v4258 = vpop.permute.xlu0 %4257
      %4259 = vrot.lane.b32.xlu0 %v4215, 6
      %v4260 = vpop.permute.xlu0 %4259
      %4261 = vrot.lane.b32.xlu0 %v4218, 6
      %v4262 = vpop.permute.xlu0 %4261
      %4263 = vrot.lane.b32.xlu0 %v4221, 6
      %v4264 = vpop.permute.xlu0 %4263
      %4265 = vrot.lane.b32.xlu0 %v4224, 6
      %v4266 = vpop.permute.xlu0 %4265
      %4267 = vrot.lane.b32.xlu0 %v4227, 6
      %v4268 = vpop.permute.xlu0 %4267
      %4269 = vrot.lane.b32.xlu0 %v4230, 6
      %v4270 = vpop.permute.xlu0 %4269
      %4271 = vrot.lane.b32.xlu0 %v4233, 6
      %v4272 = vpop.permute.xlu0 %4271
      %4273 = vrot.lane.b32.xlu0 %v4236, 6
      %v4274 = vpop.permute.xlu0 %4273
      %4275 = vrot.lane.b32.xlu0 %v4239, 6
      %v4276 = vpop.permute.xlu0 %4275
      %4277 = vrot.lane.b32.xlu0 %v4242, 6
      %v4278 = vpop.permute.xlu0 %4277
      %v4279 = vrot.slane %v3938, 1
      %v4280 = vrot.slane %v3940, 2
      %v4281 = vor.u32 %v4279, %v4280
      %v4282 = vshrl.u32 %v3919, 16
      %v4284 = vrot.slane %v4282, 1
      %v4285 = vrot.slane %v3945, 2
      %v4286 = vor.u32 %v4284, %v4285
      %v4287 = vsel %vm922, %v4281, %v4286
      %v4288 = vrot.slane %v3950, 1
      %v4289 = vrot.slane %v3952, 2
      %v4290 = vor.u32 %v4288, %v4289
      %v4291 = vshrl.u32 %v3920, 16
      %v4293 = vrot.slane %v4291, 1
      %v4294 = vrot.slane %v3957, 2
      %v4295 = vor.u32 %v4293, %v4294
      %v4296 = vsel %vm922, %v4290, %v4295
      %v4297 = vrot.slane %v3962, 1
      %v4298 = vrot.slane %v3964, 2
      %v4299 = vor.u32 %v4297, %v4298
      %v4300 = vshrl.u32 %v3921, 16
      %v4302 = vrot.slane %v4300, 1
      %v4303 = vrot.slane %v3969, 2
      %v4304 = vor.u32 %v4302, %v4303
      %v4305 = vsel %vm922, %v4299, %v4304
      %v4306 = vrot.slane %v3974, 1
      %v4307 = vrot.slane %v3976, 2
      %v4308 = vor.u32 %v4306, %v4307
      %v4309 = vshrl.u32 %v3922, 16
      %v4311 = vrot.slane %v4309, 1
      %v4312 = vrot.slane %v3981, 2
      %v4313 = vor.u32 %v4311, %v4312
      %v4314 = vsel %vm922, %v4308, %v4313
      %v4315 = vrot.slane %v3986, 1
      %v4316 = vrot.slane %v3988, 2
      %v4317 = vor.u32 %v4315, %v4316
      %v4318 = vshrl.u32 %v3923, 16
      %v4320 = vrot.slane %v4318, 1
      %v4321 = vrot.slane %v3993, 2
      %v4322 = vor.u32 %v4320, %v4321
      %v4323 = vsel %vm922, %v4317, %v4322
      %v4324 = vrot.slane %v3998, 1
      %v4325 = vrot.slane %v4000, 2
      %v4326 = vor.u32 %v4324, %v4325
      %v4327 = vshrl.u32 %v3924, 16
      %v4329 = vrot.slane %v4327, 1
      %v4330 = vrot.slane %v4005, 2
      %v4331 = vor.u32 %v4329, %v4330
      %v4332 = vsel %vm922, %v4326, %v4331
      %v4333 = vrot.slane %v4010, 1
      %v4334 = vrot.slane %v4012, 2
      %v4335 = vor.u32 %v4333, %v4334
      %v4336 = vshrl.u32 %v3925, 16
      %v4338 = vrot.slane %v4336, 1
      %v4339 = vrot.slane %v4017, 2
      %v4340 = vor.u32 %v4338, %v4339
      %v4341 = vsel %vm922, %v4335, %v4340
      %v4342 = vrot.slane %v4022, 1
      %v4343 = vrot.slane %v4024, 2
      %v4344 = vor.u32 %v4342, %v4343
      %v4345 = vshrl.u32 %v3926, 16
      %v4347 = vrot.slane %v4345, 1
      %v4348 = vrot.slane %v4029, 2
      %v4349 = vor.u32 %v4347, %v4348
      %v4350 = vsel %vm922, %v4344, %v4349
      %v4351 = vrot.slane %v4034, 1
      %v4352 = vrot.slane %v4036, 2
      %v4353 = vor.u32 %v4351, %v4352
      %v4354 = vshrl.u32 %v3927, 16
      %v4356 = vrot.slane %v4354, 1
      %v4357 = vrot.slane %v4041, 2
      %v4358 = vor.u32 %v4356, %v4357
      %v4359 = vsel %vm922, %v4353, %v4358
      %v4360 = vrot.slane %v4046, 1
      %v4361 = vrot.slane %v4048, 2
      %v4362 = vor.u32 %v4360, %v4361
      %v4363 = vshrl.u32 %v3928, 16
      %v4365 = vrot.slane %v4363, 1
      %v4366 = vrot.slane %v4053, 2
      %v4367 = vor.u32 %v4365, %v4366
      %v4368 = vsel %vm922, %v4362, %v4367
      %v4369 = vrot.slane %v4058, 1
      %v4370 = vrot.slane %v4060, 2
      %v4371 = vor.u32 %v4369, %v4370
      %v4372 = vshrl.u32 %v3929, 16
      %v4374 = vrot.slane %v4372, 1
      %v4375 = vrot.slane %v4065, 2
      %v4376 = vor.u32 %v4374, %v4375
      %v4377 = vsel %vm922, %v4371, %v4376
      %v4378 = vrot.slane %v4070, 1
      %v4379 = vrot.slane %v4072, 2
      %v4380 = vor.u32 %v4378, %v4379
      %v4381 = vshrl.u32 %v3930, 16
      %v4383 = vrot.slane %v4381, 1
      %v4384 = vrot.slane %v4077, 2
      %v4385 = vor.u32 %v4383, %v4384
      %v4386 = vsel %vm922, %v4380, %v4385
      %v4387 = vrot.slane %v4082, 1
      %v4388 = vrot.slane %v4084, 2
      %v4389 = vor.u32 %v4387, %v4388
      %v4390 = vshrl.u32 %v3931, 16
      %v4392 = vrot.slane %v4390, 1
      %v4393 = vrot.slane %v4089, 2
      %v4394 = vor.u32 %v4392, %v4393
      %v4395 = vsel %vm922, %v4389, %v4394
      %v4396 = vrot.slane %v4094, 1
      %v4397 = vrot.slane %v4096, 2
      %v4398 = vor.u32 %v4396, %v4397
      %v4399 = vshrl.u32 %v3932, 16
      %v4401 = vrot.slane %v4399, 1
      %v4402 = vrot.slane %v4101, 2
      %v4403 = vor.u32 %v4401, %v4402
      %v4404 = vsel %vm922, %v4398, %v4403
      %v4405 = vrot.slane %v4106, 1
      %v4406 = vrot.slane %v4108, 2
      %v4407 = vor.u32 %v4405, %v4406
      %v4408 = vshrl.u32 %v3933, 16
      %v4410 = vrot.slane %v4408, 1
      %v4411 = vrot.slane %v4113, 2
      %v4412 = vor.u32 %v4410, %v4411
      %v4413 = vsel %vm922, %v4407, %v4412
      %v4414 = vrot.slane %v4118, 1
      %v4415 = vrot.slane %v4120, 2
      %v4416 = vor.u32 %v4414, %v4415
      %v4417 = vshrl.u32 %v3934, 16
      %v4419 = vrot.slane %v4417, 1
      %v4420 = vrot.slane %v4125, 2
      %v4421 = vor.u32 %v4419, %v4420
      %v4422 = vsel %vm922, %v4416, %v4421
      %v4423 = vrot.slane %v4130, 1
      %v4424 = vrot.slane %v4132, 2
      %v4425 = vor.u32 %v4423, %v4424
      %v4426 = vshrl.u32 %v3935, 16
      %v4428 = vrot.slane %v4426, 1
      %v4429 = vrot.slane %v4137, 2
      %v4430 = vor.u32 %v4428, %v4429
      %v4431 = vsel %vm922, %v4425, %v4430
      %v4432 = vrot.slane %v4142, 1
      %v4433 = vrot.slane %v4144, 2
      %v4434 = vor.u32 %v4432, %v4433
      %v4435 = vshrl.u32 %v3936, 16
      %v4437 = vrot.slane %v4435, 1
      %v4438 = vrot.slane %v4149, 2
      %v4439 = vor.u32 %v4437, %v4438
      %v4440 = vsel %vm922, %v4434, %v4439
      %4441 = vrot.lane.b32.xlu0 %v4287, 9
      %v4442 = vpop.permute.xlu0 %4441
      %4443 = vrot.lane.b32.xlu0 %v4296, 9
      %v4444 = vpop.permute.xlu0 %4443
      %4445 = vrot.lane.b32.xlu0 %v4305, 9
      %v4446 = vpop.permute.xlu0 %4445
      %4447 = vrot.lane.b32.xlu0 %v4314, 9
      %v4448 = vpop.permute.xlu0 %4447
      %4449 = vrot.lane.b32.xlu0 %v4323, 9
      %v4450 = vpop.permute.xlu0 %4449
      %4451 = vrot.lane.b32.xlu0 %v4332, 9
      %v4452 = vpop.permute.xlu0 %4451
      %4453 = vrot.lane.b32.xlu0 %v4341, 9
      %v4454 = vpop.permute.xlu0 %4453
      %4455 = vrot.lane.b32.xlu0 %v4350, 9
      %v4456 = vpop.permute.xlu0 %4455
      %4457 = vrot.lane.b32.xlu0 %v4359, 9
      %v4458 = vpop.permute.xlu0 %4457
      %4459 = vrot.lane.b32.xlu0 %v4368, 9
      %v4460 = vpop.permute.xlu0 %4459
      %4461 = vrot.lane.b32.xlu0 %v4377, 9
      %v4462 = vpop.permute.xlu0 %4461
      %4463 = vrot.lane.b32.xlu0 %v4386, 9
      %v4464 = vpop.permute.xlu0 %4463
      %4465 = vrot.lane.b32.xlu0 %v4395, 9
      %v4466 = vpop.permute.xlu0 %4465
      %4467 = vrot.lane.b32.xlu0 %v4404, 9
      %v4468 = vpop.permute.xlu0 %4467
      %4469 = vrot.lane.b32.xlu0 %v4413, 9
      %v4470 = vpop.permute.xlu0 %4469
      %4471 = vrot.lane.b32.xlu0 %v4422, 9
      %v4472 = vpop.permute.xlu0 %4471
      %4473 = vrot.lane.b32.xlu0 %v4431, 9
      %v4474 = vpop.permute.xlu0 %4473
      %4475 = vrot.lane.b32.xlu0 %v4440, 9
      %v4476 = vpop.permute.xlu0 %4475
      %v4477 = vrot.slane %v3865, 2
      %v4478 = vrot.slane %v3919, 2
      %v4479 = vsel %vm1121, %v4477, %v4478
      %v4480 = vrot.slane %v3866, 2
      %v4481 = vrot.slane %v3920, 2
      %v4482 = vsel %vm1121, %v4480, %v4481
      %v4483 = vrot.slane %v3867, 2
      %v4484 = vrot.slane %v3921, 2
      %v4485 = vsel %vm1121, %v4483, %v4484
      %v4486 = vrot.slane %v3868, 2
      %v4487 = vrot.slane %v3922, 2
      %v4488 = vsel %vm1121, %v4486, %v4487
      %v4489 = vrot.slane %v3869, 2
      %v4490 = vrot.slane %v3923, 2
      %v4491 = vsel %vm1121, %v4489, %v4490
      %v4492 = vrot.slane %v3870, 2
      %v4493 = vrot.slane %v3924, 2
      %v4494 = vsel %vm1121, %v4492, %v4493
      %v4495 = vrot.slane %v3871, 2
      %v4496 = vrot.slane %v3925, 2
      %v4497 = vsel %vm1121, %v4495, %v4496
      %v4498 = vrot.slane %v3872, 2
      %v4499 = vrot.slane %v3926, 2
      %v4500 = vsel %vm1121, %v4498, %v4499
      %v4501 = vrot.slane %v3873, 2
      %v4502 = vrot.slane %v3927, 2
      %v4503 = vsel %vm1121, %v4501, %v4502
      %v4504 = vrot.slane %v3874, 2
      %v4505 = vrot.slane %v3928, 2
      %v4506 = vsel %vm1121, %v4504, %v4505
      %v4507 = vrot.slane %v3875, 2
      %v4508 = vrot.slane %v3929, 2
      %v4509 = vsel %vm1121, %v4507, %v4508
      %v4510 = vrot.slane %v3876, 2
      %v4511 = vrot.slane %v3930, 2
      %v4512 = vsel %vm1121, %v4510, %v4511
      %v4513 = vrot.slane %v3877, 2
      %v4514 = vrot.slane %v3931, 2
      %v4515 = vsel %vm1121, %v4513, %v4514
      %v4516 = vrot.slane %v3878, 2
      %v4517 = vrot.slane %v3932, 2
      %v4518 = vsel %vm1121, %v4516, %v4517
      %v4519 = vrot.slane %v3879, 2
      %v4520 = vrot.slane %v3933, 2
      %v4521 = vsel %vm1121, %v4519, %v4520
      %v4522 = vrot.slane %v3880, 2
      %v4523 = vrot.slane %v3934, 2
      %v4524 = vsel %vm1121, %v4522, %v4523
      %v4525 = vrot.slane %v3881, 2
      %v4526 = vrot.slane %v3935, 2
      %v4527 = vsel %vm1121, %v4525, %v4526
      %v4528 = vrot.slane %v3882, 2
      %v4529 = vrot.slane %v3936, 2
      %v4530 = vsel %vm1121, %v4528, %v4529
      %4531 = vrot.lane.b32.xlu0 %v4479, 12
      %v4532 = vpop.permute.xlu0 %4531
      %4533 = vrot.lane.b32.xlu0 %v4482, 12
      %v4534 = vpop.permute.xlu0 %4533
      %4535 = vrot.lane.b32.xlu0 %v4485, 12
      %v4536 = vpop.permute.xlu0 %4535
      %4537 = vrot.lane.b32.xlu0 %v4488, 12
      %v4538 = vpop.permute.xlu0 %4537
      %4539 = vrot.lane.b32.xlu0 %v4491, 12
      %v4540 = vpop.permute.xlu0 %4539
      %4541 = vrot.lane.b32.xlu0 %v4494, 12
      %v4542 = vpop.permute.xlu0 %4541
      %4543 = vrot.lane.b32.xlu0 %v4497, 12
      %v4544 = vpop.permute.xlu0 %4543
      %4545 = vrot.lane.b32.xlu0 %v4500, 12
      %v4546 = vpop.permute.xlu0 %4545
      %4547 = vrot.lane.b32.xlu0 %v4503, 12
      %v4548 = vpop.permute.xlu0 %4547
      %4549 = vrot.lane.b32.xlu0 %v4506, 12
      %v4550 = vpop.permute.xlu0 %4549
      %4551 = vrot.lane.b32.xlu0 %v4509, 12
      %v4552 = vpop.permute.xlu0 %4551
      %4553 = vrot.lane.b32.xlu0 %v4512, 12
      %v4554 = vpop.permute.xlu0 %4553
      %4555 = vrot.lane.b32.xlu0 %v4515, 12
      %v4556 = vpop.permute.xlu0 %4555
      %4557 = vrot.lane.b32.xlu0 %v4518, 12
      %v4558 = vpop.permute.xlu0 %4557
      %4559 = vrot.lane.b32.xlu0 %v4521, 12
      %v4560 = vpop.permute.xlu0 %4559
      %4561 = vrot.lane.b32.xlu0 %v4524, 12
      %v4562 = vpop.permute.xlu0 %4561
      %4563 = vrot.lane.b32.xlu0 %v4527, 12
      %v4564 = vpop.permute.xlu0 %4563
      %4565 = vrot.lane.b32.xlu0 %v4530, 12
      %v4566 = vpop.permute.xlu0 %4565
      %v4567 = vrot.slane %v3938, 2
      %v4568 = vrot.slane %v3940, 3
      %v4569 = vor.u32 %v4567, %v4568
      %v4570 = vrot.slane %v4282, 2
      %v4571 = vrot.slane %v3945, 3
      %v4572 = vor.u32 %v4570, %v4571
      %v4573 = vsel %vm1212, %v4569, %v4572
      %v4574 = vrot.slane %v3950, 2
      %v4575 = vrot.slane %v3952, 3
      %v4576 = vor.u32 %v4574, %v4575
      %v4577 = vrot.slane %v4291, 2
      %v4578 = vrot.slane %v3957, 3
      %v4579 = vor.u32 %v4577, %v4578
      %v4580 = vsel %vm1212, %v4576, %v4579
      %v4581 = vrot.slane %v3962, 2
      %v4582 = vrot.slane %v3964, 3
      %v4583 = vor.u32 %v4581, %v4582
      %v4584 = vrot.slane %v4300, 2
      %v4585 = vrot.slane %v3969, 3
      %v4586 = vor.u32 %v4584, %v4585
      %v4587 = vsel %vm1212, %v4583, %v4586
      %v4588 = vrot.slane %v3974, 2
      %v4589 = vrot.slane %v3976, 3
      %v4590 = vor.u32 %v4588, %v4589
      %v4591 = vrot.slane %v4309, 2
      %v4592 = vrot.slane %v3981, 3
      %v4593 = vor.u32 %v4591, %v4592
      %v4594 = vsel %vm1212, %v4590, %v4593
      %v4595 = vrot.slane %v3986, 2
      %v4596 = vrot.slane %v3988, 3
      %v4597 = vor.u32 %v4595, %v4596
      %v4598 = vrot.slane %v4318, 2
      %v4599 = vrot.slane %v3993, 3
      %v4600 = vor.u32 %v4598, %v4599
      %v4601 = vsel %vm1212, %v4597, %v4600
      %v4602 = vrot.slane %v3998, 2
      %v4603 = vrot.slane %v4000, 3
      %v4604 = vor.u32 %v4602, %v4603
      %v4605 = vrot.slane %v4327, 2
      %v4606 = vrot.slane %v4005, 3
      %v4607 = vor.u32 %v4605, %v4606
      %v4608 = vsel %vm1212, %v4604, %v4607
      %v4609 = vrot.slane %v4010, 2
      %v4610 = vrot.slane %v4012, 3
      %v4611 = vor.u32 %v4609, %v4610
      %v4612 = vrot.slane %v4336, 2
      %v4613 = vrot.slane %v4017, 3
      %v4614 = vor.u32 %v4612, %v4613
      %v4615 = vsel %vm1212, %v4611, %v4614
      %v4616 = vrot.slane %v4022, 2
      %v4617 = vrot.slane %v4024, 3
      %v4618 = vor.u32 %v4616, %v4617
      %v4619 = vrot.slane %v4345, 2
      %v4620 = vrot.slane %v4029, 3
      %v4621 = vor.u32 %v4619, %v4620
      %v4622 = vsel %vm1212, %v4618, %v4621
      %v4623 = vrot.slane %v4034, 2
      %v4624 = vrot.slane %v4036, 3
      %v4625 = vor.u32 %v4623, %v4624
      %v4626 = vrot.slane %v4354, 2
      %v4627 = vrot.slane %v4041, 3
      %v4628 = vor.u32 %v4626, %v4627
      %v4629 = vsel %vm1212, %v4625, %v4628
      %v4630 = vrot.slane %v4046, 2
      %v4631 = vrot.slane %v4048, 3
      %v4632 = vor.u32 %v4630, %v4631
      %v4633 = vrot.slane %v4363, 2
      %v4634 = vrot.slane %v4053, 3
      %v4635 = vor.u32 %v4633, %v4634
      %v4636 = vsel %vm1212, %v4632, %v4635
      %v4637 = vrot.slane %v4058, 2
      %v4638 = vrot.slane %v4060, 3
      %v4639 = vor.u32 %v4637, %v4638
      %v4640 = vrot.slane %v4372, 2
      %v4641 = vrot.slane %v4065, 3
      %v4642 = vor.u32 %v4640, %v4641
      %v4643 = vsel %vm1212, %v4639, %v4642
      %v4644 = vrot.slane %v4070, 2
      %v4645 = vrot.slane %v4072, 3
      %v4646 = vor.u32 %v4644, %v4645
      %v4647 = vrot.slane %v4381, 2
      %v4648 = vrot.slane %v4077, 3
      %v4649 = vor.u32 %v4647, %v4648
      %v4650 = vsel %vm1212, %v4646, %v4649
      %v4651 = vrot.slane %v4082, 2
      %v4652 = vrot.slane %v4084, 3
      %v4653 = vor.u32 %v4651, %v4652
      %v4654 = vrot.slane %v4390, 2
      %v4655 = vrot.slane %v4089, 3
      %v4656 = vor.u32 %v4654, %v4655
      %v4657 = vsel %vm1212, %v4653, %v4656
      %v4658 = vrot.slane %v4094, 2
      %v4659 = vrot.slane %v4096, 3
      %v4660 = vor.u32 %v4658, %v4659
      %v4661 = vrot.slane %v4399, 2
      %v4662 = vrot.slane %v4101, 3
      %v4663 = vor.u32 %v4661, %v4662
      %v4664 = vsel %vm1212, %v4660, %v4663
      %v4665 = vrot.slane %v4106, 2
      %v4666 = vrot.slane %v4108, 3
      %v4667 = vor.u32 %v4665, %v4666
      %v4668 = vrot.slane %v4408, 2
      %v4669 = vrot.slane %v4113, 3
      %v4670 = vor.u32 %v4668, %v4669
      %v4671 = vsel %vm1212, %v4667, %v4670
      %v4672 = vrot.slane %v4118, 2
      %v4673 = vrot.slane %v4120, 3
      %v4674 = vor.u32 %v4672, %v4673
      %v4675 = vrot.slane %v4417, 2
      %v4676 = vrot.slane %v4125, 3
      %v4677 = vor.u32 %v4675, %v4676
      %v4678 = vsel %vm1212, %v4674, %v4677
      %v4679 = vrot.slane %v4130, 2
      %v4680 = vrot.slane %v4132, 3
      %v4681 = vor.u32 %v4679, %v4680
      %v4682 = vrot.slane %v4426, 2
      %v4683 = vrot.slane %v4137, 3
      %v4684 = vor.u32 %v4682, %v4683
      %v4685 = vsel %vm1212, %v4681, %v4684
      %v4686 = vrot.slane %v4142, 2
      %v4687 = vrot.slane %v4144, 3
      %v4688 = vor.u32 %v4686, %v4687
      %v4689 = vrot.slane %v4435, 2
      %v4690 = vrot.slane %v4149, 3
      %v4691 = vor.u32 %v4689, %v4690
      %v4692 = vsel %vm1212, %v4688, %v4691
      %4693 = vrot.lane.b32.xlu0 %v4573, 15
      %v4694 = vpop.permute.xlu0 %4693
      %4695 = vrot.lane.b32.xlu0 %v4580, 15
      %v4696 = vpop.permute.xlu0 %4695
      %4697 = vrot.lane.b32.xlu0 %v4587, 15
      %v4698 = vpop.permute.xlu0 %4697
      %4699 = vrot.lane.b32.xlu0 %v4594, 15
      %v4700 = vpop.permute.xlu0 %4699
      %4701 = vrot.lane.b32.xlu0 %v4601, 15
      %v4702 = vpop.permute.xlu0 %4701
      %4703 = vrot.lane.b32.xlu0 %v4608, 15
      %v4704 = vpop.permute.xlu0 %4703
      %4705 = vrot.lane.b32.xlu0 %v4615, 15
      %v4706 = vpop.permute.xlu0 %4705
      %4707 = vrot.lane.b32.xlu0 %v4622, 15
      %v4708 = vpop.permute.xlu0 %4707
      %4709 = vrot.lane.b32.xlu0 %v4629, 15
      %v4710 = vpop.permute.xlu0 %4709
      %4711 = vrot.lane.b32.xlu0 %v4636, 15
      %v4712 = vpop.permute.xlu0 %4711
      %4713 = vrot.lane.b32.xlu0 %v4643, 15
      %v4714 = vpop.permute.xlu0 %4713
      %4715 = vrot.lane.b32.xlu0 %v4650, 15
      %v4716 = vpop.permute.xlu0 %4715
      %4717 = vrot.lane.b32.xlu0 %v4657, 15
      %v4718 = vpop.permute.xlu0 %4717
      %4719 = vrot.lane.b32.xlu0 %v4664, 15
      %v4720 = vpop.permute.xlu0 %4719
      %4721 = vrot.lane.b32.xlu0 %v4671, 15
      %v4722 = vpop.permute.xlu0 %4721
      %4723 = vrot.lane.b32.xlu0 %v4678, 15
      %v4724 = vpop.permute.xlu0 %4723
      %4725 = vrot.lane.b32.xlu0 %v4685, 15
      %v4726 = vpop.permute.xlu0 %4725
      %4727 = vrot.lane.b32.xlu0 %v4692, 15
      %v4728 = vpop.permute.xlu0 %4727
      %v4729 = vrot.slane %v3865, 3
      %v4730 = vrot.slane %v3919, 3
      %v4731 = vsel %vm1375, %v4729, %v4730
      %v4732 = vrot.slane %v3866, 3
      %v4733 = vrot.slane %v3920, 3
      %v4734 = vsel %vm1375, %v4732, %v4733
      %v4735 = vrot.slane %v3867, 3
      %v4736 = vrot.slane %v3921, 3
      %v4737 = vsel %vm1375, %v4735, %v4736
      %v4738 = vrot.slane %v3868, 3
      %v4739 = vrot.slane %v3922, 3
      %v4740 = vsel %vm1375, %v4738, %v4739
      %v4741 = vrot.slane %v3869, 3
      %v4742 = vrot.slane %v3923, 3
      %v4743 = vsel %vm1375, %v4741, %v4742
      %v4744 = vrot.slane %v3870, 3
      %v4745 = vrot.slane %v3924, 3
      %v4746 = vsel %vm1375, %v4744, %v4745
      %v4747 = vrot.slane %v3871, 3
      %v4748 = vrot.slane %v3925, 3
      %v4749 = vsel %vm1375, %v4747, %v4748
      %v4750 = vrot.slane %v3872, 3
      %v4751 = vrot.slane %v3926, 3
      %v4752 = vsel %vm1375, %v4750, %v4751
      %v4753 = vrot.slane %v3873, 3
      %v4754 = vrot.slane %v3927, 3
      %v4755 = vsel %vm1375, %v4753, %v4754
      %v4756 = vrot.slane %v3874, 3
      %v4757 = vrot.slane %v3928, 3
      %v4758 = vsel %vm1375, %v4756, %v4757
      %v4759 = vrot.slane %v3875, 3
      %v4760 = vrot.slane %v3929, 3
      %v4761 = vsel %vm1375, %v4759, %v4760
      %v4762 = vrot.slane %v3876, 3
      %v4763 = vrot.slane %v3930, 3
      %v4764 = vsel %vm1375, %v4762, %v4763
      %v4765 = vrot.slane %v3877, 3
      %v4766 = vrot.slane %v3931, 3
      %v4767 = vsel %vm1375, %v4765, %v4766
      %v4768 = vrot.slane %v3878, 3
      %v4769 = vrot.slane %v3932, 3
      %v4770 = vsel %vm1375, %v4768, %v4769
      %v4771 = vrot.slane %v3879, 3
      %v4772 = vrot.slane %v3933, 3
      %v4773 = vsel %vm1375, %v4771, %v4772
      %v4774 = vrot.slane %v3880, 3
      %v4775 = vrot.slane %v3934, 3
      %v4776 = vsel %vm1375, %v4774, %v4775
      %v4777 = vrot.slane %v3881, 3
      %v4778 = vrot.slane %v3935, 3
      %v4779 = vsel %vm1375, %v4777, %v4778
      %v4780 = vrot.slane %v3882, 3
      %v4781 = vrot.slane %v3936, 3
      %v4782 = vsel %vm1375, %v4780, %v4781
      %4783 = vrot.lane.b32.xlu0 %v4731, 18
      %v4784 = vpop.permute.xlu0 %4783
      %4785 = vrot.lane.b32.xlu0 %v4734, 18
      %v4786 = vpop.permute.xlu0 %4785
      %4787 = vrot.lane.b32.xlu0 %v4737, 18
      %v4788 = vpop.permute.xlu0 %4787
      %4789 = vrot.lane.b32.xlu0 %v4740, 18
      %v4790 = vpop.permute.xlu0 %4789
      %4791 = vrot.lane.b32.xlu0 %v4743, 18
      %v4792 = vpop.permute.xlu0 %4791
      %4793 = vrot.lane.b32.xlu0 %v4746, 18
      %v4794 = vpop.permute.xlu0 %4793
      %4795 = vrot.lane.b32.xlu0 %v4749, 18
      %v4796 = vpop.permute.xlu0 %4795
      %4797 = vrot.lane.b32.xlu0 %v4752, 18
      %v4798 = vpop.permute.xlu0 %4797
      %4799 = vrot.lane.b32.xlu0 %v4755, 18
      %v4800 = vpop.permute.xlu0 %4799
      %4801 = vrot.lane.b32.xlu0 %v4758, 18
      %v4802 = vpop.permute.xlu0 %4801
      %4803 = vrot.lane.b32.xlu0 %v4761, 18
      %v4804 = vpop.permute.xlu0 %4803
      %4805 = vrot.lane.b32.xlu0 %v4764, 18
      %v4806 = vpop.permute.xlu0 %4805
      %4807 = vrot.lane.b32.xlu0 %v4767, 18
      %v4808 = vpop.permute.xlu0 %4807
      %4809 = vrot.lane.b32.xlu0 %v4770, 18
      %v4810 = vpop.permute.xlu0 %4809
      %4811 = vrot.lane.b32.xlu0 %v4773, 18
      %v4812 = vpop.permute.xlu0 %4811
      %4813 = vrot.lane.b32.xlu0 %v4776, 18
      %v4814 = vpop.permute.xlu0 %4813
      %4815 = vrot.lane.b32.xlu0 %v4779, 18
      %v4816 = vpop.permute.xlu0 %4815
      %4817 = vrot.lane.b32.xlu0 %v4782, 18
      %v4818 = vpop.permute.xlu0 %4817
      %v4820 = vsel %vm1466, %v3865, %v4154
      %v4822 = vsel %vm1466, %v3866, %v4156
      %v4824 = vsel %vm1466, %v3867, %v4158
      %v4826 = vsel %vm1466, %v3868, %v4160
      %v4828 = vsel %vm1466, %v3869, %v4162
      %v4830 = vsel %vm1466, %v3870, %v4164
      %v4832 = vsel %vm1466, %v3871, %v4166
      %v4834 = vsel %vm1466, %v3872, %v4168
      %v4836 = vsel %vm1466, %v3873, %v4170
      %v4838 = vsel %vm1466, %v3874, %v4172
      %v4840 = vsel %vm1466, %v3875, %v4174
      %v4842 = vsel %vm1466, %v3876, %v4176
      %v4844 = vsel %vm1466, %v3877, %v4178
      %v4846 = vsel %vm1466, %v3878, %v4180
      %v4848 = vsel %vm1466, %v3879, %v4182
      %v4850 = vsel %vm1466, %v3880, %v4184
      %v4852 = vsel %vm1466, %v3881, %v4186
      %v4854 = vsel %vm1466, %v3882, %v4188
      %v4856 = vsel %vm1503, %v4820, %v4244
      %v4858 = vsel %vm1503, %v4822, %v4246
      %v4860 = vsel %vm1503, %v4824, %v4248
      %v4862 = vsel %vm1503, %v4826, %v4250
      %v4864 = vsel %vm1503, %v4828, %v4252
      %v4866 = vsel %vm1503, %v4830, %v4254
      %v4868 = vsel %vm1503, %v4832, %v4256
      %v4870 = vsel %vm1503, %v4834, %v4258
      %v4872 = vsel %vm1503, %v4836, %v4260
      %v4874 = vsel %vm1503, %v4838, %v4262
      %v4876 = vsel %vm1503, %v4840, %v4264
      %v4878 = vsel %vm1503, %v4842, %v4266
      %v4880 = vsel %vm1503, %v4844, %v4268
      %v4882 = vsel %vm1503, %v4846, %v4270
      %v4884 = vsel %vm1503, %v4848, %v4272
      %v4886 = vsel %vm1503, %v4850, %v4274
      %v4888 = vsel %vm1503, %v4852, %v4276
      %v4890 = vsel %vm1503, %v4854, %v4278
      %v4892 = vsel %vm1540, %v4856, %v4442
      %v4894 = vsel %vm1540, %v4858, %v4444
      %v4896 = vsel %vm1540, %v4860, %v4446
      %v4898 = vsel %vm1540, %v4862, %v4448
      %v4900 = vsel %vm1540, %v4864, %v4450
      %v4902 = vsel %vm1540, %v4866, %v4452
      %v4904 = vsel %vm1540, %v4868, %v4454
      %v4906 = vsel %vm1540, %v4870, %v4456
      %v4908 = vsel %vm1540, %v4872, %v4458
      %v4910 = vsel %vm1540, %v4874, %v4460
      %v4912 = vsel %vm1540, %v4876, %v4462
      %v4914 = vsel %vm1540, %v4878, %v4464
      %v4916 = vsel %vm1540, %v4880, %v4466
      %v4918 = vsel %vm1540, %v4882, %v4468
      %v4920 = vsel %vm1540, %v4884, %v4470
      %v4922 = vsel %vm1540, %v4886, %v4472
      %v4924 = vsel %vm1540, %v4888, %v4474
      %v4926 = vsel %vm1540, %v4890, %v4476
      %v4928 = vsel %vm1577, %v4892, %v4532
      %v4930 = vsel %vm1577, %v4894, %v4534
      %v4932 = vsel %vm1577, %v4896, %v4536
      %v4934 = vsel %vm1577, %v4898, %v4538
      %v4936 = vsel %vm1577, %v4900, %v4540
      %v4938 = vsel %vm1577, %v4902, %v4542
      %v4940 = vsel %vm1577, %v4904, %v4544
      %v4942 = vsel %vm1577, %v4906, %v4546
      %v4944 = vsel %vm1577, %v4908, %v4548
      %v4946 = vsel %vm1577, %v4910, %v4550
      %v4948 = vsel %vm1577, %v4912, %v4552
      %v4950 = vsel %vm1577, %v4914, %v4554
      %v4952 = vsel %vm1577, %v4916, %v4556
      %v4954 = vsel %vm1577, %v4918, %v4558
      %v4956 = vsel %vm1577, %v4920, %v4560
      %v4958 = vsel %vm1577, %v4922, %v4562
      %v4960 = vsel %vm1577, %v4924, %v4564
      %v4962 = vsel %vm1577, %v4926, %v4566
      %v4964 = vsel %vm1614, %v4928, %v4694
      %v4966 = vsel %vm1614, %v4930, %v4696
      %v4968 = vsel %vm1614, %v4932, %v4698
      %v4970 = vsel %vm1614, %v4934, %v4700
      %v4972 = vsel %vm1614, %v4936, %v4702
      %v4974 = vsel %vm1614, %v4938, %v4704
      %v4976 = vsel %vm1614, %v4940, %v4706
      %v4978 = vsel %vm1614, %v4942, %v4708
      %v4980 = vsel %vm1614, %v4944, %v4710
      %v4982 = vsel %vm1614, %v4946, %v4712
      %v4984 = vsel %vm1614, %v4948, %v4714
      %v4986 = vsel %vm1614, %v4950, %v4716
      %v4988 = vsel %vm1614, %v4952, %v4718
      %v4990 = vsel %vm1614, %v4954, %v4720
      %v4992 = vsel %vm1614, %v4956, %v4722
      %v4994 = vsel %vm1614, %v4958, %v4724
      %v4996 = vsel %vm1614, %v4960, %v4726
      %v4998 = vsel %vm1614, %v4962, %v4728
      %v5000 = vsel %vm1651, %v4964, %v4784
      %v5002 = vsel %vm1651, %v4966, %v4786
      %v5004 = vsel %vm1651, %v4968, %v4788
      %v5006 = vsel %vm1651, %v4970, %v4790
      %v5008 = vsel %vm1651, %v4972, %v4792
      %v5010 = vsel %vm1651, %v4974, %v4794
      %v5012 = vsel %vm1651, %v4976, %v4796
      %v5014 = vsel %vm1651, %v4978, %v4798
      %v5016 = vsel %vm1651, %v4980, %v4800
      %v5018 = vsel %vm1651, %v4982, %v4802
      %v5020 = vsel %vm1651, %v4984, %v4804
      %v5022 = vsel %vm1651, %v4986, %v4806
      %v5024 = vsel %vm1651, %v4988, %v4808
      %v5026 = vsel %vm1651, %v4990, %v4810
      %v5028 = vsel %vm1651, %v4992, %v4812
      %v5030 = vsel %vm1651, %v4994, %v4814
      %v5032 = vsel %vm1651, %v4996, %v4816
      %v5034 = vsel %vm1651, %v4998, %v4818
      %5047 = vrot.lane.b32.xlu0 %v5002, 21
      %v5048 = vpop.permute.xlu0 %5047
      %5049 = vrot.lane.b32.xlu0 %v5004, 21
      %v5050 = vpop.permute.xlu0 %5049
      %5051 = vrot.lane.b32.xlu0 %v5006, 21
      %v5052 = vpop.permute.xlu0 %5051
      %5053 = vrot.lane.b32.xlu0 %v5008, 21
      %v5054 = vpop.permute.xlu0 %5053
      %5055 = vrot.lane.b32.xlu0 %v5010, 21
      %v5056 = vpop.permute.xlu0 %5055
      %5057 = vrot.lane.b32.xlu0 %v5012, 21
      %v5058 = vpop.permute.xlu0 %5057
      %5059 = vrot.lane.b32.xlu0 %v5014, 21
      %v5060 = vpop.permute.xlu0 %5059
      %5061 = vrot.lane.b32.xlu0 %v5016, 21
      %v5062 = vpop.permute.xlu0 %5061
      %5063 = vrot.lane.b32.xlu0 %v5018, 21
      %v5064 = vpop.permute.xlu0 %5063
      %5065 = vrot.lane.b32.xlu0 %v5020, 21
      %v5066 = vpop.permute.xlu0 %5065
      %5067 = vrot.lane.b32.xlu0 %v5022, 21
      %v5068 = vpop.permute.xlu0 %5067
      %5069 = vrot.lane.b32.xlu0 %v5024, 21
      %v5070 = vpop.permute.xlu0 %5069
      %5072 = vrot.lane.b32.xlu0 %v5004, 42
      %v5073 = vpop.permute.xlu0 %5072
      %5074 = vrot.lane.b32.xlu0 %v5006, 42
      %v5075 = vpop.permute.xlu0 %5074
      %5076 = vrot.lane.b32.xlu0 %v5008, 42
      %v5077 = vpop.permute.xlu0 %5076
      %5078 = vrot.lane.b32.xlu0 %v5010, 42
      %v5079 = vpop.permute.xlu0 %5078
      %5080 = vrot.lane.b32.xlu0 %v5012, 42
      %v5081 = vpop.permute.xlu0 %5080
      %5082 = vrot.lane.b32.xlu0 %v5014, 42
      %v5083 = vpop.permute.xlu0 %5082
      %5084 = vrot.lane.b32.xlu0 %v5016, 42
      %v5085 = vpop.permute.xlu0 %5084
      %5086 = vrot.lane.b32.xlu0 %v5018, 42
      %v5087 = vpop.permute.xlu0 %5086
      %5088 = vrot.lane.b32.xlu0 %v5020, 42
      %v5089 = vpop.permute.xlu0 %5088
      %5090 = vrot.lane.b32.xlu0 %v5022, 42
      %v5091 = vpop.permute.xlu0 %5090
      %5092 = vrot.lane.b32.xlu0 %v5024, 42
      %v5093 = vpop.permute.xlu0 %5092
      %5094 = vrot.lane.b32.xlu0 %v5026, 42
      %v5095 = vpop.permute.xlu0 %5094
      %5097 = vrot.lane.b32.xlu0 %v5006, 63
      %v5098 = vpop.permute.xlu0 %5097
      %5099 = vrot.lane.b32.xlu0 %v5008, 63
      %v5100 = vpop.permute.xlu0 %5099
      %5101 = vrot.lane.b32.xlu0 %v5010, 63
      %v5102 = vpop.permute.xlu0 %5101
      %5103 = vrot.lane.b32.xlu0 %v5012, 63
      %v5104 = vpop.permute.xlu0 %5103
      %5105 = vrot.lane.b32.xlu0 %v5014, 63
      %v5106 = vpop.permute.xlu0 %5105
      %5107 = vrot.lane.b32.xlu0 %v5016, 63
      %v5108 = vpop.permute.xlu0 %5107
      %5109 = vrot.lane.b32.xlu0 %v5018, 63
      %v5110 = vpop.permute.xlu0 %5109
      %5111 = vrot.lane.b32.xlu0 %v5020, 63
      %v5112 = vpop.permute.xlu0 %5111
      %5113 = vrot.lane.b32.xlu0 %v5022, 63
      %v5114 = vpop.permute.xlu0 %5113
      %5115 = vrot.lane.b32.xlu0 %v5024, 63
      %v5116 = vpop.permute.xlu0 %5115
      %5117 = vrot.lane.b32.xlu0 %v5026, 63
      %v5118 = vpop.permute.xlu0 %5117
      %5119 = vrot.lane.b32.xlu0 %v5028, 63
      %v5120 = vpop.permute.xlu0 %5119
      %5122 = vrot.lane.b32.xlu0 %v5008, 84
      %v5123 = vpop.permute.xlu0 %5122
      %5124 = vrot.lane.b32.xlu0 %v5010, 84
      %v5125 = vpop.permute.xlu0 %5124
      %5126 = vrot.lane.b32.xlu0 %v5012, 84
      %v5127 = vpop.permute.xlu0 %5126
      %5128 = vrot.lane.b32.xlu0 %v5014, 84
      %v5129 = vpop.permute.xlu0 %5128
      %5130 = vrot.lane.b32.xlu0 %v5016, 84
      %v5131 = vpop.permute.xlu0 %5130
      %5132 = vrot.lane.b32.xlu0 %v5018, 84
      %v5133 = vpop.permute.xlu0 %5132
      %5134 = vrot.lane.b32.xlu0 %v5020, 84
      %v5135 = vpop.permute.xlu0 %5134
      %5136 = vrot.lane.b32.xlu0 %v5022, 84
      %v5137 = vpop.permute.xlu0 %5136
      %5138 = vrot.lane.b32.xlu0 %v5024, 84
      %v5139 = vpop.permute.xlu0 %5138
      %5140 = vrot.lane.b32.xlu0 %v5026, 84
      %v5141 = vpop.permute.xlu0 %5140
      %5142 = vrot.lane.b32.xlu0 %v5028, 84
      %v5143 = vpop.permute.xlu0 %5142
      %5144 = vrot.lane.b32.xlu0 %v5030, 84
      %v5145 = vpop.permute.xlu0 %5144
      %5147 = vrot.lane.b32.xlu0 %v5010, 105
      %v5148 = vpop.permute.xlu0 %5147
      %5149 = vrot.lane.b32.xlu0 %v5012, 105
      %v5150 = vpop.permute.xlu0 %5149
      %5151 = vrot.lane.b32.xlu0 %v5014, 105
      %v5152 = vpop.permute.xlu0 %5151
      %5153 = vrot.lane.b32.xlu0 %v5016, 105
      %v5154 = vpop.permute.xlu0 %5153
      %5155 = vrot.lane.b32.xlu0 %v5018, 105
      %v5156 = vpop.permute.xlu0 %5155
      %5157 = vrot.lane.b32.xlu0 %v5020, 105
      %v5158 = vpop.permute.xlu0 %5157
      %5159 = vrot.lane.b32.xlu0 %v5022, 105
      %v5160 = vpop.permute.xlu0 %5159
      %5161 = vrot.lane.b32.xlu0 %v5024, 105
      %v5162 = vpop.permute.xlu0 %5161
      %5163 = vrot.lane.b32.xlu0 %v5026, 105
      %v5164 = vpop.permute.xlu0 %5163
      %5165 = vrot.lane.b32.xlu0 %v5028, 105
      %v5166 = vpop.permute.xlu0 %5165
      %5167 = vrot.lane.b32.xlu0 %v5030, 105
      %v5168 = vpop.permute.xlu0 %5167
      %5169 = vrot.lane.b32.xlu0 %v5032, 105
      %v5170 = vpop.permute.xlu0 %5169
      %5172 = vrot.lane.b32.xlu0 %v5012, 126
      %v5173 = vpop.permute.xlu0 %5172
      %5174 = vrot.lane.b32.xlu0 %v5014, 126
      %v5175 = vpop.permute.xlu0 %5174
      %5176 = vrot.lane.b32.xlu0 %v5016, 126
      %v5177 = vpop.permute.xlu0 %5176
      %5178 = vrot.lane.b32.xlu0 %v5018, 126
      %v5179 = vpop.permute.xlu0 %5178
      %5180 = vrot.lane.b32.xlu0 %v5020, 126
      %v5181 = vpop.permute.xlu0 %5180
      %5182 = vrot.lane.b32.xlu0 %v5022, 126
      %v5183 = vpop.permute.xlu0 %5182
      %5184 = vrot.lane.b32.xlu0 %v5024, 126
      %v5185 = vpop.permute.xlu0 %5184
      %5186 = vrot.lane.b32.xlu0 %v5026, 126
      %v5187 = vpop.permute.xlu0 %5186
      %5188 = vrot.lane.b32.xlu0 %v5028, 126
      %v5189 = vpop.permute.xlu0 %5188
      %5190 = vrot.lane.b32.xlu0 %v5030, 126
      %v5191 = vpop.permute.xlu0 %5190
      %5192 = vrot.lane.b32.xlu0 %v5032, 126
      %v5193 = vpop.permute.xlu0 %5192
      %5194 = vrot.lane.b32.xlu0 %v5034, 126
      %v5195 = vpop.permute.xlu0 %5194
      %v5197 = vsel %vm1849, %v5000, %v5048
      %v5199 = vsel %vm1849, %v5002, %v5050
      %v5201 = vsel %vm1849, %v5004, %v5052
      %v5203 = vsel %vm1849, %v5006, %v5054
      %v5205 = vsel %vm1849, %v5008, %v5056
      %v5207 = vsel %vm1849, %v5010, %v5058
      %v5209 = vsel %vm1849, %v5012, %v5060
      %v5211 = vsel %vm1849, %v5014, %v5062
      %v5213 = vsel %vm1849, %v5016, %v5064
      %v5215 = vsel %vm1849, %v5018, %v5066
      %v5217 = vsel %vm1849, %v5020, %v5068
      %v5219 = vsel %vm1849, %v5022, %v5070
      %v5221 = vsel %vm1874, %v5197, %v5073
      %v5223 = vsel %vm1874, %v5199, %v5075
      %v5225 = vsel %vm1874, %v5201, %v5077
      %v5227 = vsel %vm1874, %v5203, %v5079
      %v5229 = vsel %vm1874, %v5205, %v5081
      %v5231 = vsel %vm1874, %v5207, %v5083
      %v5233 = vsel %vm1874, %v5209, %v5085
      %v5235 = vsel %vm1874, %v5211, %v5087
      %v5237 = vsel %vm1874, %v5213, %v5089
      %v5239 = vsel %vm1874, %v5215, %v5091
      %v5241 = vsel %vm1874, %v5217, %v5093
      %v5243 = vsel %vm1874, %v5219, %v5095
      %v5245 = vsel %vm1899, %v5221, %v5098
      %v5247 = vsel %vm1899, %v5223, %v5100
      %v5249 = vsel %vm1899, %v5225, %v5102
      %v5251 = vsel %vm1899, %v5227, %v5104
      %v5253 = vsel %vm1899, %v5229, %v5106
      %v5255 = vsel %vm1899, %v5231, %v5108
      %v5257 = vsel %vm1899, %v5233, %v5110
      %v5259 = vsel %vm1899, %v5235, %v5112
      %v5261 = vsel %vm1899, %v5237, %v5114
      %v5263 = vsel %vm1899, %v5239, %v5116
      %v5265 = vsel %vm1899, %v5241, %v5118
      %v5267 = vsel %vm1899, %v5243, %v5120
      %v5269 = vsel %vm1924, %v5245, %v5123
      %v5271 = vsel %vm1924, %v5247, %v5125
      %v5273 = vsel %vm1924, %v5249, %v5127
      %v5275 = vsel %vm1924, %v5251, %v5129
      %v5277 = vsel %vm1924, %v5253, %v5131
      %v5279 = vsel %vm1924, %v5255, %v5133
      %v5281 = vsel %vm1924, %v5257, %v5135
      %v5283 = vsel %vm1924, %v5259, %v5137
      %v5285 = vsel %vm1924, %v5261, %v5139
      %v5287 = vsel %vm1924, %v5263, %v5141
      %v5289 = vsel %vm1924, %v5265, %v5143
      %v5291 = vsel %vm1924, %v5267, %v5145
      %v5293 = vsel %vm1949, %v5269, %v5148
      %v5295 = vsel %vm1949, %v5271, %v5150
      %v5297 = vsel %vm1949, %v5273, %v5152
      %v5299 = vsel %vm1949, %v5275, %v5154
      %v5301 = vsel %vm1949, %v5277, %v5156
      %v5303 = vsel %vm1949, %v5279, %v5158
      %v5305 = vsel %vm1949, %v5281, %v5160
      %v5307 = vsel %vm1949, %v5283, %v5162
      %v5309 = vsel %vm1949, %v5285, %v5164
      %v5311 = vsel %vm1949, %v5287, %v5166
      %v5313 = vsel %vm1949, %v5289, %v5168
      %v5315 = vsel %vm1949, %v5291, %v5170
      %v5317 = vsel %vm1974, %v5293, %v5173
      %v5320 = vsel %vm1974, %v5295, %v5175
      %v5323 = vsel %vm1974, %v5297, %v5177
      %v5326 = vsel %vm1974, %v5299, %v5179
      %v5329 = vsel %vm1974, %v5301, %v5181
      %v5332 = vsel %vm1974, %v5303, %v5183
      %v5335 = vsel %vm1974, %v5305, %v5185
      %v5338 = vsel %vm1974, %v5307, %v5187
      %v5341 = vsel %vm1974, %v5309, %v5189
      %v5344 = vsel %vm1974, %v5311, %v5191
      %v5347 = vsel %vm1974, %v5313, %v5193
      %v5350 = vsel %vm1974, %v5315, %v5195
      %v5352 = vld [vmem:[%s1] sm:$0xf]
      %v5353 = vld [vmem:[%s1 + $0x4] sm:$0xf]
      %v5354 = vld [vmem:[%s1 + $0x8] sm:$0xf]
      %v5355 = vld [vmem:[%s1 + $0xc] sm:$0xf]
      %v5356 = vld [vmem:[%s1 + $0x10] sm:$0xf]
      %v5357 = vld [vmem:[%s1 + $0x14] sm:$0xf]
      %v5358 = vld [vmem:[%s1 + $0x18] sm:$0xf]
      %v5359 = vld [vmem:[%s1 + $0x1c] sm:$0xf]
      %v5360 = vld [vmem:[%s1 + $0x20] sm:$0xf]
      %v5361 = vld [vmem:[%s1 + $0x24] sm:$0xf]
      %v5362 = vld [vmem:[%s1 + $0x28] sm:$0xf]
      %v5363 = vld [vmem:[%s1 + $0x2c] sm:$0xf]
      %v5364 = vld [vmem:[%s1 + $0x30] sm:$0xf]
      %v5365 = vld [vmem:[%s1 + $0x34] sm:$0xf]
      %v5366 = vld [vmem:[%s1 + $0x38] sm:$0xf]
      %v5367 = vld [vmem:[%s1 + $0x3c] sm:$0xf]
      %v5368 = vld [vmem:[%s1 + $0x40] sm:$0xf]
      %v5369 = vld [vmem:[%s1 + $0x44] sm:$0xf]
      %v5370 = vld [vmem:[%s1 + $0x48] sm:$0x3]
      %v5390 = vunpack.c.l.b16 %v5352
      %v5391 = vunpack.c.l.b16 %v5353
      %v5392 = vunpack.c.l.b16 %v5354
      %v5393 = vunpack.c.l.b16 %v5355
      %v5394 = vunpack.c.l.b16 %v5356
      %v5395 = vunpack.c.l.b16 %v5357
      %v5396 = vunpack.c.l.b16 %v5358
      %v5397 = vunpack.c.l.b16 %v5359
      %v5398 = vunpack.c.l.b16 %v5360
      %v5399 = vunpack.c.l.b16 %v5361
      %v5400 = vunpack.c.l.b16 %v5362
      %v5401 = vunpack.c.l.b16 %v5363
      %v5402 = vunpack.c.l.b16 %v5364
      %v5403 = vunpack.c.l.b16 %v5365
      %v5404 = vunpack.c.l.b16 %v5366
      %v5405 = vunpack.c.l.b16 %v5367
      %v5406 = vunpack.c.l.b16 %v5368
      %v5407 = vunpack.c.l.b16 %v5369
      %v5408 = vunpack.c.l.b16 %v5370
      %v5409 = vpack.c.b16 %v5391, %v5390
      %v5410 = vpack.c.b16 %v5393, %v5392
      %v5411 = vpack.c.b16 %v5395, %v5394
      %v5412 = vpack.c.b16 %v5397, %v5396
      %v5413 = vpack.c.b16 %v5399, %v5398
      %v5414 = vpack.c.b16 %v5401, %v5400
      %v5415 = vpack.c.b16 %v5403, %v5402
      %v5416 = vpack.c.b16 %v5405, %v5404
      %v5417 = vpack.c.b16 %v5407, %v5406
      %v5418 = vpack.c.b16 %v5408, %v5408
      %v5428 = vsel %vm2087, %v5173, 0
      %v5430 = vsel %vm2087, %v5175, 0
      %v5432 = vsel %vm2087, %v5177, 0
      %v5434 = vsel %vm2087, %v5179, 0
      %v5436 = vsel %vm2087, %v5181, 0
      %v5438 = vsel %vm2087, %v5183, 0
      %v5440 = vsel %vm2087, %v5185, 0
      %v5442 = vsel %vm2087, %v5187, 0
      %v5444 = vsel %vm2087, %v5189, 0
      %v5446 = vsel %vm2087, %v5191, 0
      %v5448 = vsel %vm2087, %v5193, 0
      %v5450 = vsel %vm2087, %v5195, 0
      %v5453 = vand.u32 %v5418, %v2115
      %5455 = vmatprep.subr.bf16.mxu0 0
      %5456 = vmatpush1.bf16.msra.mxu0 %v5409
      %5457 = vmatprep.subr.bf16.mxu0 0
      %5458 = vmatpush1.bf16.msra.mxu0 %v5410
      %5459 = vmatprep.subr.bf16.mxu0 0
      %5460 = vmatpush1.bf16.msra.mxu0 %v5411
      %5461 = vmatprep.subr.bf16.mxu0 0
      %5462 = vmatpush1.bf16.msra.mxu0 %v5412
      %5463 = vmatprep.subr.bf16.mxu0 0
      %5464 = vmatpush1.bf16.msra.mxu0 %v5413
      %5465 = vmatprep.subr.bf16.mxu0 0
      %5466 = vmatpush1.bf16.msra.mxu0 %v5414
      %5467 = vmatprep.subr.bf16.mxu0 0
      %5468 = vmatpush1.bf16.msra.mxu0 %v5415
      %5469 = vmatprep.subr.bf16.mxu0 0
      %5470 = vmatpush1.bf16.msra.mxu0 %v5416
      %5471 = vmatprep.subr.bf16.mxu0 0
      %5472 = vmatpush1.bf16.msra.mxu0 %v5417
      %5473 = vmatprep.subr.bf16.mxu0 0
      %5474 = vmatpush1.bf16.msra.mxu0 %v5453
      %5475 = vmatprep.subr.bf16.mxu0 0
      %5476 = vmatpush1.bf16.msra.mxu0 0
      %5477 = vmatprep.subr.bf16.mxu0 0
      %5478 = vmatpush1.bf16.msra.mxu0 0
      %5479 = vmatprep.subr.bf16.mxu0 0
      %5480 = vmatpush1.bf16.msra.mxu0 0
      %5481 = vmatprep.subr.bf16.mxu0 0
      %5482 = vmatpush1.bf16.msra.mxu0 0
      %5483 = vmatprep.subr.bf16.mxu0 0
      %5484 = vmatpush1.bf16.msra.mxu0 0
      %5485 = vmatprep.subr.bf16.mxu0 0
      %5486 = vmatpush1.bf16.msra.mxu0 0
      %5487 = vmatprep.mubr.bf16.mxu0 %v5428
      %5488 = vmatmul.mubr.bf16.gmra.mrb[0].mxu0 %v5317
      %v5489 = vpop.f32.mrb[0].mxu0
      %v5490 = vadd.f32 0.0, %v5489
      %v5491 = vpop.f32.mrb[0].mxu0
      %v5492 = vpop.f32.mrb[0].mxu0
      %v5493 = vadd.f32 0.0, %v5492
      %v5494 = vpop.f32.mrb[0].mxu0
      %5495 = vmatprep.mubr.bf16.mxu0 %v5430
      %5496 = vmatmul.mubr.bf16.gmra.mrb[0].mxu0 %v5320
      %v5497 = vpop.f32.mrb[0].mxu0
      %v5498 = vadd.f32 0.0, %v5497
      %v5499 = vpop.f32.mrb[0].mxu0
      %v5500 = vpop.f32.mrb[0].mxu0
      %v5501 = vadd.f32 0.0, %v5500
      %v5502 = vpop.f32.mrb[0].mxu0
      %5503 = vmatprep.mubr.bf16.mxu0 %v5432
      %5504 = vmatmul.mubr.bf16.gmra.mrb[0].mxu0 %v5323
      %v5505 = vpop.f32.mrb[0].mxu0
      %v5506 = vadd.f32 0.0, %v5505
      %v5507 = vpop.f32.mrb[0].mxu0
      %v5508 = vpop.f32.mrb[0].mxu0
      %v5509 = vadd.f32 0.0, %v5508
      %v5510 = vpop.f32.mrb[0].mxu0
      %5511 = vmatprep.mubr.bf16.mxu0 %v5434
      %5512 = vmatmul.mubr.bf16.gmra.mrb[0].mxu0 %v5326
      %v5513 = vpop.f32.mrb[0].mxu0
      %v5514 = vadd.f32 0.0, %v5513
      %v5515 = vpop.f32.mrb[0].mxu0
      %v5516 = vpop.f32.mrb[0].mxu0
      %v5517 = vadd.f32 0.0, %v5516
      %v5518 = vpop.f32.mrb[0].mxu0
      %5519 = vmatprep.mubr.bf16.mxu0 %v5436
      %5520 = vmatmul.mubr.bf16.gmra.mrb[0].mxu0 %v5329
      %v5521 = vpop.f32.mrb[0].mxu0
      %v5522 = vadd.f32 0.0, %v5521
      %v5523 = vpop.f32.mrb[0].mxu0
      %v5524 = vpop.f32.mrb[0].mxu0
      %v5525 = vadd.f32 0.0, %v5524
      %v5526 = vpop.f32.mrb[0].mxu0
      %5527 = vmatprep.mubr.bf16.mxu0 %v5438
      %5528 = vmatmul.mubr.bf16.gmra.mrb[0].mxu0 %v5332
      %v5529 = vpop.f32.mrb[0].mxu0
      %v5530 = vadd.f32 0.0, %v5529
      %v5531 = vpop.f32.mrb[0].mxu0
      %v5532 = vpop.f32.mrb[0].mxu0
      %v5533 = vadd.f32 0.0, %v5532
      %v5534 = vpop.f32.mrb[0].mxu0
      %5535 = vmatprep.mubr.bf16.mxu0 %v5440
      %5536 = vmatmul.mubr.bf16.gmra.mrb[0].mxu0 %v5335
      %v5537 = vpop.f32.mrb[0].mxu0
      %v5538 = vadd.f32 0.0, %v5537
      %v5539 = vpop.f32.mrb[0].mxu0
      %v5540 = vpop.f32.mrb[0].mxu0
      %v5541 = vadd.f32 0.0, %v5540
      %v5542 = vpop.f32.mrb[0].mxu0
      %5543 = vmatprep.mubr.bf16.mxu0 %v5442
      %5544 = vmatmul.mubr.bf16.gmra.mrb[0].mxu0 %v5338
      %v5545 = vpop.f32.mrb[0].mxu0
      %v5546 = vadd.f32 0.0, %v5545
      %v5547 = vpop.f32.mrb[0].mxu0
      %v5548 = vpop.f32.mrb[0].mxu0
      %v5549 = vadd.f32 0.0, %v5548
      %v5550 = vpop.f32.mrb[0].mxu0
      %5551 = vmatprep.mubr.bf16.mxu0 %v5444
      %5552 = vmatmul.mubr.bf16.gmra.mrb[0].mxu0 %v5341
      %v5553 = vpop.f32.mrb[0].mxu0
      %v5554 = vadd.f32 0.0, %v5553
      %v5555 = vpop.f32.mrb[0].mxu0
      %v5556 = vpop.f32.mrb[0].mxu0
      %v5557 = vadd.f32 0.0, %v5556
      %v5558 = vpop.f32.mrb[0].mxu0
      %5559 = vmatprep.mubr.bf16.mxu0 %v5446
      %5560 = vmatmul.mubr.bf16.gmra.mrb[0].mxu0 %v5344
      %v5561 = vpop.f32.mrb[0].mxu0
      %v5562 = vadd.f32 0.0, %v5561
      %v5563 = vpop.f32.mrb[0].mxu0
      %v5564 = vpop.f32.mrb[0].mxu0
      %v5565 = vadd.f32 0.0, %v5564
      %v5566 = vpop.f32.mrb[0].mxu0
      %5567 = vmatprep.mubr.bf16.mxu0 %v5448
      %5568 = vmatmul.mubr.bf16.gmra.mrb[0].mxu0 %v5347
      %v5569 = vpop.f32.mrb[0].mxu0
      %v5570 = vadd.f32 0.0, %v5569
      %v5571 = vpop.f32.mrb[0].mxu0
      %v5572 = vpop.f32.mrb[0].mxu0
      %v5573 = vadd.f32 0.0, %v5572
      %v5574 = vpop.f32.mrb[0].mxu0
      %5575 = vmatprep.mubr.bf16.mxu0 %v5450
      %5576 = vmatmul.mubr.bf16.gmra.mrb[0].mxu0 %v5350
      %v5577 = vpop.f32.mrb[0].mxu0
      %v5578 = vadd.f32 0.0, %v5577
      %v5579 = vpop.f32.mrb[0].mxu0
      %v5580 = vpop.f32.mrb[0].mxu0
      %v5581 = vadd.f32 0.0, %v5580
      %v5582 = vpop.f32.mrb[0].mxu0
      %5583 = vdwg.mxu0
      %v5584 = vpack.c.bf16 %v5493, %v5490
      %v5585 = vpack.c.bf16 %v5501, %v5498
      %v5586 = vpack.c.bf16 %v5509, %v5506
      %v5587 = vpack.c.bf16 %v5517, %v5514
      %v5588 = vpack.c.bf16 %v5525, %v5522
      %v5589 = vpack.c.bf16 %v5533, %v5530
      %v5590 = vpack.c.bf16 %v5541, %v5538
      %v5591 = vpack.c.bf16 %v5549, %v5546
      %v5592 = vpack.c.bf16 %v5557, %v5554
      %v5593 = vpack.c.bf16 %v5565, %v5562
      %v5594 = vpack.c.bf16 %v5573, %v5570
      %v5595 = vpack.c.bf16 %v5581, %v5578
      %v5608 = vunpack.c.l.b16 %v5584
      %v5609 = vunpack.c.h.b16 %v5584
      %v5610 = vunpack.c.l.b16 %v5585
      %v5611 = vunpack.c.h.b16 %v5585
      %v5612 = vunpack.c.l.b16 %v5586
      %v5613 = vunpack.c.h.b16 %v5586
      %v5614 = vunpack.c.l.b16 %v5587
      %v5615 = vunpack.c.h.b16 %v5587
      %v5616 = vunpack.c.l.b16 %v5588
      %v5617 = vunpack.c.h.b16 %v5588
      %v5618 = vunpack.c.l.b16 %v5589
      %v5619 = vunpack.c.h.b16 %v5589
      %v5620 = vunpack.c.l.b16 %v5590
      %v5621 = vunpack.c.h.b16 %v5590
      %v5622 = vunpack.c.l.b16 %v5591
      %v5623 = vunpack.c.h.b16 %v5591
      %v5624 = vunpack.c.l.b16 %v5592
      %v5625 = vunpack.c.h.b16 %v5592
      %v5626 = vunpack.c.l.b16 %v5593
      %v5627 = vunpack.c.h.b16 %v5593
      %v5628 = vunpack.c.l.b16 %v5594
      %v5629 = vunpack.c.h.b16 %v5594
      %v5630 = vunpack.c.l.b16 %v5595
      %v5631 = vunpack.c.h.b16 %v5595
      %v5632 = vpack.c.b16 %v5608, %v5608
      %v5633 = vpack.c.b16 %v5609, %v5609
      %v5634 = vpack.c.b16 %v5610, %v5610
      %v5635 = vpack.c.b16 %v5611, %v5611
      %v5636 = vpack.c.b16 %v5612, %v5612
      %v5637 = vpack.c.b16 %v5613, %v5613
      %v5638 = vpack.c.b16 %v5614, %v5614
      %v5639 = vpack.c.b16 %v5615, %v5615
      %v5640 = vpack.c.b16 %v5616, %v5616
      %v5641 = vpack.c.b16 %v5617, %v5617
      %v5642 = vpack.c.b16 %v5618, %v5618
      %v5643 = vpack.c.b16 %v5619, %v5619
      %v5644 = vpack.c.b16 %v5620, %v5620
      %v5645 = vpack.c.b16 %v5621, %v5621
      %v5646 = vpack.c.b16 %v5622, %v5622
      %v5647 = vpack.c.b16 %v5623, %v5623
      %v5648 = vpack.c.b16 %v5624, %v5624
      %v5649 = vpack.c.b16 %v5625, %v5625
      %v5650 = vpack.c.b16 %v5626, %v5626
      %v5651 = vpack.c.b16 %v5627, %v5627
      %v5652 = vpack.c.b16 %v5628, %v5628
      %v5653 = vpack.c.b16 %v5629, %v5629
      %v5654 = vpack.c.b16 %v5630, %v5630
      %v5655 = vpack.c.b16 %v5631, %v5631
      %v5657 = vshrl.u32 %v5632, 16
      %v5659 = vrot.slane %v5657, 7
      %v5660 = vshll.u32 %v5632, 16
      %v5662 = vor.u32 %v5659, %v5660
      %v5663 = vrot.slane %v5659, 4
      %v5665 = vshrl.u32 %v5633, 16
      %v5667 = vrot.slane %v5665, 7
      %v5668 = vshll.u32 %v5633, 16
      %v5670 = vor.u32 %v5667, %v5668
      %v5671 = vsel %vm2322, %v5663, %v5670
      %v5672 = vrot.slane %v5667, 4
      %v5674 = vshrl.u32 %v5634, 16
      %v5676 = vrot.slane %v5674, 7
      %v5677 = vshll.u32 %v5634, 16
      %v5679 = vor.u32 %v5676, %v5677
      %v5680 = vrot.slane %v5676, 4
      %v5682 = vshrl.u32 %v5635, 16
      %v5684 = vrot.slane %v5682, 7
      %v5685 = vshll.u32 %v5635, 16
      %v5687 = vor.u32 %v5684, %v5685
      %v5688 = vsel %vm2322, %v5680, %v5687
      %v5689 = vrot.slane %v5684, 4
      %v5691 = vshrl.u32 %v5636, 16
      %v5693 = vrot.slane %v5691, 7
      %v5694 = vshll.u32 %v5636, 16
      %v5696 = vor.u32 %v5693, %v5694
      %v5697 = vrot.slane %v5693, 4
      %v5699 = vshrl.u32 %v5637, 16
      %v5701 = vrot.slane %v5699, 7
      %v5702 = vshll.u32 %v5637, 16
      %v5704 = vor.u32 %v5701, %v5702
      %v5705 = vsel %vm2322, %v5697, %v5704
      %v5706 = vrot.slane %v5701, 4
      %v5708 = vshrl.u32 %v5638, 16
      %v5710 = vrot.slane %v5708, 7
      %v5711 = vshll.u32 %v5638, 16
      %v5713 = vor.u32 %v5710, %v5711
      %v5714 = vrot.slane %v5710, 4
      %v5716 = vshrl.u32 %v5639, 16
      %v5718 = vrot.slane %v5716, 7
      %v5719 = vshll.u32 %v5639, 16
      %v5721 = vor.u32 %v5718, %v5719
      %v5722 = vsel %vm2322, %v5714, %v5721
      %v5723 = vrot.slane %v5718, 4
      %v5725 = vshrl.u32 %v5640, 16
      %v5727 = vrot.slane %v5725, 7
      %v5728 = vshll.u32 %v5640, 16
      %v5730 = vor.u32 %v5727, %v5728
      %v5731 = vrot.slane %v5727, 4
      %v5733 = vshrl.u32 %v5641, 16
      %v5735 = vrot.slane %v5733, 7
      %v5736 = vshll.u32 %v5641, 16
      %v5738 = vor.u32 %v5735, %v5736
      %v5739 = vsel %vm2322, %v5731, %v5738
      %v5740 = vrot.slane %v5735, 4
      %v5742 = vshrl.u32 %v5642, 16
      %v5744 = vrot.slane %v5742, 7
      %v5745 = vshll.u32 %v5642, 16
      %v5747 = vor.u32 %v5744, %v5745
      %v5748 = vrot.slane %v5744, 4
      %v5750 = vshrl.u32 %v5643, 16
      %v5752 = vrot.slane %v5750, 7
      %v5753 = vshll.u32 %v5643, 16
      %v5755 = vor.u32 %v5752, %v5753
      %v5756 = vsel %vm2322, %v5748, %v5755
      %v5757 = vrot.slane %v5752, 4
      %v5759 = vshrl.u32 %v5644, 16
      %v5761 = vrot.slane %v5759, 7
      %v5762 = vshll.u32 %v5644, 16
      %v5764 = vor.u32 %v5761, %v5762
      %v5765 = vrot.slane %v5761, 4
      %v5767 = vshrl.u32 %v5645, 16
      %v5769 = vrot.slane %v5767, 7
      %v5770 = vshll.u32 %v5645, 16
      %v5772 = vor.u32 %v5769, %v5770
      %v5773 = vsel %vm2322, %v5765, %v5772
      %v5774 = vrot.slane %v5769, 4
      %v5776 = vshrl.u32 %v5646, 16
      %v5778 = vrot.slane %v5776, 7
      %v5779 = vshll.u32 %v5646, 16
      %v5781 = vor.u32 %v5778, %v5779
      %v5782 = vrot.slane %v5778, 4
      %v5784 = vshrl.u32 %v5647, 16
      %v5786 = vrot.slane %v5784, 7
      %v5787 = vshll.u32 %v5647, 16
      %v5789 = vor.u32 %v5786, %v5787
      %v5790 = vsel %vm2322, %v5782, %v5789
      %v5791 = vrot.slane %v5786, 4
      %v5793 = vshrl.u32 %v5648, 16
      %v5795 = vrot.slane %v5793, 7
      %v5796 = vshll.u32 %v5648, 16
      %v5798 = vor.u32 %v5795, %v5796
      %v5799 = vrot.slane %v5795, 4
      %v5801 = vshrl.u32 %v5649, 16
      %v5803 = vrot.slane %v5801, 7
      %v5804 = vshll.u32 %v5649, 16
      %v5806 = vor.u32 %v5803, %v5804
      %v5807 = vsel %vm2322, %v5799, %v5806
      %v5808 = vrot.slane %v5803, 4
      %v5810 = vshrl.u32 %v5650, 16
      %v5812 = vrot.slane %v5810, 7
      %v5813 = vshll.u32 %v5650, 16
      %v5815 = vor.u32 %v5812, %v5813
      %v5816 = vrot.slane %v5812, 4
      %v5818 = vshrl.u32 %v5651, 16
      %v5820 = vrot.slane %v5818, 7
      %v5821 = vshll.u32 %v5651, 16
      %v5823 = vor.u32 %v5820, %v5821
      %v5824 = vsel %vm2322, %v5816, %v5823
      %v5825 = vrot.slane %v5820, 4
      %v5827 = vshrl.u32 %v5652, 16
      %v5829 = vrot.slane %v5827, 7
      %v5830 = vshll.u32 %v5652, 16
      %v5832 = vor.u32 %v5829, %v5830
      %v5833 = vrot.slane %v5829, 4
      %v5835 = vshrl.u32 %v5653, 16
      %v5837 = vrot.slane %v5835, 7
      %v5838 = vshll.u32 %v5653, 16
      %v5840 = vor.u32 %v5837, %v5838
      %v5841 = vsel %vm2322, %v5833, %v5840
      %v5842 = vrot.slane %v5837, 4
      %v5844 = vshrl.u32 %v5654, 16
      %v5846 = vrot.slane %v5844, 7
      %v5847 = vshll.u32 %v5654, 16
      %v5849 = vor.u32 %v5846, %v5847
      %v5850 = vrot.slane %v5846, 4
      %v5852 = vshrl.u32 %v5655, 16
      %v5854 = vrot.slane %v5852, 7
      %v5855 = vshll.u32 %v5655, 16
      %v5857 = vor.u32 %v5854, %v5855
      %v5858 = vsel %vm2322, %v5850, %v5857
      %v5859 = vrot.slane %v5854, 4
      %v5896 = vsel %vm2565, %v5662, %v2786
      %5897 = vst [vmem:[#allocation2] sm:$0xf] %v5896
      %5898 = vst.msk [vmem:[#allocation2 + $0x4] sm:$0xf] %vm2569, %v5671
      %v5899 = vld [vmem:[#allocation2 + $0x8] sm:$0x1]
      %v5900 = vsel %vm2572, %v5672, %v5899
      %5901 = vst [vmem:[#allocation2 + $0x8] sm:$0x1] %v5900
      %v5902 = vld [vmem:[#allocation2 + $0xc] sm:$0xf]
      %v5903 = vsel %vm2565, %v5679, %v5902
      %5904 = vst [vmem:[#allocation2 + $0xc] sm:$0xf] %v5903
      %5905 = vst.msk [vmem:[#allocation2 + $0x10] sm:$0xf] %vm2569, %v5688
      %v5906 = vld [vmem:[#allocation2 + $0x14] sm:$0x1]
      %v5907 = vsel %vm2572, %v5689, %v5906
      %5908 = vst [vmem:[#allocation2 + $0x14] sm:$0x1] %v5907
      %v5909 = vld [vmem:[#allocation2 + $0x18] sm:$0xf]
      %v5910 = vsel %vm2565, %v5696, %v5909
      %5911 = vst [vmem:[#allocation2 + $0x18] sm:$0xf] %v5910
      %5912 = vst.msk [vmem:[#allocation2 + $0x1c] sm:$0xf] %vm2569, %v5705
      %v5913 = vld [vmem:[#allocation2 + $0x20] sm:$0x1]
      %v5914 = vsel %vm2572, %v5706, %v5913
      %5915 = vst [vmem:[#allocation2 + $0x20] sm:$0x1] %v5914
      %v5916 = vld [vmem:[#allocation2 + $0x24] sm:$0xf]
      %v5917 = vsel %vm2565, %v5713, %v5916
      %5918 = vst [vmem:[#allocation2 + $0x24] sm:$0xf] %v5917
      %5919 = vst.msk [vmem:[#allocation2 + $0x28] sm:$0xf] %vm2569, %v5722
      %v5920 = vld [vmem:[#allocation2 + $0x2c] sm:$0x1]
      %v5921 = vsel %vm2572, %v5723, %v5920
      %5922 = vst [vmem:[#allocation2 + $0x2c] sm:$0x1] %v5921
      %v5923 = vld [vmem:[#allocation2 + $0x30] sm:$0xf]
      %v5924 = vsel %vm2565, %v5730, %v5923
      %5925 = vst [vmem:[#allocation2 + $0x30] sm:$0xf] %v5924
      %5926 = vst.msk [vmem:[#allocation2 + $0x34] sm:$0xf] %vm2569, %v5739
      %v5927 = vld [vmem:[#allocation2 + $0x38] sm:$0x1]
      %v5928 = vsel %vm2572, %v5740, %v5927
      %5929 = vst [vmem:[#allocation2 + $0x38] sm:$0x1] %v5928
      %v5930 = vld [vmem:[#allocation2 + $0x3c] sm:$0xf]
      %v5931 = vsel %vm2565, %v5747, %v5930
      %5932 = vst [vmem:[#allocation2 + $0x3c] sm:$0xf] %v5931
      %5933 = vst.msk [vmem:[#allocation2 + $0x40] sm:$0xf] %vm2569, %v5756
      %v5934 = vld [vmem:[#allocation2 + $0x44] sm:$0x1]
      %v5935 = vsel %vm2572, %v5757, %v5934
      %5936 = vst [vmem:[#allocation2 + $0x44] sm:$0x1] %v5935
      %v5937 = vld [vmem:[#allocation2 + $0x48] sm:$0xf]
      %v5938 = vsel %vm2565, %v5764, %v5937
      %5939 = vst [vmem:[#allocation2 + $0x48] sm:$0xf] %v5938
      %5940 = vst.msk [vmem:[#allocation2 + $0x4c] sm:$0xf] %vm2569, %v5773
      %v5941 = vld [vmem:[#allocation2 + $0x50] sm:$0x1]
      %v5942 = vsel %vm2572, %v5774, %v5941
      %5943 = vst [vmem:[#allocation2 + $0x50] sm:$0x1] %v5942
      %v5944 = vld [vmem:[#allocation2 + $0x54] sm:$0xf]
      %v5945 = vsel %vm2565, %v5781, %v5944
      %5946 = vst [vmem:[#allocation2 + $0x54] sm:$0xf] %v5945
      %5947 = vst.msk [vmem:[#allocation2 + $0x58] sm:$0xf] %vm2569, %v5790
      %v5948 = vld [vmem:[#allocation2 + $0x5c] sm:$0x1]
      %v5949 = vsel %vm2572, %v5791, %v5948
      %5950 = vst [vmem:[#allocation2 + $0x5c] sm:$0x1] %v5949
      %v5951 = vld [vmem:[#allocation2 + $0x60] sm:$0xf]
      %v5952 = vsel %vm2565, %v5798, %v5951
      %5953 = vst [vmem:[#allocation2 + $0x60] sm:$0xf] %v5952
      %5954 = vst.msk [vmem:[#allocation2 + $0x64] sm:$0xf] %vm2569, %v5807
      %v5955 = vld [vmem:[#allocation2 + $0x68] sm:$0x1]
      %v5956 = vsel %vm2572, %v5808, %v5955
      %5957 = vst [vmem:[#allocation2 + $0x68] sm:$0x1] %v5956
      %v5958 = vld [vmem:[#allocation2 + $0x6c] sm:$0xf]
      %v5959 = vsel %vm2565, %v5815, %v5958
      %5960 = vst [vmem:[#allocation2 + $0x6c] sm:$0xf] %v5959
      %5961 = vst.msk [vmem:[#allocation2 + $0x70] sm:$0xf] %vm2569, %v5824
      %v5962 = vld [vmem:[#allocation2 + $0x74] sm:$0x1]
      %v5963 = vsel %vm2572, %v5825, %v5962
      %5964 = vst [vmem:[#allocation2 + $0x74] sm:$0x1] %v5963
      %v5965 = vld [vmem:[#allocation2 + $0x78] sm:$0xf]
      %v5966 = vsel %vm2565, %v5832, %v5965
      %5967 = vst [vmem:[#allocation2 + $0x78] sm:$0xf] %v5966
      %5968 = vst.msk [vmem:[#allocation2 + $0x7c] sm:$0xf] %vm2569, %v5841
      %v5969 = vld [vmem:[#allocation2 + $0x80] sm:$0x1]
      %v5970 = vsel %vm2572, %v5842, %v5969
      %5971 = vst [vmem:[#allocation2 + $0x80] sm:$0x1] %v5970
      %v5972 = vld [vmem:[#allocation2 + $0x84] sm:$0xf]
      %v5973 = vsel %vm2565, %v5849, %v5972
      %5974 = vst [vmem:[#allocation2 + $0x84] sm:$0xf] %v5973
      %5975 = vst.msk [vmem:[#allocation2 + $0x88] sm:$0xf] %vm2569, %v5858
      %v5976 = vld [vmem:[#allocation2 + $0x8c] sm:$0x1]
      %v5977 = vsel %vm2572, %v5859, %v5976
      %5978 = vst [vmem:[#allocation2 + $0x8c] sm:$0x1] %v5977
      %v5979 = vld [vmem:[#allocation2] sm:$0x1]
      %v5980 = vsel %vm2572, %v5584, %v5979
      %5981 = vst [vmem:[#allocation2] sm:$0x1] %v5980
      %v5982 = vld [vmem:[#allocation2 + $0xc] sm:$0x1]
      %v5983 = vsel %vm2572, %v5585, %v5982
      %5984 = vst [vmem:[#allocation2 + $0xc] sm:$0x1] %v5983
      %v5985 = vld [vmem:[#allocation2 + $0x18] sm:$0x1]
      %v5986 = vsel %vm2572, %v5586, %v5985
      %5987 = vst [vmem:[#allocation2 + $0x18] sm:$0x1] %v5986
      %v5988 = vld [vmem:[#allocation2 + $0x24] sm:$0x1]
      %v5989 = vsel %vm2572, %v5587, %v5988
      %5990 = vst [vmem:[#allocation2 + $0x24] sm:$0x1] %v5989
      %v5991 = vld [vmem:[#allocation2 + $0x30] sm:$0x1]
      %v5992 = vsel %vm2572, %v5588, %v5991
      %5993 = vst [vmem:[#allocation2 + $0x30] sm:$0x1] %v5992
      %v5994 = vld [vmem:[#allocation2 + $0x3c] sm:$0x1]
      %v5995 = vsel %vm2572, %v5589, %v5994
      %5996 = vst [vmem:[#allocation2 + $0x3c] sm:$0x1] %v5995
      %v5997 = vld [vmem:[#allocation2 + $0x48] sm:$0x1]
      %v5998 = vsel %vm2572, %v5590, %v5997
      %5999 = vst [vmem:[#allocation2 + $0x48] sm:$0x1] %v5998
      %v6000 = vld [vmem:[#allocation2 + $0x54] sm:$0x1]
      %v6001 = vsel %vm2572, %v5591, %v6000
      %6002 = vst [vmem:[#allocation2 + $0x54] sm:$0x1] %v6001
      %v6003 = vld [vmem:[#allocation2 + $0x60] sm:$0x1]
      %v6004 = vsel %vm2572, %v5592, %v6003
      %6005 = vst [vmem:[#allocation2 + $0x60] sm:$0x1] %v6004
      %v6006 = vld [vmem:[#allocation2 + $0x6c] sm:$0x1]
      %v6007 = vsel %vm2572, %v5593, %v6006
      %6008 = vst [vmem:[#allocation2 + $0x6c] sm:$0x1] %v6007
      %v6009 = vld [vmem:[#allocation2 + $0x78] sm:$0x1]
      %v6010 = vsel %vm2572, %v5594, %v6009
      %6011 = vst [vmem:[#allocation2 + $0x78] sm:$0x1] %v6010
      %v6012 = vld [vmem:[#allocation2 + $0x84] sm:$0x1]
      %v6013 = vsel %vm2572, %v5595, %v6012
      %6014 = vst [vmem:[#allocation2 + $0x84] sm:$0x1] %v6013
      %v6015 = vrot.slane %v5633, 7
      %v6016 = vrot.slane %v6015, 4
      %v6017 = vrot.slane %v5635, 7
      %v6018 = vrot.slane %v6017, 4
      %v6019 = vrot.slane %v5637, 7
      %v6020 = vrot.slane %v6019, 4
      %v6021 = vrot.slane %v5639, 7
      %v6022 = vrot.slane %v6021, 4
      %v6023 = vrot.slane %v5641, 7
      %v6024 = vrot.slane %v6023, 4
      %v6025 = vrot.slane %v5643, 7
      %v6026 = vrot.slane %v6025, 4
      %v6027 = vrot.slane %v5645, 7
      %v6028 = vrot.slane %v6027, 4
      %v6029 = vrot.slane %v5647, 7
      %v6030 = vrot.slane %v6029, 4
      %v6031 = vrot.slane %v5649, 7
      %v6032 = vrot.slane %v6031, 4
      %v6033 = vrot.slane %v5651, 7
      %v6034 = vrot.slane %v6033, 4
      %v6035 = vrot.slane %v5653, 7
      %v6036 = vrot.slane %v6035, 4
      %v6037 = vrot.slane %v5655, 7
      %v6038 = vrot.slane %v6037, 4
      %v6051 = vld [vmem:[#allocation2 + $0x8] sm:$0x1]
      %v6052 = vsel %vm2725, %v6016, %v6051
      %6053 = vst [vmem:[#allocation2 + $0x8] sm:$0x1] %v6052
      %v6054 = vld [vmem:[#allocation2 + $0x14] sm:$0x1]
      %v6055 = vsel %vm2725, %v6018, %v6054
      %6056 = vst [vmem:[#allocation2 + $0x14] sm:$0x1] %v6055
      %v6057 = vld [vmem:[#allocation2 + $0x20] sm:$0x1]
      %v6058 = vsel %vm2725, %v6020, %v6057
      %6059 = vst [vmem:[#allocation2 + $0x20] sm:$0x1] %v6058
      %v6060 = vld [vmem:[#allocation2 + $0x2c] sm:$0x1]
      %v6061 = vsel %vm2725, %v6022, %v6060
      %6062 = vst [vmem:[#allocation2 + $0x2c] sm:$0x1] %v6061
      %v6063 = vld [vmem:[#allocation2 + $0x38] sm:$0x1]
      %v6064 = vsel %vm2725, %v6024, %v6063
      %6065 = vst [vmem:[#allocation2 + $0x38] sm:$0x1] %v6064
      %v6066 = vld [vmem:[#allocation2 + $0x44] sm:$0x1]
      %v6067 = vsel %vm2725, %v6026, %v6066
      %6068 = vst [vmem:[#allocation2 + $0x44] sm:$0x1] %v6067
      %v6069 = vld [vmem:[#allocation2 + $0x50] sm:$0x1]
      %v6070 = vsel %vm2725, %v6028, %v6069
      %6071 = vst [vmem:[#allocation2 + $0x50] sm:$0x1] %v6070
      %v6072 = vld [vmem:[#allocation2 + $0x5c] sm:$0x1]
      %v6073 = vsel %vm2725, %v6030, %v6072
      %6074 = vst [vmem:[#allocation2 + $0x5c] sm:$0x1] %v6073
      %v6075 = vld [vmem:[#allocation2 + $0x68] sm:$0x1]
      %v6076 = vsel %vm2725, %v6032, %v6075
      %6077 = vst [vmem:[#allocation2 + $0x68] sm:$0x1] %v6076
      %v6078 = vld [vmem:[#allocation2 + $0x74] sm:$0x1]
      %v6079 = vsel %vm2725, %v6034, %v6078
      %6080 = vst [vmem:[#allocation2 + $0x74] sm:$0x1] %v6079
      %v6081 = vld [vmem:[#allocation2 + $0x80] sm:$0x1]
      %v6082 = vsel %vm2725, %v6036, %v6081
      %6083 = vst [vmem:[#allocation2 + $0x80] sm:$0x1] %v6082
      %v6084 = vld [vmem:[#allocation2 + $0x8c] sm:$0x1]
      %v6085 = vsel %vm2725, %v6038, %v6084
      %6086 = vst [vmem:[#allocation2 + $0x8c] sm:$0x1] %v6085
      // Predicated region
      $region69: #{_lambda_.1} parent=59 // pred_check
        %p6087 = pneg %p378
      $region70: #{_lambda_.1} parent=59 // pred_check_branch
        %6089 = sbr.rel (%p6087) target = $region72
      $region71: #{_lambda_.1} parent=59 // pred_region
        %s6090 = scalar_lea.vmem [#allocation2], 24
        %v6091 = vld [vmem:[%s6090] sm:$0xf]
        %v6092 = vld [vmem:[%s6090 + $0x4] sm:$0xf]
        %v6093 = vld [vmem:[%s6090 + $0x8] sm:$0x1]
        %s6094 = scalar_lea.vmem [#allocation2], 12
        %6095 = vst.msk [vmem:[%s6094] sm:$0xf] %vm2569, %v6091
        %6096 = vst.msk [vmem:[%s6094 + $0x4] sm:$0xf] %vm2569, %v6092
        %vm6097 = vcmask 516096
        %6098 = vst.msk [vmem:[%s6094 + $0x8] sm:$0x1] %vm6097, %v6093
      $region72: #{_lambda_.1} parent=59 // pred_fallthru
        _
      // Predicated region
      $region73: #{_lambda_.1} parent=59 // pred_check
        %p6099 = pneg %p379
      $region74: #{_lambda_.1} parent=59 // pred_check_branch
        %6101 = sbr.rel (%p6099) target = $region76
      $region75: #{_lambda_.1} parent=59 // pred_region
        %s6102 = scalar_lea.vmem [#allocation2], 108
        %v6103 = vld [vmem:[%s6102] sm:$0xf]
        %v6104 = vld [vmem:[%s6102 + $0x4] sm:$0xf]
        %v6105 = vld [vmem:[%s6102 + $0x8] sm:$0x1]
        %s6106 = scalar_lea.vmem [#allocation2], 120
        %6107 = vst.msk [vmem:[%s6106] sm:$0xf] %vm2569, %v6103
        %6108 = vst.msk [vmem:[%s6106 + $0x4] sm:$0xf] %vm2569, %v6104
        %vm6109 = vcmask 516096
        %6110 = vst.msk [vmem:[%s6106 + $0x8] sm:$0x1] %vm6109, %v6105
      $region76: #{_lambda_.1} parent=59 // pred_fallthru
        _
      %v6111 = vld [vmem:[#allocation2] sm:$0xf]
      %v6112 = vld [vmem:[#allocation2 + $0x4] sm:$0xf]
      %v6113 = vld [vmem:[#allocation2 + $0xc] sm:$0xf]
      %v6114 = vld [vmem:[#allocation2 + $0x10] sm:$0xf]
      %v6115 = vld [vmem:[#allocation2 + $0x18] sm:$0xf]
      %v6116 = vld [vmem:[#allocation2 + $0x1c] sm:$0xf]
      %v6117 = vld [vmem:[#allocation2 + $0x24] sm:$0xf]
      %v6118 = vld [vmem:[#allocation2 + $0x28] sm:$0xf]
      %v6119 = vld [vmem:[#allocation2 + $0x30] sm:$0xf]
      %v6120 = vld [vmem:[#allocation2 + $0x34] sm:$0xf]
      %v6121 = vld [vmem:[#allocation2 + $0x3c] sm:$0xf]
      %v6122 = vld [vmem:[#allocation2 + $0x40] sm:$0xf]
      %v6123 = vld [vmem:[#allocation2 + $0x48] sm:$0xf]
      %v6124 = vld [vmem:[#allocation2 + $0x4c] sm:$0xf]
      %v6125 = vld [vmem:[#allocation2 + $0x54] sm:$0xf]
      %v6126 = vld [vmem:[#allocation2 + $0x58] sm:$0xf]
      %v6127 = vld [vmem:[#allocation2 + $0x60] sm:$0xf]
      %v6128 = vld [vmem:[#allocation2 + $0x64] sm:$0xf]
      %v6129 = vld [vmem:[#allocation2 + $0x6c] sm:$0xf]
      %v6130 = vld [vmem:[#allocation2 + $0x70] sm:$0xf]
      %v6131 = vld [vmem:[#allocation2 + $0x78] sm:$0xf]
      %v6132 = vld [vmem:[#allocation2 + $0x7c] sm:$0xf]
      %v6133 = vld [vmem:[#allocation2 + $0x84] sm:$0xf]
      %v6134 = vld [vmem:[#allocation2 + $0x88] sm:$0xf]
      %v6135 = vld [vmem:[#allocation2 + $0x8] sm:$0x1]
      %v6136 = vld [vmem:[#allocation2 + $0x14] sm:$0x1]
      %v6137 = vld [vmem:[#allocation2 + $0x20] sm:$0x1]
      %v6138 = vld [vmem:[#allocation2 + $0x2c] sm:$0x1]
      %v6139 = vld [vmem:[#allocation2 + $0x38] sm:$0x1]
      %v6140 = vld [vmem:[#allocation2 + $0x44] sm:$0x1]
      %v6141 = vld [vmem:[#allocation2 + $0x50] sm:$0x1]
      %v6142 = vld [vmem:[#allocation2 + $0x5c] sm:$0x1]
      %v6143 = vld [vmem:[#allocation2 + $0x68] sm:$0x1]
      %v6144 = vld [vmem:[#allocation2 + $0x74] sm:$0x1]
      %v6145 = vld [vmem:[#allocation2 + $0x80] sm:$0x1]
      %v6146 = vld [vmem:[#allocation2 + $0x8c] sm:$0x1]
      %v6147 = vld [vmem:[#allocation2] sm:$0xe]
      %v6148 = vld [vmem:[#allocation2 + $0xc] sm:$0xe]
      %v6149 = vld [vmem:[#allocation2 + $0x18] sm:$0xe]
      %v6150 = vld [vmem:[#allocation2 + $0x24] sm:$0xe]
      %v6151 = vld [vmem:[#allocation2 + $0x30] sm:$0xe]
      %v6152 = vld [vmem:[#allocation2 + $0x3c] sm:$0xe]
      %v6153 = vld [vmem:[#allocation2 + $0x48] sm:$0xe]
      %v6154 = vld [vmem:[#allocation2 + $0x54] sm:$0xe]
      %v6155 = vld [vmem:[#allocation2 + $0x60] sm:$0xe]
      %v6156 = vld [vmem:[#allocation2 + $0x6c] sm:$0xe]
      %v6157 = vld [vmem:[#allocation2 + $0x78] sm:$0xe]
      %v6158 = vld [vmem:[#allocation2 + $0x84] sm:$0xe]
      %v6183 = vunpack.c.l.b16 %v6111
      %v6184 = vunpack.c.l.b16 %v6112
      %v6185 = vunpack.c.l.b16 %v6113
      %v6186 = vunpack.c.l.b16 %v6114
      %v6187 = vunpack.c.l.b16 %v6115
      %v6188 = vunpack.c.l.b16 %v6116
      %v6189 = vunpack.c.l.b16 %v6117
      %v6190 = vunpack.c.l.b16 %v6118
      %v6191 = vunpack.c.l.b16 %v6119
      %v6192 = vunpack.c.l.b16 %v6120
      %v6193 = vunpack.c.l.b16 %v6121
      %v6194 = vunpack.c.l.b16 %v6122
      %v6195 = vunpack.c.l.b16 %v6123
      %v6196 = vunpack.c.l.b16 %v6124
      %v6197 = vunpack.c.l.b16 %v6125
      %v6198 = vunpack.c.l.b16 %v6126
      %v6199 = vunpack.c.l.b16 %v6127
      %v6200 = vunpack.c.l.b16 %v6128
      %v6201 = vunpack.c.l.b16 %v6129
      %v6202 = vunpack.c.l.b16 %v6130
      %v6203 = vunpack.c.l.b16 %v6131
      %v6204 = vunpack.c.l.b16 %v6132
      %v6205 = vunpack.c.l.b16 %v6133
      %v6206 = vunpack.c.l.b16 %v6134
      %v6207 = vpack.c.b16 %v6184, %v6183
      %v6208 = vpack.c.b16 %v6186, %v6185
      %v6209 = vpack.c.b16 %v6188, %v6187
      %v6210 = vpack.c.b16 %v6190, %v6189
      %v6211 = vpack.c.b16 %v6192, %v6191
      %v6212 = vpack.c.b16 %v6194, %v6193
      %v6213 = vpack.c.b16 %v6196, %v6195
      %v6214 = vpack.c.b16 %v6198, %v6197
      %v6215 = vpack.c.b16 %v6200, %v6199
      %v6216 = vpack.c.b16 %v6202, %v6201
      %v6217 = vpack.c.b16 %v6204, %v6203
      %v6218 = vpack.c.b16 %v6206, %v6205
      %v6231 = vunpack.c.l.b16 %v6135
      %v6232 = vunpack.c.l.b16 %v6136
      %v6233 = vunpack.c.l.b16 %v6137
      %v6234 = vunpack.c.l.b16 %v6138
      %v6235 = vunpack.c.l.b16 %v6139
      %v6236 = vunpack.c.l.b16 %v6140
      %v6237 = vunpack.c.l.b16 %v6141
      %v6238 = vunpack.c.l.b16 %v6142
      %v6239 = vunpack.c.l.b16 %v6143
      %v6240 = vunpack.c.l.b16 %v6144
      %v6241 = vunpack.c.l.b16 %v6145
      %v6242 = vunpack.c.l.b16 %v6146
      %v6243 = vpack.c.b16 %v6231, %v6231
      %v6244 = vpack.c.b16 %v6232, %v6232
      %v6245 = vpack.c.b16 %v6233, %v6233
      %v6246 = vpack.c.b16 %v6234, %v6234
      %v6247 = vpack.c.b16 %v6235, %v6235
      %v6248 = vpack.c.b16 %v6236, %v6236
      %v6249 = vpack.c.b16 %v6237, %v6237
      %v6250 = vpack.c.b16 %v6238, %v6238
      %v6251 = vpack.c.b16 %v6239, %v6239
      %v6252 = vpack.c.b16 %v6240, %v6240
      %v6253 = vpack.c.b16 %v6241, %v6241
      %v6254 = vpack.c.b16 %v6242, %v6242
      %v6256 = vshrl.u32 %v6207, 16
      %v6258 = vshll.u32 %v6207, 16
      %v6260 = vrot.slane %v6258, 1
      %v6261 = vor.u32 %v6256, %v6260
      %v6263 = vshll.u32 %v6243, 16
      %v6265 = vrot.slane %v6263, 1
      %v6266 = vsel %vm578, %v6261, %v6265
      %v6268 = vshrl.u32 %v6208, 16
      %v6270 = vshll.u32 %v6208, 16
      %v6272 = vrot.slane %v6270, 1
      %v6273 = vor.u32 %v6268, %v6272
      %v6275 = vshll.u32 %v6244, 16
      %v6277 = vrot.slane %v6275, 1
      %v6278 = vsel %vm578, %v6273, %v6277
      %v6280 = vshrl.u32 %v6209, 16
      %v6282 = vshll.u32 %v6209, 16
      %v6284 = vrot.slane %v6282, 1
      %v6285 = vor.u32 %v6280, %v6284
      %v6287 = vshll.u32 %v6245, 16
      %v6289 = vrot.slane %v6287, 1
      %v6290 = vsel %vm578, %v6285, %v6289
      %v6292 = vshrl.u32 %v6210, 16
      %v6294 = vshll.u32 %v6210, 16
      %v6296 = vrot.slane %v6294, 1
      %v6297 = vor.u32 %v6292, %v6296
      %v6299 = vshll.u32 %v6246, 16
      %v6301 = vrot.slane %v6299, 1
      %v6302 = vsel %vm578, %v6297, %v6301
      %v6304 = vshrl.u32 %v6211, 16
      %v6306 = vshll.u32 %v6211, 16
      %v6308 = vrot.slane %v6306, 1
      %v6309 = vor.u32 %v6304, %v6308
      %v6311 = vshll.u32 %v6247, 16
      %v6313 = vrot.slane %v6311, 1
      %v6314 = vsel %vm578, %v6309, %v6313
      %v6316 = vshrl.u32 %v6212, 16
      %v6318 = vshll.u32 %v6212, 16
      %v6320 = vrot.slane %v6318, 1
      %v6321 = vor.u32 %v6316, %v6320
      %v6323 = vshll.u32 %v6248, 16
      %v6325 = vrot.slane %v6323, 1
      %v6326 = vsel %vm578, %v6321, %v6325
      %v6328 = vshrl.u32 %v6213, 16
      %v6330 = vshll.u32 %v6213, 16
      %v6332 = vrot.slane %v6330, 1
      %v6333 = vor.u32 %v6328, %v6332
      %v6335 = vshll.u32 %v6249, 16
      %v6337 = vrot.slane %v6335, 1
      %v6338 = vsel %vm578, %v6333, %v6337
      %v6340 = vshrl.u32 %v6214, 16
      %v6342 = vshll.u32 %v6214, 16
      %v6344 = vrot.slane %v6342, 1
      %v6345 = vor.u32 %v6340, %v6344
      %v6347 = vshll.u32 %v6250, 16
      %v6349 = vrot.slane %v6347, 1
      %v6350 = vsel %vm578, %v6345, %v6349
      %v6352 = vshrl.u32 %v6215, 16
      %v6354 = vshll.u32 %v6215, 16
      %v6356 = vrot.slane %v6354, 1
      %v6357 = vor.u32 %v6352, %v6356
      %v6359 = vshll.u32 %v6251, 16
      %v6361 = vrot.slane %v6359, 1
      %v6362 = vsel %vm578, %v6357, %v6361
      %v6364 = vshrl.u32 %v6216, 16
      %v6366 = vshll.u32 %v6216, 16
      %v6368 = vrot.slane %v6366, 1
      %v6369 = vor.u32 %v6364, %v6368
      %v6371 = vshll.u32 %v6252, 16
      %v6373 = vrot.slane %v6371, 1
      %v6374 = vsel %vm578, %v6369, %v6373
      %v6376 = vshrl.u32 %v6217, 16
      %v6378 = vshll.u32 %v6217, 16
      %v6380 = vrot.slane %v6378, 1
      %v6381 = vor.u32 %v6376, %v6380
      %v6383 = vshll.u32 %v6253, 16
      %v6385 = vrot.slane %v6383, 1
      %v6386 = vsel %vm578, %v6381, %v6385
      %v6388 = vshrl.u32 %v6218, 16
      %v6390 = vshll.u32 %v6218, 16
      %v6392 = vrot.slane %v6390, 1
      %v6393 = vor.u32 %v6388, %v6392
      %v6395 = vshll.u32 %v6254, 16
      %v6397 = vrot.slane %v6395, 1
      %v6398 = vsel %vm578, %v6393, %v6397
      %6399 = vrot.lane.b32.xlu0 %v6266, 64
      %v6400 = vpop.permute.xlu0 %6399
      %6401 = vrot.lane.b32.xlu0 %v6278, 64
      %v6402 = vpop.permute.xlu0 %6401
      %6403 = vrot.lane.b32.xlu0 %v6290, 64
      %v6404 = vpop.permute.xlu0 %6403
      %6405 = vrot.lane.b32.xlu0 %v6302, 64
      %v6406 = vpop.permute.xlu0 %6405
      %6407 = vrot.lane.b32.xlu0 %v6314, 64
      %v6408 = vpop.permute.xlu0 %6407
      %6409 = vrot.lane.b32.xlu0 %v6326, 64
      %v6410 = vpop.permute.xlu0 %6409
      %6411 = vrot.lane.b32.xlu0 %v6338, 64
      %v6412 = vpop.permute.xlu0 %6411
      %6413 = vrot.lane.b32.xlu0 %v6350, 64
      %v6414 = vpop.permute.xlu0 %6413
      %6415 = vrot.lane.b32.xlu0 %v6362, 64
      %v6416 = vpop.permute.xlu0 %6415
      %6417 = vrot.lane.b32.xlu0 %v6374, 64
      %v6418 = vpop.permute.xlu0 %6417
      %6419 = vrot.lane.b32.xlu0 %v6386, 64
      %v6420 = vpop.permute.xlu0 %6419
      %6421 = vrot.lane.b32.xlu0 %v6398, 64
      %v6422 = vpop.permute.xlu0 %6421
      %v6435 = vunpack.c.l.b16 %v6147
      %v6436 = vunpack.c.l.b16 %v6148
      %v6437 = vunpack.c.l.b16 %v6149
      %v6438 = vunpack.c.l.b16 %v6150
      %v6439 = vunpack.c.l.b16 %v6151
      %v6440 = vunpack.c.l.b16 %v6152
      %v6441 = vunpack.c.l.b16 %v6153
      %v6442 = vunpack.c.l.b16 %v6154
      %v6443 = vunpack.c.l.b16 %v6155
      %v6444 = vunpack.c.l.b16 %v6156
      %v6445 = vunpack.c.l.b16 %v6157
      %v6446 = vunpack.c.l.b16 %v6158
      %v6447 = vpack.c.b16 %v6184, %v6435
      %v6448 = vpack.c.b16 %v6186, %v6436
      %v6449 = vpack.c.b16 %v6188, %v6437
      %v6450 = vpack.c.b16 %v6190, %v6438
      %v6451 = vpack.c.b16 %v6192, %v6439
      %v6452 = vpack.c.b16 %v6194, %v6440
      %v6453 = vpack.c.b16 %v6196, %v6441
      %v6454 = vpack.c.b16 %v6198, %v6442
      %v6455 = vpack.c.b16 %v6200, %v6443
      %v6456 = vpack.c.b16 %v6202, %v6444
      %v6457 = vpack.c.b16 %v6204, %v6445
      %v6458 = vpack.c.b16 %v6206, %v6446
      %v6459 = vrot.slane %v6447, 1
      %v6460 = vrot.slane %v6243, 1
      %v6461 = vsel %vm831, %v6459, %v6460
      %v6462 = vrot.slane %v6448, 1
      %v6463 = vrot.slane %v6244, 1
      %v6464 = vsel %vm831, %v6462, %v6463
      %v6465 = vrot.slane %v6449, 1
      %v6466 = vrot.slane %v6245, 1
      %v6467 = vsel %vm831, %v6465, %v6466
      %v6468 = vrot.slane %v6450, 1
      %v6469 = vrot.slane %v6246, 1
      %v6470 = vsel %vm831, %v6468, %v6469
      %v6471 = vrot.slane %v6451, 1
      %v6472 = vrot.slane %v6247, 1
      %v6473 = vsel %vm831, %v6471, %v6472
      %v6474 = vrot.slane %v6452, 1
      %v6475 = vrot.slane %v6248, 1
      %v6476 = vsel %vm831, %v6474, %v6475
      %v6477 = vrot.slane %v6453, 1
      %v6478 = vrot.slane %v6249, 1
      %v6479 = vsel %vm831, %v6477, %v6478
      %v6480 = vrot.slane %v6454, 1
      %v6481 = vrot.slane %v6250, 1
      %v6482 = vsel %vm831, %v6480, %v6481
      %v6483 = vrot.slane %v6455, 1
      %v6484 = vrot.slane %v6251, 1
      %v6485 = vsel %vm831, %v6483, %v6484
      %v6486 = vrot.slane %v6456, 1
      %v6487 = vrot.slane %v6252, 1
      %v6488 = vsel %vm831, %v6486, %v6487
      %v6489 = vrot.slane %v6457, 1
      %v6490 = vrot.slane %v6253, 1
      %v6491 = vsel %vm831, %v6489, %v6490
      %v6492 = vrot.slane %v6458, 1
      %v6493 = vrot.slane %v6254, 1
      %v6494 = vsel %vm831, %v6492, %v6493
      %v6496 = vsel %vm3170, %v6207, %v6400
      %v6499 = vsel %vm3170, %v6208, %v6402
      %v6502 = vsel %vm3170, %v6209, %v6404
      %v6505 = vsel %vm3170, %v6210, %v6406
      %v6508 = vsel %vm3170, %v6211, %v6408
      %v6511 = vsel %vm3170, %v6212, %v6410
      %v6514 = vsel %vm3170, %v6213, %v6412
      %v6517 = vsel %vm3170, %v6214, %v6414
      %v6520 = vsel %vm3170, %v6215, %v6416
      %v6523 = vsel %vm3170, %v6216, %v6418
      %v6526 = vsel %vm3170, %v6217, %v6420
      %v6529 = vsel %vm3170, %v6218, %v6422
      %v6531 = vld [vmem:[%s2] sm:$0xff]
      %v6532 = vld [vmem:[%s2 + $0x8] sm:$0xff]
      %v6533 = vld [vmem:[%s2 + $0x10] sm:$0xff]
      %v6534 = vld [vmem:[%s2 + $0x18] sm:$0xff]
      %v6535 = vld [vmem:[%s2 + $0x20] sm:$0xff]
      %v6536 = vld [vmem:[%s2 + $0x28] sm:$0xff]
      %v6537 = vld [vmem:[%s2 + $0x30] sm:$0xff]
      %v6538 = vld [vmem:[%s2 + $0x38] sm:$0xff]
      %v6539 = vld [vmem:[%s2 + $0x40] sm:$0xff]
      %v6540 = vld [vmem:[%s2 + $0x48] sm:$0xff]
      %v6541 = vld [vmem:[%s2 + $0x50] sm:$0xff]
      %v6542 = vld [vmem:[%s2 + $0x58] sm:$0xff]
      %v6543 = vld [vmem:[%s2 + $0x60] sm:$0xff]
      %v6544 = vld [vmem:[%s2 + $0x68] sm:$0xff]
      %v6545 = vld [vmem:[%s2 + $0x70] sm:$0xff]
      %v6546 = vld [vmem:[%s2 + $0x78] sm:$0xff]
      %v6547 = vld [vmem:[%s2 + $0x80] sm:$0xff]
      %v6548 = vld [vmem:[%s2 + $0x88] sm:$0xff]
      %v6549 = vld [vmem:[%s2 + $0x90] sm:$0xff]
      %v6550 = vld [vmem:[%s2 + $0x98] sm:$0xff]
      %v6551 = vld [vmem:[%s2 + $0xa0] sm:$0xff]
      %v6552 = vld [vmem:[%s2 + $0xa8] sm:$0xff]
      %v6553 = vld [vmem:[%s2 + $0xb0] sm:$0xff]
      %v6554 = vld [vmem:[%s2 + $0xb8] sm:$0xff]
      %v6579 = vunpack.c.l.b16 %v6531
      %v6580 = vunpack.c.h.b16 %v6531
      %v6581 = vunpack.c.l.b16 %v6532
      %v6582 = vunpack.c.h.b16 %v6532
      %v6583 = vunpack.c.l.b16 %v6533
      %v6584 = vunpack.c.h.b16 %v6533
      %v6585 = vunpack.c.l.b16 %v6534
      %v6586 = vunpack.c.h.b16 %v6534
      %v6587 = vunpack.c.l.b16 %v6535
      %v6588 = vunpack.c.h.b16 %v6535
      %v6589 = vunpack.c.l.b16 %v6536
      %v6590 = vunpack.c.h.b16 %v6536
      %v6591 = vunpack.c.l.b16 %v6537
      %v6592 = vunpack.c.h.b16 %v6537
      %v6593 = vunpack.c.l.b16 %v6538
      %v6594 = vunpack.c.h.b16 %v6538
      %v6595 = vunpack.c.l.b16 %v6539
      %v6596 = vunpack.c.h.b16 %v6539
      %v6597 = vunpack.c.l.b16 %v6540
      %v6598 = vunpack.c.h.b16 %v6540
      %v6599 = vunpack.c.l.b16 %v6541
      %v6600 = vunpack.c.h.b16 %v6541
      %v6601 = vunpack.c.l.b16 %v6542
      %v6602 = vunpack.c.h.b16 %v6542
      %v6603 = vunpack.c.l.b16 %v6543
      %v6604 = vunpack.c.h.b16 %v6543
      %v6605 = vunpack.c.l.b16 %v6544
      %v6606 = vunpack.c.h.b16 %v6544
      %v6607 = vunpack.c.l.b16 %v6545
      %v6608 = vunpack.c.h.b16 %v6545
      %v6609 = vunpack.c.l.b16 %v6546
      %v6610 = vunpack.c.h.b16 %v6546
      %v6611 = vunpack.c.l.b16 %v6547
      %v6612 = vunpack.c.h.b16 %v6547
      %v6613 = vunpack.c.l.b16 %v6548
      %v6614 = vunpack.c.h.b16 %v6548
      %v6615 = vunpack.c.l.b16 %v6549
      %v6616 = vunpack.c.h.b16 %v6549
      %v6617 = vunpack.c.l.b16 %v6550
      %v6618 = vunpack.c.h.b16 %v6550
      %v6619 = vunpack.c.l.b16 %v6551
      %v6620 = vunpack.c.h.b16 %v6551
      %v6621 = vunpack.c.l.b16 %v6552
      %v6622 = vunpack.c.h.b16 %v6552
      %v6623 = vunpack.c.l.b16 %v6553
      %v6624 = vunpack.c.h.b16 %v6553
      %v6625 = vunpack.c.l.b16 %v6554
      %v6626 = vunpack.c.h.b16 %v6554
      %v6627 = vpack.c.b16 %v6581, %v6579
      %v6628 = vpack.c.b16 %v6582, %v6580
      %v6629 = vpack.c.b16 %v6585, %v6583
      %v6630 = vpack.c.b16 %v6586, %v6584
      %v6631 = vpack.c.b16 %v6589, %v6587
      %v6632 = vpack.c.b16 %v6590, %v6588
      %v6633 = vpack.c.b16 %v6593, %v6591
      %v6634 = vpack.c.b16 %v6594, %v6592
      %v6635 = vpack.c.b16 %v6597, %v6595
      %v6636 = vpack.c.b16 %v6598, %v6596
      %v6637 = vpack.c.b16 %v6601, %v6599
      %v6638 = vpack.c.b16 %v6602, %v6600
      %v6639 = vpack.c.b16 %v6605, %v6603
      %v6640 = vpack.c.b16 %v6606, %v6604
      %v6641 = vpack.c.b16 %v6609, %v6607
      %v6642 = vpack.c.b16 %v6610, %v6608
      %v6643 = vpack.c.b16 %v6613, %v6611
      %v6644 = vpack.c.b16 %v6614, %v6612
      %v6645 = vpack.c.b16 %v6617, %v6615
      %v6646 = vpack.c.b16 %v6618, %v6616
      %v6647 = vpack.c.b16 %v6621, %v6619
      %v6648 = vpack.c.b16 %v6622, %v6620
      %v6649 = vpack.c.b16 %v6625, %v6623
      %v6650 = vpack.c.b16 %v6626, %v6624
      %v6676 = vsel %vm3170, %v6461, 0
      %v6679 = vsel %vm3170, %v6464, 0
      %v6682 = vsel %vm3170, %v6467, 0
      %v6685 = vsel %vm3170, %v6470, 0
      %v6688 = vsel %vm3170, %v6473, 0
      %v6691 = vsel %vm3170, %v6476, 0
      %v6694 = vsel %vm3170, %v6479, 0
      %v6697 = vsel %vm3170, %v6482, 0
      %v6700 = vsel %vm3170, %v6485, 0
      %v6703 = vsel %vm3170, %v6488, 0
      %v6706 = vsel %vm3170, %v6491, 0
      %v6709 = vsel %vm3170, %v6494, 0
      %6711 = vmatprep.subr.bf16.mxu0 %v6628
      %6712 = vmatpush1.bf16.msra.mxu0 %v6627
      %6713 = vmatprep.subr.bf16.mxu0 %v6630
      %6714 = vmatpush1.bf16.msra.mxu0 %v6629
      %6715 = vmatprep.subr.bf16.mxu0 %v6632
      %6716 = vmatpush1.bf16.msra.mxu0 %v6631
      %6717 = vmatprep.subr.bf16.mxu0 %v6634
      %6718 = vmatpush1.bf16.msra.mxu0 %v6633
      %6719 = vmatprep.subr.bf16.mxu0 %v6636
      %6720 = vmatpush1.bf16.msra.mxu0 %v6635
      %6721 = vmatprep.subr.bf16.mxu0 %v6638
      %6722 = vmatpush1.bf16.msra.mxu0 %v6637
      %6723 = vmatprep.subr.bf16.mxu0 %v6640
      %6724 = vmatpush1.bf16.msra.mxu0 %v6639
      %6725 = vmatprep.subr.bf16.mxu0 %v6642
      %6726 = vmatpush1.bf16.msra.mxu0 %v6641
      %6727 = vmatprep.subr.bf16.mxu0 %v6644
      %6728 = vmatpush1.bf16.msra.mxu0 %v6643
      %6729 = vmatprep.subr.bf16.mxu0 %v6646
      %6730 = vmatpush1.bf16.msra.mxu0 %v6645
      %6731 = vmatprep.subr.bf16.mxu0 %v6648
      %6732 = vmatpush1.bf16.msra.mxu0 %v6647
      %6733 = vmatprep.subr.bf16.mxu0 %v6650
      %6734 = vmatpush1.bf16.msra.mxu0 %v6649
      %6735 = vmatprep.subr.bf16.mxu0 0
      %6736 = vmatpush1.bf16.msra.mxu0 0
      %6737 = vmatprep.subr.bf16.mxu0 0
      %6738 = vmatpush1.bf16.msra.mxu0 0
      %6739 = vmatprep.subr.bf16.mxu0 0
      %6740 = vmatpush1.bf16.msra.mxu0 0
      %6741 = vmatprep.subr.bf16.mxu0 0
      %6742 = vmatpush1.bf16.msra.mxu0 0
      %6743 = vmatprep.mubr.bf16.mxu0 %v6676
      %6744 = vmatmul.mubr.bf16.gmra.mrb[0].mxu0 %v6496
      %v6745 = vpop.f32.mrb[0].mxu0
      %v6746 = vadd.f32 0.0, %v6745
      %v6747 = vpop.f32.mrb[0].mxu0
      %v6748 = vpop.f32.mrb[0].mxu0
      %v6749 = vadd.f32 0.0, %v6748
      %v6750 = vpop.f32.mrb[0].mxu0
      %6751 = vmatprep.mubr.bf16.mxu0 %v6679
      %6752 = vmatmul.mubr.bf16.gmra.mrb[0].mxu0 %v6499
      %v6753 = vpop.f32.mrb[0].mxu0
      %v6754 = vadd.f32 0.0, %v6753
      %v6755 = vpop.f32.mrb[0].mxu0
      %v6756 = vpop.f32.mrb[0].mxu0
      %v6757 = vadd.f32 0.0, %v6756
      %v6758 = vpop.f32.mrb[0].mxu0
      %6759 = vmatprep.mubr.bf16.mxu0 %v6682
      %6760 = vmatmul.mubr.bf16.gmra.mrb[0].mxu0 %v6502
      %v6761 = vpop.f32.mrb[0].mxu0
      %v6762 = vadd.f32 0.0, %v6761
      %v6763 = vpop.f32.mrb[0].mxu0
      %v6764 = vadd.f32 0.0, %v6763
      %v6765 = vpop.f32.mrb[0].mxu0
      %v6766 = vadd.f32 0.0, %v6765
      %v6767 = vpop.f32.mrb[0].mxu0
      %v6768 = vadd.f32 0.0, %v6767
      %6769 = vmatprep.mubr.bf16.mxu0 %v6685
      %6770 = vmatmul.mubr.bf16.gmra.mrb[0].mxu0 %v6505
      %v6771 = vpop.f32.mrb[0].mxu0
      %v6772 = vadd.f32 0.0, %v6771
      %v6773 = vpop.f32.mrb[0].mxu0
      %v6774 = vadd.f32 0.0, %v6773
      %v6775 = vpop.f32.mrb[0].mxu0
      %v6776 = vadd.f32 0.0, %v6775
      %v6777 = vpop.f32.mrb[0].mxu0
      %v6778 = vadd.f32 0.0, %v6777
      %6779 = vmatprep.mubr.bf16.mxu0 %v6688
      %6780 = vmatmul.mubr.bf16.gmra.mrb[0].mxu0 %v6508
      %v6781 = vpop.f32.mrb[0].mxu0
      %v6782 = vadd.f32 0.0, %v6781
      %v6783 = vpop.f32.mrb[0].mxu0
      %v6784 = vadd.f32 0.0, %v6783
      %v6785 = vpop.f32.mrb[0].mxu0
      %v6786 = vadd.f32 0.0, %v6785
      %v6787 = vpop.f32.mrb[0].mxu0
      %v6788 = vadd.f32 0.0, %v6787
      %6789 = vmatprep.mubr.bf16.mxu0 %v6691
      %6790 = vmatmul.mubr.bf16.gmra.mrb[0].mxu0 %v6511
      %v6791 = vpop.f32.mrb[0].mxu0
      %v6792 = vadd.f32 0.0, %v6791
      %v6793 = vpop.f32.mrb[0].mxu0
      %v6794 = vadd.f32 0.0, %v6793
      %v6795 = vpop.f32.mrb[0].mxu0
      %v6796 = vadd.f32 0.0, %v6795
      %v6797 = vpop.f32.mrb[0].mxu0
      %v6798 = vadd.f32 0.0, %v6797
      %6799 = vmatprep.mubr.bf16.mxu0 %v6694
      %6800 = vmatmul.mubr.bf16.gmra.mrb[0].mxu0 %v6514
      %v6801 = vpop.f32.mrb[0].mxu0
      %v6802 = vadd.f32 0.0, %v6801
      %v6803 = vpop.f32.mrb[0].mxu0
      %v6804 = vadd.f32 0.0, %v6803
      %v6805 = vpop.f32.mrb[0].mxu0
      %v6806 = vadd.f32 0.0, %v6805
      %v6807 = vpop.f32.mrb[0].mxu0
      %v6808 = vadd.f32 0.0, %v6807
      %6809 = vmatprep.mubr.bf16.mxu0 %v6697
      %6810 = vmatmul.mubr.bf16.gmra.mrb[0].mxu0 %v6517
      %v6811 = vpop.f32.mrb[0].mxu0
      %v6812 = vadd.f32 0.0, %v6811
      %v6813 = vpop.f32.mrb[0].mxu0
      %v6814 = vadd.f32 0.0, %v6813
      %v6815 = vpop.f32.mrb[0].mxu0
      %v6816 = vadd.f32 0.0, %v6815
      %v6817 = vpop.f32.mrb[0].mxu0
      %v6818 = vadd.f32 0.0, %v6817
      %6819 = vmatprep.mubr.bf16.mxu0 %v6700
      %6820 = vmatmul.mubr.bf16.gmra.mrb[0].mxu0 %v6520
      %v6821 = vpop.f32.mrb[0].mxu0
      %v6822 = vadd.f32 0.0, %v6821
      %v6823 = vpop.f32.mrb[0].mxu0
      %v6824 = vadd.f32 0.0, %v6823
      %v6825 = vpop.f32.mrb[0].mxu0
      %v6826 = vadd.f32 0.0, %v6825
      %v6827 = vpop.f32.mrb[0].mxu0
      %v6828 = vadd.f32 0.0, %v6827
      %6829 = vmatprep.mubr.bf16.mxu0 %v6703
      %6830 = vmatmul.mubr.bf16.gmra.mrb[0].mxu0 %v6523
      %v6831 = vpop.f32.mrb[0].mxu0
      %v6832 = vadd.f32 0.0, %v6831
      %v6833 = vpop.f32.mrb[0].mxu0
      %v6834 = vadd.f32 0.0, %v6833
      %v6835 = vpop.f32.mrb[0].mxu0
      %v6836 = vadd.f32 0.0, %v6835
      %v6837 = vpop.f32.mrb[0].mxu0
      %v6838 = vadd.f32 0.0, %v6837
      %6839 = vmatprep.mubr.bf16.mxu0 %v6706
      %6840 = vmatmul.mubr.bf16.gmra.mrb[0].mxu0 %v6526
      %v6841 = vpop.f32.mrb[0].mxu0
      %v6842 = vadd.f32 0.0, %v6841
      %v6843 = vpop.f32.mrb[0].mxu0
      %v6844 = vadd.f32 0.0, %v6843
      %v6845 = vpop.f32.mrb[0].mxu0
      %v6846 = vadd.f32 0.0, %v6845
      %v6847 = vpop.f32.mrb[0].mxu0
      %v6848 = vadd.f32 0.0, %v6847
      %6849 = vmatprep.mubr.bf16.mxu0 %v6709
      %6850 = vmatmul.mubr.bf16.gmra.mrb[0].mxu0 %v6529
      %v6851 = vpop.f32.mrb[0].mxu0
      %v6852 = vpop.f32.mrb[0].mxu0
      %v6853 = vadd.f32 0.0, %v6852
      %v6854 = vpop.f32.mrb[0].mxu0
      %v6855 = vpop.f32.mrb[0].mxu0
      %v6856 = vadd.f32 0.0, %v6855
      %6857 = vdwg.mxu0
      %6878 = vrot.lane.b32.xlu0 %v6754, 64
      %v6879 = vpop.permute.xlu0 %6878
      %6880 = vrot.lane.b32.xlu0 %v6757, 64
      %v6881 = vpop.permute.xlu0 %6880
      %6882 = vrot.lane.b32.xlu0 %v6762, 64
      %v6883 = vpop.permute.xlu0 %6882
      %6884 = vrot.lane.b32.xlu0 %v6766, 64
      %v6885 = vpop.permute.xlu0 %6884
      %6886 = vrot.lane.b32.xlu0 %v6772, 64
      %v6887 = vpop.permute.xlu0 %6886
      %6888 = vrot.lane.b32.xlu0 %v6776, 64
      %v6889 = vpop.permute.xlu0 %6888
      %6890 = vrot.lane.b32.xlu0 %v6782, 64
      %v6891 = vpop.permute.xlu0 %6890
      %6892 = vrot.lane.b32.xlu0 %v6786, 64
      %v6893 = vpop.permute.xlu0 %6892
      %6894 = vrot.lane.b32.xlu0 %v6792, 64
      %v6895 = vpop.permute.xlu0 %6894
      %6896 = vrot.lane.b32.xlu0 %v6796, 64
      %v6897 = vpop.permute.xlu0 %6896
      %6898 = vrot.lane.b32.xlu0 %v6802, 64
      %v6899 = vpop.permute.xlu0 %6898
      %6900 = vrot.lane.b32.xlu0 %v6806, 64
      %v6901 = vpop.permute.xlu0 %6900
      %6902 = vrot.lane.b32.xlu0 %v6812, 64
      %v6903 = vpop.permute.xlu0 %6902
      %6904 = vrot.lane.b32.xlu0 %v6816, 64
      %v6905 = vpop.permute.xlu0 %6904
      %6906 = vrot.lane.b32.xlu0 %v6822, 64
      %v6907 = vpop.permute.xlu0 %6906
      %6908 = vrot.lane.b32.xlu0 %v6826, 64
      %v6909 = vpop.permute.xlu0 %6908
      %6910 = vrot.lane.b32.xlu0 %v6832, 64
      %v6911 = vpop.permute.xlu0 %6910
      %6912 = vrot.lane.b32.xlu0 %v6836, 64
      %v6913 = vpop.permute.xlu0 %6912
      %6914 = vrot.lane.b32.xlu0 %v6842, 64
      %v6915 = vpop.permute.xlu0 %6914
      %6916 = vrot.lane.b32.xlu0 %v6846, 64
      %v6917 = vpop.permute.xlu0 %6916
      %v6938 = vadd.f32 %v6746, %v6879
      %v6939 = vadd.f32 %v6749, %v6881
      %v6940 = vadd.f32 %v6754, %v6883
      %v6941 = vadd.f32 %v6757, %v6885
      %v6942 = vadd.f32 %v6762, %v6887
      %v6943 = vadd.f32 %v6766, %v6889
      %v6944 = vadd.f32 %v6772, %v6891
      %v6945 = vadd.f32 %v6776, %v6893
      %v6946 = vadd.f32 %v6782, %v6895
      %v6947 = vadd.f32 %v6786, %v6897
      %v6948 = vadd.f32 %v6792, %v6899
      %v6949 = vadd.f32 %v6796, %v6901
      %v6950 = vadd.f32 %v6802, %v6903
      %v6951 = vadd.f32 %v6806, %v6905
      %v6952 = vadd.f32 %v6812, %v6907
      %v6953 = vadd.f32 %v6816, %v6909
      %v6954 = vadd.f32 %v6822, %v6911
      %v6955 = vadd.f32 %v6826, %v6913
      %v6956 = vadd.f32 %v6832, %v6915
      %v6957 = vadd.f32 %v6836, %v6917
      %v6958 = vadd.f32 %v6938, %v6764
      %v6959 = vadd.f32 %v6939, %v6768
      %v6960 = vadd.f32 %v6940, %v6774
      %v6961 = vadd.f32 %v6941, %v6778
      %v6962 = vadd.f32 %v6942, %v6784
      %v6963 = vadd.f32 %v6943, %v6788
      %v6964 = vadd.f32 %v6944, %v6794
      %v6965 = vadd.f32 %v6945, %v6798
      %v6966 = vadd.f32 %v6946, %v6804
      %v6967 = vadd.f32 %v6947, %v6808
      %v6968 = vadd.f32 %v6948, %v6814
      %v6969 = vadd.f32 %v6949, %v6818
      %v6970 = vadd.f32 %v6950, %v6824
      %v6971 = vadd.f32 %v6951, %v6828
      %v6972 = vadd.f32 %v6952, %v6834
      %v6973 = vadd.f32 %v6953, %v6838
      %v6974 = vadd.f32 %v6954, %v6844
      %v6975 = vadd.f32 %v6955, %v6848
      %v6976 = vadd.f32 %v6956, %v6853
      %v6977 = vadd.f32 %v6957, %v6856
      %v6978 = vld [vmem:[%s3] sm:$0x1]
      %v6980 = vlaneseq
      %v6981 = vshrl.u32 %v6980, 7
      %v6982 = vsub.s32 0, %v6981
      %v6983 = vrot.slane %v6978, %v6982
      %v6985 = vmul.f32 %v6958, %v6983
      %v6986 = vmul.f32 %v6959, %v6983
      %v6987 = vmul.f32 %v6960, %v6983
      %v6988 = vmul.f32 %v6961, %v6983
      %v6989 = vmul.f32 %v6962, %v6983
      %v6990 = vmul.f32 %v6963, %v6983
      %v6991 = vmul.f32 %v6964, %v6983
      %v6992 = vmul.f32 %v6965, %v6983
      %v6993 = vmul.f32 %v6966, %v6983
      %v6994 = vmul.f32 %v6967, %v6983
      %v6995 = vmul.f32 %v6968, %v6983
      %v6996 = vmul.f32 %v6969, %v6983
      %v6997 = vmul.f32 %v6970, %v6983
      %v6998 = vmul.f32 %v6971, %v6983
      %v6999 = vmul.f32 %v6972, %v6983
      %v7000 = vmul.f32 %v6973, %v6983
      %v7001 = vmul.f32 %v6974, %v6983
      %v7002 = vmul.f32 %v6975, %v6983
      %v7003 = vmul.f32 %v6976, %v6983
      %v7004 = vmul.f32 %v6977, %v6983
      %v7005 = vld [vmem:[%s4] sm:$0x1]
      %v7007 = vlaneseq
      %v7008 = vshrl.u32 %v7007, 7
      %v7009 = vsub.s32 0, %v7008
      %v7010 = vrot.slane %v7005, %v7009
      %v7012 = vadd.f32 %v6985, %v7010
      %v7013 = vadd.f32 %v6986, %v7010
      %v7014 = vadd.f32 %v6987, %v7010
      %v7015 = vadd.f32 %v6988, %v7010
      %v7016 = vadd.f32 %v6989, %v7010
      %v7017 = vadd.f32 %v6990, %v7010
      %v7018 = vadd.f32 %v6991, %v7010
      %v7019 = vadd.f32 %v6992, %v7010
      %v7020 = vadd.f32 %v6993, %v7010
      %v7021 = vadd.f32 %v6994, %v7010
      %v7022 = vadd.f32 %v6995, %v7010
      %v7023 = vadd.f32 %v6996, %v7010
      %v7024 = vadd.f32 %v6997, %v7010
      %v7025 = vadd.f32 %v6998, %v7010
      %v7026 = vadd.f32 %v6999, %v7010
      %v7027 = vadd.f32 %v7000, %v7010
      %v7028 = vadd.f32 %v7001, %v7010
      %v7029 = vadd.f32 %v7002, %v7010
      %v7030 = vadd.f32 %v7003, %v7010
      %v7031 = vadd.f32 %v7004, %v7010
      %v7032 = vmax.f32 %v7012, 0.0
      %v7033 = vmax.f32 %v7013, 0.0
      %v7034 = vmax.f32 %v7014, 0.0
      %v7035 = vmax.f32 %v7015, 0.0
      %v7036 = vmax.f32 %v7016, 0.0
      %v7037 = vmax.f32 %v7017, 0.0
      %v7038 = vmax.f32 %v7018, 0.0
      %v7039 = vmax.f32 %v7019, 0.0
      %v7040 = vmax.f32 %v7020, 0.0
      %v7041 = vmax.f32 %v7021, 0.0
      %v7042 = vmax.f32 %v7022, 0.0
      %v7043 = vmax.f32 %v7023, 0.0
      %v7044 = vmax.f32 %v7024, 0.0
      %v7045 = vmax.f32 %v7025, 0.0
      %v7046 = vmax.f32 %v7026, 0.0
      %v7047 = vmax.f32 %v7027, 0.0
      %v7048 = vmax.f32 %v7028, 0.0
      %v7049 = vmax.f32 %v7029, 0.0
      %v7050 = vmax.f32 %v7030, 0.0
      %v7051 = vmax.f32 %v7031, 0.0
      %v7052 = vpack.c.bf16 %v7033, %v7032
      %v7053 = vpack.c.bf16 %v7035, %v7034
      %v7054 = vpack.c.bf16 %v7037, %v7036
      %v7055 = vpack.c.bf16 %v7039, %v7038
      %v7056 = vpack.c.bf16 %v7041, %v7040
      %v7057 = vpack.c.bf16 %v7043, %v7042
      %v7058 = vpack.c.bf16 %v7045, %v7044
      %v7059 = vpack.c.bf16 %v7047, %v7046
      %v7060 = vpack.c.bf16 %v7049, %v7048
      %v7061 = vpack.c.bf16 %v7051, %v7050
      %v7062 = vmax.bf16 %v3728, %v7052
      %v7063 = vmax.bf16 %v3729, %v7053
      %v7064 = vmax.bf16 %v3730, %v7054
      %v7065 = vmax.bf16 %v3731, %v7055
      %v7066 = vmax.bf16 %v3732, %v7056
      %v7067 = vmax.bf16 %v3733, %v7057
      %v7068 = vmax.bf16 %v3734, %v7058
      %v7069 = vmax.bf16 %v3735, %v7059
      %v7070 = vmax.bf16 %v3736, %v7060
      %v7071 = vmax.bf16 %v3737, %v7061
      %v7082 = vunpack.c.l.b16 %v7062
      %v7083 = vunpack.c.h.b16 %v7062
      %v7084 = vunpack.c.l.b16 %v7063
      %v7085 = vunpack.c.h.b16 %v7063
      %v7086 = vunpack.c.l.b16 %v7064
      %v7087 = vunpack.c.h.b16 %v7064
      %v7088 = vunpack.c.l.b16 %v7065
      %v7089 = vunpack.c.h.b16 %v7065
      %v7090 = vunpack.c.l.b16 %v7066
      %v7091 = vunpack.c.h.b16 %v7066
      %v7092 = vunpack.c.l.b16 %v7067
      %v7093 = vunpack.c.h.b16 %v7067
      %v7094 = vunpack.c.l.b16 %v7068
      %v7095 = vunpack.c.h.b16 %v7068
      %v7096 = vunpack.c.l.b16 %v7069
      %v7097 = vunpack.c.h.b16 %v7069
      %v7098 = vunpack.c.l.b16 %v7070
      %v7099 = vunpack.c.h.b16 %v7070
      %v7100 = vunpack.c.l.b16 %v7071
      %v7101 = vunpack.c.h.b16 %v7071
      %v7102 = vpack.c.b16 %v7082, %v7082
      %v7103 = vpack.c.b16 %v7083, %v7083
      %v7104 = vpack.c.b16 %v7084, %v7084
      %v7105 = vpack.c.b16 %v7085, %v7085
      %v7106 = vpack.c.b16 %v7086, %v7086
      %v7107 = vpack.c.b16 %v7087, %v7087
      %v7108 = vpack.c.b16 %v7088, %v7088
      %v7109 = vpack.c.b16 %v7089, %v7089
      %v7110 = vpack.c.b16 %v7090, %v7090
      %v7111 = vpack.c.b16 %v7091, %v7091
      %v7112 = vpack.c.b16 %v7092, %v7092
      %v7113 = vpack.c.b16 %v7093, %v7093
      %v7114 = vpack.c.b16 %v7094, %v7094
      %v7115 = vpack.c.b16 %v7095, %v7095
      %v7116 = vpack.c.b16 %v7096, %v7096
      %v7117 = vpack.c.b16 %v7097, %v7097
      %v7118 = vpack.c.b16 %v7098, %v7098
      %v7119 = vpack.c.b16 %v7099, %v7099
      %v7120 = vpack.c.b16 %v7100, %v7100
      %v7121 = vpack.c.b16 %v7101, %v7101
      %v7123 = vshrl.u32 %v7102, 16
      %v7125 = vrot.slane %v7123, 7
      %v7126 = vshll.u32 %v7102, 16
      %v7128 = vor.u32 %v7125, %v7126
      %v7129 = vrot.slane %v7125, 4
      %v7131 = vshrl.u32 %v7103, 16
      %v7133 = vrot.slane %v7131, 7
      %v7134 = vshll.u32 %v7103, 16
      %v7136 = vor.u32 %v7133, %v7134
      %v7137 = vsel %vm2322, %v7129, %v7136
      %v7138 = vrot.slane %v7133, 4
      %v7140 = vshrl.u32 %v7104, 16
      %v7142 = vrot.slane %v7140, 7
      %v7143 = vshll.u32 %v7104, 16
      %v7145 = vor.u32 %v7142, %v7143
      %v7146 = vrot.slane %v7142, 4
      %v7148 = vshrl.u32 %v7105, 16
      %v7150 = vrot.slane %v7148, 7
      %v7151 = vshll.u32 %v7105, 16
      %v7153 = vor.u32 %v7150, %v7151
      %v7154 = vsel %vm2322, %v7146, %v7153
      %v7155 = vrot.slane %v7150, 4
      %v7157 = vshrl.u32 %v7106, 16
      %v7159 = vrot.slane %v7157, 7
      %v7160 = vshll.u32 %v7106, 16
      %v7162 = vor.u32 %v7159, %v7160
      %v7163 = vrot.slane %v7159, 4
      %v7165 = vshrl.u32 %v7107, 16
      %v7167 = vrot.slane %v7165, 7
      %v7168 = vshll.u32 %v7107, 16
      %v7170 = vor.u32 %v7167, %v7168
      %v7171 = vsel %vm2322, %v7163, %v7170
      %v7172 = vrot.slane %v7167, 4
      %v7174 = vshrl.u32 %v7108, 16
      %v7176 = vrot.slane %v7174, 7
      %v7177 = vshll.u32 %v7108, 16
      %v7179 = vor.u32 %v7176, %v7177
      %v7180 = vrot.slane %v7176, 4
      %v7182 = vshrl.u32 %v7109, 16
      %v7184 = vrot.slane %v7182, 7
      %v7185 = vshll.u32 %v7109, 16
      %v7187 = vor.u32 %v7184, %v7185
      %v7188 = vsel %vm2322, %v7180, %v7187
      %v7189 = vrot.slane %v7184, 4
      %v7191 = vshrl.u32 %v7110, 16
      %v7193 = vrot.slane %v7191, 7
      %v7194 = vshll.u32 %v7110, 16
      %v7196 = vor.u32 %v7193, %v7194
      %v7197 = vrot.slane %v7193, 4
      %v7199 = vshrl.u32 %v7111, 16
      %v7201 = vrot.slane %v7199, 7
      %v7202 = vshll.u32 %v7111, 16
      %v7204 = vor.u32 %v7201, %v7202
      %v7205 = vsel %vm2322, %v7197, %v7204
      %v7206 = vrot.slane %v7201, 4
      %v7208 = vshrl.u32 %v7112, 16
      %v7210 = vrot.slane %v7208, 7
      %v7211 = vshll.u32 %v7112, 16
      %v7213 = vor.u32 %v7210, %v7211
      %v7214 = vrot.slane %v7210, 4
      %v7216 = vshrl.u32 %v7113, 16
      %v7218 = vrot.slane %v7216, 7
      %v7219 = vshll.u32 %v7113, 16
      %v7221 = vor.u32 %v7218, %v7219
      %v7222 = vsel %vm2322, %v7214, %v7221
      %v7223 = vrot.slane %v7218, 4
      %v7225 = vshrl.u32 %v7114, 16
      %v7227 = vrot.slane %v7225, 7
      %v7228 = vshll.u32 %v7114, 16
      %v7230 = vor.u32 %v7227, %v7228
      %v7231 = vrot.slane %v7227, 4
      %v7233 = vshrl.u32 %v7115, 16
      %v7235 = vrot.slane %v7233, 7
      %v7236 = vshll.u32 %v7115, 16
      %v7238 = vor.u32 %v7235, %v7236
      %v7239 = vsel %vm2322, %v7231, %v7238
      %v7240 = vrot.slane %v7235, 4
      %v7242 = vshrl.u32 %v7116, 16
      %v7244 = vrot.slane %v7242, 7
      %v7245 = vshll.u32 %v7116, 16
      %v7247 = vor.u32 %v7244, %v7245
      %v7248 = vrot.slane %v7244, 4
      %v7250 = vshrl.u32 %v7117, 16
      %v7252 = vrot.slane %v7250, 7
      %v7253 = vshll.u32 %v7117, 16
      %v7255 = vor.u32 %v7252, %v7253
      %v7256 = vsel %vm2322, %v7248, %v7255
      %v7257 = vrot.slane %v7252, 4
      %v7259 = vshrl.u32 %v7118, 16
      %v7261 = vrot.slane %v7259, 7
      %v7262 = vshll.u32 %v7118, 16
      %v7264 = vor.u32 %v7261, %v7262
      %v7265 = vrot.slane %v7261, 4
      %v7267 = vshrl.u32 %v7119, 16
      %v7269 = vrot.slane %v7267, 7
      %v7270 = vshll.u32 %v7119, 16
      %v7272 = vor.u32 %v7269, %v7270
      %v7273 = vsel %vm2322, %v7265, %v7272
      %v7274 = vrot.slane %v7269, 4
      %v7276 = vshrl.u32 %v7120, 16
      %v7278 = vrot.slane %v7276, 7
      %v7279 = vshll.u32 %v7120, 16
      %v7281 = vor.u32 %v7278, %v7279
      %v7282 = vrot.slane %v7278, 4
      %v7284 = vshrl.u32 %v7121, 16
      %v7286 = vrot.slane %v7284, 7
      %v7287 = vshll.u32 %v7121, 16
      %v7289 = vor.u32 %v7286, %v7287
      %v7290 = vsel %vm2322, %v7282, %v7289
      %v7291 = vrot.slane %v7286, 4
      %v7322 = vld [vmem:[#allocation3] sm:$0xf]
      %v7323 = vsel %vm2565, %v7128, %v7322
      %7324 = vst [vmem:[#allocation3] sm:$0xf] %v7323
      %7325 = vst.msk [vmem:[#allocation3 + $0x4] sm:$0xf] %vm2569, %v7137
      %v7326 = vld [vmem:[#allocation3 + $0x8] sm:$0x1]
      %v7327 = vsel %vm2572, %v7138, %v7326
      %7328 = vst [vmem:[#allocation3 + $0x8] sm:$0x1] %v7327
      %v7329 = vld [vmem:[#allocation3 + $0xc] sm:$0xf]
      %v7330 = vsel %vm2565, %v7145, %v7329
      %7331 = vst [vmem:[#allocation3 + $0xc] sm:$0xf] %v7330
      %7332 = vst.msk [vmem:[#allocation3 + $0x10] sm:$0xf] %vm2569, %v7154
      %v7333 = vld [vmem:[#allocation3 + $0x14] sm:$0x1]
      %v7334 = vsel %vm2572, %v7155, %v7333
      %7335 = vst [vmem:[#allocation3 + $0x14] sm:$0x1] %v7334
      %v7336 = vld [vmem:[#allocation3 + $0x18] sm:$0xf]
      %v7337 = vsel %vm2565, %v7162, %v7336
      %7338 = vst [vmem:[#allocation3 + $0x18] sm:$0xf] %v7337
      %7339 = vst.msk [vmem:[#allocation3 + $0x1c] sm:$0xf] %vm2569, %v7171
      %v7340 = vld [vmem:[#allocation3 + $0x20] sm:$0x1]
      %v7341 = vsel %vm2572, %v7172, %v7340
      %7342 = vst [vmem:[#allocation3 + $0x20] sm:$0x1] %v7341
      %v7343 = vld [vmem:[#allocation3 + $0x24] sm:$0xf]
      %v7344 = vsel %vm2565, %v7179, %v7343
      %7345 = vst [vmem:[#allocation3 + $0x24] sm:$0xf] %v7344
      %7346 = vst.msk [vmem:[#allocation3 + $0x28] sm:$0xf] %vm2569, %v7188
      %v7347 = vld [vmem:[#allocation3 + $0x2c] sm:$0x1]
      %v7348 = vsel %vm2572, %v7189, %v7347
      %7349 = vst [vmem:[#allocation3 + $0x2c] sm:$0x1] %v7348
      %v7350 = vld [vmem:[#allocation3 + $0x30] sm:$0xf]
      %v7351 = vsel %vm2565, %v7196, %v7350
      %7352 = vst [vmem:[#allocation3 + $0x30] sm:$0xf] %v7351
      %7353 = vst.msk [vmem:[#allocation3 + $0x34] sm:$0xf] %vm2569, %v7205
      %v7354 = vld [vmem:[#allocation3 + $0x38] sm:$0x1]
      %v7355 = vsel %vm2572, %v7206, %v7354
      %7356 = vst [vmem:[#allocation3 + $0x38] sm:$0x1] %v7355
      %v7357 = vld [vmem:[#allocation3 + $0x3c] sm:$0xf]
      %v7358 = vsel %vm2565, %v7213, %v7357
      %7359 = vst [vmem:[#allocation3 + $0x3c] sm:$0xf] %v7358
      %7360 = vst.msk [vmem:[#allocation3 + $0x40] sm:$0xf] %vm2569, %v7222
      %v7361 = vld [vmem:[#allocation3 + $0x44] sm:$0x1]
      %v7362 = vsel %vm2572, %v7223, %v7361
      %7363 = vst [vmem:[#allocation3 + $0x44] sm:$0x1] %v7362
      %v7364 = vld [vmem:[#allocation3 + $0x48] sm:$0xf]
      %v7365 = vsel %vm2565, %v7230, %v7364
      %7366 = vst [vmem:[#allocation3 + $0x48] sm:$0xf] %v7365
      %7367 = vst.msk [vmem:[#allocation3 + $0x4c] sm:$0xf] %vm2569, %v7239
      %v7368 = vld [vmem:[#allocation3 + $0x50] sm:$0x1]
      %v7369 = vsel %vm2572, %v7240, %v7368
      %7370 = vst [vmem:[#allocation3 + $0x50] sm:$0x1] %v7369
      %v7371 = vld [vmem:[#allocation3 + $0x54] sm:$0xf]
      %v7372 = vsel %vm2565, %v7247, %v7371
      %7373 = vst [vmem:[#allocation3 + $0x54] sm:$0xf] %v7372
      %7374 = vst.msk [vmem:[#allocation3 + $0x58] sm:$0xf] %vm2569, %v7256
      %v7375 = vld [vmem:[#allocation3 + $0x5c] sm:$0x1]
      %v7376 = vsel %vm2572, %v7257, %v7375
      %7377 = vst [vmem:[#allocation3 + $0x5c] sm:$0x1] %v7376
      %v7378 = vld [vmem:[#allocation3 + $0x60] sm:$0xf]
      %v7379 = vsel %vm2565, %v7264, %v7378
      %7380 = vst [vmem:[#allocation3 + $0x60] sm:$0xf] %v7379
      %7381 = vst.msk [vmem:[#allocation3 + $0x64] sm:$0xf] %vm2569, %v7273
      %v7382 = vld [vmem:[#allocation3 + $0x68] sm:$0x1]
      %v7383 = vsel %vm2572, %v7274, %v7382
      %7384 = vst [vmem:[#allocation3 + $0x68] sm:$0x1] %v7383
      %v7385 = vld [vmem:[#allocation3 + $0x6c] sm:$0xf]
      %v7386 = vsel %vm2565, %v7281, %v7385
      %7387 = vst [vmem:[#allocation3 + $0x6c] sm:$0xf] %v7386
      %7388 = vst.msk [vmem:[#allocation3 + $0x70] sm:$0xf] %vm2569, %v7290
      %v7389 = vld [vmem:[#allocation3 + $0x74] sm:$0x1]
      %v7390 = vsel %vm2572, %v7291, %v7389
      %7391 = vst [vmem:[#allocation3 + $0x74] sm:$0x1] %v7390
      %v7392 = vld [vmem:[#allocation3] sm:$0x1]
      %v7393 = vsel %vm2572, %v7062, %v7392
      %7394 = vst [vmem:[#allocation3] sm:$0x1] %v7393
      %v7395 = vld [vmem:[#allocation3 + $0xc] sm:$0x1]
      %v7396 = vsel %vm2572, %v7063, %v7395
      %7397 = vst [vmem:[#allocation3 + $0xc] sm:$0x1] %v7396
      %v7398 = vld [vmem:[#allocation3 + $0x18] sm:$0x1]
      %v7399 = vsel %vm2572, %v7064, %v7398
      %7400 = vst [vmem:[#allocation3 + $0x18] sm:$0x1] %v7399
      %v7401 = vld [vmem:[#allocation3 + $0x24] sm:$0x1]
      %v7402 = vsel %vm2572, %v7065, %v7401
      %7403 = vst [vmem:[#allocation3 + $0x24] sm:$0x1] %v7402
      %v7404 = vld [vmem:[#allocation3 + $0x30] sm:$0x1]
      %v7405 = vsel %vm2572, %v7066, %v7404
      %7406 = vst [vmem:[#allocation3 + $0x30] sm:$0x1] %v7405
      %v7407 = vld [vmem:[#allocation3 + $0x3c] sm:$0x1]
      %v7408 = vsel %vm2572, %v7067, %v7407
      %7409 = vst [vmem:[#allocation3 + $0x3c] sm:$0x1] %v7408
      %v7410 = vld [vmem:[#allocation3 + $0x48] sm:$0x1]
      %v7411 = vsel %vm2572, %v7068, %v7410
      %7412 = vst [vmem:[#allocation3 + $0x48] sm:$0x1] %v7411
      %v7413 = vld [vmem:[#allocation3 + $0x54] sm:$0x1]
      %v7414 = vsel %vm2572, %v7069, %v7413
      %7415 = vst [vmem:[#allocation3 + $0x54] sm:$0x1] %v7414
      %v7416 = vld [vmem:[#allocation3 + $0x60] sm:$0x1]
      %v7417 = vsel %vm2572, %v7070, %v7416
      %7418 = vst [vmem:[#allocation3 + $0x60] sm:$0x1] %v7417
      %v7419 = vld [vmem:[#allocation3 + $0x6c] sm:$0x1]
      %v7420 = vsel %vm2572, %v7071, %v7419
      %7421 = vst [vmem:[#allocation3 + $0x6c] sm:$0x1] %v7420
      %v7422 = vrot.slane %v7103, 7
      %v7423 = vrot.slane %v7422, 4
      %v7424 = vrot.slane %v7105, 7
      %v7425 = vrot.slane %v7424, 4
      %v7426 = vrot.slane %v7107, 7
      %v7427 = vrot.slane %v7426, 4
      %v7428 = vrot.slane %v7109, 7
      %v7429 = vrot.slane %v7428, 4
      %v7430 = vrot.slane %v7111, 7
      %v7431 = vrot.slane %v7430, 4
      %v7432 = vrot.slane %v7113, 7
      %v7433 = vrot.slane %v7432, 4
      %v7434 = vrot.slane %v7115, 7
      %v7435 = vrot.slane %v7434, 4
      %v7436 = vrot.slane %v7117, 7
      %v7437 = vrot.slane %v7436, 4
      %v7438 = vrot.slane %v7119, 7
      %v7439 = vrot.slane %v7438, 4
      %v7440 = vrot.slane %v7121, 7
      %v7441 = vrot.slane %v7440, 4
      %v7452 = vld [vmem:[#allocation3 + $0x8] sm:$0x1]
      %v7453 = vsel %vm2725, %v7423, %v7452
      %7454 = vst [vmem:[#allocation3 + $0x8] sm:$0x1] %v7453
      %v7455 = vld [vmem:[#allocation3 + $0x14] sm:$0x1]
      %v7456 = vsel %vm2725, %v7425, %v7455
      %7457 = vst [vmem:[#allocation3 + $0x14] sm:$0x1] %v7456
      %v7458 = vld [vmem:[#allocation3 + $0x20] sm:$0x1]
      %v7459 = vsel %vm2725, %v7427, %v7458
      %7460 = vst [vmem:[#allocation3 + $0x20] sm:$0x1] %v7459
      %v7461 = vld [vmem:[#allocation3 + $0x2c] sm:$0x1]
      %v7462 = vsel %vm2725, %v7429, %v7461
      %7463 = vst [vmem:[#allocation3 + $0x2c] sm:$0x1] %v7462
      %v7464 = vld [vmem:[#allocation3 + $0x38] sm:$0x1]
      %v7465 = vsel %vm2725, %v7431, %v7464
      %7466 = vst [vmem:[#allocation3 + $0x38] sm:$0x1] %v7465
      %v7467 = vld [vmem:[#allocation3 + $0x44] sm:$0x1]
      %v7468 = vsel %vm2725, %v7433, %v7467
      %7469 = vst [vmem:[#allocation3 + $0x44] sm:$0x1] %v7468
      %v7470 = vld [vmem:[#allocation3 + $0x50] sm:$0x1]
      %v7471 = vsel %vm2725, %v7435, %v7470
      %7472 = vst [vmem:[#allocation3 + $0x50] sm:$0x1] %v7471
      %v7473 = vld [vmem:[#allocation3 + $0x5c] sm:$0x1]
      %v7474 = vsel %vm2725, %v7437, %v7473
      %7475 = vst [vmem:[#allocation3 + $0x5c] sm:$0x1] %v7474
      %v7476 = vld [vmem:[#allocation3 + $0x68] sm:$0x1]
      %v7477 = vsel %vm2725, %v7439, %v7476
      %7478 = vst [vmem:[#allocation3 + $0x68] sm:$0x1] %v7477
      %v7479 = vld [vmem:[#allocation3 + $0x74] sm:$0x1]
      %v7480 = vsel %vm2725, %v7441, %v7479
      %7481 = vst [vmem:[#allocation3 + $0x74] sm:$0x1] %v7480
      // Predicated region
      $region77: #{_lambda_.1} parent=59 // pred_check
        %p7482 = pneg %p378
      $region78: #{_lambda_.1} parent=59 // pred_check_branch
        %7484 = sbr.rel (%p7482) target = $region80
      $region79: #{_lambda_.1} parent=59 // pred_region
        %s7485 = scalar_lea.vmem [#allocation3], 12
        %v7486 = vld [vmem:[%s7485] sm:$0xf]
        %v7487 = vld [vmem:[%s7485 + $0x4] sm:$0xf]
        %v7488 = vld [vmem:[%s7485 + $0x8] sm:$0x1]
        %7489 = vst.msk [vmem:[#allocation3] sm:$0xf] %vm2569, %v7486
        %7490 = vst.msk [vmem:[#allocation3 + $0x4] sm:$0xf] %vm2569, %v7487
        %vm7491 = vcmask 516096
        %7492 = vst.msk [vmem:[#allocation3 + $0x8] sm:$0x1] %vm7491, %v7488
      $region80: #{_lambda_.1} parent=59 // pred_fallthru
        _
      // Predicated region
      $region81: #{_lambda_.1} parent=59 // pred_check
        %p7493 = pneg %p379
      $region82: #{_lambda_.1} parent=59 // pred_check_branch
        %7495 = sbr.rel (%p7493) target = $region84
      $region83: #{_lambda_.1} parent=59 // pred_region
        %s7496 = scalar_lea.vmem [#allocation3], 96
        %v7497 = vld [vmem:[%s7496] sm:$0xf]
        %v7498 = vld [vmem:[%s7496 + $0x4] sm:$0xf]
        %v7499 = vld [vmem:[%s7496 + $0x8] sm:$0x1]
        %s7500 = scalar_lea.vmem [#allocation3], 108
        %7501 = vst.msk [vmem:[%s7500] sm:$0xf] %vm2569, %v7497
        %7502 = vst.msk [vmem:[%s7500 + $0x4] sm:$0xf] %vm2569, %v7498
        %vm7503 = vcmask 516096
        %7504 = vst.msk [vmem:[%s7500 + $0x8] sm:$0x1] %vm7503, %v7499
      $region84: #{_lambda_.1} parent=59 // pred_fallthru
        _
      %v7505 = vld [vmem:[#allocation3] sm:$0xf]
      %v7506 = vld [vmem:[#allocation3 + $0x4] sm:$0xf]
      %v7507 = vld [vmem:[#allocation3 + $0xc] sm:$0xf]
      %v7508 = vld [vmem:[#allocation3 + $0x10] sm:$0xf]
      %v7509 = vld [vmem:[#allocation3 + $0x18] sm:$0xf]
      %v7510 = vld [vmem:[#allocation3 + $0x1c] sm:$0xf]
      %v7511 = vld [vmem:[#allocation3 + $0x24] sm:$0xf]
      %v7512 = vld [vmem:[#allocation3 + $0x28] sm:$0xf]
      %v7513 = vld [vmem:[#allocation3 + $0x30] sm:$0xf]
      %v7514 = vld [vmem:[#allocation3 + $0x34] sm:$0xf]
      %v7515 = vld [vmem:[#allocation3 + $0x3c] sm:$0xf]
      %v7516 = vld [vmem:[#allocation3 + $0x40] sm:$0xf]
      %v7517 = vld [vmem:[#allocation3 + $0x48] sm:$0xf]
      %v7518 = vld [vmem:[#allocation3 + $0x4c] sm:$0xf]
      %v7519 = vld [vmem:[#allocation3 + $0x54] sm:$0xf]
      %v7520 = vld [vmem:[#allocation3 + $0x58] sm:$0xf]
      %v7521 = vld [vmem:[#allocation3 + $0x60] sm:$0xf]
      %v7522 = vld [vmem:[#allocation3 + $0x64] sm:$0xf]
      %v7523 = vld [vmem:[#allocation3 + $0x6c] sm:$0xf]
      %v7524 = vld [vmem:[#allocation3 + $0x70] sm:$0xf]
      %v7525 = vld [vmem:[#allocation3 + $0x8] sm:$0x1]
      %v7526 = vld [vmem:[#allocation3 + $0x14] sm:$0x1]
      %v7527 = vld [vmem:[#allocation3 + $0x20] sm:$0x1]
      %v7528 = vld [vmem:[#allocation3 + $0x2c] sm:$0x1]
      %v7529 = vld [vmem:[#allocation3 + $0x38] sm:$0x1]
      %v7530 = vld [vmem:[#allocation3 + $0x44] sm:$0x1]
      %v7531 = vld [vmem:[#allocation3 + $0x50] sm:$0x1]
      %v7532 = vld [vmem:[#allocation3 + $0x5c] sm:$0x1]
      %v7533 = vld [vmem:[#allocation3 + $0x68] sm:$0x1]
      %v7534 = vld [vmem:[#allocation3 + $0x74] sm:$0x1]
      %v7535 = vld [vmem:[#allocation3] sm:$0xe]
      %v7536 = vld [vmem:[#allocation3 + $0xc] sm:$0xe]
      %v7537 = vld [vmem:[#allocation3 + $0x18] sm:$0xe]
      %v7538 = vld [vmem:[#allocation3 + $0x24] sm:$0xe]
      %v7539 = vld [vmem:[#allocation3 + $0x30] sm:$0xe]
      %v7540 = vld [vmem:[#allocation3 + $0x3c] sm:$0xe]
      %v7541 = vld [vmem:[#allocation3 + $0x48] sm:$0xe]
      %v7542 = vld [vmem:[#allocation3 + $0x54] sm:$0xe]
      %v7543 = vld [vmem:[#allocation3 + $0x60] sm:$0xe]
      %v7544 = vld [vmem:[#allocation3 + $0x6c] sm:$0xe]
      %v7565 = vunpack.c.l.b16 %v7505
      %v7566 = vunpack.c.l.b16 %v7506
      %v7567 = vunpack.c.l.b16 %v7507
      %v7568 = vunpack.c.l.b16 %v7508
      %v7569 = vunpack.c.l.b16 %v7509
      %v7570 = vunpack.c.l.b16 %v7510
      %v7571 = vunpack.c.l.b16 %v7511
      %v7572 = vunpack.c.l.b16 %v7512
      %v7573 = vunpack.c.l.b16 %v7513
      %v7574 = vunpack.c.l.b16 %v7514
      %v7575 = vunpack.c.l.b16 %v7515
      %v7576 = vunpack.c.l.b16 %v7516
      %v7577 = vunpack.c.l.b16 %v7517
      %v7578 = vunpack.c.l.b16 %v7518
      %v7579 = vunpack.c.l.b16 %v7519
      %v7580 = vunpack.c.l.b16 %v7520
      %v7581 = vunpack.c.l.b16 %v7521
      %v7582 = vunpack.c.l.b16 %v7522
      %v7583 = vunpack.c.l.b16 %v7523
      %v7584 = vunpack.c.l.b16 %v7524
      %v7585 = vpack.c.b16 %v7566, %v7565
      %v7586 = vpack.c.b16 %v7568, %v7567
      %v7587 = vpack.c.b16 %v7570, %v7569
      %v7588 = vpack.c.b16 %v7572, %v7571
      %v7589 = vpack.c.b16 %v7574, %v7573
      %v7590 = vpack.c.b16 %v7576, %v7575
      %v7591 = vpack.c.b16 %v7578, %v7577
      %v7592 = vpack.c.b16 %v7580, %v7579
      %v7593 = vpack.c.b16 %v7582, %v7581
      %v7594 = vpack.c.b16 %v7584, %v7583
      %v7605 = vunpack.c.l.b16 %v7525
      %v7606 = vunpack.c.l.b16 %v7526
      %v7607 = vunpack.c.l.b16 %v7527
      %v7608 = vunpack.c.l.b16 %v7528
      %v7609 = vunpack.c.l.b16 %v7529
      %v7610 = vunpack.c.l.b16 %v7530
      %v7611 = vunpack.c.l.b16 %v7531
      %v7612 = vunpack.c.l.b16 %v7532
      %v7613 = vunpack.c.l.b16 %v7533
      %v7614 = vunpack.c.l.b16 %v7534
      %v7615 = vpack.c.b16 %v7605, %v7605
      %v7616 = vpack.c.b16 %v7606, %v7606
      %v7617 = vpack.c.b16 %v7607, %v7607
      %v7618 = vpack.c.b16 %v7608, %v7608
      %v7619 = vpack.c.b16 %v7609, %v7609
      %v7620 = vpack.c.b16 %v7610, %v7610
      %v7621 = vpack.c.b16 %v7611, %v7611
      %v7622 = vpack.c.b16 %v7612, %v7612
      %v7623 = vpack.c.b16 %v7613, %v7613
      %v7624 = vpack.c.b16 %v7614, %v7614
      %v7626 = vshrl.u32 %v7585, 16
      %v7628 = vshll.u32 %v7585, 16
      %v7630 = vrot.slane %v7628, 1
      %v7631 = vor.u32 %v7626, %v7630
      %v7633 = vshll.u32 %v7615, 16
      %v7635 = vrot.slane %v7633, 1
      %v7636 = vsel %vm578, %v7631, %v7635
      %v7638 = vshrl.u32 %v7586, 16
      %v7640 = vshll.u32 %v7586, 16
      %v7642 = vrot.slane %v7640, 1
      %v7643 = vor.u32 %v7638, %v7642
      %v7645 = vshll.u32 %v7616, 16
      %v7647 = vrot.slane %v7645, 1
      %v7648 = vsel %vm578, %v7643, %v7647
      %v7650 = vshrl.u32 %v7587, 16
      %v7652 = vshll.u32 %v7587, 16
      %v7654 = vrot.slane %v7652, 1
      %v7655 = vor.u32 %v7650, %v7654
      %v7657 = vshll.u32 %v7617, 16
      %v7659 = vrot.slane %v7657, 1
      %v7660 = vsel %vm578, %v7655, %v7659
      %v7662 = vshrl.u32 %v7588, 16
      %v7664 = vshll.u32 %v7588, 16
      %v7666 = vrot.slane %v7664, 1
      %v7667 = vor.u32 %v7662, %v7666
      %v7669 = vshll.u32 %v7618, 16
      %v7671 = vrot.slane %v7669, 1
      %v7672 = vsel %vm578, %v7667, %v7671
      %v7674 = vshrl.u32 %v7589, 16
      %v7676 = vshll.u32 %v7589, 16
      %v7678 = vrot.slane %v7676, 1
      %v7679 = vor.u32 %v7674, %v7678
      %v7681 = vshll.u32 %v7619, 16
      %v7683 = vrot.slane %v7681, 1
      %v7684 = vsel %vm578, %v7679, %v7683
      %v7686 = vshrl.u32 %v7590, 16
      %v7688 = vshll.u32 %v7590, 16
      %v7690 = vrot.slane %v7688, 1
      %v7691 = vor.u32 %v7686, %v7690
      %v7693 = vshll.u32 %v7620, 16
      %v7695 = vrot.slane %v7693, 1
      %v7696 = vsel %vm578, %v7691, %v7695
      %v7698 = vshrl.u32 %v7591, 16
      %v7700 = vshll.u32 %v7591, 16
      %v7702 = vrot.slane %v7700, 1
      %v7703 = vor.u32 %v7698, %v7702
      %v7705 = vshll.u32 %v7621, 16
      %v7707 = vrot.slane %v7705, 1
      %v7708 = vsel %vm578, %v7703, %v7707
      %v7710 = vshrl.u32 %v7592, 16
      %v7712 = vshll.u32 %v7592, 16
      %v7714 = vrot.slane %v7712, 1
      %v7715 = vor.u32 %v7710, %v7714
      %v7717 = vshll.u32 %v7622, 16
      %v7719 = vrot.slane %v7717, 1
      %v7720 = vsel %vm578, %v7715, %v7719
      %v7722 = vshrl.u32 %v7593, 16
      %v7724 = vshll.u32 %v7593, 16
      %v7726 = vrot.slane %v7724, 1
      %v7727 = vor.u32 %v7722, %v7726
      %v7729 = vshll.u32 %v7623, 16
      %v7731 = vrot.slane %v7729, 1
      %v7732 = vsel %vm578, %v7727, %v7731
      %v7734 = vshrl.u32 %v7594, 16
      %v7736 = vshll.u32 %v7594, 16
      %v7738 = vrot.slane %v7736, 1
      %v7739 = vor.u32 %v7734, %v7738
      %v7741 = vshll.u32 %v7624, 16
      %v7743 = vrot.slane %v7741, 1
      %v7744 = vsel %vm578, %v7739, %v7743
      %7745 = vrot.lane.b32.xlu0 %v7636, 64
      %v7746 = vpop.permute.xlu0 %7745
      %7747 = vrot.lane.b32.xlu0 %v7648, 64
      %v7748 = vpop.permute.xlu0 %7747
      %7749 = vrot.lane.b32.xlu0 %v7660, 64
      %v7750 = vpop.permute.xlu0 %7749
      %7751 = vrot.lane.b32.xlu0 %v7672, 64
      %v7752 = vpop.permute.xlu0 %7751
      %7753 = vrot.lane.b32.xlu0 %v7684, 64
      %v7754 = vpop.permute.xlu0 %7753
      %7755 = vrot.lane.b32.xlu0 %v7696, 64
      %v7756 = vpop.permute.xlu0 %7755
      %7757 = vrot.lane.b32.xlu0 %v7708, 64
      %v7758 = vpop.permute.xlu0 %7757
      %7759 = vrot.lane.b32.xlu0 %v7720, 64
      %v7760 = vpop.permute.xlu0 %7759
      %7761 = vrot.lane.b32.xlu0 %v7732, 64
      %v7762 = vpop.permute.xlu0 %7761
      %7763 = vrot.lane.b32.xlu0 %v7744, 64
      %v7764 = vpop.permute.xlu0 %7763
      %v7775 = vunpack.c.l.b16 %v7535
      %v7776 = vunpack.c.l.b16 %v7536
      %v7777 = vunpack.c.l.b16 %v7537
      %v7778 = vunpack.c.l.b16 %v7538
      %v7779 = vunpack.c.l.b16 %v7539
      %v7780 = vunpack.c.l.b16 %v7540
      %v7781 = vunpack.c.l.b16 %v7541
      %v7782 = vunpack.c.l.b16 %v7542
      %v7783 = vunpack.c.l.b16 %v7543
      %v7784 = vunpack.c.l.b16 %v7544
      %v7785 = vpack.c.b16 %v7566, %v7775
      %v7786 = vpack.c.b16 %v7568, %v7776
      %v7787 = vpack.c.b16 %v7570, %v7777
      %v7788 = vpack.c.b16 %v7572, %v7778
      %v7789 = vpack.c.b16 %v7574, %v7779
      %v7790 = vpack.c.b16 %v7576, %v7780
      %v7791 = vpack.c.b16 %v7578, %v7781
      %v7792 = vpack.c.b16 %v7580, %v7782
      %v7793 = vpack.c.b16 %v7582, %v7783
      %v7794 = vpack.c.b16 %v7584, %v7784
      %v7795 = vrot.slane %v7785, 1
      %v7796 = vrot.slane %v7615, 1
      %v7797 = vsel %vm831, %v7795, %v7796
      %v7798 = vrot.slane %v7786, 1
      %v7799 = vrot.slane %v7616, 1
      %v7800 = vsel %vm831, %v7798, %v7799
      %v7801 = vrot.slane %v7787, 1
      %v7802 = vrot.slane %v7617, 1
      %v7803 = vsel %vm831, %v7801, %v7802
      %v7804 = vrot.slane %v7788, 1
      %v7805 = vrot.slane %v7618, 1
      %v7806 = vsel %vm831, %v7804, %v7805
      %v7807 = vrot.slane %v7789, 1
      %v7808 = vrot.slane %v7619, 1
      %v7809 = vsel %vm831, %v7807, %v7808
      %v7810 = vrot.slane %v7790, 1
      %v7811 = vrot.slane %v7620, 1
      %v7812 = vsel %vm831, %v7810, %v7811
      %v7813 = vrot.slane %v7791, 1
      %v7814 = vrot.slane %v7621, 1
      %v7815 = vsel %vm831, %v7813, %v7814
      %v7816 = vrot.slane %v7792, 1
      %v7817 = vrot.slane %v7622, 1
      %v7818 = vsel %vm831, %v7816, %v7817
      %v7819 = vrot.slane %v7793, 1
      %v7820 = vrot.slane %v7623, 1
      %v7821 = vsel %vm831, %v7819, %v7820
      %v7822 = vrot.slane %v7794, 1
      %v7823 = vrot.slane %v7624, 1
      %v7824 = vsel %vm831, %v7822, %v7823
      %v7826 = vsel %vm3170, %v7585, %v7746
      %v7829 = vsel %vm3170, %v7586, %v7748
      %v7832 = vsel %vm3170, %v7587, %v7750
      %v7835 = vsel %vm3170, %v7588, %v7752
      %v7838 = vsel %vm3170, %v7589, %v7754
      %v7841 = vsel %vm3170, %v7590, %v7756
      %v7844 = vsel %vm3170, %v7591, %v7758
      %v7847 = vsel %vm3170, %v7592, %v7760
      %v7850 = vsel %vm3170, %v7593, %v7762
      %v7853 = vsel %vm3170, %v7594, %v7764
      %v7855 = vld [vmem:[%s5] sm:$0xff]
      %v7856 = vld [vmem:[%s5 + $0x8] sm:$0xff]
      %v7857 = vld [vmem:[%s5 + $0x10] sm:$0xff]
      %v7858 = vld [vmem:[%s5 + $0x18] sm:$0xff]
      %v7859 = vld [vmem:[%s5 + $0x20] sm:$0xff]
      %v7860 = vld [vmem:[%s5 + $0x28] sm:$0xff]
      %v7861 = vld [vmem:[%s5 + $0x30] sm:$0xff]
      %v7862 = vld [vmem:[%s5 + $0x38] sm:$0xff]
      %v7863 = vld [vmem:[%s5 + $0x40] sm:$0xff]
      %v7864 = vld [vmem:[%s5 + $0x48] sm:$0xff]
      %v7865 = vld [vmem:[%s5 + $0x50] sm:$0xff]
      %v7866 = vld [vmem:[%s5 + $0x58] sm:$0xff]
      %v7867 = vld [vmem:[%s5 + $0x60] sm:$0xff]
      %v7868 = vld [vmem:[%s5 + $0x68] sm:$0xff]
      %v7869 = vld [vmem:[%s5 + $0x70] sm:$0xff]
      %v7870 = vld [vmem:[%s5 + $0x78] sm:$0xff]
      %v7871 = vld [vmem:[%s5 + $0x80] sm:$0xff]
      %v7872 = vld [vmem:[%s5 + $0x88] sm:$0xff]
      %v7873 = vld [vmem:[%s5 + $0x90] sm:$0xff]
      %v7874 = vld [vmem:[%s5 + $0x98] sm:$0xff]
      %v7875 = vld [vmem:[%s5 + $0xa0] sm:$0xff]
      %v7876 = vld [vmem:[%s5 + $0xa8] sm:$0xff]
      %v7877 = vld [vmem:[%s5 + $0xb0] sm:$0xff]
      %v7878 = vld [vmem:[%s5 + $0xb8] sm:$0xff]
      %v7903 = vunpack.c.l.b16 %v7855
      %v7904 = vunpack.c.h.b16 %v7855
      %v7905 = vunpack.c.l.b16 %v7856
      %v7906 = vunpack.c.h.b16 %v7856
      %v7907 = vunpack.c.l.b16 %v7857
      %v7908 = vunpack.c.h.b16 %v7857
      %v7909 = vunpack.c.l.b16 %v7858
      %v7910 = vunpack.c.h.b16 %v7858
      %v7911 = vunpack.c.l.b16 %v7859
      %v7912 = vunpack.c.h.b16 %v7859
      %v7913 = vunpack.c.l.b16 %v7860
      %v7914 = vunpack.c.h.b16 %v7860
      %v7915 = vunpack.c.l.b16 %v7861
      %v7916 = vunpack.c.h.b16 %v7861
      %v7917 = vunpack.c.l.b16 %v7862
      %v7918 = vunpack.c.h.b16 %v7862
      %v7919 = vunpack.c.l.b16 %v7863
      %v7920 = vunpack.c.h.b16 %v7863
      %v7921 = vunpack.c.l.b16 %v7864
      %v7922 = vunpack.c.h.b16 %v7864
      %v7923 = vunpack.c.l.b16 %v7865
      %v7924 = vunpack.c.h.b16 %v7865
      %v7925 = vunpack.c.l.b16 %v7866
      %v7926 = vunpack.c.h.b16 %v7866
      %v7927 = vunpack.c.l.b16 %v7867
      %v7928 = vunpack.c.h.b16 %v7867
      %v7929 = vunpack.c.l.b16 %v7868
      %v7930 = vunpack.c.h.b16 %v7868
      %v7931 = vunpack.c.l.b16 %v7869
      %v7932 = vunpack.c.h.b16 %v7869
      %v7933 = vunpack.c.l.b16 %v7870
      %v7934 = vunpack.c.h.b16 %v7870
      %v7935 = vunpack.c.l.b16 %v7871
      %v7936 = vunpack.c.h.b16 %v7871
      %v7937 = vunpack.c.l.b16 %v7872
      %v7938 = vunpack.c.h.b16 %v7872
      %v7939 = vunpack.c.l.b16 %v7873
      %v7940 = vunpack.c.h.b16 %v7873
      %v7941 = vunpack.c.l.b16 %v7874
      %v7942 = vunpack.c.h.b16 %v7874
      %v7943 = vunpack.c.l.b16 %v7875
      %v7944 = vunpack.c.h.b16 %v7875
      %v7945 = vunpack.c.l.b16 %v7876
      %v7946 = vunpack.c.h.b16 %v7876
      %v7947 = vunpack.c.l.b16 %v7877
      %v7948 = vunpack.c.h.b16 %v7877
      %v7949 = vunpack.c.l.b16 %v7878
      %v7950 = vunpack.c.h.b16 %v7878
      %v7951 = vpack.c.b16 %v7905, %v7903
      %v7952 = vpack.c.b16 %v7906, %v7904
      %v7953 = vpack.c.b16 %v7909, %v7907
      %v7954 = vpack.c.b16 %v7910, %v7908
      %v7955 = vpack.c.b16 %v7913, %v7911
      %v7956 = vpack.c.b16 %v7914, %v7912
      %v7957 = vpack.c.b16 %v7917, %v7915
      %v7958 = vpack.c.b16 %v7918, %v7916
      %v7959 = vpack.c.b16 %v7921, %v7919
      %v7960 = vpack.c.b16 %v7922, %v7920
      %v7961 = vpack.c.b16 %v7925, %v7923
      %v7962 = vpack.c.b16 %v7926, %v7924
      %v7963 = vpack.c.b16 %v7929, %v7927
      %v7964 = vpack.c.b16 %v7930, %v7928
      %v7965 = vpack.c.b16 %v7933, %v7931
      %v7966 = vpack.c.b16 %v7934, %v7932
      %v7967 = vpack.c.b16 %v7937, %v7935
      %v7968 = vpack.c.b16 %v7938, %v7936
      %v7969 = vpack.c.b16 %v7941, %v7939
      %v7970 = vpack.c.b16 %v7942, %v7940
      %v7971 = vpack.c.b16 %v7945, %v7943
      %v7972 = vpack.c.b16 %v7946, %v7944
      %v7973 = vpack.c.b16 %v7949, %v7947
      %v7974 = vpack.c.b16 %v7950, %v7948
      %v8000 = vsel %vm3170, %v7797, 0
      %v8003 = vsel %vm3170, %v7800, 0
      %v8006 = vsel %vm3170, %v7803, 0
      %v8009 = vsel %vm3170, %v7806, 0
      %v8012 = vsel %vm3170, %v7809, 0
      %v8015 = vsel %vm3170, %v7812, 0
      %v8018 = vsel %vm3170, %v7815, 0
      %v8021 = vsel %vm3170, %v7818, 0
      %v8024 = vsel %vm3170, %v7821, 0
      %v8027 = vsel %vm3170, %v7824, 0
      %8029 = vmatprep.subr.bf16.mxu0 %v7952
      %8030 = vmatpush1.bf16.msra.mxu0 %v7951
      %8031 = vmatprep.subr.bf16.mxu0 %v7954
      %8032 = vmatpush1.bf16.msra.mxu0 %v7953
      %8033 = vmatprep.subr.bf16.mxu0 %v7956
      %8034 = vmatpush1.bf16.msra.mxu0 %v7955
      %8035 = vmatprep.subr.bf16.mxu0 %v7958
      %8036 = vmatpush1.bf16.msra.mxu0 %v7957
      %8037 = vmatprep.subr.bf16.mxu0 %v7960
      %8038 = vmatpush1.bf16.msra.mxu0 %v7959
      %8039 = vmatprep.subr.bf16.mxu0 %v7962
      %8040 = vmatpush1.bf16.msra.mxu0 %v7961
      %8041 = vmatprep.subr.bf16.mxu0 %v7964
      %8042 = vmatpush1.bf16.msra.mxu0 %v7963
      %8043 = vmatprep.subr.bf16.mxu0 %v7966
      %8044 = vmatpush1.bf16.msra.mxu0 %v7965
      %8045 = vmatprep.subr.bf16.mxu0 %v7968
      %8046 = vmatpush1.bf16.msra.mxu0 %v7967
      %8047 = vmatprep.subr.bf16.mxu0 %v7970
      %8048 = vmatpush1.bf16.msra.mxu0 %v7969
      %8049 = vmatprep.subr.bf16.mxu0 %v7972
      %8050 = vmatpush1.bf16.msra.mxu0 %v7971
      %8051 = vmatprep.subr.bf16.mxu0 %v7974
      %8052 = vmatpush1.bf16.msra.mxu0 %v7973
      %8053 = vmatprep.subr.bf16.mxu0 0
      %8054 = vmatpush1.bf16.msra.mxu0 0
      %8055 = vmatprep.subr.bf16.mxu0 0
      %8056 = vmatpush1.bf16.msra.mxu0 0
      %8057 = vmatprep.subr.bf16.mxu0 0
      %8058 = vmatpush1.bf16.msra.mxu0 0
      %8059 = vmatprep.subr.bf16.mxu0 0
      %8060 = vmatpush1.bf16.msra.mxu0 0
      %8061 = vmatprep.mubr.bf16.mxu0 %v8000
      %8062 = vmatmul.mubr.bf16.gmra.mrb[0].mxu0 %v7826
      %v8063 = vpop.f32.mrb[0].mxu0
      %v8064 = vadd.f32 0.0, %v8063
      %v8065 = vpop.f32.mrb[0].mxu0
      %v8066 = vpop.f32.mrb[0].mxu0
      %v8067 = vadd.f32 0.0, %v8066
      %v8068 = vpop.f32.mrb[0].mxu0
      %8069 = vmatprep.mubr.bf16.mxu0 %v8003
      %8070 = vmatmul.mubr.bf16.gmra.mrb[0].mxu0 %v7829
      %v8071 = vpop.f32.mrb[0].mxu0
      %v8072 = vadd.f32 0.0, %v8071
      %v8073 = vpop.f32.mrb[0].mxu0
      %v8074 = vpop.f32.mrb[0].mxu0
      %v8075 = vadd.f32 0.0, %v8074
      %v8076 = vpop.f32.mrb[0].mxu0
      %8077 = vmatprep.mubr.bf16.mxu0 %v8006
      %8078 = vmatmul.mubr.bf16.gmra.mrb[0].mxu0 %v7832
      %v8079 = vpop.f32.mrb[0].mxu0
      %v8080 = vadd.f32 0.0, %v8079
      %v8081 = vpop.f32.mrb[0].mxu0
      %v8082 = vadd.f32 0.0, %v8081
      %v8083 = vpop.f32.mrb[0].mxu0
      %v8084 = vadd.f32 0.0, %v8083
      %v8085 = vpop.f32.mrb[0].mxu0
      %v8086 = vadd.f32 0.0, %v8085
      %8087 = vmatprep.mubr.bf16.mxu0 %v8009
      %8088 = vmatmul.mubr.bf16.gmra.mrb[0].mxu0 %v7835
      %v8089 = vpop.f32.mrb[0].mxu0
      %v8090 = vadd.f32 0.0, %v8089
      %v8091 = vpop.f32.mrb[0].mxu0
      %v8092 = vadd.f32 0.0, %v8091
      %v8093 = vpop.f32.mrb[0].mxu0
      %v8094 = vadd.f32 0.0, %v8093
      %v8095 = vpop.f32.mrb[0].mxu0
      %v8096 = vadd.f32 0.0, %v8095
      %8097 = vmatprep.mubr.bf16.mxu0 %v8012
      %8098 = vmatmul.mubr.bf16.gmra.mrb[0].mxu0 %v7838
      %v8099 = vpop.f32.mrb[0].mxu0
      %v8100 = vadd.f32 0.0, %v8099
      %v8101 = vpop.f32.mrb[0].mxu0
      %v8102 = vadd.f32 0.0, %v8101
      %v8103 = vpop.f32.mrb[0].mxu0
      %v8104 = vadd.f32 0.0, %v8103
      %v8105 = vpop.f32.mrb[0].mxu0
      %v8106 = vadd.f32 0.0, %v8105
      %8107 = vmatprep.mubr.bf16.mxu0 %v8015
      %8108 = vmatmul.mubr.bf16.gmra.mrb[0].mxu0 %v7841
      %v8109 = vpop.f32.mrb[0].mxu0
      %v8110 = vadd.f32 0.0, %v8109
      %v8111 = vpop.f32.mrb[0].mxu0
      %v8112 = vadd.f32 0.0, %v8111
      %v8113 = vpop.f32.mrb[0].mxu0
      %v8114 = vadd.f32 0.0, %v8113
      %v8115 = vpop.f32.mrb[0].mxu0
      %v8116 = vadd.f32 0.0, %v8115
      %8117 = vmatprep.mubr.bf16.mxu0 %v8018
      %8118 = vmatmul.mubr.bf16.gmra.mrb[0].mxu0 %v7844
      %v8119 = vpop.f32.mrb[0].mxu0
      %v8120 = vadd.f32 0.0, %v8119
      %v8121 = vpop.f32.mrb[0].mxu0
      %v8122 = vadd.f32 0.0, %v8121
      %v8123 = vpop.f32.mrb[0].mxu0
      %v8124 = vadd.f32 0.0, %v8123
      %v8125 = vpop.f32.mrb[0].mxu0
      %v8126 = vadd.f32 0.0, %v8125
      %8127 = vmatprep.mubr.bf16.mxu0 %v8021
      %8128 = vmatmul.mubr.bf16.gmra.mrb[0].mxu0 %v7847
      %v8129 = vpop.f32.mrb[0].mxu0
      %v8130 = vadd.f32 0.0, %v8129
      %v8131 = vpop.f32.mrb[0].mxu0
      %v8132 = vadd.f32 0.0, %v8131
      %v8133 = vpop.f32.mrb[0].mxu0
      %v8134 = vadd.f32 0.0, %v8133
      %v8135 = vpop.f32.mrb[0].mxu0
      %v8136 = vadd.f32 0.0, %v8135
      %8137 = vmatprep.mubr.bf16.mxu0 %v8024
      %8138 = vmatmul.mubr.bf16.gmra.mrb[0].mxu0 %v7850
      %v8139 = vpop.f32.mrb[0].mxu0
      %v8140 = vadd.f32 0.0, %v8139
      %v8141 = vpop.f32.mrb[0].mxu0
      %v8142 = vadd.f32 0.0, %v8141
      %v8143 = vpop.f32.mrb[0].mxu0
      %v8144 = vadd.f32 0.0, %v8143
      %v8145 = vpop.f32.mrb[0].mxu0
      %v8146 = vadd.f32 0.0, %v8145
      %8147 = vmatprep.mubr.bf16.mxu0 %v8027
      %8148 = vmatmul.mubr.bf16.gmra.mrb[0].mxu0 %v7853
      %v8149 = vpop.f32.mrb[0].mxu0
      %v8150 = vpop.f32.mrb[0].mxu0
      %v8151 = vadd.f32 0.0, %v8150
      %v8152 = vpop.f32.mrb[0].mxu0
      %v8153 = vpop.f32.mrb[0].mxu0
      %v8154 = vadd.f32 0.0, %v8153
      %8155 = vdwg.mxu0
      %8172 = vrot.lane.b32.xlu0 %v8072, 64
      %v8173 = vpop.permute.xlu0 %8172
      %8174 = vrot.lane.b32.xlu0 %v8075, 64
      %v8175 = vpop.permute.xlu0 %8174
      %8176 = vrot.lane.b32.xlu0 %v8080, 64
      %v8177 = vpop.permute.xlu0 %8176
      %8178 = vrot.lane.b32.xlu0 %v8084, 64
      %v8179 = vpop.permute.xlu0 %8178
      %8180 = vrot.lane.b32.xlu0 %v8090, 64
      %v8181 = vpop.permute.xlu0 %8180
      %8182 = vrot.lane.b32.xlu0 %v8094, 64
      %v8183 = vpop.permute.xlu0 %8182
      %8184 = vrot.lane.b32.xlu0 %v8100, 64
      %v8185 = vpop.permute.xlu0 %8184
      %8186 = vrot.lane.b32.xlu0 %v8104, 64
      %v8187 = vpop.permute.xlu0 %8186
      %8188 = vrot.lane.b32.xlu0 %v8110, 64
      %v8189 = vpop.permute.xlu0 %8188
      %8190 = vrot.lane.b32.xlu0 %v8114, 64
      %v8191 = vpop.permute.xlu0 %8190
      %8192 = vrot.lane.b32.xlu0 %v8120, 64
      %v8193 = vpop.permute.xlu0 %8192
      %8194 = vrot.lane.b32.xlu0 %v8124, 64
      %v8195 = vpop.permute.xlu0 %8194
      %8196 = vrot.lane.b32.xlu0 %v8130, 64
      %v8197 = vpop.permute.xlu0 %8196
      %8198 = vrot.lane.b32.xlu0 %v8134, 64
      %v8199 = vpop.permute.xlu0 %8198
      %8200 = vrot.lane.b32.xlu0 %v8140, 64
      %v8201 = vpop.permute.xlu0 %8200
      %8202 = vrot.lane.b32.xlu0 %v8144, 64
      %v8203 = vpop.permute.xlu0 %8202
      %v8220 = vadd.f32 %v8064, %v8173
      %v8221 = vadd.f32 %v8067, %v8175
      %v8222 = vadd.f32 %v8072, %v8177
      %v8223 = vadd.f32 %v8075, %v8179
      %v8224 = vadd.f32 %v8080, %v8181
      %v8225 = vadd.f32 %v8084, %v8183
      %v8226 = vadd.f32 %v8090, %v8185
      %v8227 = vadd.f32 %v8094, %v8187
      %v8228 = vadd.f32 %v8100, %v8189
      %v8229 = vadd.f32 %v8104, %v8191
      %v8230 = vadd.f32 %v8110, %v8193
      %v8231 = vadd.f32 %v8114, %v8195
      %v8232 = vadd.f32 %v8120, %v8197
      %v8233 = vadd.f32 %v8124, %v8199
      %v8234 = vadd.f32 %v8130, %v8201
      %v8235 = vadd.f32 %v8134, %v8203
      %v8236 = vadd.f32 %v8220, %v8082
      %v8237 = vadd.f32 %v8221, %v8086
      %v8238 = vadd.f32 %v8222, %v8092
      %v8239 = vadd.f32 %v8223, %v8096
      %v8240 = vadd.f32 %v8224, %v8102
      %v8241 = vadd.f32 %v8225, %v8106
      %v8242 = vadd.f32 %v8226, %v8112
      %v8243 = vadd.f32 %v8227, %v8116
      %v8244 = vadd.f32 %v8228, %v8122
      %v8245 = vadd.f32 %v8229, %v8126
      %v8246 = vadd.f32 %v8230, %v8132
      %v8247 = vadd.f32 %v8231, %v8136
      %v8248 = vadd.f32 %v8232, %v8142
      %v8249 = vadd.f32 %v8233, %v8146
      %v8250 = vadd.f32 %v8234, %v8151
      %v8251 = vadd.f32 %v8235, %v8154
      %v8252 = vld [vmem:[%s6] sm:$0x1]
      %v8254 = vlaneseq
      %v8255 = vshrl.u32 %v8254, 7
      %v8256 = vsub.s32 0, %v8255
      %v8257 = vrot.slane %v8252, %v8256
      %v8259 = vmul.f32 %v8236, %v8257
      %v8260 = vmul.f32 %v8237, %v8257
      %v8261 = vmul.f32 %v8238, %v8257
      %v8262 = vmul.f32 %v8239, %v8257
      %v8263 = vmul.f32 %v8240, %v8257
      %v8264 = vmul.f32 %v8241, %v8257
      %v8265 = vmul.f32 %v8242, %v8257
      %v8266 = vmul.f32 %v8243, %v8257
      %v8267 = vmul.f32 %v8244, %v8257
      %v8268 = vmul.f32 %v8245, %v8257
      %v8269 = vmul.f32 %v8246, %v8257
      %v8270 = vmul.f32 %v8247, %v8257
      %v8271 = vmul.f32 %v8248, %v8257
      %v8272 = vmul.f32 %v8249, %v8257
      %v8273 = vmul.f32 %v8250, %v8257
      %v8274 = vmul.f32 %v8251, %v8257
      %v8275 = vld [vmem:[%s7] sm:$0x1]
      %v8277 = vlaneseq
      %v8278 = vshrl.u32 %v8277, 7
      %v8279 = vsub.s32 0, %v8278
      %v8280 = vrot.slane %v8275, %v8279
      %v8282 = vadd.f32 %v8259, %v8280
      %v8283 = vadd.f32 %v8260, %v8280
      %v8284 = vadd.f32 %v8261, %v8280
      %v8285 = vadd.f32 %v8262, %v8280
      %v8286 = vadd.f32 %v8263, %v8280
      %v8287 = vadd.f32 %v8264, %v8280
      %v8288 = vadd.f32 %v8265, %v8280
      %v8289 = vadd.f32 %v8266, %v8280
      %v8290 = vadd.f32 %v8267, %v8280
      %v8291 = vadd.f32 %v8268, %v8280
      %v8292 = vadd.f32 %v8269, %v8280
      %v8293 = vadd.f32 %v8270, %v8280
      %v8294 = vadd.f32 %v8271, %v8280
      %v8295 = vadd.f32 %v8272, %v8280
      %v8296 = vadd.f32 %v8273, %v8280
      %v8297 = vadd.f32 %v8274, %v8280
      %v8298 = vmax.f32 %v8282, 0.0
      %v8299 = vmax.f32 %v8283, 0.0
      %v8300 = vmax.f32 %v8284, 0.0
      %v8301 = vmax.f32 %v8285, 0.0
      %v8302 = vmax.f32 %v8286, 0.0
      %v8303 = vmax.f32 %v8287, 0.0
      %v8304 = vmax.f32 %v8288, 0.0
      %v8305 = vmax.f32 %v8289, 0.0
      %v8306 = vmax.f32 %v8290, 0.0
      %v8307 = vmax.f32 %v8291, 0.0
      %v8308 = vmax.f32 %v8292, 0.0
      %v8309 = vmax.f32 %v8293, 0.0
      %v8310 = vmax.f32 %v8294, 0.0
      %v8311 = vmax.f32 %v8295, 0.0
      %v8312 = vmax.f32 %v8296, 0.0
      %v8313 = vmax.f32 %v8297, 0.0
      %v8314 = vpack.c.bf16 %v8299, %v8298
      %v8315 = vpack.c.bf16 %v8301, %v8300
      %v8316 = vpack.c.bf16 %v8303, %v8302
      %v8317 = vpack.c.bf16 %v8305, %v8304
      %v8318 = vpack.c.bf16 %v8307, %v8306
      %v8319 = vpack.c.bf16 %v8309, %v8308
      %v8320 = vpack.c.bf16 %v8311, %v8310
      %v8321 = vpack.c.bf16 %v8313, %v8312
      %v8322 = vunpack.c.l.bf16 %v8314
      %v8323 = vunpack.c.h.bf16 %v8314
      %v8324 = vunpack.c.l.bf16 %v8315
      %v8325 = vunpack.c.h.bf16 %v8315
      %v8326 = vunpack.c.l.bf16 %v8316
      %v8327 = vunpack.c.h.bf16 %v8316
      %v8328 = vunpack.c.l.bf16 %v8317
      %v8329 = vunpack.c.h.bf16 %v8317
      %v8330 = vunpack.c.l.bf16 %v8318
      %v8331 = vunpack.c.h.bf16 %v8318
      %v8332 = vunpack.c.l.bf16 %v8319
      %v8333 = vunpack.c.h.bf16 %v8319
      %v8334 = vunpack.c.l.bf16 %v8320
      %v8335 = vunpack.c.h.bf16 %v8320
      %v8336 = vunpack.c.l.bf16 %v8321
      %v8337 = vunpack.c.h.bf16 %v8321
      %v8338 = vld [vmem:[%s8] sm:$0x3]
      %v8339 = vunpack.c.l.bf16 %v8338
      %v8340 = vld [vmem:[%s9] sm:$0x1]
      %v8341 = vlaneseq
      %v8342 = vshrl.u32 %v8341, 7
      %v8343 = vsub.s32 0, %v8342
      %v8344 = vrot.slane %v8339, %v8343
      %v8345 = vmul.f32 %v8322, %v8344
      %v8346 = vmul.f32 %v8323, %v8344
      %v8347 = vmul.f32 %v8324, %v8344
      %v8348 = vmul.f32 %v8325, %v8344
      %v8349 = vmul.f32 %v8326, %v8344
      %v8350 = vmul.f32 %v8327, %v8344
      %v8351 = vmul.f32 %v8328, %v8344
      %v8352 = vmul.f32 %v8329, %v8344
      %v8353 = vmul.f32 %v8330, %v8344
      %v8354 = vmul.f32 %v8331, %v8344
      %v8355 = vmul.f32 %v8332, %v8344
      %v8356 = vmul.f32 %v8333, %v8344
      %v8357 = vmul.f32 %v8334, %v8344
      %v8358 = vmul.f32 %v8335, %v8344
      %v8359 = vmul.f32 %v8336, %v8344
      %v8360 = vmul.f32 %v8337, %v8344
      %v8361 = vsel %vm3170, %v8345, 0.0
      %8362 = vadd.xlane.f32.xlu0 %v8361
      %v8363 = vpop.xlane.xlu0 %8362
      %v8364 = vsel %vm3170, %v8346, 0.0
      %8365 = vadd.xlane.f32.xlu0 %v8364
      %v8366 = vpop.xlane.xlu0 %8365
      %v8367 = vsel %vm3170, %v8347, 0.0
      %8368 = vadd.xlane.f32.xlu0 %v8367
      %v8369 = vpop.xlane.xlu0 %8368
      %v8370 = vsel %vm3170, %v8348, 0.0
      %8371 = vadd.xlane.f32.xlu0 %v8370
      %v8372 = vpop.xlane.xlu0 %8371
      %v8373 = vsel %vm3170, %v8349, 0.0
      %8374 = vadd.xlane.f32.xlu0 %v8373
      %v8375 = vpop.xlane.xlu0 %8374
      %v8376 = vsel %vm3170, %v8350, 0.0
      %8377 = vadd.xlane.f32.xlu0 %v8376
      %v8378 = vpop.xlane.xlu0 %8377
      %v8379 = vsel %vm3170, %v8351, 0.0
      %8380 = vadd.xlane.f32.xlu0 %v8379
      %v8381 = vpop.xlane.xlu0 %8380
      %v8382 = vsel %vm3170, %v8352, 0.0
      %8383 = vadd.xlane.f32.xlu0 %v8382
      %v8384 = vpop.xlane.xlu0 %8383
      %v8385 = vsel %vm3170, %v8353, 0.0
      %8386 = vadd.xlane.f32.xlu0 %v8385
      %v8387 = vpop.xlane.xlu0 %8386
      %v8388 = vsel %vm3170, %v8354, 0.0
      %8389 = vadd.xlane.f32.xlu0 %v8388
      %v8390 = vpop.xlane.xlu0 %8389
      %v8391 = vsel %vm3170, %v8355, 0.0
      %8392 = vadd.xlane.f32.xlu0 %v8391
      %v8393 = vpop.xlane.xlu0 %8392
      %v8394 = vsel %vm3170, %v8356, 0.0
      %8395 = vadd.xlane.f32.xlu0 %v8394
      %v8396 = vpop.xlane.xlu0 %8395
      %v8397 = vsel %vm3170, %v8357, 0.0
      %8398 = vadd.xlane.f32.xlu0 %v8397
      %v8399 = vpop.xlane.xlu0 %8398
      %v8400 = vsel %vm3170, %v8358, 0.0
      %8401 = vadd.xlane.f32.xlu0 %v8400
      %v8402 = vpop.xlane.xlu0 %8401
      %v8403 = vsel %vm3170, %v8359, 0.0
      %8404 = vadd.xlane.f32.xlu0 %v8403
      %v8405 = vpop.xlane.xlu0 %8404
      %v8406 = vsel %vm3170, %v8360, 0.0
      %8407 = vadd.xlane.f32.xlu0 %v8406
      %v8408 = vpop.xlane.xlu0 %8407
      %s8409 = vtos %v8340
      %v8410 = vstv %s8409
      %v8411 = vadd.f32 %v8363, %v8410
      %v8412 = vadd.f32 %v8366, %v8410
      %v8413 = vadd.f32 %v8369, %v8410
      %v8414 = vadd.f32 %v8372, %v8410
      %v8415 = vadd.f32 %v8375, %v8410
      %v8416 = vadd.f32 %v8378, %v8410
      %v8417 = vadd.f32 %v8381, %v8410
      %v8418 = vadd.f32 %v8384, %v8410
      %v8419 = vadd.f32 %v8387, %v8410
      %v8420 = vadd.f32 %v8390, %v8410
      %v8421 = vadd.f32 %v8393, %v8410
      %v8422 = vadd.f32 %v8396, %v8410
      %v8423 = vadd.f32 %v8399, %v8410
      %v8424 = vadd.f32 %v8402, %v8410
      %v8425 = vadd.f32 %v8405, %v8410
      %v8426 = vadd.f32 %v8408, %v8410
      %v8443 = vlaneseq
      %v8444 = vand.u32 %v8443, 127
      %v8445 = vlaneseq
      %v8446 = vshrl.u32 %v8445, 7
      %v8447 = vsub.s32 %v8444, %v8446
      %v8448 = vrot.slane %v8411, %v8447
      %v8449 = vadd.s32 %v8444, 4294967288
      %v8450 = vlaneseq
      %v8451 = vshrl.u32 %v8450, 7
      %v8452 = vsub.s32 %v8449, %v8451
      %v8453 = vrot.slane %v8412, %v8452
      %vm8454 = vcmask 130112
      %v8455 = vsel %vm8454, %v8453, %v8448
      %v8456 = vlaneseq
      %v8457 = vshrl.u32 %v8456, 7
      %v8458 = vsub.s32 %v8444, %v8457
      %v8459 = vrot.slane %v8413, %v8458
      %v8460 = vlaneseq
      %v8461 = vshrl.u32 %v8460, 7
      %v8462 = vsub.s32 %v8449, %v8461
      %v8463 = vrot.slane %v8414, %v8462
      %v8464 = vsel %vm8454, %v8463, %v8459
      %v8465 = vlaneseq
      %v8466 = vshrl.u32 %v8465, 7
      %v8467 = vsub.s32 %v8444, %v8466
      %v8468 = vrot.slane %v8415, %v8467
      %v8469 = vlaneseq
      %v8470 = vshrl.u32 %v8469, 7
      %v8471 = vsub.s32 %v8449, %v8470
      %v8472 = vrot.slane %v8416, %v8471
      %v8473 = vsel %vm8454, %v8472, %v8468
      %v8474 = vlaneseq
      %v8475 = vshrl.u32 %v8474, 7
      %v8476 = vsub.s32 %v8444, %v8475
      %v8477 = vrot.slane %v8417, %v8476
      %v8478 = vlaneseq
      %v8479 = vshrl.u32 %v8478, 7
      %v8480 = vsub.s32 %v8449, %v8479
      %v8481 = vrot.slane %v8418, %v8480
      %v8482 = vsel %vm8454, %v8481, %v8477
      %v8483 = vlaneseq
      %v8484 = vshrl.u32 %v8483, 7
      %v8485 = vsub.s32 %v8444, %v8484
      %v8486 = vrot.slane %v8419, %v8485
      %v8487 = vlaneseq
      %v8488 = vshrl.u32 %v8487, 7
      %v8489 = vsub.s32 %v8449, %v8488
      %v8490 = vrot.slane %v8420, %v8489
      %v8491 = vsel %vm8454, %v8490, %v8486
      %v8492 = vlaneseq
      %v8493 = vshrl.u32 %v8492, 7
      %v8494 = vsub.s32 %v8444, %v8493
      %v8495 = vrot.slane %v8421, %v8494
      %v8496 = vlaneseq
      %v8497 = vshrl.u32 %v8496, 7
      %v8498 = vsub.s32 %v8449, %v8497
      %v8499 = vrot.slane %v8422, %v8498
      %v8500 = vsel %vm8454, %v8499, %v8495
      %v8501 = vlaneseq
      %v8502 = vshrl.u32 %v8501, 7
      %v8503 = vsub.s32 %v8444, %v8502
      %v8504 = vrot.slane %v8423, %v8503
      %v8505 = vlaneseq
      %v8506 = vshrl.u32 %v8505, 7
      %v8507 = vsub.s32 %v8449, %v8506
      %v8508 = vrot.slane %v8424, %v8507
      %v8509 = vsel %vm8454, %v8508, %v8504
      %v8510 = vlaneseq
      %v8511 = vshrl.u32 %v8510, 7
      %v8512 = vsub.s32 %v8444, %v8511
      %v8513 = vrot.slane %v8425, %v8512
      %v8514 = vlaneseq
      %v8515 = vshrl.u32 %v8514, 7
      %v8516 = vsub.s32 %v8449, %v8515
      %v8517 = vrot.slane %v8426, %v8516
      %v8518 = vsel %vm8454, %v8517, %v8513
      %vm8519 = vcmask 1041409
      %v8520 = vsel %vm8519, %v8464, %v8455
      %vm8521 = vcmask 1042434
      %v8522 = vsel %vm8521, %v8473, %v8520
      %vm8523 = vcmask 1043459
      %v8524 = vsel %vm8523, %v8482, %v8522
      %vm8525 = vcmask 1044484
      %v8526 = vsel %vm8525, %v8491, %v8524
      %vm8527 = vcmask 1045509
      %v8528 = vsel %vm8527, %v8500, %v8526
      %vm8529 = vcmask 1046534
      %v8530 = vsel %vm8529, %v8509, %v8528
      %vm8531 = vcmask 1047559
      %v8532 = vsel %vm8531, %v8518, %v8530
      %vm8534 = vcmask 130048
      %8535 = vst.msk [vmem:[%s364] sm:$0xff] %vm8534, %v8532
      %v8536 = vlaneseq
      %v8537 = vshrl.u32 %v8536, 7
      %v8538 = vsub.s32 1, %v8537
      %v8539 = vrot.slane %v8339, %v8538
      %v8540 = vmul.f32 %v8322, %v8539
      %v8541 = vmul.f32 %v8323, %v8539
      %v8542 = vmul.f32 %v8324, %v8539
      %v8543 = vmul.f32 %v8325, %v8539
      %v8544 = vmul.f32 %v8326, %v8539
      %v8545 = vmul.f32 %v8327, %v8539
      %v8546 = vmul.f32 %v8328, %v8539
      %v8547 = vmul.f32 %v8329, %v8539
      %v8548 = vmul.f32 %v8330, %v8539
      %v8549 = vmul.f32 %v8331, %v8539
      %v8550 = vmul.f32 %v8332, %v8539
      %v8551 = vmul.f32 %v8333, %v8539
      %v8552 = vmul.f32 %v8334, %v8539
      %v8553 = vmul.f32 %v8335, %v8539
      %v8554 = vmul.f32 %v8336, %v8539
      %v8555 = vmul.f32 %v8337, %v8539
      %v8556 = vsel %vm3170, %v8540, 0.0
      %8557 = vadd.xlane.f32.xlu0 %v8556
      %v8558 = vpop.xlane.xlu0 %8557
      %v8559 = vsel %vm3170, %v8541, 0.0
      %8560 = vadd.xlane.f32.xlu0 %v8559
      %v8561 = vpop.xlane.xlu0 %8560
      %v8562 = vsel %vm3170, %v8542, 0.0
      %8563 = vadd.xlane.f32.xlu0 %v8562
      %v8564 = vpop.xlane.xlu0 %8563
      %v8565 = vsel %vm3170, %v8543, 0.0
      %8566 = vadd.xlane.f32.xlu0 %v8565
      %v8567 = vpop.xlane.xlu0 %8566
      %v8568 = vsel %vm3170, %v8544, 0.0
      %8569 = vadd.xlane.f32.xlu0 %v8568
      %v8570 = vpop.xlane.xlu0 %8569
      %v8571 = vsel %vm3170, %v8545, 0.0
      %8572 = vadd.xlane.f32.xlu0 %v8571
      %v8573 = vpop.xlane.xlu0 %8572
      %v8574 = vsel %vm3170, %v8546, 0.0
      %8575 = vadd.xlane.f32.xlu0 %v8574
      %v8576 = vpop.xlane.xlu0 %8575
      %v8577 = vsel %vm3170, %v8547, 0.0
      %8578 = vadd.xlane.f32.xlu0 %v8577
      %v8579 = vpop.xlane.xlu0 %8578
      %v8580 = vsel %vm3170, %v8548, 0.0
      %8581 = vadd.xlane.f32.xlu0 %v8580
      %v8582 = vpop.xlane.xlu0 %8581
      %v8583 = vsel %vm3170, %v8549, 0.0
      %8584 = vadd.xlane.f32.xlu0 %v8583
      %v8585 = vpop.xlane.xlu0 %8584
      %v8586 = vsel %vm3170, %v8550, 0.0
      %8587 = vadd.xlane.f32.xlu0 %v8586
      %v8588 = vpop.xlane.xlu0 %8587
      %v8589 = vsel %vm3170, %v8551, 0.0
      %8590 = vadd.xlane.f32.xlu0 %v8589
      %v8591 = vpop.xlane.xlu0 %8590
      %v8592 = vsel %vm3170, %v8552, 0.0
      %8593 = vadd.xlane.f32.xlu0 %v8592
      %v8594 = vpop.xlane.xlu0 %8593
      %v8595 = vsel %vm3170, %v8553, 0.0
      %8596 = vadd.xlane.f32.xlu0 %v8595
      %v8597 = vpop.xlane.xlu0 %8596
      %v8598 = vsel %vm3170, %v8554, 0.0
      %8599 = vadd.xlane.f32.xlu0 %v8598
      %v8600 = vpop.xlane.xlu0 %8599
      %v8601 = vsel %vm3170, %v8555, 0.0
      %8602 = vadd.xlane.f32.xlu0 %v8601
      %v8603 = vpop.xlane.xlu0 %8602
      %8604 = vrot.lane.b32.xlu0 %v8340, 127
      %v8605 = vpop.permute.xlu0 %8604
      %s8606 = vtos %v8605
      %v8607 = vstv %s8606
      %v8608 = vadd.f32 %v8558, %v8607
      %v8609 = vadd.f32 %v8561, %v8607
      %v8610 = vadd.f32 %v8564, %v8607
      %v8611 = vadd.f32 %v8567, %v8607
      %v8612 = vadd.f32 %v8570, %v8607
      %v8613 = vadd.f32 %v8573, %v8607
      %v8614 = vadd.f32 %v8576, %v8607
      %v8615 = vadd.f32 %v8579, %v8607
      %v8616 = vadd.f32 %v8582, %v8607
      %v8617 = vadd.f32 %v8585, %v8607
      %v8618 = vadd.f32 %v8588, %v8607
      %v8619 = vadd.f32 %v8591, %v8607
      %v8620 = vadd.f32 %v8594, %v8607
      %v8621 = vadd.f32 %v8597, %v8607
      %v8622 = vadd.f32 %v8600, %v8607
      %v8623 = vadd.f32 %v8603, %v8607
      %v8640 = vlaneseq
      %v8641 = vshrl.u32 %v8640, 7
      %v8642 = vsub.s32 %v8444, %v8641
      %v8643 = vrot.slane %v8608, %v8642
      %v8644 = vlaneseq
      %v8645 = vshrl.u32 %v8644, 7
      %v8646 = vsub.s32 %v8449, %v8645
      %v8647 = vrot.slane %v8609, %v8646
      %v8648 = vsel %vm8454, %v8647, %v8643
      %v8649 = vlaneseq
      %v8650 = vshrl.u32 %v8649, 7
      %v8651 = vsub.s32 %v8444, %v8650
      %v8652 = vrot.slane %v8610, %v8651
      %v8653 = vlaneseq
      %v8654 = vshrl.u32 %v8653, 7
      %v8655 = vsub.s32 %v8449, %v8654
      %v8656 = vrot.slane %v8611, %v8655
      %v8657 = vsel %vm8454, %v8656, %v8652
      %v8658 = vlaneseq
      %v8659 = vshrl.u32 %v8658, 7
      %v8660 = vsub.s32 %v8444, %v8659
      %v8661 = vrot.slane %v8612, %v8660
      %v8662 = vlaneseq
      %v8663 = vshrl.u32 %v8662, 7
      %v8664 = vsub.s32 %v8449, %v8663
      %v8665 = vrot.slane %v8613, %v8664
      %v8666 = vsel %vm8454, %v8665, %v8661
      %v8667 = vlaneseq
      %v8668 = vshrl.u32 %v8667, 7
      %v8669 = vsub.s32 %v8444, %v8668
      %v8670 = vrot.slane %v8614, %v8669
      %v8671 = vlaneseq
      %v8672 = vshrl.u32 %v8671, 7
      %v8673 = vsub.s32 %v8449, %v8672
      %v8674 = vrot.slane %v8615, %v8673
      %v8675 = vsel %vm8454, %v8674, %v8670
      %v8676 = vlaneseq
      %v8677 = vshrl.u32 %v8676, 7
      %v8678 = vsub.s32 %v8444, %v8677
      %v8679 = vrot.slane %v8616, %v8678
      %v8680 = vlaneseq
      %v8681 = vshrl.u32 %v8680, 7
      %v8682 = vsub.s32 %v8449, %v8681
      %v8683 = vrot.slane %v8617, %v8682
      %v8684 = vsel %vm8454, %v8683, %v8679
      %v8685 = vlaneseq
      %v8686 = vshrl.u32 %v8685, 7
      %v8687 = vsub.s32 %v8444, %v8686
      %v8688 = vrot.slane %v8618, %v8687
      %v8689 = vlaneseq
      %v8690 = vshrl.u32 %v8689, 7
      %v8691 = vsub.s32 %v8449, %v8690
      %v8692 = vrot.slane %v8619, %v8691
      %v8693 = vsel %vm8454, %v8692, %v8688
      %v8694 = vlaneseq
      %v8695 = vshrl.u32 %v8694, 7
      %v8696 = vsub.s32 %v8444, %v8695
      %v8697 = vrot.slane %v8620, %v8696
      %v8698 = vlaneseq
      %v8699 = vshrl.u32 %v8698, 7
      %v8700 = vsub.s32 %v8449, %v8699
      %v8701 = vrot.slane %v8621, %v8700
      %v8702 = vsel %vm8454, %v8701, %v8697
      %v8703 = vlaneseq
      %v8704 = vshrl.u32 %v8703, 7
      %v8705 = vsub.s32 %v8444, %v8704
      %v8706 = vrot.slane %v8622, %v8705
      %v8707 = vlaneseq
      %v8708 = vshrl.u32 %v8707, 7
      %v8709 = vsub.s32 %v8449, %v8708
      %v8710 = vrot.slane %v8623, %v8709
      %v8711 = vsel %vm8454, %v8710, %v8706
      %v8712 = vsel %vm8519, %v8657, %v8648
      %v8713 = vsel %vm8521, %v8666, %v8712
      %v8714 = vsel %vm8523, %v8675, %v8713
      %v8715 = vsel %vm8525, %v8684, %v8714
      %v8716 = vsel %vm8527, %v8693, %v8715
      %v8717 = vsel %vm8529, %v8702, %v8716
      %v8718 = vsel %vm8531, %v8711, %v8717
      %s8720 = scalar_lea.vmem %s364, 8
      %8721 = vst.msk [vmem:[%s8720] sm:$0xff] %vm8534, %v8718
      %v8722 = vlaneseq
      %v8723 = vshrl.u32 %v8722, 7
      %v8724 = vsub.s32 2, %v8723
      %v8725 = vrot.slane %v8339, %v8724
      %v8726 = vmul.f32 %v8322, %v8725
      %v8727 = vmul.f32 %v8323, %v8725
      %v8728 = vmul.f32 %v8324, %v8725
      %v8729 = vmul.f32 %v8325, %v8725
      %v8730 = vmul.f32 %v8326, %v8725
      %v8731 = vmul.f32 %v8327, %v8725
      %v8732 = vmul.f32 %v8328, %v8725
      %v8733 = vmul.f32 %v8329, %v8725
      %v8734 = vmul.f32 %v8330, %v8725
      %v8735 = vmul.f32 %v8331, %v8725
      %v8736 = vmul.f32 %v8332, %v8725
      %v8737 = vmul.f32 %v8333, %v8725
      %v8738 = vmul.f32 %v8334, %v8725
      %v8739 = vmul.f32 %v8335, %v8725
      %v8740 = vmul.f32 %v8336, %v8725
      %v8741 = vmul.f32 %v8337, %v8725
      %v8742 = vsel %vm3170, %v8726, 0.0
      %8743 = vadd.xlane.f32.xlu0 %v8742
      %v8744 = vpop.xlane.xlu0 %8743
      %v8745 = vsel %vm3170, %v8727, 0.0
      %8746 = vadd.xlane.f32.xlu0 %v8745
      %v8747 = vpop.xlane.xlu0 %8746
      %v8748 = vsel %vm3170, %v8728, 0.0
      %8749 = vadd.xlane.f32.xlu0 %v8748
      %v8750 = vpop.xlane.xlu0 %8749
      %v8751 = vsel %vm3170, %v8729, 0.0
      %8752 = vadd.xlane.f32.xlu0 %v8751
      %v8753 = vpop.xlane.xlu0 %8752
      %v8754 = vsel %vm3170, %v8730, 0.0
      %8755 = vadd.xlane.f32.xlu0 %v8754
      %v8756 = vpop.xlane.xlu0 %8755
      %v8757 = vsel %vm3170, %v8731, 0.0
      %8758 = vadd.xlane.f32.xlu0 %v8757
      %v8759 = vpop.xlane.xlu0 %8758
      %v8760 = vsel %vm3170, %v8732, 0.0
      %8761 = vadd.xlane.f32.xlu0 %v8760
      %v8762 = vpop.xlane.xlu0 %8761
      %v8763 = vsel %vm3170, %v8733, 0.0
      %8764 = vadd.xlane.f32.xlu0 %v8763
      %v8765 = vpop.xlane.xlu0 %8764
      %v8766 = vsel %vm3170, %v8734, 0.0
      %8767 = vadd.xlane.f32.xlu0 %v8766
      %v8768 = vpop.xlane.xlu0 %8767
      %v8769 = vsel %vm3170, %v8735, 0.0
      %8770 = vadd.xlane.f32.xlu0 %v8769
      %v8771 = vpop.xlane.xlu0 %8770
      %v8772 = vsel %vm3170, %v8736, 0.0
      %8773 = vadd.xlane.f32.xlu0 %v8772
      %v8774 = vpop.xlane.xlu0 %8773
      %v8775 = vsel %vm3170, %v8737, 0.0
      %8776 = vadd.xlane.f32.xlu0 %v8775
      %v8777 = vpop.xlane.xlu0 %8776
      %v8778 = vsel %vm3170, %v8738, 0.0
      %8779 = vadd.xlane.f32.xlu0 %v8778
      %v8780 = vpop.xlane.xlu0 %8779
      %v8781 = vsel %vm3170, %v8739, 0.0
      %8782 = vadd.xlane.f32.xlu0 %v8781
      %v8783 = vpop.xlane.xlu0 %8782
      %v8784 = vsel %vm3170, %v8740, 0.0
      %8785 = vadd.xlane.f32.xlu0 %v8784
      %v8786 = vpop.xlane.xlu0 %8785
      %v8787 = vsel %vm3170, %v8741, 0.0
      %8788 = vadd.xlane.f32.xlu0 %v8787
      %v8789 = vpop.xlane.xlu0 %8788
      %8790 = vrot.lane.b32.xlu0 %v8340, 126
      %v8791 = vpop.permute.xlu0 %8790
      %s8792 = vtos %v8791
      %v8793 = vstv %s8792
      %v8794 = vadd.f32 %v8744, %v8793
      %v8795 = vadd.f32 %v8747, %v8793
      %v8796 = vadd.f32 %v8750, %v8793
      %v8797 = vadd.f32 %v8753, %v8793
      %v8798 = vadd.f32 %v8756, %v8793
      %v8799 = vadd.f32 %v8759, %v8793
      %v8800 = vadd.f32 %v8762, %v8793
      %v8801 = vadd.f32 %v8765, %v8793
      %v8802 = vadd.f32 %v8768, %v8793
      %v8803 = vadd.f32 %v8771, %v8793
      %v8804 = vadd.f32 %v8774, %v8793
      %v8805 = vadd.f32 %v8777, %v8793
      %v8806 = vadd.f32 %v8780, %v8793
      %v8807 = vadd.f32 %v8783, %v8793
      %v8808 = vadd.f32 %v8786, %v8793
      %v8809 = vadd.f32 %v8789, %v8793
      %v8826 = vlaneseq
      %v8827 = vshrl.u32 %v8826, 7
      %v8828 = vsub.s32 %v8444, %v8827
      %v8829 = vrot.slane %v8794, %v8828
      %v8830 = vlaneseq
      %v8831 = vshrl.u32 %v8830, 7
      %v8832 = vsub.s32 %v8449, %v8831
      %v8833 = vrot.slane %v8795, %v8832
      %v8834 = vsel %vm8454, %v8833, %v8829
      %v8835 = vlaneseq
      %v8836 = vshrl.u32 %v8835, 7
      %v8837 = vsub.s32 %v8444, %v8836
      %v8838 = vrot.slane %v8796, %v8837
      %v8839 = vlaneseq
      %v8840 = vshrl.u32 %v8839, 7
      %v8841 = vsub.s32 %v8449, %v8840
      %v8842 = vrot.slane %v8797, %v8841
      %v8843 = vsel %vm8454, %v8842, %v8838
      %v8844 = vlaneseq
      %v8845 = vshrl.u32 %v8844, 7
      %v8846 = vsub.s32 %v8444, %v8845
      %v8847 = vrot.slane %v8798, %v8846
      %v8848 = vlaneseq
      %v8849 = vshrl.u32 %v8848, 7
      %v8850 = vsub.s32 %v8449, %v8849
      %v8851 = vrot.slane %v8799, %v8850
      %v8852 = vsel %vm8454, %v8851, %v8847
      %v8853 = vlaneseq
      %v8854 = vshrl.u32 %v8853, 7
      %v8855 = vsub.s32 %v8444, %v8854
      %v8856 = vrot.slane %v8800, %v8855
      %v8857 = vlaneseq
      %v8858 = vshrl.u32 %v8857, 7
      %v8859 = vsub.s32 %v8449, %v8858
      %v8860 = vrot.slane %v8801, %v8859
      %v8861 = vsel %vm8454, %v8860, %v8856
      %v8862 = vlaneseq
      %v8863 = vshrl.u32 %v8862, 7
      %v8864 = vsub.s32 %v8444, %v8863
      %v8865 = vrot.slane %v8802, %v8864
      %v8866 = vlaneseq
      %v8867 = vshrl.u32 %v8866, 7
      %v8868 = vsub.s32 %v8449, %v8867
      %v8869 = vrot.slane %v8803, %v8868
      %v8870 = vsel %vm8454, %v8869, %v8865
      %v8871 = vlaneseq
      %v8872 = vshrl.u32 %v8871, 7
      %v8873 = vsub.s32 %v8444, %v8872
      %v8874 = vrot.slane %v8804, %v8873
      %v8875 = vlaneseq
      %v8876 = vshrl.u32 %v8875, 7
      %v8877 = vsub.s32 %v8449, %v8876
      %v8878 = vrot.slane %v8805, %v8877
      %v8879 = vsel %vm8454, %v8878, %v8874
      %v8880 = vlaneseq
      %v8881 = vshrl.u32 %v8880, 7
      %v8882 = vsub.s32 %v8444, %v8881
      %v8883 = vrot.slane %v8806, %v8882
      %v8884 = vlaneseq
      %v8885 = vshrl.u32 %v8884, 7
      %v8886 = vsub.s32 %v8449, %v8885
      %v8887 = vrot.slane %v8807, %v8886
      %v8888 = vsel %vm8454, %v8887, %v8883
      %v8889 = vlaneseq
      %v8890 = vshrl.u32 %v8889, 7
      %v8891 = vsub.s32 %v8444, %v8890
      %v8892 = vrot.slane %v8808, %v8891
      %v8893 = vlaneseq
      %v8894 = vshrl.u32 %v8893, 7
      %v8895 = vsub.s32 %v8449, %v8894
      %v8896 = vrot.slane %v8809, %v8895
      %v8897 = vsel %vm8454, %v8896, %v8892
      %v8898 = vsel %vm8519, %v8843, %v8834
      %v8899 = vsel %vm8521, %v8852, %v8898
      %v8900 = vsel %vm8523, %v8861, %v8899
      %v8901 = vsel %vm8525, %v8870, %v8900
      %v8902 = vsel %vm8527, %v8879, %v8901
      %v8903 = vsel %vm8529, %v8888, %v8902
      %v8904 = vsel %vm8531, %v8897, %v8903
      %s8906 = scalar_lea.vmem %s364, 16
      %8907 = vst.msk [vmem:[%s8906] sm:$0xff] %vm8534, %v8904
      %p8908 = scmp.lt.s32.totalorder %s21, 3
      %s8909 = scalar_select %p8908, %s21, 3
      %s8910 = smul.addr %s8909, 3
      %s8911 = smul.addr %s8910, 8
      %s8912 = scalar_lea.vmem %s10, %s8911
      // Predicated region
      $region85: #{_lambda_.1} parent=59 // pred_check
        %p8913 = pneg %p254
      $region86: #{_lambda_.1} parent=59 // pred_check_branch
        %8915 = sbr.rel (%p8913) target = $region88
      $region87: #{_lambda_.1} parent=59 // pred_region
        _
      $region88: #{_lambda_.1} parent=59 // pred_fallthru
        _
    $region60: #{_lambda_.1} parent=5 // pred_fallthru
      _
    %p8916 = scmp.le.s32.totalorder 2, %s16
    // Predicated region
    $region89: #{_lambda_.1} parent=5 // pred_check
      %p8917 = pneg %p8916
    $region90: #{_lambda_.1} parent=5 // pred_check_branch
      %8919 = sbr.rel (%p8917) target = $region92
    $region91: #{_lambda_.1} parent=5 // pred_region
      %s8920 = ssub.s32 %s16, 2
      // Predicated region
      $region93: #{_lambda_.1} parent=91 // pred_check
        %p8921 = pneg %p260
      $region94: #{_lambda_.1} parent=91 // pred_check_branch
        %8923 = sbr.rel (%p8921) target = $region96
      $region95: #{_lambda_.1} parent=91 // pred_region
        %p8924 = scmp.lt.s32.totalorder %s22, 3
        %s8925 = scalar_select %p8924, %s22, 3
        %s8926 = smul.addr %s8925, 3
        %s8927 = smul.addr %s8926, 8
        %s8928 = scalar_lea.vmem %s10, %s8927
      $region96: #{_lambda_.1} parent=91 // pred_fallthru
        _
    $region92: #{_lambda_.1} parent=5 // pred_fallthru
      _
  $region6: #{_lambda_.1} parent=0 // loop_footer
    %s20 = sadd.s32 1, %s16
  $region7: #{_lambda_.1} parent=0 // loop_footer_branch
    %15 = sbr.rel target = $region3
  $region8: #{_lambda_.1} parent=0 // loop_exit
    _

</llo_original>
